<compile_context>
chip_gen: v7x
topology: tpu7x:2x2x1
jax: 0.10.0
libtpu: 0.0.40
codegen_flags: <defaults>
</compile_context>

<pallas_src>
import functools

import jax
import jax.numpy as jnp
from jax.experimental import pallas as pl
from jax.experimental.pallas import tpu as pltpu


# ------------------------------ helpers --------------------------------------
def _round_up(x, m):
    return ((x + m - 1) // m) * m


def _pick_hw_config():
    """Per-generation tile maxima + scoped-VMEM limit (safe fallbacks)."""
    tm_max, tk_max = 512, 2048                  # conservative: v7x has 64 MiB VMEM
    vmem_limit = 40 * 1024 * 1024               # > 32 MiB default, headroom on v7x
    try:
        info = pltpu.get_tpu_info()
        cap = getattr(info, "vmem_capacity_bytes", None)
        if cap is not None and cap >= 100 * 1024 * 1024:   # v5e / v6e (128 MiB VMEM)
            tm_max = 1024
            vmem_limit = 64 * 1024 * 1024
    except Exception:
        pass
    return tm_max, tk_max, vmem_limit


_TM_MAX, _TK_MAX, _VMEM_LIMIT = _pick_hw_config()
_TM_SPLIT_TILE = 32     # force >=2 M blocks whenever M >= 2*this (keeps 2 v7x TCs busy)


def _plan_m(m):
    """Pick (tm, m_padded): tm | m_padded, tm % 16 == 0, tm <= cap.
    No padding when m is already a multiple of 16 (true for every layer here)."""
    mp = _round_up(m, 16)
    cap = _TM_MAX
    if mp >= 2 * _TM_SPLIT_TILE:
        cap = min(cap, mp // 2)      # guarantee >= 2 parallel M blocks
    tm = None
    for g in range(1, mp // 16 + 1):
        if mp % g == 0:
            cand = mp // g
            if cand <= cap and cand % 16 == 0:
                tm = cand
                break
    if tm is None:                   # rare fallback: pad M up to a tile multiple
        tm = max(16, (min(cap, mp) // 16) * 16)
        mp = _round_up(mp, tm)
    return tm, mp


def _plan_k(kpad):
    """Largest K tile (multiple of 128) that divides kpad and is <= _TK_MAX."""
    best, d = 128, 128
    while d <= min(kpad, _TK_MAX):
        if kpad % d == 0:
            best = d
        d += 128
    return best


# ----------------------------- Pallas kernels --------------------------------
@functools.lru_cache(maxsize=None)
def _make_mm_kernel(n_pairs, has_act, has_res):
    """Single-K-step fused matmul: o = [PReLU](sum_i A_i @ W_i) [+ res].
    No accumulator scratch, no init pass — result produced in one shot."""

    def kernel(*refs):
        idx = 0
        a_refs = refs[idx:idx + n_pairs]; idx += n_pairs
        w_refs = refs[idx:idx + n_pairs]; idx += n_pairs
        alpha_ref = None
        res_ref = None
        if has_act:
            alpha_ref = refs[idx]; idx += 1
        if has_res:
            res_ref = refs[idx]; idx += 1
        o_ref = refs[idx]

        acc = jnp.dot(a_refs[0][...], w_refs[0][...],
                      preferred_element_type=jnp.float32)
        for q in range(1, n_pairs):
            acc = acc + jnp.dot(a_refs[q][...], w_refs[q][...],
                                preferred_element_type=jnp.float32)

        nk = o_ref.shape[-1]                      # true cout (may be < npad)
        if nk != acc.shape[-1]:
            acc = acc[:, :nk]                     # lane-slice off the N padding
        if has_act:
            alpha = alpha_ref[0]
            acc = jnp.where(acc >= 0.0, acc, alpha * acc)
        if has_res:
            acc = acc + res_ref[...].astype(jnp.float32)
        o_ref[...] = acc.astype(o_ref.dtype)

    return kernel


@functools.lru_cache(maxsize=None)
def _make_mm_kernel_kgrid(has_act, has_res):
    """K-grid fused matmul (only used when K does not fit one tile):
    f32 VMEM accumulator, zeroed at k==0, epilogue at k==last."""

    def kernel(*refs):
        a_ref, w_ref = refs[0], refs[1]
        idx = 2
        alpha_ref = None
        res_ref = None
        if has_act:
            alpha_ref = refs[idx]; idx += 1
        if has_res:
            res_ref = refs[idx]; idx += 1
        o_ref = refs[idx]
        acc_ref = refs[idx + 1]

        kk = pl.program_id(1)

        @pl.when(kk == 0)
        def _init():
            acc_ref[...] = jnp.zeros_like(acc_ref)

        acc_ref[...] += jnp.dot(a_ref[...], w_ref[...],
                                preferred_element_type=jnp.float32)

        @pl.when(kk == pl.num_programs(1) - 1)
        def _epilogue():
            acc = acc_ref[...]
            nk = o_ref.shape[-1]
            if nk != acc.shape[-1]:
                acc = acc[:, :nk]
            if has_act:
                alpha = alpha_ref[0]
                acc = jnp.where(acc >= 0.0, acc, alpha * acc)
            if has_res:
                acc = acc + res_ref[...].astype(jnp.float32)
            o_ref[...] = acc.astype(o_ref.dtype)

    return kernel


# --------------------------- fused matmul wrapper ------------------------------
def _fused_matmul(a_list, w_list, cout, *, alpha=None, residual=None,
                  out_dtype=jnp.bfloat16):
    """out[:m, :cout] = epilogue(sum_i a_i @ w_i).
    a_i: (m, kpad_i) bf16; w_i: (kpad_i, npad) bf16; residual: (m, cout)."""
    m = a_list[0].shape[0]
    npad = w_list[0].shape[1]
    kpads = [a.shape[1] for a in a_list]
    has_act = alpha is not None
    has_res = residual is not None

    tm, mp = _plan_m(m)
    if mp != m:                                   # rare: not hit by this net
        a_list = [jnp.pad(a, ((0, mp - m), (0, 0))) for a in a_list]
        if has_res:
            residual = jnp.pad(residual, ((0, mp - m), (0, 0)))
    gm = mp // tm

    single_k = (len(a_list) > 1) or (kpads[0] <= _TK_MAX)

    out_bytes = mp * cout * jnp.dtype(out_dtype).itemsize
    bytes_accessed = (sum(mp * kp * 2 for kp in kpads)
                      + sum(kp * npad * 2 for kp in kpads)
                      + out_bytes + (mp * cout * 2 if has_res else 0))
    flops = 2 * mp * npad * sum(kpads)

    if single_k:
        kernel = _make_mm_kernel(len(a_list), has_act, has_res)
        grid = (gm,)
        in_specs = ([pl.BlockSpec((tm, kp), lambda i: (i, 0)) for kp in kpads]
                    + [pl.BlockSpec((kp, npad), lambda i: (0, 0)) for kp in kpads])
        inputs = list(a_list) + list(w_list)
        if has_act:
            inputs.append(jnp.asarray(alpha, jnp.float32).reshape(1))
            in_specs.append(pl.BlockSpec(memory_space=pltpu.MemorySpace.SMEM))
        if has_res:
            inputs.append(residual)
            in_specs.append(pl.BlockSpec((tm, cout), lambda i: (i, 0)))
        out_specs = pl.BlockSpec((tm, cout), lambda i: (i, 0))
        scratch = []
        dim_sem = ("parallel",)
    else:
        kpad = kpads[0]
        tk = _plan_k(kpad)
        gk = kpad // tk
        kernel = _make_mm_kernel_kgrid(has_act, has_res)
        grid = (gm, gk)
        in_specs = [pl.BlockSpec((tm, tk), lambda i, kk: (i, kk)),
                    pl.BlockSpec((tk, npad), lambda i, kk: (kk, 0))]
        inputs = [a_list[0], w_list[0]]
        if has_act:
            inputs.append(jnp.asarray(alpha, jnp.float32).reshape(1))
            in_specs.append(pl.BlockSpec(memory_space=pltpu.MemorySpace.SMEM))
        if has_res:
            inputs.append(residual)
            in_specs.append(pl.BlockSpec((tm, cout), lambda i, kk: (i, 0)))
        out_specs = pl.BlockSpec((tm, cout), lambda i, kk: (i, 0))
        scratch = [pltpu.VMEM((tm, npad), jnp.float32)]
        dim_sem = ("parallel", "arbitrary")

    out = pl.pallas_call(
        kernel,
        out_shape=jax.ShapeDtypeStruct((mp, cout), out_dtype),
        grid_spec=pltpu.PrefetchScalarGridSpec(
            num_scalar_prefetch=0,
            grid=grid,
            in_specs=in_specs,
            out_specs=out_specs,
            scratch_shapes=scratch,
        ),
        compiler_params=pltpu.CompilerParams(
            dimension_semantics=dim_sem,
            vmem_limit_bytes=_VMEM_LIMIT,
        ),
        cost_estimate=pl.CostEstimate(
            flops=int(flops), transcendentals=0, bytes_accessed=int(bytes_accessed)),
    )(*inputs)

    if mp != m:
        out = out[:m]
    return out


# ------------------------------ im2col ---------------------------------------
def _im2col_3x3(x, stride, kpad):
    """bf16 NHWC -> (N*Ho*Wo, kpad) patches (kh-major, kw, C fastest).
    K zero-padding is folded into the single concatenate (no extra pad pass)."""
    n, h, w, c = x.shape
    xp = jnp.pad(x, ((0, 0), (1, 1), (1, 1), (0, 0)))
    ho = (h + 2 - 3) // stride + 1
    wo = (w + 2 - 3) // stride + 1
    cols = []
    for dy in range(3):
        for dx in range(3):
            cols.append(xp[:, dy:dy + stride * (ho - 1) + 1:stride,
                           dx:dx + stride * (wo - 1) + 1:stride, :])
    k = 9 * c
    if kpad > k:
        cols.append(jnp.zeros((n, ho, wo, kpad - k), x.dtype))
    a = jnp.concatenate(cols, axis=-1)
    return a.reshape(n * ho * wo, kpad), (n, ho, wo)


# --------------------------- layer-level wrappers ------------------------------
def conv3x3_block(x, wp, *, alpha=None, residual=None, stride=1,
                  out_dtype=jnp.bfloat16):
    assert wp["kh"] == 3 and x.shape[-1] == wp["cin"]
    a, (n, ho, wo) = _im2col_3x3(x, stride, wp["kpad"])
    m = n * ho * wo
    res2d = None
    if residual is not None:
        res2d = residual.reshape(m, wp["cout"])
    out2d = _fused_matmul([a], [wp["mat"]], wp["cout"], alpha=alpha,
                          residual=res2d, out_dtype=out_dtype)
    return out2d.reshape(n, ho, wo, wp["cout"])


def conv1x1_block(x, wp, *, out_dtype=jnp.bfloat16):
    assert wp["kh"] == 1 and x.shape[-1] == wp["cin"]
    n, h, w, cin = x.shape
    m = n * h * w
    a = x.reshape(m, cin)
    if wp["kpad"] != cin:
        a = jnp.pad(a, ((0, 0), (0, wp["kpad"] - cin)))
    out2d = _fused_matmul([a], [wp["mat"]], wp["cout"], out_dtype=out_dtype)
    return out2d.reshape(n, h, w, wp["cout"])


def concat_conv1x1_block(x1, x2, wpp, *, out_dtype=jnp.bfloat16):
    """Fused channel-concat + 1x1 conv: the concatenated tensor is never built;
    the two operands are fed as two K-groups against a split packed weight."""
    n, h, w, c1 = x1.shape
    c2 = x2.shape[-1]
    assert (c1, c2) == (wpp["c1"], wpp["c2"]) and x2.shape[:3] == (n, h, w)
    m = n * h * w
    a1 = x1.reshape(m, c1)
    a2 = x2.reshape(m, c2)
    if wpp["k1p"] != c1:
        a1 = jnp.pad(a1, ((0, 0), (0, wpp["k1p"] - c1)))
    if wpp["k2p"] != c2:
        a2 = jnp.pad(a2, ((0, 0), (0, wpp["k2p"] - c2)))
    out2d = _fused_matmul([a1, a2], [wpp["mat1"], wpp["mat2"]], wpp["cout"],
                          out_dtype=out_dtype)
    return out2d.reshape(n, h, w, wpp["cout"])


def pixel_shuffle_nhwc(x, r):
    """torch.nn.PixelShuffle semantics, channels-last layout (bf16 glue)."""
    n, h, w, crr = x.shape
    c = crr // (r * r)
    x = x.reshape(n, h, w, c, r, r)
    x = jnp.transpose(x, (0, 1, 4, 2, 5, 3))
    return x.reshape(n, h * r, w * r, c)


# ------------------------------ full forward ----------------------------------
def residual_block_forward_pallas(x_bf16, pp):
    res1 = x_bf16
    out = conv3x3_block(x_bf16, pp['w1'], alpha=pp['a2'])
    out = conv3x3_block(out, pp['w3'], alpha=pp['a4'], residual=res1)
    cat1 = out
    out = conv3x3_block(out, pp['w5'], alpha=pp['a6'], stride=2)
    res2 = out
    out = conv3x3_block(out, pp['w7'], alpha=pp['a8'], residual=res2)
    cat2 = out
    out = conv3x3_block(out, pp['w9'], alpha=pp['a10'], stride=2)
    res3 = out
    out = conv3x3_block(out, pp['w11'], alpha=pp['a12'], residual=res3)
    out = conv1x1_block(out, pp['w13'])                       # conv13 (1x1)
    out = pixel_shuffle_nhwc(out, 2)                          # up14
    out = concat_conv1x1_block(out, cat2, pp['w15'])          # cat + conv15 fused
    res4 = out
    out = conv3x3_block(out, pp['w16'], alpha=pp['a17'], residual=res4)
    out = conv1x1_block(out, pp['w18'])                       # conv18 (1x1)
    out = pixel_shuffle_nhwc(out, 2)                          # up19
    out = concat_conv1x1_block(out, cat1, pp['w20'])          # cat + conv20 fused
    res5 = out
    out = conv3x3_block(out, pp['w21'], alpha=pp['a22'])
    out = conv3x3_block(out, pp['w23'], alpha=pp['a24'], residual=res5)
    out = conv3x3_block(out, pp['w25'], residual=res1, out_dtype=jnp.float32)
    return out


# ------------------------------- parameters -----------------------------------
def init_params(key, ch):
    shapes = {
        'w1': (ch, ch, 3, 3),          'w3': (ch, ch, 3, 3),
        'w5': (2 * ch, ch, 3, 3),      'w7': (2 * ch, 2 * ch, 3, 3),
        'w9': (4 * ch, 2 * ch, 3, 3),  'w11': (4 * ch, 4 * ch, 3, 3),
        'w13': (8 * ch, 4 * ch, 1, 1), 'w15': (2 * ch, 4 * ch, 1, 1),
        'w16': (2 * ch, 2 * ch, 3, 3), 'w18': (4 * ch, 2 * ch, 1, 1),
        'w20': (ch, 2 * ch, 1, 1),     'w21': (ch, ch, 3, 3),
        'w23': (ch, ch, 3, 3),         'w25': (ch, ch, 3, 3),
    }
    p = {}
    names = sorted(shapes)
    keys = jax.random.split(key, len(names))
    for k_, name in zip(keys, names):
        p[name] = 0.1 * jax.random.normal(k_, shapes[name], jnp.float32)
    for name in ['a2', 'a4', 'a6', 'a8', 'a10', 'a12', 'a17', 'a22', 'a24']:
        p[name] = jnp.float32(0.25)        # nn.PReLU() default init
    return p


def pack_conv_weight(w):
    """OIHW f32 -> padded (Kpad, Npad) bf16 matrix matching the im2col column order.
    Padding is fixed 128-alignment, independent of any device-derived tile plan."""
    cout, cin, kh, kw = w.shape
    k = kh * kw * cin
    kpad = _round_up(k, 128)
    npad = _round_up(cout, 128)
    wm = jnp.transpose(w, (2, 3, 1, 0)).reshape(k, cout)
    wm = jnp.pad(wm, ((0, kpad - k), (0, npad - cout))).astype(jnp.bfloat16)
    return {"mat": wm, "kh": kh, "kw": kw, "cin": cin, "cout": cout,
            "kpad": kpad, "npad": npad}


def pack_concat_1x1_weight(w, cin_first):
    """1x1 conv weight split into two K-groups (first = pixel-shuffled branch,
    second = skip-connection branch), each padded to 128 in K/N, bf16."""
    cout, cin, kh, kw = w.shape
    assert kh == 1 and kw == 1
    wm = jnp.transpose(w, (2, 3, 1, 0)).reshape(cin, cout)
    c1, c2 = cin_first, cin - cin_first
    npad = _round_up(cout, 128)
    k1p, k2p = _round_up(c1, 128), _round_up(c2, 128)
    w1 = jnp.pad(wm[:c1], ((0, k1p - c1), (0, npad - cout))).astype(jnp.bfloat16)
    w2 = jnp.pad(wm[c1:], ((0, k2p - c2), (0, npad - cout))).astype(jnp.bfloat16)
    return {"mat1": w1, "mat2": w2, "c1": c1, "c2": c2, "k1p": k1p, "k2p": k2p,
            "cout": cout, "npad": npad}


def pack_params(p):
    """Pre-pack all conv weights once (outside the per-forward path)."""
    ch = p['w1'].shape[0]
    pp = {k: v for k, v in p.items() if not k.startswith('w')}
    for name in ['w1', 'w3', 'w5', 'w7', 'w9', 'w11', 'w13', 'w16', 'w18',
                 'w21', 'w23', 'w25']:
        pp[name] = pack_conv_weight(p[name])
    pp['w15'] = pack_concat_1x1_weight(p['w15'], 2 * ch)   # [up14 out | cat2]
    pp['w20'] = pack_concat_1x1_weight(p['w20'], ch)       # [up19 out | cat1]
    return pp


# -------------------------- pure-JAX reference --------------------------------
def conv_ref(x, w, *, alpha=None, residual=None, stride=1, pad=1,
             out_dtype=jnp.bfloat16):
    """Same dtype policy as the Pallas path (bf16 operands, f32 accumulate,
    bf16 layer outputs), via XLA conv."""
    wh = jnp.transpose(w, (2, 3, 1, 0)).astype(jnp.bfloat16)      # OIHW -> HWIO
    out = jax.lax.conv_general_dilated(
        x.astype(jnp.bfloat16), wh, (stride, stride),
        [(pad, pad), (pad, pad)],
        dimension_numbers=("NHWC", "HWIO", "NHWC"),
        preferred_element_type=jnp.float32)
    if alpha is not None:
        out = jnp.where(out >= 0, out, alpha * out)
    if residual is not None:
        out = out + residual.astype(jnp.float32)
    return out.astype(out_dtype)


def residual_block_forward_ref(x_bf16, p):
    res1 = x_bf16
    out = conv_ref(x_bf16, p['w1'], alpha=p['a2'])
    out = conv_ref(out, p['w3'], alpha=p['a4'], residual=res1)
    cat1 = out
    out = conv_ref(out, p['w5'], alpha=p['a6'], stride=2)
    res2 = out
    out = conv_ref(out, p['w7'], alpha=p['a8'], residual=res2)
    cat2 = out
    out = conv_ref(out, p['w9'], alpha=p['a10'], stride=2)
    res3 = out
    out = conv_ref(out, p['w11'], alpha=p['a12'], residual=res3)
    out = conv_ref(out, p['w13'], pad=0)
    out = pixel_shuffle_nhwc(out, 2)
    out = jnp.concatenate([out, cat2], axis=-1)
    out = conv_ref(out, p['w15'], pad=0)
    res4 = out
    out = conv_ref(out, p['w16'], alpha=p['a17'], residual=res4)
    out = conv_ref(out, p['w18'], pad=0)
    out = pixel_shuffle_nhwc(out, 2)
    out = jnp.concatenate([out, cat1], axis=-1)
    out = conv_ref(out, p['w20'], pad=0)
    res5 = out
    out = conv_ref(out, p['w21'], alpha=p['a22'])
    out = conv_ref(out, p['w23'], alpha=p['a24'], residual=res5)
    out = conv_ref(out, p['w25'], residual=res1, out_dtype=jnp.float32)
    return out


# --------------------------------- main ---------------------------------------
if __name__ == "__main__":
    ch = 4
    key = jax.random.PRNGKey(0)
    kx, kp = jax.random.split(key)

    # PyTorch-convention input: NCHW
    x_nchw = jax.random.normal(kx, (2, ch, 16, 16), jnp.float32)
    params = init_params(kp, ch)
    packed = pack_params(params)                   # weights packed once, up front

    # NHWC bf16 activations everywhere in between; final output back to f32 NCHW
    x_nhwc = jnp.transpose(x_nchw, (0, 2, 3, 1)).astype(jnp.bfloat16)

    pallas_fwd = jax.jit(lambda xx: residual_block_forward_pallas(xx, packed))
    out_nhwc = pallas_fwd(x_nhwc)
    jax.block_until_ready(out_nhwc)

    # sanity check against a pure-JAX (XLA conv) reference with the same
    # bf16-operand / f32-accumulate / bf16-intermediate policy
    ref_fwd = jax.jit(lambda xx: residual_block_forward_ref(xx, params))
    ref_nhwc = ref_fwd(x_nhwc)
    err = float(jnp.max(jnp.abs(out_nhwc - ref_nhwc)))
    assert err < 5e-2, f"mismatch vs reference, max abs err = {err}"

    out_nchw = jnp.transpose(out_nhwc, (0, 3, 1, 2))      # back to PyTorch layout
    jax.block_until_ready(out_nchw)
    print("KERNEL_OK")
</pallas_src>

<mosaic_0001>
module attributes {stable_mosaic.version = 11 : i64} {
  func.func @kernel(%arg0: i32, %arg1: memref<256x128xbf16, #tpu.memory_space<vmem>>, %arg2: memref<128x128xbf16, #tpu.memory_space<vmem>>, %arg3: memref<1xf32, #tpu.memory_space<smem>>, %arg4: memref<256x4xbf16, #tpu.memory_space<vmem>>) attributes {dimension_semantics = [#tpu.dimension_semantics<parallel>], iteration_bounds = array<i64: 2>, scalar_prefetch = 0 : i64, scratch_operands = 0 : i64, tpu.core_type = #tpu.core_type<tc>, window_params = [{transform_indices = @transform_0, window_bounds = array<i64: 256, 128>}, {pipeline_mode = #tpu.pipeline_mode<synchronous>, transform_indices = @transform_1, window_bounds = array<i64: 128, 128>}, {transform_indices = @transform_2, window_bounds = array<i64: 1>}, {transform_indices = @transform_3, window_bounds = array<i64: 256, 4>}]} {
    %c0 = arith.constant 0 : index
    %c0_0 = arith.constant 0 : index
    %0 = vector.load %arg1[%c0, %c0_0] : memref<256x128xbf16, #tpu.memory_space<vmem>>, vector<256x128xbf16>
    %c0_1 = arith.constant 0 : index
    %c0_2 = arith.constant 0 : index
    %1 = vector.load %arg2[%c0_1, %c0_2] : memref<128x128xbf16, #tpu.memory_space<vmem>>, vector<128x128xbf16>
    %cst = arith.constant dense<0.000000e+00> : vector<256x128xf32>
    %2 = tpu.matmul %0, %1, %cst {dimension_numbers = #tpu.dot_dimension_numbers<[1], [0], [0], [1], [0, 0, 1, 1], [], []>} : vector<256x128xbf16>, vector<128x128xbf16>, vector<256x128xf32> -> vector<256x128xf32>
    %3 = vector.extract_strided_slice %2 {offsets = [0, 0], sizes = [256, 4], strides = [1, 1]} : vector<256x128xf32> to vector<256x4xf32>
    %c0_3 = arith.constant 0 : index
    %4 = memref.load %arg3[%c0_3] : memref<1xf32, #tpu.memory_space<smem>>
    %cst_4 = arith.constant 0.000000e+00 : f32
    %5 = vector.broadcast %cst_4 : f32 to vector<256x4xf32>
    %6 = arith.cmpf oge, %3, %5 : vector<256x4xf32>
    %7 = vector.broadcast %4 : f32 to vector<256x4xf32>
    %8 = arith.mulf %7, %3 : vector<256x4xf32>
    %9 = arith.select %6, %3, %8 : vector<256x4xi1>, vector<256x4xf32>
    %10 = arith.truncf %9 : vector<256x4xf32> to vector<256x4xbf16>
    %c0_5 = arith.constant 0 : index
    %c0_6 = arith.constant 0 : index
    %11 = vector.load %arg4[%c0_5, %c0_6] : memref<256x4xbf16, #tpu.memory_space<vmem>>, vector<256x4xbf16>
    tpu.vector_store %arg4[%c0_5, %c0_6], %10 {strides = array<i32>} : memref<256x4xbf16, #tpu.memory_space<vmem>>, vector<256x4xbf16>,
    return
  }
  func.func @transform_0(%arg0: i32) -> (i32, i32) {
    %c0_i32 = arith.constant 0 : i32
    %c0_i32_0 = arith.constant 0 : i32
    return %arg0, %c0_i32 : i32, i32
  }
  func.func @transform_1(%arg0: i32) -> (i32, i32) {
    %c0_i32 = arith.constant 0 : i32
    %c0_i32_0 = arith.constant 0 : i32
    %c0_i32_1 = arith.constant 0 : i32
    return %c0_i32, %c0_i32_0 : i32, i32
  }
  func.func @transform_2(%arg0: i32) -> i32 {
    %c0_i32 = arith.constant 0 : i32
    %c0_i32_0 = arith.constant 0 : i32
    return %c0_i32 : i32
  }
  func.func @transform_3(%arg0: i32) -> (i32, i32) {
    %c0_i32 = arith.constant 0 : i32
    %c0_i32_0 = arith.constant 0 : i32
    return %arg0, %c0_i32 : i32, i32
  }
}

module attributes {stable_mosaic.version = 11 : i64} {
  func.func @kernel(%arg0: i32, %arg1: memref<256x128xbf16, #tpu.memory_space<vmem>>, %arg2: memref<128x128xbf16, #tpu.memory_space<vmem>>, %arg3: memref<1xf32, #tpu.memory_space<smem>>, %arg4: memref<256x4xbf16, #tpu.memory_space<vmem>>, %arg5: memref<256x4xbf16, #tpu.memory_space<vmem>>) attributes {dimension_semantics = [#tpu.dimension_semantics<parallel>], iteration_bounds = array<i64: 2>, scalar_prefetch = 0 : i64, scratch_operands = 0 : i64, tpu.core_type = #tpu.core_type<tc>, window_params = [{transform_indices = @transform_0, window_bounds = array<i64: 256, 128>}, {pipeline_mode = #tpu.pipeline_mode<synchronous>, transform_indices = @transform_1, window_bounds = array<i64: 128, 128>}, {transform_indices = @transform_2, window_bounds = array<i64: 1>}, {transform_indices = @transform_3, window_bounds = array<i64: 256, 4>}, {transform_indices = @transform_4, window_bounds = array<i64: 256, 4>}]} {
    %c0 = arith.constant 0 : index
    %c0_0 = arith.constant 0 : index
    %0 = vector.load %arg1[%c0, %c0_0] : memref<256x128xbf16, #tpu.memory_space<vmem>>, vector<256x128xbf16>
    %c0_1 = arith.constant 0 : index
    %c0_2 = arith.constant 0 : index
    %1 = vector.load %arg2[%c0_1, %c0_2] : memref<128x128xbf16, #tpu.memory_space<vmem>>, vector<128x128xbf16>
    %cst = arith.constant dense<0.000000e+00> : vector<256x128xf32>
    %2 = tpu.matmul %0, %1, %cst {dimension_numbers = #tpu.dot_dimension_numbers<[1], [0], [0], [1], [0, 0, 1, 1], [], []>} : vector<256x128xbf16>, vector<128x128xbf16>, vector<256x128xf32> -> vector<256x128xf32>
    %3 = vector.extract_strided_slice %2 {offsets = [0, 0], sizes = [256, 4], strides = [1, 1]} : vector<256x128xf32> to vector<256x4xf32>
    %c0_3 = arith.constant 0 : index
    %4 = memref.load %arg3[%c0_3] : memref<1xf32, #tpu.memory_space<smem>>
    %cst_4 = arith.constant 0.000000e+00 : f32
    %5 = vector.broadcast %cst_4 : f32 to vector<256x4xf32>
    %6 = arith.cmpf oge, %3, %5 : vector<256x4xf32>
    %7 = vector.broadcast %4 : f32 to vector<256x4xf32>
    %8 = arith.mulf %7, %3 : vector<256x4xf32>
    %9 = arith.select %6, %3, %8 : vector<256x4xi1>, vector<256x4xf32>
    %c0_5 = arith.constant 0 : index
    %c0_6 = arith.constant 0 : index
    %10 = vector.load %arg4[%c0_5, %c0_6] : memref<256x4xbf16, #tpu.memory_space<vmem>>, vector<256x4xbf16>
    %11 = arith.extf %10 : vector<256x4xbf16> to vector<256x4xf32>
    %12 = arith.addf %9, %11 : vector<256x4xf32>
    %13 = arith.truncf %12 : vector<256x4xf32> to vector<256x4xbf16>
    %c0_7 = arith.constant 0 : index
    %c0_8 = arith.constant 0 : index
    %14 = vector.load %arg5[%c0_7, %c0_8] : memref<256x4xbf16, #tpu.memory_space<vmem>>, vector<256x4xbf16>
    tpu.vector_store %arg5[%c0_7, %c0_8], %13 {strides = array<i32>} : memref<256x4xbf16, #tpu.memory_space<vmem>>, vector<256x4xbf16>,
    return
  }
  func.func @transform_0(%arg0: i32) -> (i32, i32) {
    %c0_i32 = arith.constant 0 : i32
    %c0_i32_0 = arith.constant 0 : i32
    return %arg0, %c0_i32 : i32, i32
  }
  func.func @transform_1(%arg0: i32) -> (i32, i32) {
    %c0_i32 = arith.constant 0 : i32
    %c0_i32_0 = arith.constant 0 : i32
    %c0_i32_1 = arith.constant 0 : i32
    return %c0_i32, %c0_i32_0 : i32, i32
  }
  func.func @transform_2(%arg0: i32) -> i32 {
    %c0_i32 = arith.constant 0 : i32
    %c0_i32_0 = arith.constant 0 : i32
    return %c0_i32 : i32
  }
  func.func @transform_3(%arg0: i32) -> (i32, i32) {
    %c0_i32 = arith.constant 0 : i32
    %c0_i32_0 = arith.constant 0 : i32
    return %arg0, %c0_i32 : i32, i32
  }
  func.func @transform_4(%arg0: i32) -> (i32, i32) {
    %c0_i32 = arith.constant 0 : i32
    %c0_i32_0 = arith.constant 0 : i32
    return %arg0, %c0_i32 : i32, i32
  }
}

module attributes {stable_mosaic.version = 11 : i64} {
  func.func @kernel(%arg0: i32, %arg1: memref<64x128xbf16, #tpu.memory_space<vmem>>, %arg2: memref<128x128xbf16, #tpu.memory_space<vmem>>, %arg3: memref<1xf32, #tpu.memory_space<smem>>, %arg4: memref<64x8xbf16, #tpu.memory_space<vmem>>) attributes {dimension_semantics = [#tpu.dimension_semantics<parallel>], iteration_bounds = array<i64: 2>, scalar_prefetch = 0 : i64, scratch_operands = 0 : i64, tpu.core_type = #tpu.core_type<tc>, window_params = [{transform_indices = @transform_0, window_bounds = array<i64: 64, 128>}, {pipeline_mode = #tpu.pipeline_mode<synchronous>, transform_indices = @transform_1, window_bounds = array<i64: 128, 128>}, {transform_indices = @transform_2, window_bounds = array<i64: 1>}, {transform_indices = @transform_3, window_bounds = array<i64: 64, 8>}]} {
    %c0 = arith.constant 0 : index
    %c0_0 = arith.constant 0 : index
    %0 = vector.load %arg1[%c0, %c0_0] : memref<64x128xbf16, #tpu.memory_space<vmem>>, vector<64x128xbf16>
    %c0_1 = arith.constant 0 : index
    %c0_2 = arith.constant 0 : index
    %1 = vector.load %arg2[%c0_1, %c0_2] : memref<128x128xbf16, #tpu.memory_space<vmem>>, vector<128x128xbf16>
    %cst = arith.constant dense<0.000000e+00> : vector<64x128xf32>
    %2 = tpu.matmul %0, %1, %cst {dimension_numbers = #tpu.dot_dimension_numbers<[1], [0], [0], [1], [0, 0, 1, 1], [], []>} : vector<64x128xbf16>, vector<128x128xbf16>, vector<64x128xf32> -> vector<64x128xf32>
    %3 = vector.extract_strided_slice %2 {offsets = [0, 0], sizes = [64, 8], strides = [1, 1]} : vector<64x128xf32> to vector<64x8xf32>
    %c0_3 = arith.constant 0 : index
    %4 = memref.load %arg3[%c0_3] : memref<1xf32, #tpu.memory_space<smem>>
    %cst_4 = arith.constant 0.000000e+00 : f32
    %5 = vector.broadcast %cst_4 : f32 to vector<64x8xf32>
    %6 = arith.cmpf oge, %3, %5 : vector<64x8xf32>
    %7 = vector.broadcast %4 : f32 to vector<64x8xf32>
    %8 = arith.mulf %7, %3 : vector<64x8xf32>
    %9 = arith.select %6, %3, %8 : vector<64x8xi1>, vector<64x8xf32>
    %10 = arith.truncf %9 : vector<64x8xf32> to vector<64x8xbf16>
    %c0_5 = arith.constant 0 : index
    %c0_6 = arith.constant 0 : index
    %11 = vector.load %arg4[%c0_5, %c0_6] : memref<64x8xbf16, #tpu.memory_space<vmem>>, vector<64x8xbf16>
    tpu.vector_store %arg4[%c0_5, %c0_6], %10 {strides = array<i32>} : memref<64x8xbf16, #tpu.memory_space<vmem>>, vector<64x8xbf16>,
    return
  }
  func.func @transform_0(%arg0: i32) -> (i32, i32) {
    %c0_i32 = arith.constant 0 : i32
    %c0_i32_0 = arith.constant 0 : i32
    return %arg0, %c0_i32 : i32, i32
  }
  func.func @transform_1(%arg0: i32) -> (i32, i32) {
    %c0_i32 = arith.constant 0 : i32
    %c0_i32_0 = arith.constant 0 : i32
    %c0_i32_1 = arith.constant 0 : i32
    return %c0_i32, %c0_i32_0 : i32, i32
  }
  func.func @transform_2(%arg0: i32) -> i32 {
    %c0_i32 = arith.constant 0 : i32
    %c0_i32_0 = arith.constant 0 : i32
    return %c0_i32 : i32
  }
  func.func @transform_3(%arg0: i32) -> (i32, i32) {
    %c0_i32 = arith.constant 0 : i32
    %c0_i32_0 = arith.constant 0 : i32
    return %arg0, %c0_i32 : i32, i32
  }
}

module attributes {stable_mosaic.version = 11 : i64} {
  func.func @kernel(%arg0: i32, %arg1: memref<64x128xbf16, #tpu.memory_space<vmem>>, %arg2: memref<128x128xbf16, #tpu.memory_space<vmem>>, %arg3: memref<1xf32, #tpu.memory_space<smem>>, %arg4: memref<64x8xbf16, #tpu.memory_space<vmem>>, %arg5: memref<64x8xbf16, #tpu.memory_space<vmem>>) attributes {dimension_semantics = [#tpu.dimension_semantics<parallel>], iteration_bounds = array<i64: 2>, scalar_prefetch = 0 : i64, scratch_operands = 0 : i64, tpu.core_type = #tpu.core_type<tc>, window_params = [{transform_indices = @transform_0, window_bounds = array<i64: 64, 128>}, {pipeline_mode = #tpu.pipeline_mode<synchronous>, transform_indices = @transform_1, window_bounds = array<i64: 128, 128>}, {transform_indices = @transform_2, window_bounds = array<i64: 1>}, {transform_indices = @transform_3, window_bounds = array<i64: 64, 8>}, {transform_indices = @transform_4, window_bounds = array<i64: 64, 8>}]} {
    %c0 = arith.constant 0 : index
    %c0_0 = arith.constant 0 : index
    %0 = vector.load %arg1[%c0, %c0_0] : memref<64x128xbf16, #tpu.memory_space<vmem>>, vector<64x128xbf16>
    %c0_1 = arith.constant 0 : index
    %c0_2 = arith.constant 0 : index
    %1 = vector.load %arg2[%c0_1, %c0_2] : memref<128x128xbf16, #tpu.memory_space<vmem>>, vector<128x128xbf16>
    %cst = arith.constant dense<0.000000e+00> : vector<64x128xf32>
    %2 = tpu.matmul %0, %1, %cst {dimension_numbers = #tpu.dot_dimension_numbers<[1], [0], [0], [1], [0, 0, 1, 1], [], []>} : vector<64x128xbf16>, vector<128x128xbf16>, vector<64x128xf32> -> vector<64x128xf32>
    %3 = vector.extract_strided_slice %2 {offsets = [0, 0], sizes = [64, 8], strides = [1, 1]} : vector<64x128xf32> to vector<64x8xf32>
    %c0_3 = arith.constant 0 : index
    %4 = memref.load %arg3[%c0_3] : memref<1xf32, #tpu.memory_space<smem>>
    %cst_4 = arith.constant 0.000000e+00 : f32
    %5 = vector.broadcast %cst_4 : f32 to vector<64x8xf32>
    %6 = arith.cmpf oge, %3, %5 : vector<64x8xf32>
    %7 = vector.broadcast %4 : f32 to vector<64x8xf32>
    %8 = arith.mulf %7, %3 : vector<64x8xf32>
    %9 = arith.select %6, %3, %8 : vector<64x8xi1>, vector<64x8xf32>
    %c0_5 = arith.constant 0 : index
    %c0_6 = arith.constant 0 : index
    %10 = vector.load %arg4[%c0_5, %c0_6] : memref<64x8xbf16, #tpu.memory_space<vmem>>, vector<64x8xbf16>
    %11 = arith.extf %10 : vector<64x8xbf16> to vector<64x8xf32>
    %12 = arith.addf %9, %11 : vector<64x8xf32>
    %13 = arith.truncf %12 : vector<64x8xf32> to vector<64x8xbf16>
    %c0_7 = arith.constant 0 : index
    %c0_8 = arith.constant 0 : index
    %14 = vector.load %arg5[%c0_7, %c0_8] : memref<64x8xbf16, #tpu.memory_space<vmem>>, vector<64x8xbf16>
    tpu.vector_store %arg5[%c0_7, %c0_8], %13 {strides = array<i32>} : memref<64x8xbf16, #tpu.memory_space<vmem>>, vector<64x8xbf16>,
    return
  }
  func.func @transform_0(%arg0: i32) -> (i32, i32) {
    %c0_i32 = arith.constant 0 : i32
    %c0_i32_0 = arith.constant 0 : i32
    return %arg0, %c0_i32 : i32, i32
  }
  func.func @transform_1(%arg0: i32) -> (i32, i32) {
    %c0_i32 = arith.constant 0 : i32
    %c0_i32_0 = arith.constant 0 : i32
    %c0_i32_1 = arith.constant 0 : i32
    return %c0_i32, %c0_i32_0 : i32, i32
  }
  func.func @transform_2(%arg0: i32) -> i32 {
    %c0_i32 = arith.constant 0 : i32
    %c0_i32_0 = arith.constant 0 : i32
    return %c0_i32 : i32
  }
  func.func @transform_3(%arg0: i32) -> (i32, i32) {
    %c0_i32 = arith.constant 0 : i32
    %c0_i32_0 = arith.constant 0 : i32
    return %arg0, %c0_i32 : i32, i32
  }
  func.func @transform_4(%arg0: i32) -> (i32, i32) {
    %c0_i32 = arith.constant 0 : i32
    %c0_i32_0 = arith.constant 0 : i32
    return %arg0, %c0_i32 : i32, i32
  }
}

module attributes {stable_mosaic.version = 11 : i64} {
  func.func @kernel(%arg0: i32, %arg1: memref<32x128xbf16, #tpu.memory_space<vmem>>, %arg2: memref<128x128xbf16, #tpu.memory_space<vmem>>, %arg3: memref<1xf32, #tpu.memory_space<smem>>, %arg4: memref<32x16xbf16, #tpu.memory_space<vmem>>) attributes {dimension_semantics = [#tpu.dimension_semantics<parallel>], iteration_bounds = array<i64: 1>, scalar_prefetch = 0 : i64, scratch_operands = 0 : i64, tpu.core_type = #tpu.core_type<tc>, window_params = [{transform_indices = @transform_0, window_bounds = array<i64: 32, 128>}, {pipeline_mode = #tpu.pipeline_mode<synchronous>, transform_indices = @transform_1, window_bounds = array<i64: 128, 128>}, {transform_indices = @transform_2, window_bounds = array<i64: 1>}, {transform_indices = @transform_3, window_bounds = array<i64: 32, 16>}]} {
    %c0 = arith.constant 0 : index
    %c0_0 = arith.constant 0 : index
    %0 = vector.load %arg1[%c0, %c0_0] : memref<32x128xbf16, #tpu.memory_space<vmem>>, vector<32x128xbf16>
    %c0_1 = arith.constant 0 : index
    %c0_2 = arith.constant 0 : index
    %1 = vector.load %arg2[%c0_1, %c0_2] : memref<128x128xbf16, #tpu.memory_space<vmem>>, vector<128x128xbf16>
    %cst = arith.constant dense<0.000000e+00> : vector<32x128xf32>
    %2 = tpu.matmul %0, %1, %cst {dimension_numbers = #tpu.dot_dimension_numbers<[1], [0], [0], [1], [0, 0, 1, 1], [], []>} : vector<32x128xbf16>, vector<128x128xbf16>, vector<32x128xf32> -> vector<32x128xf32>
    %3 = vector.extract_strided_slice %2 {offsets = [0, 0], sizes = [32, 16], strides = [1, 1]} : vector<32x128xf32> to vector<32x16xf32>
    %c0_3 = arith.constant 0 : index
    %4 = memref.load %arg3[%c0_3] : memref<1xf32, #tpu.memory_space<smem>>
    %cst_4 = arith.constant 0.000000e+00 : f32
    %5 = vector.broadcast %cst_4 : f32 to vector<32x16xf32>
    %6 = arith.cmpf oge, %3, %5 : vector<32x16xf32>
    %7 = vector.broadcast %4 : f32 to vector<32x16xf32>
    %8 = arith.mulf %7, %3 : vector<32x16xf32>
    %9 = arith.select %6, %3, %8 : vector<32x16xi1>, vector<32x16xf32>
    %10 = arith.truncf %9 : vector<32x16xf32> to vector<32x16xbf16>
    %c0_5 = arith.constant 0 : index
    %c0_6 = arith.constant 0 : index
    %11 = vector.load %arg4[%c0_5, %c0_6] : memref<32x16xbf16, #tpu.memory_space<vmem>>, vector<32x16xbf16>
    tpu.vector_store %arg4[%c0_5, %c0_6], %10 {strides = array<i32>} : memref<32x16xbf16, #tpu.memory_space<vmem>>, vector<32x16xbf16>,
    return
  }
  func.func @transform_0(%arg0: i32) -> (i32, i32) {
    %c0_i32 = arith.constant 0 : i32
    %c0_i32_0 = arith.constant 0 : i32
    return %arg0, %c0_i32 : i32, i32
  }
  func.func @transform_1(%arg0: i32) -> (i32, i32) {
    %c0_i32 = arith.constant 0 : i32
    %c0_i32_0 = arith.constant 0 : i32
    %c0_i32_1 = arith.constant 0 : i32
    return %c0_i32, %c0_i32_0 : i32, i32
  }
  func.func @transform_2(%arg0: i32) -> i32 {
    %c0_i32 = arith.constant 0 : i32
    %c0_i32_0 = arith.constant 0 : i32
    return %c0_i32 : i32
  }
  func.func @transform_3(%arg0: i32) -> (i32, i32) {
    %c0_i32 = arith.constant 0 : i32
    %c0_i32_0 = arith.constant 0 : i32
    return %arg0, %c0_i32 : i32, i32
  }
}

module attributes {stable_mosaic.version = 11 : i64} {
  func.func @kernel(%arg0: i32, %arg1: memref<32x256xbf16, #tpu.memory_space<vmem>>, %arg2: memref<256x128xbf16, #tpu.memory_space<vmem>>, %arg3: memref<1xf32, #tpu.memory_space<smem>>, %arg4: memref<32x16xbf16, #tpu.memory_space<vmem>>, %arg5: memref<32x16xbf16, #tpu.memory_space<vmem>>) attributes {dimension_semantics = [#tpu.dimension_semantics<parallel>], iteration_bounds = array<i64: 1>, scalar_prefetch = 0 : i64, scratch_operands = 0 : i64, tpu.core_type = #tpu.core_type<tc>, window_params = [{transform_indices = @transform_0, window_bounds = array<i64: 32, 256>}, {pipeline_mode = #tpu.pipeline_mode<synchronous>, transform_indices = @transform_1, window_bounds = array<i64: 256, 128>}, {transform_indices = @transform_2, window_bounds = array<i64: 1>}, {transform_indices = @transform_3, window_bounds = array<i64: 32, 16>}, {transform_indices = @transform_4, window_bounds = array<i64: 32, 16>}]} {
    %c0 = arith.constant 0 : index
    %c0_0 = arith.constant 0 : index
    %0 = vector.load %arg1[%c0, %c0_0] : memref<32x256xbf16, #tpu.memory_space<vmem>>, vector<32x256xbf16>
    %c0_1 = arith.constant 0 : index
    %c0_2 = arith.constant 0 : index
    %1 = vector.load %arg2[%c0_1, %c0_2] : memref<256x128xbf16, #tpu.memory_space<vmem>>, vector<256x128xbf16>
    %cst = arith.constant dense<0.000000e+00> : vector<32x128xf32>
    %2 = tpu.matmul %0, %1, %cst {dimension_numbers = #tpu.dot_dimension_numbers<[1], [0], [0], [1], [0, 0, 1, 1], [], []>} : vector<32x256xbf16>, vector<256x128xbf16>, vector<32x128xf32> -> vector<32x128xf32>
    %3 = vector.extract_strided_slice %2 {offsets = [0, 0], sizes = [32, 16], strides = [1, 1]} : vector<32x128xf32> to vector<32x16xf32>
    %c0_3 = arith.constant 0 : index
    %4 = memref.load %arg3[%c0_3] : memref<1xf32, #tpu.memory_space<smem>>
    %cst_4 = arith.constant 0.000000e+00 : f32
    %5 = vector.broadcast %cst_4 : f32 to vector<32x16xf32>
    %6 = arith.cmpf oge, %3, %5 : vector<32x16xf32>
    %7 = vector.broadcast %4 : f32 to vector<32x16xf32>
    %8 = arith.mulf %7, %3 : vector<32x16xf32>
    %9 = arith.select %6, %3, %8 : vector<32x16xi1>, vector<32x16xf32>
    %c0_5 = arith.constant 0 : index
    %c0_6 = arith.constant 0 : index
    %10 = vector.load %arg4[%c0_5, %c0_6] : memref<32x16xbf16, #tpu.memory_space<vmem>>, vector<32x16xbf16>
    %11 = arith.extf %10 : vector<32x16xbf16> to vector<32x16xf32>
    %12 = arith.addf %9, %11 : vector<32x16xf32>
    %13 = arith.truncf %12 : vector<32x16xf32> to vector<32x16xbf16>
    %c0_7 = arith.constant 0 : index
    %c0_8 = arith.constant 0 : index
    %14 = vector.load %arg5[%c0_7, %c0_8] : memref<32x16xbf16, #tpu.memory_space<vmem>>, vector<32x16xbf16>
    tpu.vector_store %arg5[%c0_7, %c0_8], %13 {strides = array<i32>} : memref<32x16xbf16, #tpu.memory_space<vmem>>, vector<32x16xbf16>,
    return
  }
  func.func @transform_0(%arg0: i32) -> (i32, i32) {
    %c0_i32 = arith.constant 0 : i32
    %c0_i32_0 = arith.constant 0 : i32
    return %arg0, %c0_i32 : i32, i32
  }
  func.func @transform_1(%arg0: i32) -> (i32, i32) {
    %c0_i32 = arith.constant 0 : i32
    %c0_i32_0 = arith.constant 0 : i32
    %c0_i32_1 = arith.constant 0 : i32
    return %c0_i32, %c0_i32_0 : i32, i32
  }
  func.func @transform_2(%arg0: i32) -> i32 {
    %c0_i32 = arith.constant 0 : i32
    %c0_i32_0 = arith.constant 0 : i32
    return %c0_i32 : i32
  }
  func.func @transform_3(%arg0: i32) -> (i32, i32) {
    %c0_i32 = arith.constant 0 : i32
    %c0_i32_0 = arith.constant 0 : i32
    return %arg0, %c0_i32 : i32, i32
  }
  func.func @transform_4(%arg0: i32) -> (i32, i32) {
    %c0_i32 = arith.constant 0 : i32
    %c0_i32_0 = arith.constant 0 : i32
    return %arg0, %c0_i32 : i32, i32
  }
}

module attributes {stable_mosaic.version = 11 : i64} {
  func.func @kernel(%arg0: i32, %arg1: memref<32x128xbf16, #tpu.memory_space<vmem>>, %arg2: memref<128x128xbf16, #tpu.memory_space<vmem>>, %arg3: memref<32x32xbf16, #tpu.memory_space<vmem>>) attributes {dimension_semantics = [#tpu.dimension_semantics<parallel>], iteration_bounds = array<i64: 1>, scalar_prefetch = 0 : i64, scratch_operands = 0 : i64, tpu.core_type = #tpu.core_type<tc>, window_params = [{transform_indices = @transform_0, window_bounds = array<i64: 32, 128>}, {pipeline_mode = #tpu.pipeline_mode<synchronous>, transform_indices = @transform_1, window_bounds = array<i64: 128, 128>}, {transform_indices = @transform_2, window_bounds = array<i64: 32, 32>}]} {
    %c0 = arith.constant 0 : index
    %c0_0 = arith.constant 0 : index
    %0 = vector.load %arg1[%c0, %c0_0] : memref<32x128xbf16, #tpu.memory_space<vmem>>, vector<32x128xbf16>
    %c0_1 = arith.constant 0 : index
    %c0_2 = arith.constant 0 : index
    %1 = vector.load %arg2[%c0_1, %c0_2] : memref<128x128xbf16, #tpu.memory_space<vmem>>, vector<128x128xbf16>
    %cst = arith.constant dense<0.000000e+00> : vector<32x128xf32>
    %2 = tpu.matmul %0, %1, %cst {dimension_numbers = #tpu.dot_dimension_numbers<[1], [0], [0], [1], [0, 0, 1, 1], [], []>} : vector<32x128xbf16>, vector<128x128xbf16>, vector<32x128xf32> -> vector<32x128xf32>
    %3 = vector.extract_strided_slice %2 {offsets = [0, 0], sizes = [32, 32], strides = [1, 1]} : vector<32x128xf32> to vector<32x32xf32>
    %4 = arith.truncf %3 : vector<32x32xf32> to vector<32x32xbf16>
    %c0_3 = arith.constant 0 : index
    %c0_4 = arith.constant 0 : index
    %5 = vector.load %arg3[%c0_3, %c0_4] : memref<32x32xbf16, #tpu.memory_space<vmem>>, vector<32x32xbf16>
    tpu.vector_store %arg3[%c0_3, %c0_4], %4 {strides = array<i32>} : memref<32x32xbf16, #tpu.memory_space<vmem>>, vector<32x32xbf16>,
    return
  }
  func.func @transform_0(%arg0: i32) -> (i32, i32) {
    %c0_i32 = arith.constant 0 : i32
    %c0_i32_0 = arith.constant 0 : i32
    return %arg0, %c0_i32 : i32, i32
  }
  func.func @transform_1(%arg0: i32) -> (i32, i32) {
    %c0_i32 = arith.constant 0 : i32
    %c0_i32_0 = arith.constant 0 : i32
    %c0_i32_1 = arith.constant 0 : i32
    return %c0_i32, %c0_i32_0 : i32, i32
  }
  func.func @transform_2(%arg0: i32) -> (i32, i32) {
    %c0_i32 = arith.constant 0 : i32
    %c0_i32_0 = arith.constant 0 : i32
    return %arg0, %c0_i32 : i32, i32
  }
}

module attributes {stable_mosaic.version = 11 : i64} {
  func.func @kernel(%arg0: i32, %arg1: memref<64x128xbf16, #tpu.memory_space<vmem>>, %arg2: memref<64x128xbf16, #tpu.memory_space<vmem>>, %arg3: memref<128x128xbf16, #tpu.memory_space<vmem>>, %arg4: memref<128x128xbf16, #tpu.memory_space<vmem>>, %arg5: memref<64x8xbf16, #tpu.memory_space<vmem>>) attributes {dimension_semantics = [#tpu.dimension_semantics<parallel>], iteration_bounds = array<i64: 2>, scalar_prefetch = 0 : i64, scratch_operands = 0 : i64, tpu.core_type = #tpu.core_type<tc>, window_params = [{transform_indices = @transform_0, window_bounds = array<i64: 64, 128>}, {transform_indices = @transform_1, window_bounds = array<i64: 64, 128>}, {pipeline_mode = #tpu.pipeline_mode<synchronous>, transform_indices = @transform_2, window_bounds = array<i64: 128, 128>}, {pipeline_mode = #tpu.pipeline_mode<synchronous>, transform_indices = @transform_3, window_bounds = array<i64: 128, 128>}, {transform_indices = @transform_4, window_bounds = array<i64: 64, 8>}]} {
    %c0 = arith.constant 0 : index
    %c0_0 = arith.constant 0 : index
    %0 = vector.load %arg1[%c0, %c0_0] : memref<64x128xbf16, #tpu.memory_space<vmem>>, vector<64x128xbf16>
    %c0_1 = arith.constant 0 : index
    %c0_2 = arith.constant 0 : index
    %1 = vector.load %arg3[%c0_1, %c0_2] : memref<128x128xbf16, #tpu.memory_space<vmem>>, vector<128x128xbf16>
    %cst = arith.constant dense<0.000000e+00> : vector<64x128xf32>
    %2 = tpu.matmul %0, %1, %cst {dimension_numbers = #tpu.dot_dimension_numbers<[1], [0], [0], [1], [0, 0, 1, 1], [], []>} : vector<64x128xbf16>, vector<128x128xbf16>, vector<64x128xf32> -> vector<64x128xf32>
    %c0_3 = arith.constant 0 : index
    %c0_4 = arith.constant 0 : index
    %3 = vector.load %arg2[%c0_3, %c0_4] : memref<64x128xbf16, #tpu.memory_space<vmem>>, vector<64x128xbf16>
    %c0_5 = arith.constant 0 : index
    %c0_6 = arith.constant 0 : index
    %4 = vector.load %arg4[%c0_5, %c0_6] : memref<128x128xbf16, #tpu.memory_space<vmem>>, vector<128x128xbf16>
    %cst_7 = arith.constant dense<0.000000e+00> : vector<64x128xf32>
    %5 = tpu.matmul %3, %4, %cst_7 {dimension_numbers = #tpu.dot_dimension_numbers<[1], [0], [0], [1], [0, 0, 1, 1], [], []>} : vector<64x128xbf16>, vector<128x128xbf16>, vector<64x128xf32> -> vector<64x128xf32>
    %6 = arith.addf %2, %5 : vector<64x128xf32>
    %7 = vector.extract_strided_slice %6 {offsets = [0, 0], sizes = [64, 8], strides = [1, 1]} : vector<64x128xf32> to vector<64x8xf32>
    %8 = arith.truncf %7 : vector<64x8xf32> to vector<64x8xbf16>
    %c0_8 = arith.constant 0 : index
    %c0_9 = arith.constant 0 : index
    %9 = vector.load %arg5[%c0_8, %c0_9] : memref<64x8xbf16, #tpu.memory_space<vmem>>, vector<64x8xbf16>
    tpu.vector_store %arg5[%c0_8, %c0_9], %8 {strides = array<i32>} : memref<64x8xbf16, #tpu.memory_space<vmem>>, vector<64x8xbf16>,
    return
  }
  func.func @transform_0(%arg0: i32) -> (i32, i32) {
    %c0_i32 = arith.constant 0 : i32
    %c0_i32_0 = arith.constant 0 : i32
    return %arg0, %c0_i32 : i32, i32
  }
  func.func @transform_1(%arg0: i32) -> (i32, i32) {
    %c0_i32 = arith.constant 0 : i32
    %c0_i32_0 = arith.constant 0 : i32
    return %arg0, %c0_i32 : i32, i32
  }
  func.func @transform_2(%arg0: i32) -> (i32, i32) {
    %c0_i32 = arith.constant 0 : i32
    %c0_i32_0 = arith.constant 0 : i32
    %c0_i32_1 = arith.constant 0 : i32
    return %c0_i32, %c0_i32_0 : i32, i32
  }
  func.func @transform_3(%arg0: i32) -> (i32, i32) {
    %c0_i32 = arith.constant 0 : i32
    %c0_i32_0 = arith.constant 0 : i32
    %c0_i32_1 = arith.constant 0 : i32
    return %c0_i32, %c0_i32_0 : i32, i32
  }
  func.func @transform_4(%arg0: i32) -> (i32, i32) {
    %c0_i32 = arith.constant 0 : i32
    %c0_i32_0 = arith.constant 0 : i32
    return %arg0, %c0_i32 : i32, i32
  }
}

module attributes {stable_mosaic.version = 11 : i64} {
  func.func @kernel(%arg0: i32, %arg1: memref<64x128xbf16, #tpu.memory_space<vmem>>, %arg2: memref<128x128xbf16, #tpu.memory_space<vmem>>, %arg3: memref<64x16xbf16, #tpu.memory_space<vmem>>) attributes {dimension_semantics = [#tpu.dimension_semantics<parallel>], iteration_bounds = array<i64: 2>, scalar_prefetch = 0 : i64, scratch_operands = 0 : i64, tpu.core_type = #tpu.core_type<tc>, window_params = [{transform_indices = @transform_0, window_bounds = array<i64: 64, 128>}, {pipeline_mode = #tpu.pipeline_mode<synchronous>, transform_indices = @transform_1, window_bounds = array<i64: 128, 128>}, {transform_indices = @transform_2, window_bounds = array<i64: 64, 16>}]} {
    %c0 = arith.constant 0 : index
    %c0_0 = arith.constant 0 : index
    %0 = vector.load %arg1[%c0, %c0_0] : memref<64x128xbf16, #tpu.memory_space<vmem>>, vector<64x128xbf16>
    %c0_1 = arith.constant 0 : index
    %c0_2 = arith.constant 0 : index
    %1 = vector.load %arg2[%c0_1, %c0_2] : memref<128x128xbf16, #tpu.memory_space<vmem>>, vector<128x128xbf16>
    %cst = arith.constant dense<0.000000e+00> : vector<64x128xf32>
    %2 = tpu.matmul %0, %1, %cst {dimension_numbers = #tpu.dot_dimension_numbers<[1], [0], [0], [1], [0, 0, 1, 1], [], []>} : vector<64x128xbf16>, vector<128x128xbf16>, vector<64x128xf32> -> vector<64x128xf32>
    %3 = vector.extract_strided_slice %2 {offsets = [0, 0], sizes = [64, 16], strides = [1, 1]} : vector<64x128xf32> to vector<64x16xf32>
    %4 = arith.truncf %3 : vector<64x16xf32> to vector<64x16xbf16>
    %c0_3 = arith.constant 0 : index
    %c0_4 = arith.constant 0 : index
    %5 = vector.load %arg3[%c0_3, %c0_4] : memref<64x16xbf16, #tpu.memory_space<vmem>>, vector<64x16xbf16>
    tpu.vector_store %arg3[%c0_3, %c0_4], %4 {strides = array<i32>} : memref<64x16xbf16, #tpu.memory_space<vmem>>, vector<64x16xbf16>,
    return
  }
  func.func @transform_0(%arg0: i32) -> (i32, i32) {
    %c0_i32 = arith.constant 0 : i32
    %c0_i32_0 = arith.constant 0 : i32
    return %arg0, %c0_i32 : i32, i32
  }
  func.func @transform_1(%arg0: i32) -> (i32, i32) {
    %c0_i32 = arith.constant 0 : i32
    %c0_i32_0 = arith.constant 0 : i32
    %c0_i32_1 = arith.constant 0 : i32
    return %c0_i32, %c0_i32_0 : i32, i32
  }
  func.func @transform_2(%arg0: i32) -> (i32, i32) {
    %c0_i32 = arith.constant 0 : i32
    %c0_i32_0 = arith.constant 0 : i32
    return %arg0, %c0_i32 : i32, i32
  }
}

module attributes {stable_mosaic.version = 11 : i64} {
  func.func @kernel(%arg0: i32, %arg1: memref<256x128xbf16, #tpu.memory_space<vmem>>, %arg2: memref<256x128xbf16, #tpu.memory_space<vmem>>, %arg3: memref<128x128xbf16, #tpu.memory_space<vmem>>, %arg4: memref<128x128xbf16, #tpu.memory_space<vmem>>, %arg5: memref<256x4xbf16, #tpu.memory_space<vmem>>) attributes {dimension_semantics = [#tpu.dimension_semantics<parallel>], iteration_bounds = array<i64: 2>, scalar_prefetch = 0 : i64, scratch_operands = 0 : i64, tpu.core_type = #tpu.core_type<tc>, window_params = [{transform_indices = @transform_0, window_bounds = array<i64: 256, 128>}, {transform_indices = @transform_1, window_bounds = array<i64: 256, 128>}, {pipeline_mode = #tpu.pipeline_mode<synchronous>, transform_indices = @transform_2, window_bounds = array<i64: 128, 128>}, {pipeline_mode = #tpu.pipeline_mode<synchronous>, transform_indices = @transform_3, window_bounds = array<i64: 128, 128>}, {transform_indices = @transform_4, window_bounds = array<i64: 256, 4>}]} {
    %c0 = arith.constant 0 : index
    %c0_0 = arith.constant 0 : index
    %0 = vector.load %arg1[%c0, %c0_0] : memref<256x128xbf16, #tpu.memory_space<vmem>>, vector<256x128xbf16>
    %c0_1 = arith.constant 0 : index
    %c0_2 = arith.constant 0 : index
    %1 = vector.load %arg3[%c0_1, %c0_2] : memref<128x128xbf16, #tpu.memory_space<vmem>>, vector<128x128xbf16>
    %cst = arith.constant dense<0.000000e+00> : vector<256x128xf32>
    %2 = tpu.matmul %0, %1, %cst {dimension_numbers = #tpu.dot_dimension_numbers<[1], [0], [0], [1], [0, 0, 1, 1], [], []>} : vector<256x128xbf16>, vector<128x128xbf16>, vector<256x128xf32> -> vector<256x128xf32>
    %c0_3 = arith.constant 0 : index
    %c0_4 = arith.constant 0 : index
    %3 = vector.load %arg2[%c0_3, %c0_4] : memref<256x128xbf16, #tpu.memory_space<vmem>>, vector<256x128xbf16>
    %c0_5 = arith.constant 0 : index
    %c0_6 = arith.constant 0 : index
    %4 = vector.load %arg4[%c0_5, %c0_6] : memref<128x128xbf16, #tpu.memory_space<vmem>>, vector<128x128xbf16>
    %cst_7 = arith.constant dense<0.000000e+00> : vector<256x128xf32>
    %5 = tpu.matmul %3, %4, %cst_7 {dimension_numbers = #tpu.dot_dimension_numbers<[1], [0], [0], [1], [0, 0, 1, 1], [], []>} : vector<256x128xbf16>, vector<128x128xbf16>, vector<256x128xf32> -> vector<256x128xf32>
    %6 = arith.addf %2, %5 : vector<256x128xf32>
    %7 = vector.extract_strided_slice %6 {offsets = [0, 0], sizes = [256, 4], strides = [1, 1]} : vector<256x128xf32> to vector<256x4xf32>
    %8 = arith.truncf %7 : vector<256x4xf32> to vector<256x4xbf16>
    %c0_8 = arith.constant 0 : index
    %c0_9 = arith.constant 0 : index
    %9 = vector.load %arg5[%c0_8, %c0_9] : memref<256x4xbf16, #tpu.memory_space<vmem>>, vector<256x4xbf16>
    tpu.vector_store %arg5[%c0_8, %c0_9], %8 {strides = array<i32>} : memref<256x4xbf16, #tpu.memory_space<vmem>>, vector<256x4xbf16>,
    return
  }
  func.func @transform_0(%arg0: i32) -> (i32, i32) {
    %c0_i32 = arith.constant 0 : i32
    %c0_i32_0 = arith.constant 0 : i32
    return %arg0, %c0_i32 : i32, i32
  }
  func.func @transform_1(%arg0: i32) -> (i32, i32) {
    %c0_i32 = arith.constant 0 : i32
    %c0_i32_0 = arith.constant 0 : i32
    return %arg0, %c0_i32 : i32, i32
  }
  func.func @transform_2(%arg0: i32) -> (i32, i32) {
    %c0_i32 = arith.constant 0 : i32
    %c0_i32_0 = arith.constant 0 : i32
    %c0_i32_1 = arith.constant 0 : i32
    return %c0_i32, %c0_i32_0 : i32, i32
  }
  func.func @transform_3(%arg0: i32) -> (i32, i32) {
    %c0_i32 = arith.constant 0 : i32
    %c0_i32_0 = arith.constant 0 : i32
    %c0_i32_1 = arith.constant 0 : i32
    return %c0_i32, %c0_i32_0 : i32, i32
  }
  func.func @transform_4(%arg0: i32) -> (i32, i32) {
    %c0_i32 = arith.constant 0 : i32
    %c0_i32_0 = arith.constant 0 : i32
    return %arg0, %c0_i32 : i32, i32
  }
}

module attributes {stable_mosaic.version = 11 : i64} {
  func.func @kernel(%arg0: i32, %arg1: memref<256x128xbf16, #tpu.memory_space<vmem>>, %arg2: memref<128x128xbf16, #tpu.memory_space<vmem>>, %arg3: memref<256x4xbf16, #tpu.memory_space<vmem>>, %arg4: memref<256x4xf32, #tpu.memory_space<vmem>>) attributes {dimension_semantics = [#tpu.dimension_semantics<parallel>], iteration_bounds = array<i64: 2>, scalar_prefetch = 0 : i64, scratch_operands = 0 : i64, tpu.core_type = #tpu.core_type<tc>, window_params = [{transform_indices = @transform_0, window_bounds = array<i64: 256, 128>}, {pipeline_mode = #tpu.pipeline_mode<synchronous>, transform_indices = @transform_1, window_bounds = array<i64: 128, 128>}, {transform_indices = @transform_2, window_bounds = array<i64: 256, 4>}, {transform_indices = @transform_3, window_bounds = array<i64: 256, 4>}]} {
    %c0 = arith.constant 0 : index
    %c0_0 = arith.constant 0 : index
    %0 = vector.load %arg1[%c0, %c0_0] : memref<256x128xbf16, #tpu.memory_space<vmem>>, vector<256x128xbf16>
    %c0_1 = arith.constant 0 : index
    %c0_2 = arith.constant 0 : index
    %1 = vector.load %arg2[%c0_1, %c0_2] : memref<128x128xbf16, #tpu.memory_space<vmem>>, vector<128x128xbf16>
    %cst = arith.constant dense<0.000000e+00> : vector<256x128xf32>
    %2 = tpu.matmul %0, %1, %cst {dimension_numbers = #tpu.dot_dimension_numbers<[1], [0], [0], [1], [0, 0, 1, 1], [], []>} : vector<256x128xbf16>, vector<128x128xbf16>, vector<256x128xf32> -> vector<256x128xf32>
    %3 = vector.extract_strided_slice %2 {offsets = [0, 0], sizes = [256, 4], strides = [1, 1]} : vector<256x128xf32> to vector<256x4xf32>
    %c0_3 = arith.constant 0 : index
    %c0_4 = arith.constant 0 : index
    %4 = vector.load %arg3[%c0_3, %c0_4] : memref<256x4xbf16, #tpu.memory_space<vmem>>, vector<256x4xbf16>
    %5 = arith.extf %4 : vector<256x4xbf16> to vector<256x4xf32>
    %6 = arith.addf %3, %5 : vector<256x4xf32>
    %c0_5 = arith.constant 0 : index
    %c0_6 = arith.constant 0 : index
    %7 = vector.load %arg4[%c0_5, %c0_6] : memref<256x4xf32, #tpu.memory_space<vmem>>, vector<256x4xf32>
    tpu.vector_store %arg4[%c0_5, %c0_6], %6 {strides = array<i32>} : memref<256x4xf32, #tpu.memory_space<vmem>>, vector<256x4xf32>,
    return
  }
  func.func @transform_0(%arg0: i32) -> (i32, i32) {
    %c0_i32 = arith.constant 0 : i32
    %c0_i32_0 = arith.constant 0 : i32
    return %arg0, %c0_i32 : i32, i32
  }
  func.func @transform_1(%arg0: i32) -> (i32, i32) {
    %c0_i32 = arith.constant 0 : i32
    %c0_i32_0 = arith.constant 0 : i32
    %c0_i32_1 = arith.constant 0 : i32
    return %c0_i32, %c0_i32_0 : i32, i32
  }
  func.func @transform_2(%arg0: i32) -> (i32, i32) {
    %c0_i32 = arith.constant 0 : i32
    %c0_i32_0 = arith.constant 0 : i32
    return %arg0, %c0_i32 : i32, i32
  }
  func.func @transform_3(%arg0: i32) -> (i32, i32) {
    %c0_i32 = arith.constant 0 : i32
    %c0_i32_0 = arith.constant 0 : i32
    return %arg0, %c0_i32 : i32, i32
  }
}

</mosaic_0001>

<llo_original>
// kernel: _lambda_.14
$region0: #{_lambda_.14}
  #allocation0 [shape = 'u32[]', space=smem, size = 0x4, offset = 0x4, fixed_abs, tag = 'smem constant byte address 0x4 - core index']
  #allocation1 [shape = 'u32[144,128]{1,0:T(1,128)}', space=vmem, size = 0x12000, scoped, tag = 'internal scratch']
  #allocation2 [shape = 'f32[1]{0:T(128)S(6)}', space=smem, size = 0x200, scoped, tag = 'scoped memory for _lambda_.14']
  %s0 = inlined_call_operand.vmem [shape: bf16[512,128], index: 0, kind: input, shape index: {}]
  %s1 = inlined_call_operand.vmem [shape: bf16[128,128], index: 1, kind: input, shape index: {}]
  %s2 = inlined_call_operand.<no memory space> [shape: f32[1], index: 2, kind: input, shape index: {}]
  %s3 = inlined_call_operand.vmem [shape: bf16[512,4], index: 3, kind: output, shape index: {}]
  %s4 = sld [smem:[#allocation0]]
  $region45: #{_lambda_.14} parent=0
    _
  %s6 = ssub.s32 1, %s4
  %s7 = scalar_select 0, %s6, %s4
  %8 = sst [smem:[#allocation2]] %s2
  loop: start=0, step=1, limit=4
  $region2: #{_lambda_.14} parent=0 // loop_pre_header
    _
  $region3: #{_lambda_.14} parent=0 // loop_header
    %s10 = sphi 0, %s14
    %p11 = scmp.ge.s32.totalorder %s10, 4
    %s20 = sphi 0, %s22
    %s23 = sphi 0, %s20
    %s24 = sphi 0, %s23
    %s40 = sphi 0, %s24
    %s44 = sphi 0, %s44
    %s46 = sphi 0, %s44
    %s47 = sphi 0, %s46
    %s61 = sphi 0, %s47
    %s65 = sphi 0, %s65
    %s67 = sphi 0, %s65
    %s68 = sphi 0, %s67
    %s82 = sphi 0, %s68
    %s88 = sphi 0, %s90
    %s91 = sphi 0, %s88
    %s92 = sphi 0, %s91
    %s108 = sphi 0, %s92
  $region4: #{_lambda_.14} parent=0 // loop_header_branch
    %13 = sbr.rel (%p11) target = $region8
  $region5: #{_lambda_.14} parent=0 // loop_body
    %s15 = ssub.s32 %s10, 1
    %s16 = ssub.s32 %s10, 2
    %s17 = sadd.s32 %s10, 1
    %s18 = ssub.s32 %s10, %s17
    %p19 = scmp.eq.s32.totalorder %s18, 0
    %s21 = sadd.s32 %s20, 1
    %s22 = scalar_select %p19, %s20, %s21
    %p25 = pneg %p19
    %p26 = scmp.eq.s32.totalorder %s10, 1
    %p27 = por %p25, %p26
    %p28 = scmp.ne.s32.totalorder %s20, %s23
    %p29 = scmp.eq.s32.totalorder %s10, 0
    %p30 = por %p28, %p29
    %p31 = scmp.ne.s32.totalorder %s20, %s23
    %p32 = scmp.eq.s32.totalorder %s15, 1
    %p33 = por %p31, %p32
    %p34 = scmp.ne.s32.totalorder %s23, %s24
    %p35 = scmp.eq.s32.totalorder %s15, 0
    %p36 = por %p34, %p35
    %p37 = scmp.ne.s32.totalorder %s23, %s24
    %p38 = scmp.eq.s32.totalorder %s16, 1
    %p39 = por %p37, %p38
    %p41 = scmp.ne.s32.totalorder %s24, %s40
    %p42 = scmp.eq.s32.totalorder %s16, 0
    %p43 = por %p41, %p42
    %s45 = sadd.s32 %s44, 1
    %p48 = scmp.eq.s32.totalorder %s10, 1
    %p49 = scmp.ne.s32.totalorder %s44, %s46
    %p50 = scmp.eq.s32.totalorder %s10, 0
    %p51 = por %p49, %p50
    %p52 = scmp.ne.s32.totalorder %s44, %s46
    %p53 = scmp.eq.s32.totalorder %s15, 1
    %p54 = por %p52, %p53
    %p55 = scmp.ne.s32.totalorder %s46, %s47
    %p56 = scmp.eq.s32.totalorder %s15, 0
    %p57 = por %p55, %p56
    %p58 = scmp.ne.s32.totalorder %s46, %s47
    %p59 = scmp.eq.s32.totalorder %s16, 1
    %p60 = por %p58, %p59
    %p62 = scmp.ne.s32.totalorder %s47, %s61
    %p63 = scmp.eq.s32.totalorder %s16, 0
    %p64 = por %p62, %p63
    %s66 = sadd.s32 %s65, 1
    %p69 = scmp.eq.s32.totalorder %s10, 1
    %p70 = scmp.ne.s32.totalorder %s65, %s67
    %p71 = scmp.eq.s32.totalorder %s10, 0
    %p72 = por %p70, %p71
    %p73 = scmp.ne.s32.totalorder %s65, %s67
    %p74 = scmp.eq.s32.totalorder %s15, 1
    %p75 = por %p73, %p74
    %p76 = scmp.ne.s32.totalorder %s67, %s68
    %p77 = scmp.eq.s32.totalorder %s15, 0
    %p78 = por %p76, %p77
    %p79 = scmp.ne.s32.totalorder %s67, %s68
    %p80 = scmp.eq.s32.totalorder %s16, 1
    %p81 = por %p79, %p80
    %p83 = scmp.ne.s32.totalorder %s68, %s82
    %p84 = scmp.eq.s32.totalorder %s16, 0
    %p85 = por %p83, %p84
    %s86 = ssub.s32 %s10, %s17
    %p87 = scmp.eq.s32.totalorder %s86, 0
    %s89 = sadd.s32 %s88, 1
    %s90 = scalar_select %p87, %s88, %s89
    %p93 = pneg %p87
    %p94 = scmp.eq.s32.totalorder %s10, 1
    %p95 = por %p93, %p94
    %p96 = scmp.ne.s32.totalorder %s88, %s91
    %p97 = scmp.eq.s32.totalorder %s10, 0
    %p98 = por %p96, %p97
    %p99 = scmp.ne.s32.totalorder %s88, %s91
    %p100 = scmp.eq.s32.totalorder %s15, 1
    %p101 = por %p99, %p100
    %p102 = scmp.ne.s32.totalorder %s91, %s92
    %p103 = scmp.eq.s32.totalorder %s15, 0
    %p104 = por %p102, %p103
    %p105 = scmp.ne.s32.totalorder %s91, %s92
    %p106 = scmp.eq.s32.totalorder %s16, 1
    %p107 = por %p105, %p106
    %p109 = scmp.ne.s32.totalorder %s92, %s108
    %p110 = scmp.eq.s32.totalorder %s16, 0
    %p111 = por %p109, %p110
    %p112 = scmp.le.s32.totalorder 1, %s10
    %p113 = scmp.lt.s32.totalorder %s10, 3
    %p114 = pnand %p112, %p113
    %p115 = pneg %p114
    // Predicated region
    $region9: #{_lambda_.14} parent=5 // pred_check
      _
    $region10: #{_lambda_.14} parent=5 // pred_check_branch
      %117 = sbr.rel (%p114) target = $region12
    $region11: #{_lambda_.14} parent=5 // pred_region
      %s118 = ssub.s32 %s10, 1
      // Predicated region
      $region13: #{_lambda_.14} parent=11 // pred_check
        %p119 = pneg %p57
      $region14: #{_lambda_.14} parent=11 // pred_check_branch
        %121 = sbr.rel (%p119) target = $region16
      $region15: #{_lambda_.14} parent=11 // pred_region
        _
      $region16: #{_lambda_.14} parent=11 // pred_fallthru
        _
      // Predicated region
      $region17: #{_lambda_.14} parent=11 // pred_check
        %p122 = pneg %p78
      $region18: #{_lambda_.14} parent=11 // pred_check_branch
        %124 = sbr.rel (%p122) target = $region20
      $region19: #{_lambda_.14} parent=11 // pred_region
        _
      $region20: #{_lambda_.14} parent=11 // pred_fallthru
        _
    $region12: #{_lambda_.14} parent=5 // pred_fallthru
      _
    %p125 = scmp.lt.s32.totalorder %s10, 2
    // Predicated region
    $region21: #{_lambda_.14} parent=5 // pred_check
      %p126 = pneg %p125
    $region22: #{_lambda_.14} parent=5 // pred_check_branch
      %128 = sbr.rel (%p126) target = $region24
    $region23: #{_lambda_.14} parent=5 // pred_region
      // Predicated region
      $region25: #{_lambda_.14} parent=23 // pred_check
        %p129 = pneg %p30
      $region26: #{_lambda_.14} parent=23 // pred_check_branch
        %131 = sbr.rel (%p129) target = $region28
      $region27: #{_lambda_.14} parent=23 // pred_region
        %s132 = smul.u32 32, %s10
        %p133 = scmp.lt.s32.totalorder %s132, 63
        %s134 = scalar_select %p133, %s132, 63
        %s135 = smul.addr %s134, 4
        %s136 = scalar_lea.vmem %s0, %s135
        %s137 = smul.u32 32, %s10
      $region28: #{_lambda_.14} parent=23 // pred_fallthru
        _
    $region24: #{_lambda_.14} parent=5 // pred_fallthru
      _
    %p138 = scmp.le.s32.totalorder 1, %s10
    %p139 = scmp.lt.s32.totalorder %s10, 3
    %p140 = pnand %p138, %p139
    %p141 = pneg %p140
    // Predicated region
    $region29: #{_lambda_.14} parent=5 // pred_check
      _
    $region30: #{_lambda_.14} parent=5 // pred_check_branch
      %143 = sbr.rel (%p140) target = $region32
    $region31: #{_lambda_.14} parent=5 // pred_region
      %s144 = ssub.s32 %s10, 1
      %s145 = smul.u32 32, %s15
      %p146 = scmp.lt.s32.totalorder %s145, 63
      %s147 = scalar_select %p146, %s145, 63
      %s148 = smul.addr %s147, 4
      %s149 = scalar_lea.vmem %s0, %s148
      %p150 = pneg %p36
      %p151 = pneg %p33
      %p152 = pneg %p57
      %p153 = pneg %p54
      %p154 = pneg %p78
      %p155 = pneg %p75
      %p156 = pneg %p104
      %p157 = pneg %p101
      %s158 = smul.u32 32, %s15
      %p159 = scmp.lt.s32.totalorder %s158, 63
      %s160 = scalar_select %p159, %s158, 63
      %s161 = smul.addr %s160, 4
      %s162 = scalar_lea.vmem %s3, %s161
      %s163 = smul.u32 32, %s15
      %p164 = scmp.lt.s32.totalorder %s163, 63
      %s165 = scalar_select %p164, %s163, 63
      %s166 = smul.addr %s165, 4
      %s167 = scalar_lea.vmem %s0, %s166
      %s168 = smul.u32 32, %s15
      %s169 = smul.u32 32, %s15
      %p170 = scmp.lt.s32.totalorder %s169, 63
      %s171 = scalar_select %p170, %s169, 63
      %s172 = smul.addr %s171, 4
      %s173 = scalar_lea.vmem %s3, %s172
      %s174 = smul.u32 32, %s15
      %v176 = vld [vmem:[%s167] sm:$0xf]
      %v177 = vld [vmem:[%s167 + $0x4] sm:$0xf]
      %v178 = vld [vmem:[%s167 + $0x8] sm:$0xf]
      %v179 = vld [vmem:[%s167 + $0xc] sm:$0xf]
      %v180 = vld [vmem:[%s167 + $0x10] sm:$0xf]
      %v181 = vld [vmem:[%s167 + $0x14] sm:$0xf]
      %v182 = vld [vmem:[%s167 + $0x18] sm:$0xf]
      %v183 = vld [vmem:[%s167 + $0x1c] sm:$0xf]
      %v184 = vld [vmem:[%s167 + $0x20] sm:$0xf]
      %v185 = vld [vmem:[%s167 + $0x24] sm:$0xf]
      %v186 = vld [vmem:[%s167 + $0x28] sm:$0xf]
      %v187 = vld [vmem:[%s167 + $0x2c] sm:$0xf]
      %v188 = vld [vmem:[%s167 + $0x30] sm:$0xf]
      %v189 = vld [vmem:[%s167 + $0x34] sm:$0xf]
      %v190 = vld [vmem:[%s167 + $0x38] sm:$0xf]
      %v191 = vld [vmem:[%s167 + $0x3c] sm:$0xf]
      %v192 = vld [vmem:[%s167 + $0x40] sm:$0xf]
      %v193 = vld [vmem:[%s167 + $0x44] sm:$0xf]
      %v194 = vld [vmem:[%s167 + $0x48] sm:$0xf]
      %v195 = vld [vmem:[%s167 + $0x4c] sm:$0xf]
      %v196 = vld [vmem:[%s167 + $0x50] sm:$0xf]
      %v197 = vld [vmem:[%s167 + $0x54] sm:$0xf]
      %v198 = vld [vmem:[%s167 + $0x58] sm:$0xf]
      %v199 = vld [vmem:[%s167 + $0x5c] sm:$0xf]
      %v200 = vld [vmem:[%s167 + $0x60] sm:$0xf]
      %v201 = vld [vmem:[%s167 + $0x64] sm:$0xf]
      %v202 = vld [vmem:[%s167 + $0x68] sm:$0xf]
      %v203 = vld [vmem:[%s167 + $0x6c] sm:$0xf]
      %v204 = vld [vmem:[%s167 + $0x70] sm:$0xf]
      %v205 = vld [vmem:[%s167 + $0x74] sm:$0xf]
      %v206 = vld [vmem:[%s167 + $0x78] sm:$0xf]
      %v207 = vld [vmem:[%s167 + $0x7c] sm:$0xf]
      %v208 = vld [vmem:[%s1] sm:$0xf]
      %v209 = vld [vmem:[%s1 + $0x4] sm:$0xf]
      %v210 = vld [vmem:[%s1 + $0x8] sm:$0xf]
      %v211 = vld [vmem:[%s1 + $0xc] sm:$0xf]
      %v212 = vld [vmem:[%s1 + $0x10] sm:$0xf]
      %v213 = vld [vmem:[%s1 + $0x14] sm:$0xf]
      %v214 = vld [vmem:[%s1 + $0x18] sm:$0xf]
      %v215 = vld [vmem:[%s1 + $0x1c] sm:$0xf]
      %v216 = vld [vmem:[%s1 + $0x20] sm:$0xf]
      %v217 = vld [vmem:[%s1 + $0x24] sm:$0xf]
      %v218 = vld [vmem:[%s1 + $0x28] sm:$0xf]
      %v219 = vld [vmem:[%s1 + $0x2c] sm:$0xf]
      %v220 = vld [vmem:[%s1 + $0x30] sm:$0xf]
      %v221 = vld [vmem:[%s1 + $0x34] sm:$0xf]
      %v222 = vld [vmem:[%s1 + $0x38] sm:$0xf]
      %v223 = vld [vmem:[%s1 + $0x3c] sm:$0xf]
      %v256 = vunpack.c.l.b16 %v176
      %v257 = vunpack.c.l.b16 %v177
      %v258 = vunpack.c.l.b16 %v178
      %v259 = vunpack.c.l.b16 %v179
      %v260 = vunpack.c.l.b16 %v180
      %v261 = vunpack.c.l.b16 %v181
      %v262 = vunpack.c.l.b16 %v182
      %v263 = vunpack.c.l.b16 %v183
      %v264 = vunpack.c.l.b16 %v184
      %v265 = vunpack.c.l.b16 %v185
      %v266 = vunpack.c.l.b16 %v186
      %v267 = vunpack.c.l.b16 %v187
      %v268 = vunpack.c.l.b16 %v188
      %v269 = vunpack.c.l.b16 %v189
      %v270 = vunpack.c.l.b16 %v190
      %v271 = vunpack.c.l.b16 %v191
      %v272 = vunpack.c.l.b16 %v192
      %v273 = vunpack.c.l.b16 %v193
      %v274 = vunpack.c.l.b16 %v194
      %v275 = vunpack.c.l.b16 %v195
      %v276 = vunpack.c.l.b16 %v196
      %v277 = vunpack.c.l.b16 %v197
      %v278 = vunpack.c.l.b16 %v198
      %v279 = vunpack.c.l.b16 %v199
      %v280 = vunpack.c.l.b16 %v200
      %v281 = vunpack.c.l.b16 %v201
      %v282 = vunpack.c.l.b16 %v202
      %v283 = vunpack.c.l.b16 %v203
      %v284 = vunpack.c.l.b16 %v204
      %v285 = vunpack.c.l.b16 %v205
      %v286 = vunpack.c.l.b16 %v206
      %v287 = vunpack.c.l.b16 %v207
      %v288 = vpack.c.b16 %v257, %v256
      %v289 = vpack.c.b16 %v259, %v258
      %v290 = vpack.c.b16 %v261, %v260
      %v291 = vpack.c.b16 %v263, %v262
      %v292 = vpack.c.b16 %v265, %v264
      %v293 = vpack.c.b16 %v267, %v266
      %v294 = vpack.c.b16 %v269, %v268
      %v295 = vpack.c.b16 %v271, %v270
      %v296 = vpack.c.b16 %v273, %v272
      %v297 = vpack.c.b16 %v275, %v274
      %v298 = vpack.c.b16 %v277, %v276
      %v299 = vpack.c.b16 %v279, %v278
      %v300 = vpack.c.b16 %v281, %v280
      %v301 = vpack.c.b16 %v283, %v282
      %v302 = vpack.c.b16 %v285, %v284
      %v303 = vpack.c.b16 %v287, %v286
      %v336 = vunpack.c.l.b16 %v208
      %v337 = vunpack.c.l.b16 %v209
      %v338 = vunpack.c.l.b16 %v210
      %v339 = vunpack.c.l.b16 %v211
      %v340 = vunpack.c.l.b16 %v212
      %v341 = vunpack.c.l.b16 %v213
      %v342 = vunpack.c.l.b16 %v214
      %v343 = vunpack.c.l.b16 %v215
      %v344 = vunpack.c.l.b16 %v216
      %v345 = vunpack.c.l.b16 %v217
      %v346 = vunpack.c.l.b16 %v218
      %v347 = vunpack.c.l.b16 %v219
      %v348 = vunpack.c.l.b16 %v220
      %v349 = vunpack.c.l.b16 %v221
      %v350 = vunpack.c.l.b16 %v222
      %v351 = vunpack.c.l.b16 %v223
      %v352 = vpack.c.b16 %v337, %v336
      %v353 = vpack.c.b16 %v339, %v338
      %v354 = vpack.c.b16 %v341, %v340
      %v355 = vpack.c.b16 %v343, %v342
      %v356 = vpack.c.b16 %v345, %v344
      %v357 = vpack.c.b16 %v347, %v346
      %v358 = vpack.c.b16 %v349, %v348
      %v359 = vpack.c.b16 %v351, %v350
      %368 = vmatprep.subr.bf16.mxu0 0
      %369 = vmatpush1.bf16.msra.mxu0 %v352
      %370 = vmatprep.subr.bf16.mxu0 0
      %371 = vmatpush1.bf16.msra.mxu0 %v353
      %372 = vmatprep.subr.bf16.mxu0 0
      %373 = vmatpush1.bf16.msra.mxu0 %v354
      %374 = vmatprep.subr.bf16.mxu0 0
      %375 = vmatpush1.bf16.msra.mxu0 %v355
      %376 = vmatprep.subr.bf16.mxu0 0
      %377 = vmatpush1.bf16.msra.mxu0 %v356
      %378 = vmatprep.subr.bf16.mxu0 0
      %379 = vmatpush1.bf16.msra.mxu0 %v357
      %380 = vmatprep.subr.bf16.mxu0 0
      %381 = vmatpush1.bf16.msra.mxu0 %v358
      %382 = vmatprep.subr.bf16.mxu0 0
      %383 = vmatpush1.bf16.msra.mxu0 %v359
      %384 = vmatprep.subr.bf16.mxu0 0
      %385 = vmatpush1.bf16.msra.mxu0 0
      %386 = vmatprep.subr.bf16.mxu0 0
      %387 = vmatpush1.bf16.msra.mxu0 0
      %388 = vmatprep.subr.bf16.mxu0 0
      %389 = vmatpush1.bf16.msra.mxu0 0
      %390 = vmatprep.subr.bf16.mxu0 0
      %391 = vmatpush1.bf16.msra.mxu0 0
      %392 = vmatprep.subr.bf16.mxu0 0
      %393 = vmatpush1.bf16.msra.mxu0 0
      %394 = vmatprep.subr.bf16.mxu0 0
      %395 = vmatpush1.bf16.msra.mxu0 0
      %396 = vmatprep.subr.bf16.mxu0 0
      %397 = vmatpush1.bf16.msra.mxu0 0
      %398 = vmatprep.subr.bf16.mxu0 0
      %399 = vmatpush1.bf16.msra.mxu0 0
      %400 = vmatprep.mubr.bf16.mxu0 0
      %401 = vmatmul.mubr.bf16.gmra.mrb[0].mxu0 %v288
      %v402 = vpop.f32.mrb[0].mxu0
      %v403 = vadd.f32 0.0, %v402
      %v404 = vpop.f32.mrb[0].mxu0
      %v405 = vpop.f32.mrb[0].mxu0
      %v406 = vadd.f32 0.0, %v405
      %v407 = vpop.f32.mrb[0].mxu0
      %408 = vmatprep.mubr.bf16.mxu0 0
      %409 = vmatmul.mubr.bf16.gmra.mrb[0].mxu0 %v289
      %v410 = vpop.f32.mrb[0].mxu0
      %v411 = vadd.f32 0.0, %v410
      %v412 = vpop.f32.mrb[0].mxu0
      %v413 = vpop.f32.mrb[0].mxu0
      %v414 = vadd.f32 0.0, %v413
      %v415 = vpop.f32.mrb[0].mxu0
      %416 = vmatprep.mubr.bf16.mxu0 0
      %417 = vmatmul.mubr.bf16.gmra.mrb[0].mxu0 %v290
      %v418 = vpop.f32.mrb[0].mxu0
      %v419 = vadd.f32 0.0, %v418
      %v420 = vpop.f32.mrb[0].mxu0
      %v421 = vpop.f32.mrb[0].mxu0
      %v422 = vadd.f32 0.0, %v421
      %v423 = vpop.f32.mrb[0].mxu0
      %424 = vmatprep.mubr.bf16.mxu0 0
      %425 = vmatmul.mubr.bf16.gmra.mrb[0].mxu0 %v291
      %v426 = vpop.f32.mrb[0].mxu0
      %v427 = vadd.f32 0.0, %v426
      %v428 = vpop.f32.mrb[0].mxu0
      %v429 = vpop.f32.mrb[0].mxu0
      %v430 = vadd.f32 0.0, %v429
      %v431 = vpop.f32.mrb[0].mxu0
      %432 = vmatprep.mubr.bf16.mxu0 0
      %433 = vmatmul.mubr.bf16.gmra.mrb[0].mxu0 %v292
      %v434 = vpop.f32.mrb[0].mxu0
      %v435 = vadd.f32 0.0, %v434
      %v436 = vpop.f32.mrb[0].mxu0
      %v437 = vpop.f32.mrb[0].mxu0
      %v438 = vadd.f32 0.0, %v437
      %v439 = vpop.f32.mrb[0].mxu0
      %440 = vmatprep.mubr.bf16.mxu0 0
      %441 = vmatmul.mubr.bf16.gmra.mrb[0].mxu0 %v293
      %v442 = vpop.f32.mrb[0].mxu0
      %v443 = vadd.f32 0.0, %v442
      %v444 = vpop.f32.mrb[0].mxu0
      %v445 = vpop.f32.mrb[0].mxu0
      %v446 = vadd.f32 0.0, %v445
      %v447 = vpop.f32.mrb[0].mxu0
      %448 = vmatprep.mubr.bf16.mxu0 0
      %449 = vmatmul.mubr.bf16.gmra.mrb[0].mxu0 %v294
      %v450 = vpop.f32.mrb[0].mxu0
      %v451 = vadd.f32 0.0, %v450
      %v452 = vpop.f32.mrb[0].mxu0
      %v453 = vpop.f32.mrb[0].mxu0
      %v454 = vadd.f32 0.0, %v453
      %v455 = vpop.f32.mrb[0].mxu0
      %456 = vmatprep.mubr.bf16.mxu0 0
      %457 = vmatmul.mubr.bf16.gmra.mrb[0].mxu0 %v295
      %v458 = vpop.f32.mrb[0].mxu0
      %v459 = vadd.f32 0.0, %v458
      %v460 = vpop.f32.mrb[0].mxu0
      %v461 = vpop.f32.mrb[0].mxu0
      %v462 = vadd.f32 0.0, %v461
      %v463 = vpop.f32.mrb[0].mxu0
      %464 = vmatprep.mubr.bf16.mxu0 0
      %465 = vmatmul.mubr.bf16.gmra.mrb[0].mxu0 %v296
      %v466 = vpop.f32.mrb[0].mxu0
      %v467 = vadd.f32 0.0, %v466
      %v468 = vpop.f32.mrb[0].mxu0
      %v469 = vpop.f32.mrb[0].mxu0
      %v470 = vadd.f32 0.0, %v469
      %v471 = vpop.f32.mrb[0].mxu0
      %472 = vmatprep.mubr.bf16.mxu0 0
      %473 = vmatmul.mubr.bf16.gmra.mrb[0].mxu0 %v297
      %v474 = vpop.f32.mrb[0].mxu0
      %v475 = vadd.f32 0.0, %v474
      %v476 = vpop.f32.mrb[0].mxu0
      %v477 = vpop.f32.mrb[0].mxu0
      %v478 = vadd.f32 0.0, %v477
      %v479 = vpop.f32.mrb[0].mxu0
      %480 = vmatprep.mubr.bf16.mxu0 0
      %481 = vmatmul.mubr.bf16.gmra.mrb[0].mxu0 %v298
      %v482 = vpop.f32.mrb[0].mxu0
      %v483 = vadd.f32 0.0, %v482
      %v484 = vpop.f32.mrb[0].mxu0
      %v485 = vpop.f32.mrb[0].mxu0
      %v486 = vadd.f32 0.0, %v485
      %v487 = vpop.f32.mrb[0].mxu0
      %488 = vmatprep.mubr.bf16.mxu0 0
      %489 = vmatmul.mubr.bf16.gmra.mrb[0].mxu0 %v299
      %v490 = vpop.f32.mrb[0].mxu0
      %v491 = vadd.f32 0.0, %v490
      %v492 = vpop.f32.mrb[0].mxu0
      %v493 = vpop.f32.mrb[0].mxu0
      %v494 = vadd.f32 0.0, %v493
      %v495 = vpop.f32.mrb[0].mxu0
      %496 = vmatprep.mubr.bf16.mxu0 0
      %497 = vmatmul.mubr.bf16.gmra.mrb[0].mxu0 %v300
      %v498 = vpop.f32.mrb[0].mxu0
      %v499 = vadd.f32 0.0, %v498
      %v500 = vpop.f32.mrb[0].mxu0
      %v501 = vpop.f32.mrb[0].mxu0
      %v502 = vadd.f32 0.0, %v501
      %v503 = vpop.f32.mrb[0].mxu0
      %504 = vmatprep.mubr.bf16.mxu0 0
      %505 = vmatmul.mubr.bf16.gmra.mrb[0].mxu0 %v301
      %v506 = vpop.f32.mrb[0].mxu0
      %v507 = vadd.f32 0.0, %v506
      %v508 = vpop.f32.mrb[0].mxu0
      %v509 = vpop.f32.mrb[0].mxu0
      %v510 = vadd.f32 0.0, %v509
      %v511 = vpop.f32.mrb[0].mxu0
      %512 = vmatprep.mubr.bf16.mxu0 0
      %513 = vmatmul.mubr.bf16.gmra.mrb[0].mxu0 %v302
      %v514 = vpop.f32.mrb[0].mxu0
      %v515 = vadd.f32 0.0, %v514
      %v516 = vpop.f32.mrb[0].mxu0
      %v517 = vpop.f32.mrb[0].mxu0
      %v518 = vadd.f32 0.0, %v517
      %v519 = vpop.f32.mrb[0].mxu0
      %520 = vmatprep.mubr.bf16.mxu0 0
      %521 = vmatmul.mubr.bf16.gmra.mrb[0].mxu0 %v303
      %v522 = vpop.f32.mrb[0].mxu0
      %v523 = vadd.f32 0.0, %v522
      %v524 = vpop.f32.mrb[0].mxu0
      %v525 = vpop.f32.mrb[0].mxu0
      %v526 = vadd.f32 0.0, %v525
      %v527 = vpop.f32.mrb[0].mxu0
      %528 = vdwg.mxu0
      %s529 = sld [smem:[#allocation2]]
      %vm530 = vcmp.ge.f32.partialorder %v403, 0.0
      %vm531 = vcmp.ge.f32.partialorder %v406, 0.0
      %vm532 = vcmp.ge.f32.partialorder %v411, 0.0
      %vm533 = vcmp.ge.f32.partialorder %v414, 0.0
      %vm534 = vcmp.ge.f32.partialorder %v419, 0.0
      %vm535 = vcmp.ge.f32.partialorder %v422, 0.0
      %vm536 = vcmp.ge.f32.partialorder %v427, 0.0
      %vm537 = vcmp.ge.f32.partialorder %v430, 0.0
      %vm538 = vcmp.ge.f32.partialorder %v435, 0.0
      %vm539 = vcmp.ge.f32.partialorder %v438, 0.0
      %vm540 = vcmp.ge.f32.partialorder %v443, 0.0
      %vm541 = vcmp.ge.f32.partialorder %v446, 0.0
      %vm542 = vcmp.ge.f32.partialorder %v451, 0.0
      %vm543 = vcmp.ge.f32.partialorder %v454, 0.0
      %vm544 = vcmp.ge.f32.partialorder %v459, 0.0
      %vm545 = vcmp.ge.f32.partialorder %v462, 0.0
      %vm546 = vcmp.ge.f32.partialorder %v467, 0.0
      %vm547 = vcmp.ge.f32.partialorder %v470, 0.0
      %vm548 = vcmp.ge.f32.partialorder %v475, 0.0
      %vm549 = vcmp.ge.f32.partialorder %v478, 0.0
      %vm550 = vcmp.ge.f32.partialorder %v483, 0.0
      %vm551 = vcmp.ge.f32.partialorder %v486, 0.0
      %vm552 = vcmp.ge.f32.partialorder %v491, 0.0
      %vm553 = vcmp.ge.f32.partialorder %v494, 0.0
      %vm554 = vcmp.ge.f32.partialorder %v499, 0.0
      %vm555 = vcmp.ge.f32.partialorder %v502, 0.0
      %vm556 = vcmp.ge.f32.partialorder %v507, 0.0
      %vm557 = vcmp.ge.f32.partialorder %v510, 0.0
      %vm558 = vcmp.ge.f32.partialorder %v515, 0.0
      %vm559 = vcmp.ge.f32.partialorder %v518, 0.0
      %vm560 = vcmp.ge.f32.partialorder %v523, 0.0
      %vm561 = vcmp.ge.f32.partialorder %v526, 0.0
      %v562 = vstv %s529
      %v563 = vmul.f32 %v562, %v403
      %v564 = vmul.f32 %v562, %v406
      %v565 = vmul.f32 %v562, %v411
      %v566 = vmul.f32 %v562, %v414
      %v567 = vmul.f32 %v562, %v419
      %v568 = vmul.f32 %v562, %v422
      %v569 = vmul.f32 %v562, %v427
      %v570 = vmul.f32 %v562, %v430
      %v571 = vmul.f32 %v562, %v435
      %v572 = vmul.f32 %v562, %v438
      %v573 = vmul.f32 %v562, %v443
      %v574 = vmul.f32 %v562, %v446
      %v575 = vmul.f32 %v562, %v451
      %v576 = vmul.f32 %v562, %v454
      %v577 = vmul.f32 %v562, %v459
      %v578 = vmul.f32 %v562, %v462
      %v579 = vmul.f32 %v562, %v467
      %v580 = vmul.f32 %v562, %v470
      %v581 = vmul.f32 %v562, %v475
      %v582 = vmul.f32 %v562, %v478
      %v583 = vmul.f32 %v562, %v483
      %v584 = vmul.f32 %v562, %v486
      %v585 = vmul.f32 %v562, %v491
      %v586 = vmul.f32 %v562, %v494
      %v587 = vmul.f32 %v562, %v499
      %v588 = vmul.f32 %v562, %v502
      %v589 = vmul.f32 %v562, %v507
      %v590 = vmul.f32 %v562, %v510
      %v591 = vmul.f32 %v562, %v515
      %v592 = vmul.f32 %v562, %v518
      %v593 = vmul.f32 %v562, %v523
      %v594 = vmul.f32 %v562, %v526
      %v595 = vsel %vm530, %v403, %v563
      %v596 = vsel %vm531, %v406, %v564
      %v597 = vsel %vm532, %v411, %v565
      %v598 = vsel %vm533, %v414, %v566
      %v599 = vsel %vm534, %v419, %v567
      %v600 = vsel %vm535, %v422, %v568
      %v601 = vsel %vm536, %v427, %v569
      %v602 = vsel %vm537, %v430, %v570
      %v603 = vsel %vm538, %v435, %v571
      %v604 = vsel %vm539, %v438, %v572
      %v605 = vsel %vm540, %v443, %v573
      %v606 = vsel %vm541, %v446, %v574
      %v607 = vsel %vm542, %v451, %v575
      %v608 = vsel %vm543, %v454, %v576
      %v609 = vsel %vm544, %v459, %v577
      %v610 = vsel %vm545, %v462, %v578
      %v611 = vsel %vm546, %v467, %v579
      %v612 = vsel %vm547, %v470, %v580
      %v613 = vsel %vm548, %v475, %v581
      %v614 = vsel %vm549, %v478, %v582
      %v615 = vsel %vm550, %v483, %v583
      %v616 = vsel %vm551, %v486, %v584
      %v617 = vsel %vm552, %v491, %v585
      %v618 = vsel %vm553, %v494, %v586
      %v619 = vsel %vm554, %v499, %v587
      %v620 = vsel %vm555, %v502, %v588
      %v621 = vsel %vm556, %v507, %v589
      %v622 = vsel %vm557, %v510, %v590
      %v623 = vsel %vm558, %v515, %v591
      %v624 = vsel %vm559, %v518, %v592
      %v625 = vsel %vm560, %v523, %v593
      %v626 = vsel %vm561, %v526, %v594
      %v627 = vpack.c.bf16 %v596, %v595
      %v628 = vpack.c.bf16 %v598, %v597
      %v629 = vpack.c.bf16 %v600, %v599
      %v630 = vpack.c.bf16 %v602, %v601
      %v631 = vpack.c.bf16 %v604, %v603
      %v632 = vpack.c.bf16 %v606, %v605
      %v633 = vpack.c.bf16 %v608, %v607
      %v634 = vpack.c.bf16 %v610, %v609
      %v635 = vpack.c.bf16 %v612, %v611
      %v636 = vpack.c.bf16 %v614, %v613
      %v637 = vpack.c.bf16 %v616, %v615
      %v638 = vpack.c.bf16 %v618, %v617
      %v639 = vpack.c.bf16 %v620, %v619
      %v640 = vpack.c.bf16 %v622, %v621
      %v641 = vpack.c.bf16 %v624, %v623
      %v642 = vpack.c.bf16 %v626, %v625
      %v659 = vunpack.c.l.b16 %v627
      %v660 = vunpack.c.h.b16 %v627
      %v661 = vunpack.c.l.b16 %v628
      %v662 = vunpack.c.h.b16 %v628
      %v663 = vunpack.c.l.b16 %v629
      %v664 = vunpack.c.h.b16 %v629
      %v665 = vunpack.c.l.b16 %v630
      %v666 = vunpack.c.h.b16 %v630
      %v667 = vunpack.c.l.b16 %v631
      %v668 = vunpack.c.h.b16 %v631
      %v669 = vunpack.c.l.b16 %v632
      %v670 = vunpack.c.h.b16 %v632
      %v671 = vunpack.c.l.b16 %v633
      %v672 = vunpack.c.h.b16 %v633
      %v673 = vunpack.c.l.b16 %v634
      %v674 = vunpack.c.h.b16 %v634
      %v675 = vunpack.c.l.b16 %v635
      %v676 = vunpack.c.h.b16 %v635
      %v677 = vunpack.c.l.b16 %v636
      %v678 = vunpack.c.h.b16 %v636
      %v679 = vunpack.c.l.b16 %v637
      %v680 = vunpack.c.h.b16 %v637
      %v681 = vunpack.c.l.b16 %v638
      %v682 = vunpack.c.h.b16 %v638
      %v683 = vunpack.c.l.b16 %v639
      %v684 = vunpack.c.h.b16 %v639
      %v685 = vunpack.c.l.b16 %v640
      %v686 = vunpack.c.h.b16 %v640
      %v687 = vunpack.c.l.b16 %v641
      %v688 = vunpack.c.h.b16 %v641
      %v689 = vunpack.c.l.b16 %v642
      %v690 = vunpack.c.h.b16 %v642
      %v691 = vpack.c.b16 %v659, %v659
      %v692 = vpack.c.b16 %v660, %v660
      %v693 = vpack.c.b16 %v661, %v661
      %v694 = vpack.c.b16 %v662, %v662
      %v695 = vpack.c.b16 %v663, %v663
      %v696 = vpack.c.b16 %v664, %v664
      %v697 = vpack.c.b16 %v665, %v665
      %v698 = vpack.c.b16 %v666, %v666
      %v699 = vpack.c.b16 %v667, %v667
      %v700 = vpack.c.b16 %v668, %v668
      %v701 = vpack.c.b16 %v669, %v669
      %v702 = vpack.c.b16 %v670, %v670
      %v703 = vpack.c.b16 %v671, %v671
      %v704 = vpack.c.b16 %v672, %v672
      %v705 = vpack.c.b16 %v673, %v673
      %v706 = vpack.c.b16 %v674, %v674
      %v707 = vpack.c.b16 %v675, %v675
      %v708 = vpack.c.b16 %v676, %v676
      %v709 = vpack.c.b16 %v677, %v677
      %v710 = vpack.c.b16 %v678, %v678
      %v711 = vpack.c.b16 %v679, %v679
      %v712 = vpack.c.b16 %v680, %v680
      %v713 = vpack.c.b16 %v681, %v681
      %v714 = vpack.c.b16 %v682, %v682
      %v715 = vpack.c.b16 %v683, %v683
      %v716 = vpack.c.b16 %v684, %v684
      %v717 = vpack.c.b16 %v685, %v685
      %v718 = vpack.c.b16 %v686, %v686
      %v719 = vpack.c.b16 %v687, %v687
      %v720 = vpack.c.b16 %v688, %v688
      %v721 = vpack.c.b16 %v689, %v689
      %v722 = vpack.c.b16 %v690, %v690
      %vm755 = vcmask 27648
      %756 = vst.msk [vmem:[%s173] sm:$0xf] %vm755, %v691
      %757 = vst.msk [vmem:[%s173 + $0x4] sm:$0xf] %vm755, %v692
      %758 = vst.msk [vmem:[%s173 + $0x8] sm:$0xf] %vm755, %v693
      %759 = vst.msk [vmem:[%s173 + $0xc] sm:$0xf] %vm755, %v694
      %760 = vst.msk [vmem:[%s173 + $0x10] sm:$0xf] %vm755, %v695
      %761 = vst.msk [vmem:[%s173 + $0x14] sm:$0xf] %vm755, %v696
      %762 = vst.msk [vmem:[%s173 + $0x18] sm:$0xf] %vm755, %v697
      %763 = vst.msk [vmem:[%s173 + $0x1c] sm:$0xf] %vm755, %v698
      %764 = vst.msk [vmem:[%s173 + $0x20] sm:$0xf] %vm755, %v699
      %765 = vst.msk [vmem:[%s173 + $0x24] sm:$0xf] %vm755, %v700
      %766 = vst.msk [vmem:[%s173 + $0x28] sm:$0xf] %vm755, %v701
      %767 = vst.msk [vmem:[%s173 + $0x2c] sm:$0xf] %vm755, %v702
      %768 = vst.msk [vmem:[%s173 + $0x30] sm:$0xf] %vm755, %v703
      %769 = vst.msk [vmem:[%s173 + $0x34] sm:$0xf] %vm755, %v704
      %770 = vst.msk [vmem:[%s173 + $0x38] sm:$0xf] %vm755, %v705
      %771 = vst.msk [vmem:[%s173 + $0x3c] sm:$0xf] %vm755, %v706
      %772 = vst.msk [vmem:[%s173 + $0x40] sm:$0xf] %vm755, %v707
      %773 = vst.msk [vmem:[%s173 + $0x44] sm:$0xf] %vm755, %v708
      %774 = vst.msk [vmem:[%s173 + $0x48] sm:$0xf] %vm755, %v709
      %775 = vst.msk [vmem:[%s173 + $0x4c] sm:$0xf] %vm755, %v710
      %776 = vst.msk [vmem:[%s173 + $0x50] sm:$0xf] %vm755, %v711
      %777 = vst.msk [vmem:[%s173 + $0x54] sm:$0xf] %vm755, %v712
      %778 = vst.msk [vmem:[%s173 + $0x58] sm:$0xf] %vm755, %v713
      %779 = vst.msk [vmem:[%s173 + $0x5c] sm:$0xf] %vm755, %v714
      %780 = vst.msk [vmem:[%s173 + $0x60] sm:$0xf] %vm755, %v715
      %781 = vst.msk [vmem:[%s173 + $0x64] sm:$0xf] %vm755, %v716
      %782 = vst.msk [vmem:[%s173 + $0x68] sm:$0xf] %vm755, %v717
      %783 = vst.msk [vmem:[%s173 + $0x6c] sm:$0xf] %vm755, %v718
      %784 = vst.msk [vmem:[%s173 + $0x70] sm:$0xf] %vm755, %v719
      %785 = vst.msk [vmem:[%s173 + $0x74] sm:$0xf] %vm755, %v720
      %786 = vst.msk [vmem:[%s173 + $0x78] sm:$0xf] %vm755, %v721
      %787 = vst.msk [vmem:[%s173 + $0x7c] sm:$0xf] %vm755, %v722
      %s788 = smul.u32 32, %s15
      %p789 = scmp.lt.s32.totalorder %s788, 63
      %s790 = scalar_select %p789, %s788, 63
      %s791 = smul.addr %s790, 4
      %s792 = scalar_lea.vmem %s3, %s791
      // Predicated region
      $region33: #{_lambda_.14} parent=31 // pred_check
        %p793 = pneg %p101
      $region34: #{_lambda_.14} parent=31 // pred_check_branch
        %795 = sbr.rel (%p793) target = $region36
      $region35: #{_lambda_.14} parent=31 // pred_region
        %s796 = smul.u32 32, %s15
      $region36: #{_lambda_.14} parent=31 // pred_fallthru
        _
    $region32: #{_lambda_.14} parent=5 // pred_fallthru
      _
    %p797 = scmp.le.s32.totalorder 2, %s10
    // Predicated region
    $region37: #{_lambda_.14} parent=5 // pred_check
      %p798 = pneg %p797
    $region38: #{_lambda_.14} parent=5 // pred_check_branch
      %800 = sbr.rel (%p798) target = $region40
    $region39: #{_lambda_.14} parent=5 // pred_region
      %s801 = ssub.s32 %s10, 2
      // Predicated region
      $region41: #{_lambda_.14} parent=39 // pred_check
        %p802 = pneg %p107
      $region42: #{_lambda_.14} parent=39 // pred_check_branch
        %804 = sbr.rel (%p802) target = $region44
      $region43: #{_lambda_.14} parent=39 // pred_region
        %s805 = smul.u32 32, %s16
        %p806 = scmp.lt.s32.totalorder %s805, 63
        %s807 = scalar_select %p806, %s805, 63
        %s808 = smul.addr %s807, 4
        %s809 = scalar_lea.vmem %s3, %s808
      $region44: #{_lambda_.14} parent=39 // pred_fallthru
        _
    $region40: #{_lambda_.14} parent=5 // pred_fallthru
      _
  $region6: #{_lambda_.14} parent=0 // loop_footer
    %s14 = sadd.s32 1, %s10
  $region7: #{_lambda_.14} parent=0 // loop_footer_branch
    %9 = sbr.rel target = $region3
  $region8: #{_lambda_.14} parent=0 // loop_exit
    _

// kernel: _lambda_.15
$region0: #{_lambda_.15}
  #allocation0 [shape = 'u32[]', space=smem, size = 0x4, offset = 0x4, fixed_abs, tag = 'smem constant byte address 0x4 - core index']
  #allocation1 [shape = 'u32[144,128]{1,0:T(1,128)}', space=vmem, size = 0x12000, scoped, tag = 'internal scratch']
  #allocation2 [shape = 'f32[1]{0:T(128)S(6)}', space=smem, size = 0x200, scoped, tag = 'scoped memory for _lambda_.15']
  %s0 = inlined_call_operand.vmem [shape: bf16[512,128], index: 0, kind: input, shape index: {}]
  %s1 = inlined_call_operand.vmem [shape: bf16[128,128], index: 1, kind: input, shape index: {}]
  %s2 = inlined_call_operand.<no memory space> [shape: f32[1], index: 2, kind: input, shape index: {}]
  %s3 = inlined_call_operand.vmem [shape: bf16[512,4], index: 3, kind: input, shape index: {}]
  %s4 = inlined_call_operand.vmem [shape: bf16[512,4], index: 4, kind: output, shape index: {}]
  %s5 = sld [smem:[#allocation0]]
  $region49: #{_lambda_.15} parent=0
    _
  %s7 = ssub.s32 1, %s5
  %s8 = scalar_select 0, %s7, %s5
  %9 = sst [smem:[#allocation2]] %s2
  loop: start=0, step=1, limit=4
  $region2: #{_lambda_.15} parent=0 // loop_pre_header
    _
  $region3: #{_lambda_.15} parent=0 // loop_header
    %s11 = sphi 0, %s15
    %p12 = scmp.ge.s32.totalorder %s11, 4
    %s21 = sphi 0, %s23
    %s24 = sphi 0, %s21
    %s25 = sphi 0, %s24
    %s41 = sphi 0, %s25
    %s45 = sphi 0, %s45
    %s47 = sphi 0, %s45
    %s48 = sphi 0, %s47
    %s62 = sphi 0, %s48
    %s66 = sphi 0, %s66
    %s68 = sphi 0, %s66
    %s69 = sphi 0, %s68
    %s83 = sphi 0, %s69
    %s89 = sphi 0, %s91
    %s92 = sphi 0, %s89
    %s93 = sphi 0, %s92
    %s109 = sphi 0, %s93
    %s115 = sphi 0, %s117
    %s118 = sphi 0, %s115
    %s119 = sphi 0, %s118
    %s135 = sphi 0, %s119
  $region4: #{_lambda_.15} parent=0 // loop_header_branch
    %14 = sbr.rel (%p12) target = $region8
  $region5: #{_lambda_.15} parent=0 // loop_body
    %s16 = ssub.s32 %s11, 1
    %s17 = ssub.s32 %s11, 2
    %s18 = sadd.s32 %s11, 1
    %s19 = ssub.s32 %s11, %s18
    %p20 = scmp.eq.s32.totalorder %s19, 0
    %s22 = sadd.s32 %s21, 1
    %s23 = scalar_select %p20, %s21, %s22
    %p26 = pneg %p20
    %p27 = scmp.eq.s32.totalorder %s11, 1
    %p28 = por %p26, %p27
    %p29 = scmp.ne.s32.totalorder %s21, %s24
    %p30 = scmp.eq.s32.totalorder %s11, 0
    %p31 = por %p29, %p30
    %p32 = scmp.ne.s32.totalorder %s21, %s24
    %p33 = scmp.eq.s32.totalorder %s16, 1
    %p34 = por %p32, %p33
    %p35 = scmp.ne.s32.totalorder %s24, %s25
    %p36 = scmp.eq.s32.totalorder %s16, 0
    %p37 = por %p35, %p36
    %p38 = scmp.ne.s32.totalorder %s24, %s25
    %p39 = scmp.eq.s32.totalorder %s17, 1
    %p40 = por %p38, %p39
    %p42 = scmp.ne.s32.totalorder %s25, %s41
    %p43 = scmp.eq.s32.totalorder %s17, 0
    %p44 = por %p42, %p43
    %s46 = sadd.s32 %s45, 1
    %p49 = scmp.eq.s32.totalorder %s11, 1
    %p50 = scmp.ne.s32.totalorder %s45, %s47
    %p51 = scmp.eq.s32.totalorder %s11, 0
    %p52 = por %p50, %p51
    %p53 = scmp.ne.s32.totalorder %s45, %s47
    %p54 = scmp.eq.s32.totalorder %s16, 1
    %p55 = por %p53, %p54
    %p56 = scmp.ne.s32.totalorder %s47, %s48
    %p57 = scmp.eq.s32.totalorder %s16, 0
    %p58 = por %p56, %p57
    %p59 = scmp.ne.s32.totalorder %s47, %s48
    %p60 = scmp.eq.s32.totalorder %s17, 1
    %p61 = por %p59, %p60
    %p63 = scmp.ne.s32.totalorder %s48, %s62
    %p64 = scmp.eq.s32.totalorder %s17, 0
    %p65 = por %p63, %p64
    %s67 = sadd.s32 %s66, 1
    %p70 = scmp.eq.s32.totalorder %s11, 1
    %p71 = scmp.ne.s32.totalorder %s66, %s68
    %p72 = scmp.eq.s32.totalorder %s11, 0
    %p73 = por %p71, %p72
    %p74 = scmp.ne.s32.totalorder %s66, %s68
    %p75 = scmp.eq.s32.totalorder %s16, 1
    %p76 = por %p74, %p75
    %p77 = scmp.ne.s32.totalorder %s68, %s69
    %p78 = scmp.eq.s32.totalorder %s16, 0
    %p79 = por %p77, %p78
    %p80 = scmp.ne.s32.totalorder %s68, %s69
    %p81 = scmp.eq.s32.totalorder %s17, 1
    %p82 = por %p80, %p81
    %p84 = scmp.ne.s32.totalorder %s69, %s83
    %p85 = scmp.eq.s32.totalorder %s17, 0
    %p86 = por %p84, %p85
    %s87 = ssub.s32 %s11, %s18
    %p88 = scmp.eq.s32.totalorder %s87, 0
    %s90 = sadd.s32 %s89, 1
    %s91 = scalar_select %p88, %s89, %s90
    %p94 = pneg %p88
    %p95 = scmp.eq.s32.totalorder %s11, 1
    %p96 = por %p94, %p95
    %p97 = scmp.ne.s32.totalorder %s89, %s92
    %p98 = scmp.eq.s32.totalorder %s11, 0
    %p99 = por %p97, %p98
    %p100 = scmp.ne.s32.totalorder %s89, %s92
    %p101 = scmp.eq.s32.totalorder %s16, 1
    %p102 = por %p100, %p101
    %p103 = scmp.ne.s32.totalorder %s92, %s93
    %p104 = scmp.eq.s32.totalorder %s16, 0
    %p105 = por %p103, %p104
    %p106 = scmp.ne.s32.totalorder %s92, %s93
    %p107 = scmp.eq.s32.totalorder %s17, 1
    %p108 = por %p106, %p107
    %p110 = scmp.ne.s32.totalorder %s93, %s109
    %p111 = scmp.eq.s32.totalorder %s17, 0
    %p112 = por %p110, %p111
    %s113 = ssub.s32 %s11, %s18
    %p114 = scmp.eq.s32.totalorder %s113, 0
    %s116 = sadd.s32 %s115, 1
    %s117 = scalar_select %p114, %s115, %s116
    %p120 = pneg %p114
    %p121 = scmp.eq.s32.totalorder %s11, 1
    %p122 = por %p120, %p121
    %p123 = scmp.ne.s32.totalorder %s115, %s118
    %p124 = scmp.eq.s32.totalorder %s11, 0
    %p125 = por %p123, %p124
    %p126 = scmp.ne.s32.totalorder %s115, %s118
    %p127 = scmp.eq.s32.totalorder %s16, 1
    %p128 = por %p126, %p127
    %p129 = scmp.ne.s32.totalorder %s118, %s119
    %p130 = scmp.eq.s32.totalorder %s16, 0
    %p131 = por %p129, %p130
    %p132 = scmp.ne.s32.totalorder %s118, %s119
    %p133 = scmp.eq.s32.totalorder %s17, 1
    %p134 = por %p132, %p133
    %p136 = scmp.ne.s32.totalorder %s119, %s135
    %p137 = scmp.eq.s32.totalorder %s17, 0
    %p138 = por %p136, %p137
    %p139 = scmp.le.s32.totalorder 1, %s11
    %p140 = scmp.lt.s32.totalorder %s11, 3
    %p141 = pnand %p139, %p140
    %p142 = pneg %p141
    // Predicated region
    $region9: #{_lambda_.15} parent=5 // pred_check
      _
    $region10: #{_lambda_.15} parent=5 // pred_check_branch
      %144 = sbr.rel (%p141) target = $region12
    $region11: #{_lambda_.15} parent=5 // pred_region
      %s145 = ssub.s32 %s11, 1
      // Predicated region
      $region13: #{_lambda_.15} parent=11 // pred_check
        %p146 = pneg %p58
      $region14: #{_lambda_.15} parent=11 // pred_check_branch
        %148 = sbr.rel (%p146) target = $region16
      $region15: #{_lambda_.15} parent=11 // pred_region
        _
      $region16: #{_lambda_.15} parent=11 // pred_fallthru
        _
      // Predicated region
      $region17: #{_lambda_.15} parent=11 // pred_check
        %p149 = pneg %p79
      $region18: #{_lambda_.15} parent=11 // pred_check_branch
        %151 = sbr.rel (%p149) target = $region20
      $region19: #{_lambda_.15} parent=11 // pred_region
        _
      $region20: #{_lambda_.15} parent=11 // pred_fallthru
        _
    $region12: #{_lambda_.15} parent=5 // pred_fallthru
      _
    %p152 = scmp.lt.s32.totalorder %s11, 2
    // Predicated region
    $region21: #{_lambda_.15} parent=5 // pred_check
      %p153 = pneg %p152
    $region22: #{_lambda_.15} parent=5 // pred_check_branch
      %155 = sbr.rel (%p153) target = $region24
    $region23: #{_lambda_.15} parent=5 // pred_region
      // Predicated region
      $region25: #{_lambda_.15} parent=23 // pred_check
        %p156 = pneg %p31
      $region26: #{_lambda_.15} parent=23 // pred_check_branch
        %158 = sbr.rel (%p156) target = $region28
      $region27: #{_lambda_.15} parent=23 // pred_region
        %s159 = smul.u32 32, %s11
        %p160 = scmp.lt.s32.totalorder %s159, 63
        %s161 = scalar_select %p160, %s159, 63
        %s162 = smul.addr %s161, 4
        %s163 = scalar_lea.vmem %s0, %s162
        %s164 = smul.u32 32, %s11
      $region28: #{_lambda_.15} parent=23 // pred_fallthru
        _
      // Predicated region
      $region29: #{_lambda_.15} parent=23 // pred_check
        %p165 = pneg %p99
      $region30: #{_lambda_.15} parent=23 // pred_check_branch
        %167 = sbr.rel (%p165) target = $region32
      $region31: #{_lambda_.15} parent=23 // pred_region
        %s168 = smul.u32 32, %s11
        %p169 = scmp.lt.s32.totalorder %s168, 63
        %s170 = scalar_select %p169, %s168, 63
        %s171 = smul.addr %s170, 4
        %s172 = scalar_lea.vmem %s3, %s171
        %s173 = smul.u32 32, %s11
      $region32: #{_lambda_.15} parent=23 // pred_fallthru
        _
    $region24: #{_lambda_.15} parent=5 // pred_fallthru
      _
    %p174 = scmp.le.s32.totalorder 1, %s11
    %p175 = scmp.lt.s32.totalorder %s11, 3
    %p176 = pnand %p174, %p175
    %p177 = pneg %p176
    // Predicated region
    $region33: #{_lambda_.15} parent=5 // pred_check
      _
    $region34: #{_lambda_.15} parent=5 // pred_check_branch
      %179 = sbr.rel (%p176) target = $region36
    $region35: #{_lambda_.15} parent=5 // pred_region
      %s180 = ssub.s32 %s11, 1
      %s181 = smul.u32 32, %s16
      %p182 = scmp.lt.s32.totalorder %s181, 63
      %s183 = scalar_select %p182, %s181, 63
      %s184 = smul.addr %s183, 4
      %s185 = scalar_lea.vmem %s0, %s184
      %p186 = pneg %p37
      %p187 = pneg %p34
      %p188 = pneg %p58
      %p189 = pneg %p55
      %p190 = pneg %p79
      %p191 = pneg %p76
      %s192 = smul.u32 32, %s16
      %p193 = scmp.lt.s32.totalorder %s192, 63
      %s194 = scalar_select %p193, %s192, 63
      %s195 = smul.addr %s194, 4
      %s196 = scalar_lea.vmem %s3, %s195
      %p197 = pneg %p105
      %p198 = pneg %p102
      %p199 = pneg %p131
      %p200 = pneg %p128
      %s201 = smul.u32 32, %s16
      %p202 = scmp.lt.s32.totalorder %s201, 63
      %s203 = scalar_select %p202, %s201, 63
      %s204 = smul.addr %s203, 4
      %s205 = scalar_lea.vmem %s4, %s204
      %s206 = smul.u32 32, %s16
      %p207 = scmp.lt.s32.totalorder %s206, 63
      %s208 = scalar_select %p207, %s206, 63
      %s209 = smul.addr %s208, 4
      %s210 = scalar_lea.vmem %s0, %s209
      %s211 = smul.u32 32, %s16
      %s212 = smul.u32 32, %s16
      %p213 = scmp.lt.s32.totalorder %s212, 63
      %s214 = scalar_select %p213, %s212, 63
      %s215 = smul.addr %s214, 4
      %s216 = scalar_lea.vmem %s3, %s215
      %s217 = smul.u32 32, %s16
      %s218 = smul.u32 32, %s16
      %p219 = scmp.lt.s32.totalorder %s218, 63
      %s220 = scalar_select %p219, %s218, 63
      %s221 = smul.addr %s220, 4
      %s222 = scalar_lea.vmem %s4, %s221
      %s223 = smul.u32 32, %s16
      %v225 = vld [vmem:[%s210] sm:$0xf]
      %v226 = vld [vmem:[%s210 + $0x4] sm:$0xf]
      %v227 = vld [vmem:[%s210 + $0x8] sm:$0xf]
      %v228 = vld [vmem:[%s210 + $0xc] sm:$0xf]
      %v229 = vld [vmem:[%s210 + $0x10] sm:$0xf]
      %v230 = vld [vmem:[%s210 + $0x14] sm:$0xf]
      %v231 = vld [vmem:[%s210 + $0x18] sm:$0xf]
      %v232 = vld [vmem:[%s210 + $0x1c] sm:$0xf]
      %v233 = vld [vmem:[%s210 + $0x20] sm:$0xf]
      %v234 = vld [vmem:[%s210 + $0x24] sm:$0xf]
      %v235 = vld [vmem:[%s210 + $0x28] sm:$0xf]
      %v236 = vld [vmem:[%s210 + $0x2c] sm:$0xf]
      %v237 = vld [vmem:[%s210 + $0x30] sm:$0xf]
      %v238 = vld [vmem:[%s210 + $0x34] sm:$0xf]
      %v239 = vld [vmem:[%s210 + $0x38] sm:$0xf]
      %v240 = vld [vmem:[%s210 + $0x3c] sm:$0xf]
      %v241 = vld [vmem:[%s210 + $0x40] sm:$0xf]
      %v242 = vld [vmem:[%s210 + $0x44] sm:$0xf]
      %v243 = vld [vmem:[%s210 + $0x48] sm:$0xf]
      %v244 = vld [vmem:[%s210 + $0x4c] sm:$0xf]
      %v245 = vld [vmem:[%s210 + $0x50] sm:$0xf]
      %v246 = vld [vmem:[%s210 + $0x54] sm:$0xf]
      %v247 = vld [vmem:[%s210 + $0x58] sm:$0xf]
      %v248 = vld [vmem:[%s210 + $0x5c] sm:$0xf]
      %v249 = vld [vmem:[%s210 + $0x60] sm:$0xf]
      %v250 = vld [vmem:[%s210 + $0x64] sm:$0xf]
      %v251 = vld [vmem:[%s210 + $0x68] sm:$0xf]
      %v252 = vld [vmem:[%s210 + $0x6c] sm:$0xf]
      %v253 = vld [vmem:[%s210 + $0x70] sm:$0xf]
      %v254 = vld [vmem:[%s210 + $0x74] sm:$0xf]
      %v255 = vld [vmem:[%s210 + $0x78] sm:$0xf]
      %v256 = vld [vmem:[%s210 + $0x7c] sm:$0xf]
      %v257 = vld [vmem:[%s1] sm:$0xf]
      %v258 = vld [vmem:[%s1 + $0x4] sm:$0xf]
      %v259 = vld [vmem:[%s1 + $0x8] sm:$0xf]
      %v260 = vld [vmem:[%s1 + $0xc] sm:$0xf]
      %v261 = vld [vmem:[%s1 + $0x10] sm:$0xf]
      %v262 = vld [vmem:[%s1 + $0x14] sm:$0xf]
      %v263 = vld [vmem:[%s1 + $0x18] sm:$0xf]
      %v264 = vld [vmem:[%s1 + $0x1c] sm:$0xf]
      %v265 = vld [vmem:[%s1 + $0x20] sm:$0xf]
      %v266 = vld [vmem:[%s1 + $0x24] sm:$0xf]
      %v267 = vld [vmem:[%s1 + $0x28] sm:$0xf]
      %v268 = vld [vmem:[%s1 + $0x2c] sm:$0xf]
      %v269 = vld [vmem:[%s1 + $0x30] sm:$0xf]
      %v270 = vld [vmem:[%s1 + $0x34] sm:$0xf]
      %v271 = vld [vmem:[%s1 + $0x38] sm:$0xf]
      %v272 = vld [vmem:[%s1 + $0x3c] sm:$0xf]
      %v305 = vunpack.c.l.b16 %v225
      %v306 = vunpack.c.l.b16 %v226
      %v307 = vunpack.c.l.b16 %v227
      %v308 = vunpack.c.l.b16 %v228
      %v309 = vunpack.c.l.b16 %v229
      %v310 = vunpack.c.l.b16 %v230
      %v311 = vunpack.c.l.b16 %v231
      %v312 = vunpack.c.l.b16 %v232
      %v313 = vunpack.c.l.b16 %v233
      %v314 = vunpack.c.l.b16 %v234
      %v315 = vunpack.c.l.b16 %v235
      %v316 = vunpack.c.l.b16 %v236
      %v317 = vunpack.c.l.b16 %v237
      %v318 = vunpack.c.l.b16 %v238
      %v319 = vunpack.c.l.b16 %v239
      %v320 = vunpack.c.l.b16 %v240
      %v321 = vunpack.c.l.b16 %v241
      %v322 = vunpack.c.l.b16 %v242
      %v323 = vunpack.c.l.b16 %v243
      %v324 = vunpack.c.l.b16 %v244
      %v325 = vunpack.c.l.b16 %v245
      %v326 = vunpack.c.l.b16 %v246
      %v327 = vunpack.c.l.b16 %v247
      %v328 = vunpack.c.l.b16 %v248
      %v329 = vunpack.c.l.b16 %v249
      %v330 = vunpack.c.l.b16 %v250
      %v331 = vunpack.c.l.b16 %v251
      %v332 = vunpack.c.l.b16 %v252
      %v333 = vunpack.c.l.b16 %v253
      %v334 = vunpack.c.l.b16 %v254
      %v335 = vunpack.c.l.b16 %v255
      %v336 = vunpack.c.l.b16 %v256
      %v337 = vpack.c.b16 %v306, %v305
      %v338 = vpack.c.b16 %v308, %v307
      %v339 = vpack.c.b16 %v310, %v309
      %v340 = vpack.c.b16 %v312, %v311
      %v341 = vpack.c.b16 %v314, %v313
      %v342 = vpack.c.b16 %v316, %v315
      %v343 = vpack.c.b16 %v318, %v317
      %v344 = vpack.c.b16 %v320, %v319
      %v345 = vpack.c.b16 %v322, %v321
      %v346 = vpack.c.b16 %v324, %v323
      %v347 = vpack.c.b16 %v326, %v325
      %v348 = vpack.c.b16 %v328, %v327
      %v349 = vpack.c.b16 %v330, %v329
      %v350 = vpack.c.b16 %v332, %v331
      %v351 = vpack.c.b16 %v334, %v333
      %v352 = vpack.c.b16 %v336, %v335
      %v385 = vunpack.c.l.b16 %v257
      %v386 = vunpack.c.l.b16 %v258
      %v387 = vunpack.c.l.b16 %v259
      %v388 = vunpack.c.l.b16 %v260
      %v389 = vunpack.c.l.b16 %v261
      %v390 = vunpack.c.l.b16 %v262
      %v391 = vunpack.c.l.b16 %v263
      %v392 = vunpack.c.l.b16 %v264
      %v393 = vunpack.c.l.b16 %v265
      %v394 = vunpack.c.l.b16 %v266
      %v395 = vunpack.c.l.b16 %v267
      %v396 = vunpack.c.l.b16 %v268
      %v397 = vunpack.c.l.b16 %v269
      %v398 = vunpack.c.l.b16 %v270
      %v399 = vunpack.c.l.b16 %v271
      %v400 = vunpack.c.l.b16 %v272
      %v401 = vpack.c.b16 %v386, %v385
      %v402 = vpack.c.b16 %v388, %v387
      %v403 = vpack.c.b16 %v390, %v389
      %v404 = vpack.c.b16 %v392, %v391
      %v405 = vpack.c.b16 %v394, %v393
      %v406 = vpack.c.b16 %v396, %v395
      %v407 = vpack.c.b16 %v398, %v397
      %v408 = vpack.c.b16 %v400, %v399
      %417 = vmatprep.subr.bf16.mxu0 0
      %418 = vmatpush1.bf16.msra.mxu0 %v401
      %419 = vmatprep.subr.bf16.mxu0 0
      %420 = vmatpush1.bf16.msra.mxu0 %v402
      %421 = vmatprep.subr.bf16.mxu0 0
      %422 = vmatpush1.bf16.msra.mxu0 %v403
      %423 = vmatprep.subr.bf16.mxu0 0
      %424 = vmatpush1.bf16.msra.mxu0 %v404
      %425 = vmatprep.subr.bf16.mxu0 0
      %426 = vmatpush1.bf16.msra.mxu0 %v405
      %427 = vmatprep.subr.bf16.mxu0 0
      %428 = vmatpush1.bf16.msra.mxu0 %v406
      %429 = vmatprep.subr.bf16.mxu0 0
      %430 = vmatpush1.bf16.msra.mxu0 %v407
      %431 = vmatprep.subr.bf16.mxu0 0
      %432 = vmatpush1.bf16.msra.mxu0 %v408
      %433 = vmatprep.subr.bf16.mxu0 0
      %434 = vmatpush1.bf16.msra.mxu0 0
      %435 = vmatprep.subr.bf16.mxu0 0
      %436 = vmatpush1.bf16.msra.mxu0 0
      %437 = vmatprep.subr.bf16.mxu0 0
      %438 = vmatpush1.bf16.msra.mxu0 0
      %439 = vmatprep.subr.bf16.mxu0 0
      %440 = vmatpush1.bf16.msra.mxu0 0
      %441 = vmatprep.subr.bf16.mxu0 0
      %442 = vmatpush1.bf16.msra.mxu0 0
      %443 = vmatprep.subr.bf16.mxu0 0
      %444 = vmatpush1.bf16.msra.mxu0 0
      %445 = vmatprep.subr.bf16.mxu0 0
      %446 = vmatpush1.bf16.msra.mxu0 0
      %447 = vmatprep.subr.bf16.mxu0 0
      %448 = vmatpush1.bf16.msra.mxu0 0
      %449 = vmatprep.mubr.bf16.mxu0 0
      %450 = vmatmul.mubr.bf16.gmra.mrb[0].mxu0 %v337
      %v451 = vpop.f32.mrb[0].mxu0
      %v452 = vadd.f32 0.0, %v451
      %v453 = vpop.f32.mrb[0].mxu0
      %v454 = vpop.f32.mrb[0].mxu0
      %v455 = vadd.f32 0.0, %v454
      %v456 = vpop.f32.mrb[0].mxu0
      %457 = vmatprep.mubr.bf16.mxu0 0
      %458 = vmatmul.mubr.bf16.gmra.mrb[0].mxu0 %v338
      %v459 = vpop.f32.mrb[0].mxu0
      %v460 = vadd.f32 0.0, %v459
      %v461 = vpop.f32.mrb[0].mxu0
      %v462 = vpop.f32.mrb[0].mxu0
      %v463 = vadd.f32 0.0, %v462
      %v464 = vpop.f32.mrb[0].mxu0
      %465 = vmatprep.mubr.bf16.mxu0 0
      %466 = vmatmul.mubr.bf16.gmra.mrb[0].mxu0 %v339
      %v467 = vpop.f32.mrb[0].mxu0
      %v468 = vadd.f32 0.0, %v467
      %v469 = vpop.f32.mrb[0].mxu0
      %v470 = vpop.f32.mrb[0].mxu0
      %v471 = vadd.f32 0.0, %v470
      %v472 = vpop.f32.mrb[0].mxu0
      %473 = vmatprep.mubr.bf16.mxu0 0
      %474 = vmatmul.mubr.bf16.gmra.mrb[0].mxu0 %v340
      %v475 = vpop.f32.mrb[0].mxu0
      %v476 = vadd.f32 0.0, %v475
      %v477 = vpop.f32.mrb[0].mxu0
      %v478 = vpop.f32.mrb[0].mxu0
      %v479 = vadd.f32 0.0, %v478
      %v480 = vpop.f32.mrb[0].mxu0
      %481 = vmatprep.mubr.bf16.mxu0 0
      %482 = vmatmul.mubr.bf16.gmra.mrb[0].mxu0 %v341
      %v483 = vpop.f32.mrb[0].mxu0
      %v484 = vadd.f32 0.0, %v483
      %v485 = vpop.f32.mrb[0].mxu0
      %v486 = vpop.f32.mrb[0].mxu0
      %v487 = vadd.f32 0.0, %v486
      %v488 = vpop.f32.mrb[0].mxu0
      %489 = vmatprep.mubr.bf16.mxu0 0
      %490 = vmatmul.mubr.bf16.gmra.mrb[0].mxu0 %v342
      %v491 = vpop.f32.mrb[0].mxu0
      %v492 = vadd.f32 0.0, %v491
      %v493 = vpop.f32.mrb[0].mxu0
      %v494 = vpop.f32.mrb[0].mxu0
      %v495 = vadd.f32 0.0, %v494
      %v496 = vpop.f32.mrb[0].mxu0
      %497 = vmatprep.mubr.bf16.mxu0 0
      %498 = vmatmul.mubr.bf16.gmra.mrb[0].mxu0 %v343
      %v499 = vpop.f32.mrb[0].mxu0
      %v500 = vadd.f32 0.0, %v499
      %v501 = vpop.f32.mrb[0].mxu0
      %v502 = vpop.f32.mrb[0].mxu0
      %v503 = vadd.f32 0.0, %v502
      %v504 = vpop.f32.mrb[0].mxu0
      %505 = vmatprep.mubr.bf16.mxu0 0
      %506 = vmatmul.mubr.bf16.gmra.mrb[0].mxu0 %v344
      %v507 = vpop.f32.mrb[0].mxu0
      %v508 = vadd.f32 0.0, %v507
      %v509 = vpop.f32.mrb[0].mxu0
      %v510 = vpop.f32.mrb[0].mxu0
      %v511 = vadd.f32 0.0, %v510
      %v512 = vpop.f32.mrb[0].mxu0
      %513 = vmatprep.mubr.bf16.mxu0 0
      %514 = vmatmul.mubr.bf16.gmra.mrb[0].mxu0 %v345
      %v515 = vpop.f32.mrb[0].mxu0
      %v516 = vadd.f32 0.0, %v515
      %v517 = vpop.f32.mrb[0].mxu0
      %v518 = vpop.f32.mrb[0].mxu0
      %v519 = vadd.f32 0.0, %v518
      %v520 = vpop.f32.mrb[0].mxu0
      %521 = vmatprep.mubr.bf16.mxu0 0
      %522 = vmatmul.mubr.bf16.gmra.mrb[0].mxu0 %v346
      %v523 = vpop.f32.mrb[0].mxu0
      %v524 = vadd.f32 0.0, %v523
      %v525 = vpop.f32.mrb[0].mxu0
      %v526 = vpop.f32.mrb[0].mxu0
      %v527 = vadd.f32 0.0, %v526
      %v528 = vpop.f32.mrb[0].mxu0
      %529 = vmatprep.mubr.bf16.mxu0 0
      %530 = vmatmul.mubr.bf16.gmra.mrb[0].mxu0 %v347
      %v531 = vpop.f32.mrb[0].mxu0
      %v532 = vadd.f32 0.0, %v531
      %v533 = vpop.f32.mrb[0].mxu0
      %v534 = vpop.f32.mrb[0].mxu0
      %v535 = vadd.f32 0.0, %v534
      %v536 = vpop.f32.mrb[0].mxu0
      %537 = vmatprep.mubr.bf16.mxu0 0
      %538 = vmatmul.mubr.bf16.gmra.mrb[0].mxu0 %v348
      %v539 = vpop.f32.mrb[0].mxu0
      %v540 = vadd.f32 0.0, %v539
      %v541 = vpop.f32.mrb[0].mxu0
      %v542 = vpop.f32.mrb[0].mxu0
      %v543 = vadd.f32 0.0, %v542
      %v544 = vpop.f32.mrb[0].mxu0
      %545 = vmatprep.mubr.bf16.mxu0 0
      %546 = vmatmul.mubr.bf16.gmra.mrb[0].mxu0 %v349
      %v547 = vpop.f32.mrb[0].mxu0
      %v548 = vadd.f32 0.0, %v547
      %v549 = vpop.f32.mrb[0].mxu0
      %v550 = vpop.f32.mrb[0].mxu0
      %v551 = vadd.f32 0.0, %v550
      %v552 = vpop.f32.mrb[0].mxu0
      %553 = vmatprep.mubr.bf16.mxu0 0
      %554 = vmatmul.mubr.bf16.gmra.mrb[0].mxu0 %v350
      %v555 = vpop.f32.mrb[0].mxu0
      %v556 = vadd.f32 0.0, %v555
      %v557 = vpop.f32.mrb[0].mxu0
      %v558 = vpop.f32.mrb[0].mxu0
      %v559 = vadd.f32 0.0, %v558
      %v560 = vpop.f32.mrb[0].mxu0
      %561 = vmatprep.mubr.bf16.mxu0 0
      %562 = vmatmul.mubr.bf16.gmra.mrb[0].mxu0 %v351
      %v563 = vpop.f32.mrb[0].mxu0
      %v564 = vadd.f32 0.0, %v563
      %v565 = vpop.f32.mrb[0].mxu0
      %v566 = vpop.f32.mrb[0].mxu0
      %v567 = vadd.f32 0.0, %v566
      %v568 = vpop.f32.mrb[0].mxu0
      %569 = vmatprep.mubr.bf16.mxu0 0
      %570 = vmatmul.mubr.bf16.gmra.mrb[0].mxu0 %v352
      %v571 = vpop.f32.mrb[0].mxu0
      %v572 = vadd.f32 0.0, %v571
      %v573 = vpop.f32.mrb[0].mxu0
      %v574 = vpop.f32.mrb[0].mxu0
      %v575 = vadd.f32 0.0, %v574
      %v576 = vpop.f32.mrb[0].mxu0
      %577 = vdwg.mxu0
      %s578 = sld [smem:[#allocation2]]
      %vm579 = vcmp.ge.f32.partialorder %v452, 0.0
      %vm580 = vcmp.ge.f32.partialorder %v455, 0.0
      %vm581 = vcmp.ge.f32.partialorder %v460, 0.0
      %vm582 = vcmp.ge.f32.partialorder %v463, 0.0
      %vm583 = vcmp.ge.f32.partialorder %v468, 0.0
      %vm584 = vcmp.ge.f32.partialorder %v471, 0.0
      %vm585 = vcmp.ge.f32.partialorder %v476, 0.0
      %vm586 = vcmp.ge.f32.partialorder %v479, 0.0
      %vm587 = vcmp.ge.f32.partialorder %v484, 0.0
      %vm588 = vcmp.ge.f32.partialorder %v487, 0.0
      %vm589 = vcmp.ge.f32.partialorder %v492, 0.0
      %vm590 = vcmp.ge.f32.partialorder %v495, 0.0
      %vm591 = vcmp.ge.f32.partialorder %v500, 0.0
      %vm592 = vcmp.ge.f32.partialorder %v503, 0.0
      %vm593 = vcmp.ge.f32.partialorder %v508, 0.0
      %vm594 = vcmp.ge.f32.partialorder %v511, 0.0
      %vm595 = vcmp.ge.f32.partialorder %v516, 0.0
      %vm596 = vcmp.ge.f32.partialorder %v519, 0.0
      %vm597 = vcmp.ge.f32.partialorder %v524, 0.0
      %vm598 = vcmp.ge.f32.partialorder %v527, 0.0
      %vm599 = vcmp.ge.f32.partialorder %v532, 0.0
      %vm600 = vcmp.ge.f32.partialorder %v535, 0.0
      %vm601 = vcmp.ge.f32.partialorder %v540, 0.0
      %vm602 = vcmp.ge.f32.partialorder %v543, 0.0
      %vm603 = vcmp.ge.f32.partialorder %v548, 0.0
      %vm604 = vcmp.ge.f32.partialorder %v551, 0.0
      %vm605 = vcmp.ge.f32.partialorder %v556, 0.0
      %vm606 = vcmp.ge.f32.partialorder %v559, 0.0
      %vm607 = vcmp.ge.f32.partialorder %v564, 0.0
      %vm608 = vcmp.ge.f32.partialorder %v567, 0.0
      %vm609 = vcmp.ge.f32.partialorder %v572, 0.0
      %vm610 = vcmp.ge.f32.partialorder %v575, 0.0
      %v611 = vstv %s578
      %v612 = vmul.f32 %v611, %v452
      %v613 = vmul.f32 %v611, %v455
      %v614 = vmul.f32 %v611, %v460
      %v615 = vmul.f32 %v611, %v463
      %v616 = vmul.f32 %v611, %v468
      %v617 = vmul.f32 %v611, %v471
      %v618 = vmul.f32 %v611, %v476
      %v619 = vmul.f32 %v611, %v479
      %v620 = vmul.f32 %v611, %v484
      %v621 = vmul.f32 %v611, %v487
      %v622 = vmul.f32 %v611, %v492
      %v623 = vmul.f32 %v611, %v495
      %v624 = vmul.f32 %v611, %v500
      %v625 = vmul.f32 %v611, %v503
      %v626 = vmul.f32 %v611, %v508
      %v627 = vmul.f32 %v611, %v511
      %v628 = vmul.f32 %v611, %v516
      %v629 = vmul.f32 %v611, %v519
      %v630 = vmul.f32 %v611, %v524
      %v631 = vmul.f32 %v611, %v527
      %v632 = vmul.f32 %v611, %v532
      %v633 = vmul.f32 %v611, %v535
      %v634 = vmul.f32 %v611, %v540
      %v635 = vmul.f32 %v611, %v543
      %v636 = vmul.f32 %v611, %v548
      %v637 = vmul.f32 %v611, %v551
      %v638 = vmul.f32 %v611, %v556
      %v639 = vmul.f32 %v611, %v559
      %v640 = vmul.f32 %v611, %v564
      %v641 = vmul.f32 %v611, %v567
      %v642 = vmul.f32 %v611, %v572
      %v643 = vmul.f32 %v611, %v575
      %v644 = vsel %vm579, %v452, %v612
      %v645 = vsel %vm580, %v455, %v613
      %v646 = vsel %vm581, %v460, %v614
      %v647 = vsel %vm582, %v463, %v615
      %v648 = vsel %vm583, %v468, %v616
      %v649 = vsel %vm584, %v471, %v617
      %v650 = vsel %vm585, %v476, %v618
      %v651 = vsel %vm586, %v479, %v619
      %v652 = vsel %vm587, %v484, %v620
      %v653 = vsel %vm588, %v487, %v621
      %v654 = vsel %vm589, %v492, %v622
      %v655 = vsel %vm590, %v495, %v623
      %v656 = vsel %vm591, %v500, %v624
      %v657 = vsel %vm592, %v503, %v625
      %v658 = vsel %vm593, %v508, %v626
      %v659 = vsel %vm594, %v511, %v627
      %v660 = vsel %vm595, %v516, %v628
      %v661 = vsel %vm596, %v519, %v629
      %v662 = vsel %vm597, %v524, %v630
      %v663 = vsel %vm598, %v527, %v631
      %v664 = vsel %vm599, %v532, %v632
      %v665 = vsel %vm600, %v535, %v633
      %v666 = vsel %vm601, %v540, %v634
      %v667 = vsel %vm602, %v543, %v635
      %v668 = vsel %vm603, %v548, %v636
      %v669 = vsel %vm604, %v551, %v637
      %v670 = vsel %vm605, %v556, %v638
      %v671 = vsel %vm606, %v559, %v639
      %v672 = vsel %vm607, %v564, %v640
      %v673 = vsel %vm608, %v567, %v641
      %v674 = vsel %vm609, %v572, %v642
      %v675 = vsel %vm610, %v575, %v643
      %v676 = vld [vmem:[%s216] sm:$0xf]
      %v677 = vld [vmem:[%s216 + $0x4] sm:$0xf]
      %v678 = vld [vmem:[%s216 + $0x8] sm:$0xf]
      %v679 = vld [vmem:[%s216 + $0xc] sm:$0xf]
      %v680 = vld [vmem:[%s216 + $0x10] sm:$0xf]
      %v681 = vld [vmem:[%s216 + $0x14] sm:$0xf]
      %v682 = vld [vmem:[%s216 + $0x18] sm:$0xf]
      %v683 = vld [vmem:[%s216 + $0x1c] sm:$0xf]
      %v684 = vld [vmem:[%s216 + $0x20] sm:$0xf]
      %v685 = vld [vmem:[%s216 + $0x24] sm:$0xf]
      %v686 = vld [vmem:[%s216 + $0x28] sm:$0xf]
      %v687 = vld [vmem:[%s216 + $0x2c] sm:$0xf]
      %v688 = vld [vmem:[%s216 + $0x30] sm:$0xf]
      %v689 = vld [vmem:[%s216 + $0x34] sm:$0xf]
      %v690 = vld [vmem:[%s216 + $0x38] sm:$0xf]
      %v691 = vld [vmem:[%s216 + $0x3c] sm:$0xf]
      %v692 = vld [vmem:[%s216 + $0x40] sm:$0xf]
      %v693 = vld [vmem:[%s216 + $0x44] sm:$0xf]
      %v694 = vld [vmem:[%s216 + $0x48] sm:$0xf]
      %v695 = vld [vmem:[%s216 + $0x4c] sm:$0xf]
      %v696 = vld [vmem:[%s216 + $0x50] sm:$0xf]
      %v697 = vld [vmem:[%s216 + $0x54] sm:$0xf]
      %v698 = vld [vmem:[%s216 + $0x58] sm:$0xf]
      %v699 = vld [vmem:[%s216 + $0x5c] sm:$0xf]
      %v700 = vld [vmem:[%s216 + $0x60] sm:$0xf]
      %v701 = vld [vmem:[%s216 + $0x64] sm:$0xf]
      %v702 = vld [vmem:[%s216 + $0x68] sm:$0xf]
      %v703 = vld [vmem:[%s216 + $0x6c] sm:$0xf]
      %v704 = vld [vmem:[%s216 + $0x70] sm:$0xf]
      %v705 = vld [vmem:[%s216 + $0x74] sm:$0xf]
      %v706 = vld [vmem:[%s216 + $0x78] sm:$0xf]
      %v707 = vld [vmem:[%s216 + $0x7c] sm:$0xf]
      %v708 = vunpack.c.l.bf16 %v676
      %v709 = vunpack.c.l.bf16 %v677
      %v710 = vunpack.c.l.bf16 %v678
      %v711 = vunpack.c.l.bf16 %v679
      %v712 = vunpack.c.l.bf16 %v680
      %v713 = vunpack.c.l.bf16 %v681
      %v714 = vunpack.c.l.bf16 %v682
      %v715 = vunpack.c.l.bf16 %v683
      %v716 = vunpack.c.l.bf16 %v684
      %v717 = vunpack.c.l.bf16 %v685
      %v718 = vunpack.c.l.bf16 %v686
      %v719 = vunpack.c.l.bf16 %v687
      %v720 = vunpack.c.l.bf16 %v688
      %v721 = vunpack.c.l.bf16 %v689
      %v722 = vunpack.c.l.bf16 %v690
      %v723 = vunpack.c.l.bf16 %v691
      %v724 = vunpack.c.l.bf16 %v692
      %v725 = vunpack.c.l.bf16 %v693
      %v726 = vunpack.c.l.bf16 %v694
      %v727 = vunpack.c.l.bf16 %v695
      %v728 = vunpack.c.l.bf16 %v696
      %v729 = vunpack.c.l.bf16 %v697
      %v730 = vunpack.c.l.bf16 %v698
      %v731 = vunpack.c.l.bf16 %v699
      %v732 = vunpack.c.l.bf16 %v700
      %v733 = vunpack.c.l.bf16 %v701
      %v734 = vunpack.c.l.bf16 %v702
      %v735 = vunpack.c.l.bf16 %v703
      %v736 = vunpack.c.l.bf16 %v704
      %v737 = vunpack.c.l.bf16 %v705
      %v738 = vunpack.c.l.bf16 %v706
      %v739 = vunpack.c.l.bf16 %v707
      %v740 = vadd.f32 %v644, %v708
      %v741 = vadd.f32 %v645, %v709
      %v742 = vadd.f32 %v646, %v710
      %v743 = vadd.f32 %v647, %v711
      %v744 = vadd.f32 %v648, %v712
      %v745 = vadd.f32 %v649, %v713
      %v746 = vadd.f32 %v650, %v714
      %v747 = vadd.f32 %v651, %v715
      %v748 = vadd.f32 %v652, %v716
      %v749 = vadd.f32 %v653, %v717
      %v750 = vadd.f32 %v654, %v718
      %v751 = vadd.f32 %v655, %v719
      %v752 = vadd.f32 %v656, %v720
      %v753 = vadd.f32 %v657, %v721
      %v754 = vadd.f32 %v658, %v722
      %v755 = vadd.f32 %v659, %v723
      %v756 = vadd.f32 %v660, %v724
      %v757 = vadd.f32 %v661, %v725
      %v758 = vadd.f32 %v662, %v726
      %v759 = vadd.f32 %v663, %v727
      %v760 = vadd.f32 %v664, %v728
      %v761 = vadd.f32 %v665, %v729
      %v762 = vadd.f32 %v666, %v730
      %v763 = vadd.f32 %v667, %v731
      %v764 = vadd.f32 %v668, %v732
      %v765 = vadd.f32 %v669, %v733
      %v766 = vadd.f32 %v670, %v734
      %v767 = vadd.f32 %v671, %v735
      %v768 = vadd.f32 %v672, %v736
      %v769 = vadd.f32 %v673, %v737
      %v770 = vadd.f32 %v674, %v738
      %v771 = vadd.f32 %v675, %v739
      %v772 = vpack.c.bf16 %v741, %v740
      %v773 = vpack.c.bf16 %v743, %v742
      %v774 = vpack.c.bf16 %v745, %v744
      %v775 = vpack.c.bf16 %v747, %v746
      %v776 = vpack.c.bf16 %v749, %v748
      %v777 = vpack.c.bf16 %v751, %v750
      %v778 = vpack.c.bf16 %v753, %v752
      %v779 = vpack.c.bf16 %v755, %v754
      %v780 = vpack.c.bf16 %v757, %v756
      %v781 = vpack.c.bf16 %v759, %v758
      %v782 = vpack.c.bf16 %v761, %v760
      %v783 = vpack.c.bf16 %v763, %v762
      %v784 = vpack.c.bf16 %v765, %v764
      %v785 = vpack.c.bf16 %v767, %v766
      %v786 = vpack.c.bf16 %v769, %v768
      %v787 = vpack.c.bf16 %v771, %v770
      %v804 = vunpack.c.l.b16 %v772
      %v805 = vunpack.c.h.b16 %v772
      %v806 = vunpack.c.l.b16 %v773
      %v807 = vunpack.c.h.b16 %v773
      %v808 = vunpack.c.l.b16 %v774
      %v809 = vunpack.c.h.b16 %v774
      %v810 = vunpack.c.l.b16 %v775
      %v811 = vunpack.c.h.b16 %v775
      %v812 = vunpack.c.l.b16 %v776
      %v813 = vunpack.c.h.b16 %v776
      %v814 = vunpack.c.l.b16 %v777
      %v815 = vunpack.c.h.b16 %v777
      %v816 = vunpack.c.l.b16 %v778
      %v817 = vunpack.c.h.b16 %v778
      %v818 = vunpack.c.l.b16 %v779
      %v819 = vunpack.c.h.b16 %v779
      %v820 = vunpack.c.l.b16 %v780
      %v821 = vunpack.c.h.b16 %v780
      %v822 = vunpack.c.l.b16 %v781
      %v823 = vunpack.c.h.b16 %v781
      %v824 = vunpack.c.l.b16 %v782
      %v825 = vunpack.c.h.b16 %v782
      %v826 = vunpack.c.l.b16 %v783
      %v827 = vunpack.c.h.b16 %v783
      %v828 = vunpack.c.l.b16 %v784
      %v829 = vunpack.c.h.b16 %v784
      %v830 = vunpack.c.l.b16 %v785
      %v831 = vunpack.c.h.b16 %v785
      %v832 = vunpack.c.l.b16 %v786
      %v833 = vunpack.c.h.b16 %v786
      %v834 = vunpack.c.l.b16 %v787
      %v835 = vunpack.c.h.b16 %v787
      %v836 = vpack.c.b16 %v804, %v804
      %v837 = vpack.c.b16 %v805, %v805
      %v838 = vpack.c.b16 %v806, %v806
      %v839 = vpack.c.b16 %v807, %v807
      %v840 = vpack.c.b16 %v808, %v808
      %v841 = vpack.c.b16 %v809, %v809
      %v842 = vpack.c.b16 %v810, %v810
      %v843 = vpack.c.b16 %v811, %v811
      %v844 = vpack.c.b16 %v812, %v812
      %v845 = vpack.c.b16 %v813, %v813
      %v846 = vpack.c.b16 %v814, %v814
      %v847 = vpack.c.b16 %v815, %v815
      %v848 = vpack.c.b16 %v816, %v816
      %v849 = vpack.c.b16 %v817, %v817
      %v850 = vpack.c.b16 %v818, %v818
      %v851 = vpack.c.b16 %v819, %v819
      %v852 = vpack.c.b16 %v820, %v820
      %v853 = vpack.c.b16 %v821, %v821
      %v854 = vpack.c.b16 %v822, %v822
      %v855 = vpack.c.b16 %v823, %v823
      %v856 = vpack.c.b16 %v824, %v824
      %v857 = vpack.c.b16 %v825, %v825
      %v858 = vpack.c.b16 %v826, %v826
      %v859 = vpack.c.b16 %v827, %v827
      %v860 = vpack.c.b16 %v828, %v828
      %v861 = vpack.c.b16 %v829, %v829
      %v862 = vpack.c.b16 %v830, %v830
      %v863 = vpack.c.b16 %v831, %v831
      %v864 = vpack.c.b16 %v832, %v832
      %v865 = vpack.c.b16 %v833, %v833
      %v866 = vpack.c.b16 %v834, %v834
      %v867 = vpack.c.b16 %v835, %v835
      %vm900 = vcmask 27648
      %901 = vst.msk [vmem:[%s222] sm:$0xf] %vm900, %v836
      %902 = vst.msk [vmem:[%s222 + $0x4] sm:$0xf] %vm900, %v837
      %903 = vst.msk [vmem:[%s222 + $0x8] sm:$0xf] %vm900, %v838
      %904 = vst.msk [vmem:[%s222 + $0xc] sm:$0xf] %vm900, %v839
      %905 = vst.msk [vmem:[%s222 + $0x10] sm:$0xf] %vm900, %v840
      %906 = vst.msk [vmem:[%s222 + $0x14] sm:$0xf] %vm900, %v841
      %907 = vst.msk [vmem:[%s222 + $0x18] sm:$0xf] %vm900, %v842
      %908 = vst.msk [vmem:[%s222 + $0x1c] sm:$0xf] %vm900, %v843
      %909 = vst.msk [vmem:[%s222 + $0x20] sm:$0xf] %vm900, %v844
      %910 = vst.msk [vmem:[%s222 + $0x24] sm:$0xf] %vm900, %v845
      %911 = vst.msk [vmem:[%s222 + $0x28] sm:$0xf] %vm900, %v846
      %912 = vst.msk [vmem:[%s222 + $0x2c] sm:$0xf] %vm900, %v847
      %913 = vst.msk [vmem:[%s222 + $0x30] sm:$0xf] %vm900, %v848
      %914 = vst.msk [vmem:[%s222 + $0x34] sm:$0xf] %vm900, %v849
      %915 = vst.msk [vmem:[%s222 + $0x38] sm:$0xf] %vm900, %v850
      %916 = vst.msk [vmem:[%s222 + $0x3c] sm:$0xf] %vm900, %v851
      %917 = vst.msk [vmem:[%s222 + $0x40] sm:$0xf] %vm900, %v852
      %918 = vst.msk [vmem:[%s222 + $0x44] sm:$0xf] %vm900, %v853
      %919 = vst.msk [vmem:[%s222 + $0x48] sm:$0xf] %vm900, %v854
      %920 = vst.msk [vmem:[%s222 + $0x4c] sm:$0xf] %vm900, %v855
      %921 = vst.msk [vmem:[%s222 + $0x50] sm:$0xf] %vm900, %v856
      %922 = vst.msk [vmem:[%s222 + $0x54] sm:$0xf] %vm900, %v857
      %923 = vst.msk [vmem:[%s222 + $0x58] sm:$0xf] %vm900, %v858
      %924 = vst.msk [vmem:[%s222 + $0x5c] sm:$0xf] %vm900, %v859
      %925 = vst.msk [vmem:[%s222 + $0x60] sm:$0xf] %vm900, %v860
      %926 = vst.msk [vmem:[%s222 + $0x64] sm:$0xf] %vm900, %v861
      %927 = vst.msk [vmem:[%s222 + $0x68] sm:$0xf] %vm900, %v862
      %928 = vst.msk [vmem:[%s222 + $0x6c] sm:$0xf] %vm900, %v863
      %929 = vst.msk [vmem:[%s222 + $0x70] sm:$0xf] %vm900, %v864
      %930 = vst.msk [vmem:[%s222 + $0x74] sm:$0xf] %vm900, %v865
      %931 = vst.msk [vmem:[%s222 + $0x78] sm:$0xf] %vm900, %v866
      %932 = vst.msk [vmem:[%s222 + $0x7c] sm:$0xf] %vm900, %v867
      %s933 = smul.u32 32, %s16
      %p934 = scmp.lt.s32.totalorder %s933, 63
      %s935 = scalar_select %p934, %s933, 63
      %s936 = smul.addr %s935, 4
      %s937 = scalar_lea.vmem %s4, %s936
      // Predicated region
      $region37: #{_lambda_.15} parent=35 // pred_check
        %p938 = pneg %p128
      $region38: #{_lambda_.15} parent=35 // pred_check_branch
        %940 = sbr.rel (%p938) target = $region40
      $region39: #{_lambda_.15} parent=35 // pred_region
        %s941 = smul.u32 32, %s16
      $region40: #{_lambda_.15} parent=35 // pred_fallthru
        _
    $region36: #{_lambda_.15} parent=5 // pred_fallthru
      _
    %p942 = scmp.le.s32.totalorder 2, %s11
    // Predicated region
    $region41: #{_lambda_.15} parent=5 // pred_check
      %p943 = pneg %p942
    $region42: #{_lambda_.15} parent=5 // pred_check_branch
      %945 = sbr.rel (%p943) target = $region44
    $region43: #{_lambda_.15} parent=5 // pred_region
      %s946 = ssub.s32 %s11, 2
      // Predicated region
      $region45: #{_lambda_.15} parent=43 // pred_check
        %p947 = pneg %p134
      $region46: #{_lambda_.15} parent=43 // pred_check_branch
        %949 = sbr.rel (%p947) target = $region48
      $region47: #{_lambda_.15} parent=43 // pred_region
        %s950 = smul.u32 32, %s17
        %p951 = scmp.lt.s32.totalorder %s950, 63
        %s952 = scalar_select %p951, %s950, 63
        %s953 = smul.addr %s952, 4
        %s954 = scalar_lea.vmem %s4, %s953
      $region48: #{_lambda_.15} parent=43 // pred_fallthru
        _
    $region44: #{_lambda_.15} parent=5 // pred_fallthru
      _
  $region6: #{_lambda_.15} parent=0 // loop_footer
    %s15 = sadd.s32 1, %s11
  $region7: #{_lambda_.15} parent=0 // loop_footer_branch
    %10 = sbr.rel target = $region3
  $region8: #{_lambda_.15} parent=0 // loop_exit
    _

// kernel: _lambda_.16
$region0: #{_lambda_.16}
  #allocation0 [shape = 'u32[]', space=smem, size = 0x4, offset = 0x4, fixed_abs, tag = 'smem constant byte address 0x4 - core index']
  #allocation1 [shape = 'u32[144,128]{1,0:T(1,128)}', space=vmem, size = 0x12000, scoped, tag = 'internal scratch']
  #allocation2 [shape = 'f32[1]{0:T(128)S(6)}', space=smem, size = 0x200, scoped, tag = 'scoped memory for _lambda_.16']
  %s0 = inlined_call_operand.vmem [shape: bf16[128,128], index: 0, kind: input, shape index: {}]
  %s1 = inlined_call_operand.vmem [shape: bf16[128,128], index: 1, kind: input, shape index: {}]
  %s2 = inlined_call_operand.<no memory space> [shape: f32[1], index: 2, kind: input, shape index: {}]
  %s3 = inlined_call_operand.vmem [shape: bf16[128,8], index: 3, kind: output, shape index: {}]
  %s4 = sld [smem:[#allocation0]]
  $region45: #{_lambda_.16} parent=0
    _
  %s6 = ssub.s32 1, %s4
  %s7 = scalar_select 0, %s6, %s4
  %8 = sst [smem:[#allocation2]] %s2
  loop: start=0, step=1, limit=4
  $region2: #{_lambda_.16} parent=0 // loop_pre_header
    _
  $region3: #{_lambda_.16} parent=0 // loop_header
    %s10 = sphi 0, %s14
    %p11 = scmp.ge.s32.totalorder %s10, 4
    %s20 = sphi 0, %s22
    %s23 = sphi 0, %s20
    %s24 = sphi 0, %s23
    %s40 = sphi 0, %s24
    %s44 = sphi 0, %s44
    %s46 = sphi 0, %s44
    %s47 = sphi 0, %s46
    %s61 = sphi 0, %s47
    %s65 = sphi 0, %s65
    %s67 = sphi 0, %s65
    %s68 = sphi 0, %s67
    %s82 = sphi 0, %s68
    %s88 = sphi 0, %s90
    %s91 = sphi 0, %s88
    %s92 = sphi 0, %s91
    %s108 = sphi 0, %s92
  $region4: #{_lambda_.16} parent=0 // loop_header_branch
    %13 = sbr.rel (%p11) target = $region8
  $region5: #{_lambda_.16} parent=0 // loop_body
    %s15 = ssub.s32 %s10, 1
    %s16 = ssub.s32 %s10, 2
    %s17 = sadd.s32 %s10, 1
    %s18 = ssub.s32 %s10, %s17
    %p19 = scmp.eq.s32.totalorder %s18, 0
    %s21 = sadd.s32 %s20, 1
    %s22 = scalar_select %p19, %s20, %s21
    %p25 = pneg %p19
    %p26 = scmp.eq.s32.totalorder %s10, 1
    %p27 = por %p25, %p26
    %p28 = scmp.ne.s32.totalorder %s20, %s23
    %p29 = scmp.eq.s32.totalorder %s10, 0
    %p30 = por %p28, %p29
    %p31 = scmp.ne.s32.totalorder %s20, %s23
    %p32 = scmp.eq.s32.totalorder %s15, 1
    %p33 = por %p31, %p32
    %p34 = scmp.ne.s32.totalorder %s23, %s24
    %p35 = scmp.eq.s32.totalorder %s15, 0
    %p36 = por %p34, %p35
    %p37 = scmp.ne.s32.totalorder %s23, %s24
    %p38 = scmp.eq.s32.totalorder %s16, 1
    %p39 = por %p37, %p38
    %p41 = scmp.ne.s32.totalorder %s24, %s40
    %p42 = scmp.eq.s32.totalorder %s16, 0
    %p43 = por %p41, %p42
    %s45 = sadd.s32 %s44, 1
    %p48 = scmp.eq.s32.totalorder %s10, 1
    %p49 = scmp.ne.s32.totalorder %s44, %s46
    %p50 = scmp.eq.s32.totalorder %s10, 0
    %p51 = por %p49, %p50
    %p52 = scmp.ne.s32.totalorder %s44, %s46
    %p53 = scmp.eq.s32.totalorder %s15, 1
    %p54 = por %p52, %p53
    %p55 = scmp.ne.s32.totalorder %s46, %s47
    %p56 = scmp.eq.s32.totalorder %s15, 0
    %p57 = por %p55, %p56
    %p58 = scmp.ne.s32.totalorder %s46, %s47
    %p59 = scmp.eq.s32.totalorder %s16, 1
    %p60 = por %p58, %p59
    %p62 = scmp.ne.s32.totalorder %s47, %s61
    %p63 = scmp.eq.s32.totalorder %s16, 0
    %p64 = por %p62, %p63
    %s66 = sadd.s32 %s65, 1
    %p69 = scmp.eq.s32.totalorder %s10, 1
    %p70 = scmp.ne.s32.totalorder %s65, %s67
    %p71 = scmp.eq.s32.totalorder %s10, 0
    %p72 = por %p70, %p71
    %p73 = scmp.ne.s32.totalorder %s65, %s67
    %p74 = scmp.eq.s32.totalorder %s15, 1
    %p75 = por %p73, %p74
    %p76 = scmp.ne.s32.totalorder %s67, %s68
    %p77 = scmp.eq.s32.totalorder %s15, 0
    %p78 = por %p76, %p77
    %p79 = scmp.ne.s32.totalorder %s67, %s68
    %p80 = scmp.eq.s32.totalorder %s16, 1
    %p81 = por %p79, %p80
    %p83 = scmp.ne.s32.totalorder %s68, %s82
    %p84 = scmp.eq.s32.totalorder %s16, 0
    %p85 = por %p83, %p84
    %s86 = ssub.s32 %s10, %s17
    %p87 = scmp.eq.s32.totalorder %s86, 0
    %s89 = sadd.s32 %s88, 1
    %s90 = scalar_select %p87, %s88, %s89
    %p93 = pneg %p87
    %p94 = scmp.eq.s32.totalorder %s10, 1
    %p95 = por %p93, %p94
    %p96 = scmp.ne.s32.totalorder %s88, %s91
    %p97 = scmp.eq.s32.totalorder %s10, 0
    %p98 = por %p96, %p97
    %p99 = scmp.ne.s32.totalorder %s88, %s91
    %p100 = scmp.eq.s32.totalorder %s15, 1
    %p101 = por %p99, %p100
    %p102 = scmp.ne.s32.totalorder %s91, %s92
    %p103 = scmp.eq.s32.totalorder %s15, 0
    %p104 = por %p102, %p103
    %p105 = scmp.ne.s32.totalorder %s91, %s92
    %p106 = scmp.eq.s32.totalorder %s16, 1
    %p107 = por %p105, %p106
    %p109 = scmp.ne.s32.totalorder %s92, %s108
    %p110 = scmp.eq.s32.totalorder %s16, 0
    %p111 = por %p109, %p110
    %p112 = scmp.le.s32.totalorder 1, %s10
    %p113 = scmp.lt.s32.totalorder %s10, 3
    %p114 = pnand %p112, %p113
    %p115 = pneg %p114
    // Predicated region
    $region9: #{_lambda_.16} parent=5 // pred_check
      _
    $region10: #{_lambda_.16} parent=5 // pred_check_branch
      %117 = sbr.rel (%p114) target = $region12
    $region11: #{_lambda_.16} parent=5 // pred_region
      %s118 = ssub.s32 %s10, 1
      // Predicated region
      $region13: #{_lambda_.16} parent=11 // pred_check
        %p119 = pneg %p57
      $region14: #{_lambda_.16} parent=11 // pred_check_branch
        %121 = sbr.rel (%p119) target = $region16
      $region15: #{_lambda_.16} parent=11 // pred_region
        _
      $region16: #{_lambda_.16} parent=11 // pred_fallthru
        _
      // Predicated region
      $region17: #{_lambda_.16} parent=11 // pred_check
        %p122 = pneg %p78
      $region18: #{_lambda_.16} parent=11 // pred_check_branch
        %124 = sbr.rel (%p122) target = $region20
      $region19: #{_lambda_.16} parent=11 // pred_region
        _
      $region20: #{_lambda_.16} parent=11 // pred_fallthru
        _
    $region12: #{_lambda_.16} parent=5 // pred_fallthru
      _
    %p125 = scmp.lt.s32.totalorder %s10, 2
    // Predicated region
    $region21: #{_lambda_.16} parent=5 // pred_check
      %p126 = pneg %p125
    $region22: #{_lambda_.16} parent=5 // pred_check_branch
      %128 = sbr.rel (%p126) target = $region24
    $region23: #{_lambda_.16} parent=5 // pred_region
      // Predicated region
      $region25: #{_lambda_.16} parent=23 // pred_check
        %p129 = pneg %p30
      $region26: #{_lambda_.16} parent=23 // pred_check_branch
        %131 = sbr.rel (%p129) target = $region28
      $region27: #{_lambda_.16} parent=23 // pred_region
        %s132 = smul.u32 8, %s10
        %p133 = scmp.lt.s32.totalorder %s132, 15
        %s134 = scalar_select %p133, %s132, 15
        %s135 = smul.addr %s134, 4
        %s136 = scalar_lea.vmem %s0, %s135
        %s137 = smul.u32 8, %s10
      $region28: #{_lambda_.16} parent=23 // pred_fallthru
        _
    $region24: #{_lambda_.16} parent=5 // pred_fallthru
      _
    %p138 = scmp.le.s32.totalorder 1, %s10
    %p139 = scmp.lt.s32.totalorder %s10, 3
    %p140 = pnand %p138, %p139
    %p141 = pneg %p140
    // Predicated region
    $region29: #{_lambda_.16} parent=5 // pred_check
      _
    $region30: #{_lambda_.16} parent=5 // pred_check_branch
      %143 = sbr.rel (%p140) target = $region32
    $region31: #{_lambda_.16} parent=5 // pred_region
      %s144 = ssub.s32 %s10, 1
      %s145 = smul.u32 8, %s15
      %p146 = scmp.lt.s32.totalorder %s145, 15
      %s147 = scalar_select %p146, %s145, 15
      %s148 = smul.addr %s147, 4
      %s149 = scalar_lea.vmem %s0, %s148
      %p150 = pneg %p36
      %p151 = pneg %p33
      %p152 = pneg %p57
      %p153 = pneg %p54
      %p154 = pneg %p78
      %p155 = pneg %p75
      %p156 = pneg %p104
      %p157 = pneg %p101
      %s158 = smul.u32 8, %s15
      %p159 = scmp.lt.s32.totalorder %s158, 15
      %s160 = scalar_select %p159, %s158, 15
      %s161 = smul.addr %s160, 4
      %s162 = scalar_lea.vmem %s3, %s161
      %s163 = smul.u32 8, %s15
      %p164 = scmp.lt.s32.totalorder %s163, 15
      %s165 = scalar_select %p164, %s163, 15
      %s166 = smul.addr %s165, 4
      %s167 = scalar_lea.vmem %s0, %s166
      %s168 = smul.u32 8, %s15
      %s169 = smul.u32 8, %s15
      %p170 = scmp.lt.s32.totalorder %s169, 15
      %s171 = scalar_select %p170, %s169, 15
      %s172 = smul.addr %s171, 4
      %s173 = scalar_lea.vmem %s3, %s172
      %s174 = smul.u32 8, %s15
      %v176 = vld [vmem:[%s167] sm:$0xf]
      %v177 = vld [vmem:[%s167 + $0x4] sm:$0xf]
      %v178 = vld [vmem:[%s167 + $0x8] sm:$0xf]
      %v179 = vld [vmem:[%s167 + $0xc] sm:$0xf]
      %v180 = vld [vmem:[%s167 + $0x10] sm:$0xf]
      %v181 = vld [vmem:[%s167 + $0x14] sm:$0xf]
      %v182 = vld [vmem:[%s167 + $0x18] sm:$0xf]
      %v183 = vld [vmem:[%s167 + $0x1c] sm:$0xf]
      %v184 = vld [vmem:[%s1] sm:$0xf]
      %v185 = vld [vmem:[%s1 + $0x4] sm:$0xf]
      %v186 = vld [vmem:[%s1 + $0x8] sm:$0xf]
      %v187 = vld [vmem:[%s1 + $0xc] sm:$0xf]
      %v188 = vld [vmem:[%s1 + $0x10] sm:$0xf]
      %v189 = vld [vmem:[%s1 + $0x14] sm:$0xf]
      %v190 = vld [vmem:[%s1 + $0x18] sm:$0xf]
      %v191 = vld [vmem:[%s1 + $0x1c] sm:$0xf]
      %v192 = vld [vmem:[%s1 + $0x20] sm:$0xf]
      %v193 = vld [vmem:[%s1 + $0x24] sm:$0xf]
      %v194 = vld [vmem:[%s1 + $0x28] sm:$0xf]
      %v195 = vld [vmem:[%s1 + $0x2c] sm:$0xf]
      %v196 = vld [vmem:[%s1 + $0x30] sm:$0xf]
      %v197 = vld [vmem:[%s1 + $0x34] sm:$0xf]
      %v198 = vld [vmem:[%s1 + $0x38] sm:$0xf]
      %v199 = vld [vmem:[%s1 + $0x3c] sm:$0xf]
      %v208 = vunpack.c.l.b16 %v176
      %v209 = vunpack.c.l.b16 %v177
      %v210 = vunpack.c.l.b16 %v178
      %v211 = vunpack.c.l.b16 %v179
      %v212 = vunpack.c.l.b16 %v180
      %v213 = vunpack.c.l.b16 %v181
      %v214 = vunpack.c.l.b16 %v182
      %v215 = vunpack.c.l.b16 %v183
      %v216 = vpack.c.b16 %v209, %v208
      %v217 = vpack.c.b16 %v211, %v210
      %v218 = vpack.c.b16 %v213, %v212
      %v219 = vpack.c.b16 %v215, %v214
      %v240 = vunpack.c.l.b16 %v184
      %v241 = vunpack.c.l.b16 %v185
      %v242 = vunpack.c.l.b16 %v186
      %v243 = vunpack.c.l.b16 %v187
      %v244 = vunpack.c.l.b16 %v188
      %v245 = vunpack.c.l.b16 %v189
      %v246 = vunpack.c.l.b16 %v190
      %v247 = vunpack.c.l.b16 %v191
      %v248 = vunpack.c.l.b16 %v192
      %v249 = vunpack.c.l.b16 %v193
      %v250 = vunpack.c.l.b16 %v194
      %v251 = vunpack.c.l.b16 %v195
      %v252 = vunpack.c.l.b16 %v196
      %v253 = vunpack.c.l.b16 %v197
      %v254 = vunpack.c.l.b16 %v198
      %v255 = vunpack.c.l.b16 %v199
      %v256 = vpack.c.b16 %v241, %v240
      %v257 = vpack.c.b16 %v243, %v242
      %v258 = vpack.c.b16 %v245, %v244
      %v259 = vpack.c.b16 %v247, %v246
      %v260 = vpack.c.b16 %v249, %v248
      %v261 = vpack.c.b16 %v251, %v250
      %v262 = vpack.c.b16 %v253, %v252
      %v263 = vpack.c.b16 %v255, %v254
      %272 = vmatprep.subr.bf16.mxu0 0
      %273 = vmatpush1.bf16.msra.mxu0 %v256
      %274 = vmatprep.subr.bf16.mxu0 0
      %275 = vmatpush1.bf16.msra.mxu0 %v257
      %276 = vmatprep.subr.bf16.mxu0 0
      %277 = vmatpush1.bf16.msra.mxu0 %v258
      %278 = vmatprep.subr.bf16.mxu0 0
      %279 = vmatpush1.bf16.msra.mxu0 %v259
      %280 = vmatprep.subr.bf16.mxu0 0
      %281 = vmatpush1.bf16.msra.mxu0 %v260
      %282 = vmatprep.subr.bf16.mxu0 0
      %283 = vmatpush1.bf16.msra.mxu0 %v261
      %284 = vmatprep.subr.bf16.mxu0 0
      %285 = vmatpush1.bf16.msra.mxu0 %v262
      %286 = vmatprep.subr.bf16.mxu0 0
      %287 = vmatpush1.bf16.msra.mxu0 %v263
      %288 = vmatprep.subr.bf16.mxu0 0
      %289 = vmatpush1.bf16.msra.mxu0 0
      %290 = vmatprep.subr.bf16.mxu0 0
      %291 = vmatpush1.bf16.msra.mxu0 0
      %292 = vmatprep.subr.bf16.mxu0 0
      %293 = vmatpush1.bf16.msra.mxu0 0
      %294 = vmatprep.subr.bf16.mxu0 0
      %295 = vmatpush1.bf16.msra.mxu0 0
      %296 = vmatprep.subr.bf16.mxu0 0
      %297 = vmatpush1.bf16.msra.mxu0 0
      %298 = vmatprep.subr.bf16.mxu0 0
      %299 = vmatpush1.bf16.msra.mxu0 0
      %300 = vmatprep.subr.bf16.mxu0 0
      %301 = vmatpush1.bf16.msra.mxu0 0
      %302 = vmatprep.subr.bf16.mxu0 0
      %303 = vmatpush1.bf16.msra.mxu0 0
      %304 = vmatprep.mubr.bf16.mxu0 0
      %305 = vmatmul.mubr.bf16.gmra.mrb[0].mxu0 %v216
      %v306 = vpop.f32.mrb[0].mxu0
      %v307 = vadd.f32 0.0, %v306
      %v308 = vpop.f32.mrb[0].mxu0
      %v309 = vpop.f32.mrb[0].mxu0
      %v310 = vadd.f32 0.0, %v309
      %v311 = vpop.f32.mrb[0].mxu0
      %312 = vmatprep.mubr.bf16.mxu0 0
      %313 = vmatmul.mubr.bf16.gmra.mrb[0].mxu0 %v217
      %v314 = vpop.f32.mrb[0].mxu0
      %v315 = vadd.f32 0.0, %v314
      %v316 = vpop.f32.mrb[0].mxu0
      %v317 = vpop.f32.mrb[0].mxu0
      %v318 = vadd.f32 0.0, %v317
      %v319 = vpop.f32.mrb[0].mxu0
      %320 = vmatprep.mubr.bf16.mxu0 0
      %321 = vmatmul.mubr.bf16.gmra.mrb[0].mxu0 %v218
      %v322 = vpop.f32.mrb[0].mxu0
      %v323 = vadd.f32 0.0, %v322
      %v324 = vpop.f32.mrb[0].mxu0
      %v325 = vpop.f32.mrb[0].mxu0
      %v326 = vadd.f32 0.0, %v325
      %v327 = vpop.f32.mrb[0].mxu0
      %328 = vmatprep.mubr.bf16.mxu0 0
      %329 = vmatmul.mubr.bf16.gmra.mrb[0].mxu0 %v219
      %v330 = vpop.f32.mrb[0].mxu0
      %v331 = vadd.f32 0.0, %v330
      %v332 = vpop.f32.mrb[0].mxu0
      %v333 = vpop.f32.mrb[0].mxu0
      %v334 = vadd.f32 0.0, %v333
      %v335 = vpop.f32.mrb[0].mxu0
      %336 = vdwg.mxu0
      %s337 = sld [smem:[#allocation2]]
      %vm338 = vcmp.ge.f32.partialorder %v307, 0.0
      %vm339 = vcmp.ge.f32.partialorder %v310, 0.0
      %vm340 = vcmp.ge.f32.partialorder %v315, 0.0
      %vm341 = vcmp.ge.f32.partialorder %v318, 0.0
      %vm342 = vcmp.ge.f32.partialorder %v323, 0.0
      %vm343 = vcmp.ge.f32.partialorder %v326, 0.0
      %vm344 = vcmp.ge.f32.partialorder %v331, 0.0
      %vm345 = vcmp.ge.f32.partialorder %v334, 0.0
      %v346 = vstv %s337
      %v347 = vmul.f32 %v346, %v307
      %v348 = vmul.f32 %v346, %v310
      %v349 = vmul.f32 %v346, %v315
      %v350 = vmul.f32 %v346, %v318
      %v351 = vmul.f32 %v346, %v323
      %v352 = vmul.f32 %v346, %v326
      %v353 = vmul.f32 %v346, %v331
      %v354 = vmul.f32 %v346, %v334
      %v355 = vsel %vm338, %v307, %v347
      %v356 = vsel %vm339, %v310, %v348
      %v357 = vsel %vm340, %v315, %v349
      %v358 = vsel %vm341, %v318, %v350
      %v359 = vsel %vm342, %v323, %v351
      %v360 = vsel %vm343, %v326, %v352
      %v361 = vsel %vm344, %v331, %v353
      %v362 = vsel %vm345, %v334, %v354
      %v363 = vpack.c.bf16 %v356, %v355
      %v364 = vpack.c.bf16 %v358, %v357
      %v365 = vpack.c.bf16 %v360, %v359
      %v366 = vpack.c.bf16 %v362, %v361
      %v371 = vunpack.c.l.b16 %v363
      %v372 = vunpack.c.h.b16 %v363
      %v373 = vunpack.c.l.b16 %v364
      %v374 = vunpack.c.h.b16 %v364
      %v375 = vunpack.c.l.b16 %v365
      %v376 = vunpack.c.h.b16 %v365
      %v377 = vunpack.c.l.b16 %v366
      %v378 = vunpack.c.h.b16 %v366
      %v379 = vpack.c.b16 %v371, %v371
      %v380 = vpack.c.b16 %v372, %v372
      %v381 = vpack.c.b16 %v373, %v373
      %v382 = vpack.c.b16 %v374, %v374
      %v383 = vpack.c.b16 %v375, %v375
      %v384 = vpack.c.b16 %v376, %v376
      %v385 = vpack.c.b16 %v377, %v377
      %v386 = vpack.c.b16 %v378, %v378
      %vm395 = vcmask 60416
      %396 = vst.msk [vmem:[%s173] sm:$0xf] %vm395, %v379
      %397 = vst.msk [vmem:[%s173 + $0x4] sm:$0xf] %vm395, %v380
      %398 = vst.msk [vmem:[%s173 + $0x8] sm:$0xf] %vm395, %v381
      %399 = vst.msk [vmem:[%s173 + $0xc] sm:$0xf] %vm395, %v382
      %400 = vst.msk [vmem:[%s173 + $0x10] sm:$0xf] %vm395, %v383
      %401 = vst.msk [vmem:[%s173 + $0x14] sm:$0xf] %vm395, %v384
      %402 = vst.msk [vmem:[%s173 + $0x18] sm:$0xf] %vm395, %v385
      %403 = vst.msk [vmem:[%s173 + $0x1c] sm:$0xf] %vm395, %v386
      %s404 = smul.u32 8, %s15
      %p405 = scmp.lt.s32.totalorder %s404, 15
      %s406 = scalar_select %p405, %s404, 15
      %s407 = smul.addr %s406, 4
      %s408 = scalar_lea.vmem %s3, %s407
      // Predicated region
      $region33: #{_lambda_.16} parent=31 // pred_check
        %p409 = pneg %p101
      $region34: #{_lambda_.16} parent=31 // pred_check_branch
        %411 = sbr.rel (%p409) target = $region36
      $region35: #{_lambda_.16} parent=31 // pred_region
        %s412 = smul.u32 8, %s15
      $region36: #{_lambda_.16} parent=31 // pred_fallthru
        _
    $region32: #{_lambda_.16} parent=5 // pred_fallthru
      _
    %p413 = scmp.le.s32.totalorder 2, %s10
    // Predicated region
    $region37: #{_lambda_.16} parent=5 // pred_check
      %p414 = pneg %p413
    $region38: #{_lambda_.16} parent=5 // pred_check_branch
      %416 = sbr.rel (%p414) target = $region40
    $region39: #{_lambda_.16} parent=5 // pred_region
      %s417 = ssub.s32 %s10, 2
      // Predicated region
      $region41: #{_lambda_.16} parent=39 // pred_check
        %p418 = pneg %p107
      $region42: #{_lambda_.16} parent=39 // pred_check_branch
        %420 = sbr.rel (%p418) target = $region44
      $region43: #{_lambda_.16} parent=39 // pred_region
        %s421 = smul.u32 8, %s16
        %p422 = scmp.lt.s32.totalorder %s421, 15
        %s423 = scalar_select %p422, %s421, 15
        %s424 = smul.addr %s423, 4
        %s425 = scalar_lea.vmem %s3, %s424
      $region44: #{_lambda_.16} parent=39 // pred_fallthru
        _
    $region40: #{_lambda_.16} parent=5 // pred_fallthru
      _
  $region6: #{_lambda_.16} parent=0 // loop_footer
    %s14 = sadd.s32 1, %s10
  $region7: #{_lambda_.16} parent=0 // loop_footer_branch
    %9 = sbr.rel target = $region3
  $region8: #{_lambda_.16} parent=0 // loop_exit
    _

// kernel: _lambda_.17
$region0: #{_lambda_.17}
  #allocation0 [shape = 'u32[]', space=smem, size = 0x4, offset = 0x4, fixed_abs, tag = 'smem constant byte address 0x4 - core index']
  #allocation1 [shape = 'u32[144,128]{1,0:T(1,128)}', space=vmem, size = 0x12000, scoped, tag = 'internal scratch']
  #allocation2 [shape = 'f32[1]{0:T(128)S(6)}', space=smem, size = 0x200, scoped, tag = 'scoped memory for _lambda_.17']
  %s0 = inlined_call_operand.vmem [shape: bf16[128,128], index: 0, kind: input, shape index: {}]
  %s1 = inlined_call_operand.vmem [shape: bf16[128,128], index: 1, kind: input, shape index: {}]
  %s2 = inlined_call_operand.<no memory space> [shape: f32[1], index: 2, kind: input, shape index: {}]
  %s3 = inlined_call_operand.vmem [shape: bf16[128,8], index: 3, kind: input, shape index: {}]
  %s4 = inlined_call_operand.vmem [shape: bf16[128,8], index: 4, kind: output, shape index: {}]
  %s5 = sld [smem:[#allocation0]]
  $region49: #{_lambda_.17} parent=0
    _
  %s7 = ssub.s32 1, %s5
  %s8 = scalar_select 0, %s7, %s5
  %9 = sst [smem:[#allocation2]] %s2
  loop: start=0, step=1, limit=4
  $region2: #{_lambda_.17} parent=0 // loop_pre_header
    _
  $region3: #{_lambda_.17} parent=0 // loop_header
    %s11 = sphi 0, %s15
    %p12 = scmp.ge.s32.totalorder %s11, 4
    %s21 = sphi 0, %s23
    %s24 = sphi 0, %s21
    %s25 = sphi 0, %s24
    %s41 = sphi 0, %s25
    %s45 = sphi 0, %s45
    %s47 = sphi 0, %s45
    %s48 = sphi 0, %s47
    %s62 = sphi 0, %s48
    %s66 = sphi 0, %s66
    %s68 = sphi 0, %s66
    %s69 = sphi 0, %s68
    %s83 = sphi 0, %s69
    %s89 = sphi 0, %s91
    %s92 = sphi 0, %s89
    %s93 = sphi 0, %s92
    %s109 = sphi 0, %s93
    %s115 = sphi 0, %s117
    %s118 = sphi 0, %s115
    %s119 = sphi 0, %s118
    %s135 = sphi 0, %s119
  $region4: #{_lambda_.17} parent=0 // loop_header_branch
    %14 = sbr.rel (%p12) target = $region8
  $region5: #{_lambda_.17} parent=0 // loop_body
    %s16 = ssub.s32 %s11, 1
    %s17 = ssub.s32 %s11, 2
    %s18 = sadd.s32 %s11, 1
    %s19 = ssub.s32 %s11, %s18
    %p20 = scmp.eq.s32.totalorder %s19, 0
    %s22 = sadd.s32 %s21, 1
    %s23 = scalar_select %p20, %s21, %s22
    %p26 = pneg %p20
    %p27 = scmp.eq.s32.totalorder %s11, 1
    %p28 = por %p26, %p27
    %p29 = scmp.ne.s32.totalorder %s21, %s24
    %p30 = scmp.eq.s32.totalorder %s11, 0
    %p31 = por %p29, %p30
    %p32 = scmp.ne.s32.totalorder %s21, %s24
    %p33 = scmp.eq.s32.totalorder %s16, 1
    %p34 = por %p32, %p33
    %p35 = scmp.ne.s32.totalorder %s24, %s25
    %p36 = scmp.eq.s32.totalorder %s16, 0
    %p37 = por %p35, %p36
    %p38 = scmp.ne.s32.totalorder %s24, %s25
    %p39 = scmp.eq.s32.totalorder %s17, 1
    %p40 = por %p38, %p39
    %p42 = scmp.ne.s32.totalorder %s25, %s41
    %p43 = scmp.eq.s32.totalorder %s17, 0
    %p44 = por %p42, %p43
    %s46 = sadd.s32 %s45, 1
    %p49 = scmp.eq.s32.totalorder %s11, 1
    %p50 = scmp.ne.s32.totalorder %s45, %s47
    %p51 = scmp.eq.s32.totalorder %s11, 0
    %p52 = por %p50, %p51
    %p53 = scmp.ne.s32.totalorder %s45, %s47
    %p54 = scmp.eq.s32.totalorder %s16, 1
    %p55 = por %p53, %p54
    %p56 = scmp.ne.s32.totalorder %s47, %s48
    %p57 = scmp.eq.s32.totalorder %s16, 0
    %p58 = por %p56, %p57
    %p59 = scmp.ne.s32.totalorder %s47, %s48
    %p60 = scmp.eq.s32.totalorder %s17, 1
    %p61 = por %p59, %p60
    %p63 = scmp.ne.s32.totalorder %s48, %s62
    %p64 = scmp.eq.s32.totalorder %s17, 0
    %p65 = por %p63, %p64
    %s67 = sadd.s32 %s66, 1
    %p70 = scmp.eq.s32.totalorder %s11, 1
    %p71 = scmp.ne.s32.totalorder %s66, %s68
    %p72 = scmp.eq.s32.totalorder %s11, 0
    %p73 = por %p71, %p72
    %p74 = scmp.ne.s32.totalorder %s66, %s68
    %p75 = scmp.eq.s32.totalorder %s16, 1
    %p76 = por %p74, %p75
    %p77 = scmp.ne.s32.totalorder %s68, %s69
    %p78 = scmp.eq.s32.totalorder %s16, 0
    %p79 = por %p77, %p78
    %p80 = scmp.ne.s32.totalorder %s68, %s69
    %p81 = scmp.eq.s32.totalorder %s17, 1
    %p82 = por %p80, %p81
    %p84 = scmp.ne.s32.totalorder %s69, %s83
    %p85 = scmp.eq.s32.totalorder %s17, 0
    %p86 = por %p84, %p85
    %s87 = ssub.s32 %s11, %s18
    %p88 = scmp.eq.s32.totalorder %s87, 0
    %s90 = sadd.s32 %s89, 1
    %s91 = scalar_select %p88, %s89, %s90
    %p94 = pneg %p88
    %p95 = scmp.eq.s32.totalorder %s11, 1
    %p96 = por %p94, %p95
    %p97 = scmp.ne.s32.totalorder %s89, %s92
    %p98 = scmp.eq.s32.totalorder %s11, 0
    %p99 = por %p97, %p98
    %p100 = scmp.ne.s32.totalorder %s89, %s92
    %p101 = scmp.eq.s32.totalorder %s16, 1
    %p102 = por %p100, %p101
    %p103 = scmp.ne.s32.totalorder %s92, %s93
    %p104 = scmp.eq.s32.totalorder %s16, 0
    %p105 = por %p103, %p104
    %p106 = scmp.ne.s32.totalorder %s92, %s93
    %p107 = scmp.eq.s32.totalorder %s17, 1
    %p108 = por %p106, %p107
    %p110 = scmp.ne.s32.totalorder %s93, %s109
    %p111 = scmp.eq.s32.totalorder %s17, 0
    %p112 = por %p110, %p111
    %s113 = ssub.s32 %s11, %s18
    %p114 = scmp.eq.s32.totalorder %s113, 0
    %s116 = sadd.s32 %s115, 1
    %s117 = scalar_select %p114, %s115, %s116
    %p120 = pneg %p114
    %p121 = scmp.eq.s32.totalorder %s11, 1
    %p122 = por %p120, %p121
    %p123 = scmp.ne.s32.totalorder %s115, %s118
    %p124 = scmp.eq.s32.totalorder %s11, 0
    %p125 = por %p123, %p124
    %p126 = scmp.ne.s32.totalorder %s115, %s118
    %p127 = scmp.eq.s32.totalorder %s16, 1
    %p128 = por %p126, %p127
    %p129 = scmp.ne.s32.totalorder %s118, %s119
    %p130 = scmp.eq.s32.totalorder %s16, 0
    %p131 = por %p129, %p130
    %p132 = scmp.ne.s32.totalorder %s118, %s119
    %p133 = scmp.eq.s32.totalorder %s17, 1
    %p134 = por %p132, %p133
    %p136 = scmp.ne.s32.totalorder %s119, %s135
    %p137 = scmp.eq.s32.totalorder %s17, 0
    %p138 = por %p136, %p137
    %p139 = scmp.le.s32.totalorder 1, %s11
    %p140 = scmp.lt.s32.totalorder %s11, 3
    %p141 = pnand %p139, %p140
    %p142 = pneg %p141
    // Predicated region
    $region9: #{_lambda_.17} parent=5 // pred_check
      _
    $region10: #{_lambda_.17} parent=5 // pred_check_branch
      %144 = sbr.rel (%p141) target = $region12
    $region11: #{_lambda_.17} parent=5 // pred_region
      %s145 = ssub.s32 %s11, 1
      // Predicated region
      $region13: #{_lambda_.17} parent=11 // pred_check
        %p146 = pneg %p58
      $region14: #{_lambda_.17} parent=11 // pred_check_branch
        %148 = sbr.rel (%p146) target = $region16
      $region15: #{_lambda_.17} parent=11 // pred_region
        _
      $region16: #{_lambda_.17} parent=11 // pred_fallthru
        _
      // Predicated region
      $region17: #{_lambda_.17} parent=11 // pred_check
        %p149 = pneg %p79
      $region18: #{_lambda_.17} parent=11 // pred_check_branch
        %151 = sbr.rel (%p149) target = $region20
      $region19: #{_lambda_.17} parent=11 // pred_region
        _
      $region20: #{_lambda_.17} parent=11 // pred_fallthru
        _
    $region12: #{_lambda_.17} parent=5 // pred_fallthru
      _
    %p152 = scmp.lt.s32.totalorder %s11, 2
    // Predicated region
    $region21: #{_lambda_.17} parent=5 // pred_check
      %p153 = pneg %p152
    $region22: #{_lambda_.17} parent=5 // pred_check_branch
      %155 = sbr.rel (%p153) target = $region24
    $region23: #{_lambda_.17} parent=5 // pred_region
      // Predicated region
      $region25: #{_lambda_.17} parent=23 // pred_check
        %p156 = pneg %p31
      $region26: #{_lambda_.17} parent=23 // pred_check_branch
        %158 = sbr.rel (%p156) target = $region28
      $region27: #{_lambda_.17} parent=23 // pred_region
        %s159 = smul.u32 8, %s11
        %p160 = scmp.lt.s32.totalorder %s159, 15
        %s161 = scalar_select %p160, %s159, 15
        %s162 = smul.addr %s161, 4
        %s163 = scalar_lea.vmem %s0, %s162
        %s164 = smul.u32 8, %s11
      $region28: #{_lambda_.17} parent=23 // pred_fallthru
        _
      // Predicated region
      $region29: #{_lambda_.17} parent=23 // pred_check
        %p165 = pneg %p99
      $region30: #{_lambda_.17} parent=23 // pred_check_branch
        %167 = sbr.rel (%p165) target = $region32
      $region31: #{_lambda_.17} parent=23 // pred_region
        %s168 = smul.u32 8, %s11
        %p169 = scmp.lt.s32.totalorder %s168, 15
        %s170 = scalar_select %p169, %s168, 15
        %s171 = smul.addr %s170, 4
        %s172 = scalar_lea.vmem %s3, %s171
        %s173 = smul.u32 8, %s11
      $region32: #{_lambda_.17} parent=23 // pred_fallthru
        _
    $region24: #{_lambda_.17} parent=5 // pred_fallthru
      _
    %p174 = scmp.le.s32.totalorder 1, %s11
    %p175 = scmp.lt.s32.totalorder %s11, 3
    %p176 = pnand %p174, %p175
    %p177 = pneg %p176
    // Predicated region
    $region33: #{_lambda_.17} parent=5 // pred_check
      _
    $region34: #{_lambda_.17} parent=5 // pred_check_branch
      %179 = sbr.rel (%p176) target = $region36
    $region35: #{_lambda_.17} parent=5 // pred_region
      %s180 = ssub.s32 %s11, 1
      %s181 = smul.u32 8, %s16
      %p182 = scmp.lt.s32.totalorder %s181, 15
      %s183 = scalar_select %p182, %s181, 15
      %s184 = smul.addr %s183, 4
      %s185 = scalar_lea.vmem %s0, %s184
      %p186 = pneg %p37
      %p187 = pneg %p34
      %p188 = pneg %p58
      %p189 = pneg %p55
      %p190 = pneg %p79
      %p191 = pneg %p76
      %s192 = smul.u32 8, %s16
      %p193 = scmp.lt.s32.totalorder %s192, 15
      %s194 = scalar_select %p193, %s192, 15
      %s195 = smul.addr %s194, 4
      %s196 = scalar_lea.vmem %s3, %s195
      %p197 = pneg %p105
      %p198 = pneg %p102
      %p199 = pneg %p131
      %p200 = pneg %p128
      %s201 = smul.u32 8, %s16
      %p202 = scmp.lt.s32.totalorder %s201, 15
      %s203 = scalar_select %p202, %s201, 15
      %s204 = smul.addr %s203, 4
      %s205 = scalar_lea.vmem %s4, %s204
      %s206 = smul.u32 8, %s16
      %p207 = scmp.lt.s32.totalorder %s206, 15
      %s208 = scalar_select %p207, %s206, 15
      %s209 = smul.addr %s208, 4
      %s210 = scalar_lea.vmem %s0, %s209
      %s211 = smul.u32 8, %s16
      %s212 = smul.u32 8, %s16
      %p213 = scmp.lt.s32.totalorder %s212, 15
      %s214 = scalar_select %p213, %s212, 15
      %s215 = smul.addr %s214, 4
      %s216 = scalar_lea.vmem %s3, %s215
      %s217 = smul.u32 8, %s16
      %s218 = smul.u32 8, %s16
      %p219 = scmp.lt.s32.totalorder %s218, 15
      %s220 = scalar_select %p219, %s218, 15
      %s221 = smul.addr %s220, 4
      %s222 = scalar_lea.vmem %s4, %s221
      %s223 = smul.u32 8, %s16
      %v225 = vld [vmem:[%s210] sm:$0xf]
      %v226 = vld [vmem:[%s210 + $0x4] sm:$0xf]
      %v227 = vld [vmem:[%s210 + $0x8] sm:$0xf]
      %v228 = vld [vmem:[%s210 + $0xc] sm:$0xf]
      %v229 = vld [vmem:[%s210 + $0x10] sm:$0xf]
      %v230 = vld [vmem:[%s210 + $0x14] sm:$0xf]
      %v231 = vld [vmem:[%s210 + $0x18] sm:$0xf]
      %v232 = vld [vmem:[%s210 + $0x1c] sm:$0xf]
      %v233 = vld [vmem:[%s1] sm:$0xf]
      %v234 = vld [vmem:[%s1 + $0x4] sm:$0xf]
      %v235 = vld [vmem:[%s1 + $0x8] sm:$0xf]
      %v236 = vld [vmem:[%s1 + $0xc] sm:$0xf]
      %v237 = vld [vmem:[%s1 + $0x10] sm:$0xf]
      %v238 = vld [vmem:[%s1 + $0x14] sm:$0xf]
      %v239 = vld [vmem:[%s1 + $0x18] sm:$0xf]
      %v240 = vld [vmem:[%s1 + $0x1c] sm:$0xf]
      %v241 = vld [vmem:[%s1 + $0x20] sm:$0xf]
      %v242 = vld [vmem:[%s1 + $0x24] sm:$0xf]
      %v243 = vld [vmem:[%s1 + $0x28] sm:$0xf]
      %v244 = vld [vmem:[%s1 + $0x2c] sm:$0xf]
      %v245 = vld [vmem:[%s1 + $0x30] sm:$0xf]
      %v246 = vld [vmem:[%s1 + $0x34] sm:$0xf]
      %v247 = vld [vmem:[%s1 + $0x38] sm:$0xf]
      %v248 = vld [vmem:[%s1 + $0x3c] sm:$0xf]
      %v257 = vunpack.c.l.b16 %v225
      %v258 = vunpack.c.l.b16 %v226
      %v259 = vunpack.c.l.b16 %v227
      %v260 = vunpack.c.l.b16 %v228
      %v261 = vunpack.c.l.b16 %v229
      %v262 = vunpack.c.l.b16 %v230
      %v263 = vunpack.c.l.b16 %v231
      %v264 = vunpack.c.l.b16 %v232
      %v265 = vpack.c.b16 %v258, %v257
      %v266 = vpack.c.b16 %v260, %v259
      %v267 = vpack.c.b16 %v262, %v261
      %v268 = vpack.c.b16 %v264, %v263
      %v289 = vunpack.c.l.b16 %v233
      %v290 = vunpack.c.l.b16 %v234
      %v291 = vunpack.c.l.b16 %v235
      %v292 = vunpack.c.l.b16 %v236
      %v293 = vunpack.c.l.b16 %v237
      %v294 = vunpack.c.l.b16 %v238
      %v295 = vunpack.c.l.b16 %v239
      %v296 = vunpack.c.l.b16 %v240
      %v297 = vunpack.c.l.b16 %v241
      %v298 = vunpack.c.l.b16 %v242
      %v299 = vunpack.c.l.b16 %v243
      %v300 = vunpack.c.l.b16 %v244
      %v301 = vunpack.c.l.b16 %v245
      %v302 = vunpack.c.l.b16 %v246
      %v303 = vunpack.c.l.b16 %v247
      %v304 = vunpack.c.l.b16 %v248
      %v305 = vpack.c.b16 %v290, %v289
      %v306 = vpack.c.b16 %v292, %v291
      %v307 = vpack.c.b16 %v294, %v293
      %v308 = vpack.c.b16 %v296, %v295
      %v309 = vpack.c.b16 %v298, %v297
      %v310 = vpack.c.b16 %v300, %v299
      %v311 = vpack.c.b16 %v302, %v301
      %v312 = vpack.c.b16 %v304, %v303
      %321 = vmatprep.subr.bf16.mxu0 0
      %322 = vmatpush1.bf16.msra.mxu0 %v305
      %323 = vmatprep.subr.bf16.mxu0 0
      %324 = vmatpush1.bf16.msra.mxu0 %v306
      %325 = vmatprep.subr.bf16.mxu0 0
      %326 = vmatpush1.bf16.msra.mxu0 %v307
      %327 = vmatprep.subr.bf16.mxu0 0
      %328 = vmatpush1.bf16.msra.mxu0 %v308
      %329 = vmatprep.subr.bf16.mxu0 0
      %330 = vmatpush1.bf16.msra.mxu0 %v309
      %331 = vmatprep.subr.bf16.mxu0 0
      %332 = vmatpush1.bf16.msra.mxu0 %v310
      %333 = vmatprep.subr.bf16.mxu0 0
      %334 = vmatpush1.bf16.msra.mxu0 %v311
      %335 = vmatprep.subr.bf16.mxu0 0
      %336 = vmatpush1.bf16.msra.mxu0 %v312
      %337 = vmatprep.subr.bf16.mxu0 0
      %338 = vmatpush1.bf16.msra.mxu0 0
      %339 = vmatprep.subr.bf16.mxu0 0
      %340 = vmatpush1.bf16.msra.mxu0 0
      %341 = vmatprep.subr.bf16.mxu0 0
      %342 = vmatpush1.bf16.msra.mxu0 0
      %343 = vmatprep.subr.bf16.mxu0 0
      %344 = vmatpush1.bf16.msra.mxu0 0
      %345 = vmatprep.subr.bf16.mxu0 0
      %346 = vmatpush1.bf16.msra.mxu0 0
      %347 = vmatprep.subr.bf16.mxu0 0
      %348 = vmatpush1.bf16.msra.mxu0 0
      %349 = vmatprep.subr.bf16.mxu0 0
      %350 = vmatpush1.bf16.msra.mxu0 0
      %351 = vmatprep.subr.bf16.mxu0 0
      %352 = vmatpush1.bf16.msra.mxu0 0
      %353 = vmatprep.mubr.bf16.mxu0 0
      %354 = vmatmul.mubr.bf16.gmra.mrb[0].mxu0 %v265
      %v355 = vpop.f32.mrb[0].mxu0
      %v356 = vadd.f32 0.0, %v355
      %v357 = vpop.f32.mrb[0].mxu0
      %v358 = vpop.f32.mrb[0].mxu0
      %v359 = vadd.f32 0.0, %v358
      %v360 = vpop.f32.mrb[0].mxu0
      %361 = vmatprep.mubr.bf16.mxu0 0
      %362 = vmatmul.mubr.bf16.gmra.mrb[0].mxu0 %v266
      %v363 = vpop.f32.mrb[0].mxu0
      %v364 = vadd.f32 0.0, %v363
      %v365 = vpop.f32.mrb[0].mxu0
      %v366 = vpop.f32.mrb[0].mxu0
      %v367 = vadd.f32 0.0, %v366
      %v368 = vpop.f32.mrb[0].mxu0
      %369 = vmatprep.mubr.bf16.mxu0 0
      %370 = vmatmul.mubr.bf16.gmra.mrb[0].mxu0 %v267
      %v371 = vpop.f32.mrb[0].mxu0
      %v372 = vadd.f32 0.0, %v371
      %v373 = vpop.f32.mrb[0].mxu0
      %v374 = vpop.f32.mrb[0].mxu0
      %v375 = vadd.f32 0.0, %v374
      %v376 = vpop.f32.mrb[0].mxu0
      %377 = vmatprep.mubr.bf16.mxu0 0
      %378 = vmatmul.mubr.bf16.gmra.mrb[0].mxu0 %v268
      %v379 = vpop.f32.mrb[0].mxu0
      %v380 = vadd.f32 0.0, %v379
      %v381 = vpop.f32.mrb[0].mxu0
      %v382 = vpop.f32.mrb[0].mxu0
      %v383 = vadd.f32 0.0, %v382
      %v384 = vpop.f32.mrb[0].mxu0
      %385 = vdwg.mxu0
      %s386 = sld [smem:[#allocation2]]
      %vm387 = vcmp.ge.f32.partialorder %v356, 0.0
      %vm388 = vcmp.ge.f32.partialorder %v359, 0.0
      %vm389 = vcmp.ge.f32.partialorder %v364, 0.0
      %vm390 = vcmp.ge.f32.partialorder %v367, 0.0
      %vm391 = vcmp.ge.f32.partialorder %v372, 0.0
      %vm392 = vcmp.ge.f32.partialorder %v375, 0.0
      %vm393 = vcmp.ge.f32.partialorder %v380, 0.0
      %vm394 = vcmp.ge.f32.partialorder %v383, 0.0
      %v395 = vstv %s386
      %v396 = vmul.f32 %v395, %v356
      %v397 = vmul.f32 %v395, %v359
      %v398 = vmul.f32 %v395, %v364
      %v399 = vmul.f32 %v395, %v367
      %v400 = vmul.f32 %v395, %v372
      %v401 = vmul.f32 %v395, %v375
      %v402 = vmul.f32 %v395, %v380
      %v403 = vmul.f32 %v395, %v383
      %v404 = vsel %vm387, %v356, %v396
      %v405 = vsel %vm388, %v359, %v397
      %v406 = vsel %vm389, %v364, %v398
      %v407 = vsel %vm390, %v367, %v399
      %v408 = vsel %vm391, %v372, %v400
      %v409 = vsel %vm392, %v375, %v401
      %v410 = vsel %vm393, %v380, %v402
      %v411 = vsel %vm394, %v383, %v403
      %v412 = vld [vmem:[%s216] sm:$0xf]
      %v413 = vld [vmem:[%s216 + $0x4] sm:$0xf]
      %v414 = vld [vmem:[%s216 + $0x8] sm:$0xf]
      %v415 = vld [vmem:[%s216 + $0xc] sm:$0xf]
      %v416 = vld [vmem:[%s216 + $0x10] sm:$0xf]
      %v417 = vld [vmem:[%s216 + $0x14] sm:$0xf]
      %v418 = vld [vmem:[%s216 + $0x18] sm:$0xf]
      %v419 = vld [vmem:[%s216 + $0x1c] sm:$0xf]
      %v420 = vunpack.c.l.bf16 %v412
      %v421 = vunpack.c.l.bf16 %v413
      %v422 = vunpack.c.l.bf16 %v414
      %v423 = vunpack.c.l.bf16 %v415
      %v424 = vunpack.c.l.bf16 %v416
      %v425 = vunpack.c.l.bf16 %v417
      %v426 = vunpack.c.l.bf16 %v418
      %v427 = vunpack.c.l.bf16 %v419
      %v428 = vadd.f32 %v404, %v420
      %v429 = vadd.f32 %v405, %v421
      %v430 = vadd.f32 %v406, %v422
      %v431 = vadd.f32 %v407, %v423
      %v432 = vadd.f32 %v408, %v424
      %v433 = vadd.f32 %v409, %v425
      %v434 = vadd.f32 %v410, %v426
      %v435 = vadd.f32 %v411, %v427
      %v436 = vpack.c.bf16 %v429, %v428
      %v437 = vpack.c.bf16 %v431, %v430
      %v438 = vpack.c.bf16 %v433, %v432
      %v439 = vpack.c.bf16 %v435, %v434
      %v444 = vunpack.c.l.b16 %v436
      %v445 = vunpack.c.h.b16 %v436
      %v446 = vunpack.c.l.b16 %v437
      %v447 = vunpack.c.h.b16 %v437
      %v448 = vunpack.c.l.b16 %v438
      %v449 = vunpack.c.h.b16 %v438
      %v450 = vunpack.c.l.b16 %v439
      %v451 = vunpack.c.h.b16 %v439
      %v452 = vpack.c.b16 %v444, %v444
      %v453 = vpack.c.b16 %v445, %v445
      %v454 = vpack.c.b16 %v446, %v446
      %v455 = vpack.c.b16 %v447, %v447
      %v456 = vpack.c.b16 %v448, %v448
      %v457 = vpack.c.b16 %v449, %v449
      %v458 = vpack.c.b16 %v450, %v450
      %v459 = vpack.c.b16 %v451, %v451
      %vm468 = vcmask 60416
      %469 = vst.msk [vmem:[%s222] sm:$0xf] %vm468, %v452
      %470 = vst.msk [vmem:[%s222 + $0x4] sm:$0xf] %vm468, %v453
      %471 = vst.msk [vmem:[%s222 + $0x8] sm:$0xf] %vm468, %v454
      %472 = vst.msk [vmem:[%s222 + $0xc] sm:$0xf] %vm468, %v455
      %473 = vst.msk [vmem:[%s222 + $0x10] sm:$0xf] %vm468, %v456
      %474 = vst.msk [vmem:[%s222 + $0x14] sm:$0xf] %vm468, %v457
      %475 = vst.msk [vmem:[%s222 + $0x18] sm:$0xf] %vm468, %v458
      %476 = vst.msk [vmem:[%s222 + $0x1c] sm:$0xf] %vm468, %v459
      %s477 = smul.u32 8, %s16
      %p478 = scmp.lt.s32.totalorder %s477, 15
      %s479 = scalar_select %p478, %s477, 15
      %s480 = smul.addr %s479, 4
      %s481 = scalar_lea.vmem %s4, %s480
      // Predicated region
      $region37: #{_lambda_.17} parent=35 // pred_check
        %p482 = pneg %p128
      $region38: #{_lambda_.17} parent=35 // pred_check_branch
        %484 = sbr.rel (%p482) target = $region40
      $region39: #{_lambda_.17} parent=35 // pred_region
        %s485 = smul.u32 8, %s16
      $region40: #{_lambda_.17} parent=35 // pred_fallthru
        _
    $region36: #{_lambda_.17} parent=5 // pred_fallthru
      _
    %p486 = scmp.le.s32.totalorder 2, %s11
    // Predicated region
    $region41: #{_lambda_.17} parent=5 // pred_check
      %p487 = pneg %p486
    $region42: #{_lambda_.17} parent=5 // pred_check_branch
      %489 = sbr.rel (%p487) target = $region44
    $region43: #{_lambda_.17} parent=5 // pred_region
      %s490 = ssub.s32 %s11, 2
      // Predicated region
      $region45: #{_lambda_.17} parent=43 // pred_check
        %p491 = pneg %p134
      $region46: #{_lambda_.17} parent=43 // pred_check_branch
        %493 = sbr.rel (%p491) target = $region48
      $region47: #{_lambda_.17} parent=43 // pred_region
        %s494 = smul.u32 8, %s17
        %p495 = scmp.lt.s32.totalorder %s494, 15
        %s496 = scalar_select %p495, %s494, 15
        %s497 = smul.addr %s496, 4
        %s498 = scalar_lea.vmem %s4, %s497
      $region48: #{_lambda_.17} parent=43 // pred_fallthru
        _
    $region44: #{_lambda_.17} parent=5 // pred_fallthru
      _
  $region6: #{_lambda_.17} parent=0 // loop_footer
    %s15 = sadd.s32 1, %s11
  $region7: #{_lambda_.17} parent=0 // loop_footer_branch
    %10 = sbr.rel target = $region3
  $region8: #{_lambda_.17} parent=0 // loop_exit
    _

// kernel: _lambda_.18
$region0: #{_lambda_.18}
  #allocation0 [shape = 'u32[]', space=smem, size = 0x4, offset = 0x4, fixed_abs, tag = 'smem constant byte address 0x4 - core index']
  #allocation1 [shape = 'u32[144,128]{1,0:T(1,128)}', space=vmem, size = 0x12000, scoped, tag = 'internal scratch']
  #allocation2 [shape = 'f32[1]{0:T(128)S(6)}', space=smem, size = 0x200, scoped, tag = 'scoped memory for _lambda_.18']
  %s0 = inlined_call_operand.vmem [shape: bf16[32,128], index: 0, kind: input, shape index: {}]
  %s1 = inlined_call_operand.vmem [shape: bf16[128,128], index: 1, kind: input, shape index: {}]
  %s2 = inlined_call_operand.<no memory space> [shape: f32[1], index: 2, kind: input, shape index: {}]
  %s3 = inlined_call_operand.vmem [shape: bf16[32,16], index: 3, kind: output, shape index: {}]
  %s4 = sld [smem:[#allocation0]]
  $region22: #{_lambda_.18} parent=0
    _
  %s6 = ssub.s32 1, %s4
  %s7 = scalar_select 0, %s6, %s4
  %8 = sst [smem:[#allocation2]] %s2
  // Predicated region
  $region2: #{_lambda_.18} parent=0 // pred_check
    _
  $region3: #{_lambda_.18} parent=0 // pred_check_branch
    %10 = sbr.rel (0) target = $region5
  $region4: #{_lambda_.18} parent=0 // pred_region
    _
  $region5: #{_lambda_.18} parent=0 // pred_fallthru
    _
  // Predicated region
  $region6: #{_lambda_.18} parent=0 // pred_check
    _
  $region7: #{_lambda_.18} parent=0 // pred_check_branch
    %12 = sbr.rel (0) target = $region9
  $region8: #{_lambda_.18} parent=0 // pred_region
    _
  $region9: #{_lambda_.18} parent=0 // pred_fallthru
    _
  // Predicated region
  $region10: #{_lambda_.18} parent=0 // pred_check
    _
  $region11: #{_lambda_.18} parent=0 // pred_check_branch
    %14 = sbr.rel (0) target = $region13
  $region12: #{_lambda_.18} parent=0 // pred_region
    _
  $region13: #{_lambda_.18} parent=0 // pred_fallthru
    _
  %v16 = vld [vmem:[%s0] sm:$0xf]
  %v17 = vld [vmem:[%s0 + $0x4] sm:$0xf]
  %v18 = vld [vmem:[%s0 + $0x8] sm:$0xf]
  %v19 = vld [vmem:[%s0 + $0xc] sm:$0xf]
  %v20 = vld [vmem:[%s1] sm:$0xf]
  %v21 = vld [vmem:[%s1 + $0x4] sm:$0xf]
  %v22 = vld [vmem:[%s1 + $0x8] sm:$0xf]
  %v23 = vld [vmem:[%s1 + $0xc] sm:$0xf]
  %v24 = vld [vmem:[%s1 + $0x10] sm:$0xf]
  %v25 = vld [vmem:[%s1 + $0x14] sm:$0xf]
  %v26 = vld [vmem:[%s1 + $0x18] sm:$0xf]
  %v27 = vld [vmem:[%s1 + $0x1c] sm:$0xf]
  %v28 = vld [vmem:[%s1 + $0x20] sm:$0xf]
  %v29 = vld [vmem:[%s1 + $0x24] sm:$0xf]
  %v30 = vld [vmem:[%s1 + $0x28] sm:$0xf]
  %v31 = vld [vmem:[%s1 + $0x2c] sm:$0xf]
  %v32 = vld [vmem:[%s1 + $0x30] sm:$0xf]
  %v33 = vld [vmem:[%s1 + $0x34] sm:$0xf]
  %v34 = vld [vmem:[%s1 + $0x38] sm:$0xf]
  %v35 = vld [vmem:[%s1 + $0x3c] sm:$0xf]
  %v40 = vunpack.c.l.b16 %v16
  %v41 = vunpack.c.l.b16 %v17
  %v42 = vunpack.c.l.b16 %v18
  %v43 = vunpack.c.l.b16 %v19
  %v44 = vpack.c.b16 %v41, %v40
  %v45 = vpack.c.b16 %v43, %v42
  %v64 = vunpack.c.l.b16 %v20
  %v65 = vunpack.c.l.b16 %v21
  %v66 = vunpack.c.l.b16 %v22
  %v67 = vunpack.c.l.b16 %v23
  %v68 = vunpack.c.l.b16 %v24
  %v69 = vunpack.c.l.b16 %v25
  %v70 = vunpack.c.l.b16 %v26
  %v71 = vunpack.c.l.b16 %v27
  %v72 = vunpack.c.l.b16 %v28
  %v73 = vunpack.c.l.b16 %v29
  %v74 = vunpack.c.l.b16 %v30
  %v75 = vunpack.c.l.b16 %v31
  %v76 = vunpack.c.l.b16 %v32
  %v77 = vunpack.c.l.b16 %v33
  %v78 = vunpack.c.l.b16 %v34
  %v79 = vunpack.c.l.b16 %v35
  %v80 = vpack.c.b16 %v65, %v64
  %v81 = vpack.c.b16 %v67, %v66
  %v82 = vpack.c.b16 %v69, %v68
  %v83 = vpack.c.b16 %v71, %v70
  %v84 = vpack.c.b16 %v73, %v72
  %v85 = vpack.c.b16 %v75, %v74
  %v86 = vpack.c.b16 %v77, %v76
  %v87 = vpack.c.b16 %v79, %v78
  %96 = vmatprep.subr.bf16.mxu0 0
  %97 = vmatpush1.bf16.msra.mxu0 %v80
  %98 = vmatprep.subr.bf16.mxu0 0
  %99 = vmatpush1.bf16.msra.mxu0 %v81
  %100 = vmatprep.subr.bf16.mxu0 0
  %101 = vmatpush1.bf16.msra.mxu0 %v82
  %102 = vmatprep.subr.bf16.mxu0 0
  %103 = vmatpush1.bf16.msra.mxu0 %v83
  %104 = vmatprep.subr.bf16.mxu0 0
  %105 = vmatpush1.bf16.msra.mxu0 %v84
  %106 = vmatprep.subr.bf16.mxu0 0
  %107 = vmatpush1.bf16.msra.mxu0 %v85
  %108 = vmatprep.subr.bf16.mxu0 0
  %109 = vmatpush1.bf16.msra.mxu0 %v86
  %110 = vmatprep.subr.bf16.mxu0 0
  %111 = vmatpush1.bf16.msra.mxu0 %v87
  %112 = vmatprep.subr.bf16.mxu0 0
  %113 = vmatpush1.bf16.msra.mxu0 0
  %114 = vmatprep.subr.bf16.mxu0 0
  %115 = vmatpush1.bf16.msra.mxu0 0
  %116 = vmatprep.subr.bf16.mxu0 0
  %117 = vmatpush1.bf16.msra.mxu0 0
  %118 = vmatprep.subr.bf16.mxu0 0
  %119 = vmatpush1.bf16.msra.mxu0 0
  %120 = vmatprep.subr.bf16.mxu0 0
  %121 = vmatpush1.bf16.msra.mxu0 0
  %122 = vmatprep.subr.bf16.mxu0 0
  %123 = vmatpush1.bf16.msra.mxu0 0
  %124 = vmatprep.subr.bf16.mxu0 0
  %125 = vmatpush1.bf16.msra.mxu0 0
  %126 = vmatprep.subr.bf16.mxu0 0
  %127 = vmatpush1.bf16.msra.mxu0 0
  %128 = vmatprep.mubr.bf16.mxu0 0
  %129 = vmatmul.mubr.bf16.gmra.mrb[0].mxu0 %v44
  %v130 = vpop.f32.mrb[0].mxu0
  %v131 = vadd.f32 0.0, %v130
  %v132 = vpop.f32.mrb[0].mxu0
  %v133 = vpop.f32.mrb[0].mxu0
  %v134 = vadd.f32 0.0, %v133
  %v135 = vpop.f32.mrb[0].mxu0
  %136 = vmatprep.mubr.bf16.mxu0 0
  %137 = vmatmul.mubr.bf16.gmra.mrb[0].mxu0 %v45
  %v138 = vpop.f32.mrb[0].mxu0
  %v139 = vadd.f32 0.0, %v138
  %v140 = vpop.f32.mrb[0].mxu0
  %v141 = vpop.f32.mrb[0].mxu0
  %v142 = vadd.f32 0.0, %v141
  %v143 = vpop.f32.mrb[0].mxu0
  %144 = vdwg.mxu0
  %s145 = sld [smem:[#allocation2]]
  %vm146 = vcmp.ge.f32.partialorder %v131, 0.0
  %vm147 = vcmp.ge.f32.partialorder %v134, 0.0
  %vm148 = vcmp.ge.f32.partialorder %v139, 0.0
  %vm149 = vcmp.ge.f32.partialorder %v142, 0.0
  %v150 = vstv %s145
  %v151 = vmul.f32 %v150, %v131
  %v152 = vmul.f32 %v150, %v134
  %v153 = vmul.f32 %v150, %v139
  %v154 = vmul.f32 %v150, %v142
  %v155 = vsel %vm146, %v131, %v151
  %v156 = vsel %vm147, %v134, %v152
  %v157 = vsel %vm148, %v139, %v153
  %v158 = vsel %vm149, %v142, %v154
  %v159 = vpack.c.bf16 %v156, %v155
  %v160 = vpack.c.bf16 %v158, %v157
  %v163 = vunpack.c.l.b16 %v159
  %v164 = vunpack.c.h.b16 %v159
  %v165 = vunpack.c.l.b16 %v160
  %v166 = vunpack.c.h.b16 %v160
  %v167 = vpack.c.b16 %v163, %v163
  %v168 = vpack.c.b16 %v164, %v164
  %v169 = vpack.c.b16 %v165, %v165
  %v170 = vpack.c.b16 %v166, %v166
  %vm175 = vcmask 125952
  %176 = vst.msk [vmem:[%s3] sm:$0xf] %vm175, %v167
  %177 = vst.msk [vmem:[%s3 + $0x4] sm:$0xf] %vm175, %v168
  %178 = vst.msk [vmem:[%s3 + $0x8] sm:$0xf] %vm175, %v169
  %179 = vst.msk [vmem:[%s3 + $0xc] sm:$0xf] %vm175, %v170
  // Predicated region
  $region14: #{_lambda_.18} parent=0 // pred_check
    _
  $region15: #{_lambda_.18} parent=0 // pred_check_branch
    %181 = sbr.rel (0) target = $region17
  $region16: #{_lambda_.18} parent=0 // pred_region
    _
  $region17: #{_lambda_.18} parent=0 // pred_fallthru
    _
  // Predicated region
  $region18: #{_lambda_.18} parent=0 // pred_check
    _
  $region19: #{_lambda_.18} parent=0 // pred_check_branch
    %183 = sbr.rel (0) target = $region21
  $region20: #{_lambda_.18} parent=0 // pred_region
    _
  $region21: #{_lambda_.18} parent=0 // pred_fallthru
    _

// kernel: _lambda_.19
$region0: #{_lambda_.19}
  #allocation0 [shape = 'u32[]', space=smem, size = 0x4, offset = 0x4, fixed_abs, tag = 'smem constant byte address 0x4 - core index']
  #allocation1 [shape = 'u32[144,128]{1,0:T(1,128)}', space=vmem, size = 0x12000, scoped, tag = 'internal scratch']
  #allocation2 [shape = 'f32[1]{0:T(128)S(6)}', space=smem, size = 0x200, scoped, tag = 'scoped memory for _lambda_.19']
  %s0 = inlined_call_operand.vmem [shape: bf16[32,256], index: 0, kind: input, shape index: {}]
  %s1 = inlined_call_operand.vmem [shape: bf16[256,128], index: 1, kind: input, shape index: {}]
  %s2 = inlined_call_operand.<no memory space> [shape: f32[1], index: 2, kind: input, shape index: {}]
  %s3 = inlined_call_operand.vmem [shape: bf16[32,16], index: 3, kind: input, shape index: {}]
  %s4 = inlined_call_operand.vmem [shape: bf16[32,16], index: 4, kind: output, shape index: {}]
  %s5 = sld [smem:[#allocation0]]
  $region26: #{_lambda_.19} parent=0
    _
  %s7 = ssub.s32 1, %s5
  %s8 = scalar_select 0, %s7, %s5
  %9 = sst [smem:[#allocation2]] %s2
  // Predicated region
  $region2: #{_lambda_.19} parent=0 // pred_check
    _
  $region3: #{_lambda_.19} parent=0 // pred_check_branch
    %11 = sbr.rel (0) target = $region5
  $region4: #{_lambda_.19} parent=0 // pred_region
    _
  $region5: #{_lambda_.19} parent=0 // pred_fallthru
    _
  // Predicated region
  $region6: #{_lambda_.19} parent=0 // pred_check
    _
  $region7: #{_lambda_.19} parent=0 // pred_check_branch
    %13 = sbr.rel (0) target = $region9
  $region8: #{_lambda_.19} parent=0 // pred_region
    _
  $region9: #{_lambda_.19} parent=0 // pred_fallthru
    _
  // Predicated region
  $region10: #{_lambda_.19} parent=0 // pred_check
    _
  $region11: #{_lambda_.19} parent=0 // pred_check_branch
    %15 = sbr.rel (0) target = $region13
  $region12: #{_lambda_.19} parent=0 // pred_region
    _
  $region13: #{_lambda_.19} parent=0 // pred_fallthru
    _
  // Predicated region
  $region14: #{_lambda_.19} parent=0 // pred_check
    _
  $region15: #{_lambda_.19} parent=0 // pred_check_branch
    %17 = sbr.rel (0) target = $region17
  $region16: #{_lambda_.19} parent=0 // pred_region
    _
  $region17: #{_lambda_.19} parent=0 // pred_fallthru
    _
  %v19 = vld [vmem:[%s0] sm:$0xff]
  %v20 = vld [vmem:[%s0 + $0x8] sm:$0xff]
  %v21 = vld [vmem:[%s0 + $0x10] sm:$0xff]
  %v22 = vld [vmem:[%s0 + $0x18] sm:$0xff]
  %v23 = vld [vmem:[%s1] sm:$0xf]
  %v24 = vld [vmem:[%s1 + $0x4] sm:$0xf]
  %v25 = vld [vmem:[%s1 + $0x8] sm:$0xf]
  %v26 = vld [vmem:[%s1 + $0xc] sm:$0xf]
  %v27 = vld [vmem:[%s1 + $0x10] sm:$0xf]
  %v28 = vld [vmem:[%s1 + $0x14] sm:$0xf]
  %v29 = vld [vmem:[%s1 + $0x18] sm:$0xf]
  %v30 = vld [vmem:[%s1 + $0x1c] sm:$0xf]
  %v31 = vld [vmem:[%s1 + $0x20] sm:$0xf]
  %v32 = vld [vmem:[%s1 + $0x24] sm:$0xf]
  %v33 = vld [vmem:[%s1 + $0x28] sm:$0xf]
  %v34 = vld [vmem:[%s1 + $0x2c] sm:$0xf]
  %v35 = vld [vmem:[%s1 + $0x30] sm:$0xf]
  %v36 = vld [vmem:[%s1 + $0x34] sm:$0xf]
  %v37 = vld [vmem:[%s1 + $0x38] sm:$0xf]
  %v38 = vld [vmem:[%s1 + $0x3c] sm:$0xf]
  %v39 = vld [vmem:[%s1 + $0x40] sm:$0xf]
  %v40 = vld [vmem:[%s1 + $0x44] sm:$0xf]
  %v41 = vld [vmem:[%s1 + $0x48] sm:$0xf]
  %v42 = vld [vmem:[%s1 + $0x4c] sm:$0xf]
  %v43 = vld [vmem:[%s1 + $0x50] sm:$0xf]
  %v44 = vld [vmem:[%s1 + $0x54] sm:$0xf]
  %v45 = vld [vmem:[%s1 + $0x58] sm:$0xf]
  %v46 = vld [vmem:[%s1 + $0x5c] sm:$0xf]
  %v47 = vld [vmem:[%s1 + $0x60] sm:$0xf]
  %v48 = vld [vmem:[%s1 + $0x64] sm:$0xf]
  %v49 = vld [vmem:[%s1 + $0x68] sm:$0xf]
  %v50 = vld [vmem:[%s1 + $0x6c] sm:$0xf]
  %v51 = vld [vmem:[%s1 + $0x70] sm:$0xf]
  %v52 = vld [vmem:[%s1 + $0x74] sm:$0xf]
  %v53 = vld [vmem:[%s1 + $0x78] sm:$0xf]
  %v54 = vld [vmem:[%s1 + $0x7c] sm:$0xf]
  %v59 = vunpack.c.l.b16 %v19
  %v60 = vunpack.c.h.b16 %v19
  %v61 = vunpack.c.l.b16 %v20
  %v62 = vunpack.c.h.b16 %v20
  %v63 = vunpack.c.l.b16 %v21
  %v64 = vunpack.c.h.b16 %v21
  %v65 = vunpack.c.l.b16 %v22
  %v66 = vunpack.c.h.b16 %v22
  %v67 = vpack.c.b16 %v61, %v59
  %v68 = vpack.c.b16 %v62, %v60
  %v69 = vpack.c.b16 %v65, %v63
  %v70 = vpack.c.b16 %v66, %v64
  %v107 = vunpack.c.l.b16 %v23
  %v108 = vunpack.c.l.b16 %v24
  %v109 = vunpack.c.l.b16 %v25
  %v110 = vunpack.c.l.b16 %v26
  %v111 = vunpack.c.l.b16 %v27
  %v112 = vunpack.c.l.b16 %v28
  %v113 = vunpack.c.l.b16 %v29
  %v114 = vunpack.c.l.b16 %v30
  %v115 = vunpack.c.l.b16 %v31
  %v116 = vunpack.c.l.b16 %v32
  %v117 = vunpack.c.l.b16 %v33
  %v118 = vunpack.c.l.b16 %v34
  %v119 = vunpack.c.l.b16 %v35
  %v120 = vunpack.c.l.b16 %v36
  %v121 = vunpack.c.l.b16 %v37
  %v122 = vunpack.c.l.b16 %v38
  %v123 = vunpack.c.l.b16 %v39
  %v124 = vunpack.c.l.b16 %v40
  %v125 = vunpack.c.l.b16 %v41
  %v126 = vunpack.c.l.b16 %v42
  %v127 = vunpack.c.l.b16 %v43
  %v128 = vunpack.c.l.b16 %v44
  %v129 = vunpack.c.l.b16 %v45
  %v130 = vunpack.c.l.b16 %v46
  %v131 = vunpack.c.l.b16 %v47
  %v132 = vunpack.c.l.b16 %v48
  %v133 = vunpack.c.l.b16 %v49
  %v134 = vunpack.c.l.b16 %v50
  %v135 = vunpack.c.l.b16 %v51
  %v136 = vunpack.c.l.b16 %v52
  %v137 = vunpack.c.l.b16 %v53
  %v138 = vunpack.c.l.b16 %v54
  %v139 = vpack.c.b16 %v108, %v107
  %v140 = vpack.c.b16 %v110, %v109
  %v141 = vpack.c.b16 %v112, %v111
  %v142 = vpack.c.b16 %v114, %v113
  %v143 = vpack.c.b16 %v116, %v115
  %v144 = vpack.c.b16 %v118, %v117
  %v145 = vpack.c.b16 %v120, %v119
  %v146 = vpack.c.b16 %v122, %v121
  %v147 = vpack.c.b16 %v124, %v123
  %v148 = vpack.c.b16 %v126, %v125
  %v149 = vpack.c.b16 %v128, %v127
  %v150 = vpack.c.b16 %v130, %v129
  %v151 = vpack.c.b16 %v132, %v131
  %v152 = vpack.c.b16 %v134, %v133
  %v153 = vpack.c.b16 %v136, %v135
  %v154 = vpack.c.b16 %v138, %v137
  %171 = vmatprep.subr.bf16.mxu0 0
  %172 = vmatpush1.bf16.msra.mxu0 %v139
  %173 = vmatprep.subr.bf16.mxu0 0
  %174 = vmatpush1.bf16.msra.mxu0 %v140
  %175 = vmatprep.subr.bf16.mxu0 0
  %176 = vmatpush1.bf16.msra.mxu0 %v141
  %177 = vmatprep.subr.bf16.mxu0 0
  %178 = vmatpush1.bf16.msra.mxu0 %v142
  %179 = vmatprep.subr.bf16.mxu0 0
  %180 = vmatpush1.bf16.msra.mxu0 %v143
  %181 = vmatprep.subr.bf16.mxu0 0
  %182 = vmatpush1.bf16.msra.mxu0 %v144
  %183 = vmatprep.subr.bf16.mxu0 0
  %184 = vmatpush1.bf16.msra.mxu0 %v145
  %185 = vmatprep.subr.bf16.mxu0 0
  %186 = vmatpush1.bf16.msra.mxu0 %v146
  %187 = vmatprep.subr.bf16.mxu0 0
  %188 = vmatpush1.bf16.msra.mxu0 %v147
  %189 = vmatprep.subr.bf16.mxu0 0
  %190 = vmatpush1.bf16.msra.mxu0 %v148
  %191 = vmatprep.subr.bf16.mxu0 0
  %192 = vmatpush1.bf16.msra.mxu0 %v149
  %193 = vmatprep.subr.bf16.mxu0 0
  %194 = vmatpush1.bf16.msra.mxu0 %v150
  %195 = vmatprep.subr.bf16.mxu0 0
  %196 = vmatpush1.bf16.msra.mxu0 %v151
  %197 = vmatprep.subr.bf16.mxu0 0
  %198 = vmatpush1.bf16.msra.mxu0 %v152
  %199 = vmatprep.subr.bf16.mxu0 0
  %200 = vmatpush1.bf16.msra.mxu0 %v153
  %201 = vmatprep.subr.bf16.mxu0 0
  %202 = vmatpush1.bf16.msra.mxu0 %v154
  %203 = vmatprep.mubr.bf16.mxu0 %v68
  %204 = vmatmul.mubr.bf16.gmra.mrb[0].mxu0 %v67
  %v205 = vpop.f32.mrb[0].mxu0
  %v206 = vadd.f32 0.0, %v205
  %v207 = vpop.f32.mrb[0].mxu0
  %v208 = vpop.f32.mrb[0].mxu0
  %v209 = vadd.f32 0.0, %v208
  %v210 = vpop.f32.mrb[0].mxu0
  %211 = vmatprep.mubr.bf16.mxu0 %v70
  %212 = vmatmul.mubr.bf16.gmra.mrb[0].mxu0 %v69
  %v213 = vpop.f32.mrb[0].mxu0
  %v214 = vadd.f32 0.0, %v213
  %v215 = vpop.f32.mrb[0].mxu0
  %v216 = vpop.f32.mrb[0].mxu0
  %v217 = vadd.f32 0.0, %v216
  %v218 = vpop.f32.mrb[0].mxu0
  %219 = vdwg.mxu0
  %s220 = sld [smem:[#allocation2]]
  %vm221 = vcmp.ge.f32.partialorder %v206, 0.0
  %vm222 = vcmp.ge.f32.partialorder %v209, 0.0
  %vm223 = vcmp.ge.f32.partialorder %v214, 0.0
  %vm224 = vcmp.ge.f32.partialorder %v217, 0.0
  %v225 = vstv %s220
  %v226 = vmul.f32 %v225, %v206
  %v227 = vmul.f32 %v225, %v209
  %v228 = vmul.f32 %v225, %v214
  %v229 = vmul.f32 %v225, %v217
  %v230 = vsel %vm221, %v206, %v226
  %v231 = vsel %vm222, %v209, %v227
  %v232 = vsel %vm223, %v214, %v228
  %v233 = vsel %vm224, %v217, %v229
  %v234 = vld [vmem:[%s3] sm:$0xf]
  %v235 = vld [vmem:[%s3 + $0x4] sm:$0xf]
  %v236 = vld [vmem:[%s3 + $0x8] sm:$0xf]
  %v237 = vld [vmem:[%s3 + $0xc] sm:$0xf]
  %v238 = vunpack.c.l.bf16 %v234
  %v239 = vunpack.c.l.bf16 %v235
  %v240 = vunpack.c.l.bf16 %v236
  %v241 = vunpack.c.l.bf16 %v237
  %v242 = vadd.f32 %v230, %v238
  %v243 = vadd.f32 %v231, %v239
  %v244 = vadd.f32 %v232, %v240
  %v245 = vadd.f32 %v233, %v241
  %v246 = vpack.c.bf16 %v243, %v242
  %v247 = vpack.c.bf16 %v245, %v244
  %v250 = vunpack.c.l.b16 %v246
  %v251 = vunpack.c.h.b16 %v246
  %v252 = vunpack.c.l.b16 %v247
  %v253 = vunpack.c.h.b16 %v247
  %v254 = vpack.c.b16 %v250, %v250
  %v255 = vpack.c.b16 %v251, %v251
  %v256 = vpack.c.b16 %v252, %v252
  %v257 = vpack.c.b16 %v253, %v253
  %vm262 = vcmask 125952
  %263 = vst.msk [vmem:[%s4] sm:$0xf] %vm262, %v254
  %264 = vst.msk [vmem:[%s4 + $0x4] sm:$0xf] %vm262, %v255
  %265 = vst.msk [vmem:[%s4 + $0x8] sm:$0xf] %vm262, %v256
  %266 = vst.msk [vmem:[%s4 + $0xc] sm:$0xf] %vm262, %v257
  // Predicated region
  $region18: #{_lambda_.19} parent=0 // pred_check
    _
  $region19: #{_lambda_.19} parent=0 // pred_check_branch
    %268 = sbr.rel (0) target = $region21
  $region20: #{_lambda_.19} parent=0 // pred_region
    _
  $region21: #{_lambda_.19} parent=0 // pred_fallthru
    _
  // Predicated region
  $region22: #{_lambda_.19} parent=0 // pred_check
    _
  $region23: #{_lambda_.19} parent=0 // pred_check_branch
    %270 = sbr.rel (0) target = $region25
  $region24: #{_lambda_.19} parent=0 // pred_region
    _
  $region25: #{_lambda_.19} parent=0 // pred_fallthru
    _

// kernel: _lambda_.20
$region0: #{_lambda_.20}
  #allocation0 [shape = 'u32[]', space=smem, size = 0x4, offset = 0x4, fixed_abs, tag = 'smem constant byte address 0x4 - core index']
  #allocation1 [shape = 'u32[144,128]{1,0:T(1,128)}', space=vmem, size = 0x12000, scoped, tag = 'internal scratch']
  %s0 = inlined_call_operand.vmem [shape: bf16[32,128], index: 0, kind: input, shape index: {}]
  %s1 = inlined_call_operand.vmem [shape: bf16[128,128], index: 1, kind: input, shape index: {}]
  %s2 = inlined_call_operand.vmem [shape: bf16[32,32], index: 2, kind: output, shape index: {}]
  %s3 = sld [smem:[#allocation0]]
  $region18: #{_lambda_.20} parent=0
    _
  %s5 = ssub.s32 1, %s3
  %s6 = scalar_select 0, %s5, %s3
  // Predicated region
  $region2: #{_lambda_.20} parent=0 // pred_check
    _
  $region3: #{_lambda_.20} parent=0 // pred_check_branch
    %8 = sbr.rel (0) target = $region5
  $region4: #{_lambda_.20} parent=0 // pred_region
    _
  $region5: #{_lambda_.20} parent=0 // pred_fallthru
    _
  // Predicated region
  $region6: #{_lambda_.20} parent=0 // pred_check
    _
  $region7: #{_lambda_.20} parent=0 // pred_check_branch
    %10 = sbr.rel (0) target = $region9
  $region8: #{_lambda_.20} parent=0 // pred_region
    _
  $region9: #{_lambda_.20} parent=0 // pred_fallthru
    _
  %v12 = vld [vmem:[%s0] sm:$0xf]
  %v13 = vld [vmem:[%s0 + $0x4] sm:$0xf]
  %v14 = vld [vmem:[%s0 + $0x8] sm:$0xf]
  %v15 = vld [vmem:[%s0 + $0xc] sm:$0xf]
  %v16 = vld [vmem:[%s1] sm:$0xf]
  %v17 = vld [vmem:[%s1 + $0x4] sm:$0xf]
  %v18 = vld [vmem:[%s1 + $0x8] sm:$0xf]
  %v19 = vld [vmem:[%s1 + $0xc] sm:$0xf]
  %v20 = vld [vmem:[%s1 + $0x10] sm:$0xf]
  %v21 = vld [vmem:[%s1 + $0x14] sm:$0xf]
  %v22 = vld [vmem:[%s1 + $0x18] sm:$0xf]
  %v23 = vld [vmem:[%s1 + $0x1c] sm:$0xf]
  %v24 = vld [vmem:[%s1 + $0x20] sm:$0xf]
  %v25 = vld [vmem:[%s1 + $0x24] sm:$0xf]
  %v26 = vld [vmem:[%s1 + $0x28] sm:$0xf]
  %v27 = vld [vmem:[%s1 + $0x2c] sm:$0xf]
  %v28 = vld [vmem:[%s1 + $0x30] sm:$0xf]
  %v29 = vld [vmem:[%s1 + $0x34] sm:$0xf]
  %v30 = vld [vmem:[%s1 + $0x38] sm:$0xf]
  %v31 = vld [vmem:[%s1 + $0x3c] sm:$0xf]
  %v36 = vunpack.c.l.b16 %v12
  %v37 = vunpack.c.l.b16 %v13
  %v38 = vunpack.c.l.b16 %v14
  %v39 = vunpack.c.l.b16 %v15
  %v40 = vpack.c.b16 %v37, %v36
  %v41 = vpack.c.b16 %v39, %v38
  %v60 = vunpack.c.l.b16 %v16
  %v61 = vunpack.c.l.b16 %v17
  %v62 = vunpack.c.l.b16 %v18
  %v63 = vunpack.c.l.b16 %v19
  %v64 = vunpack.c.l.b16 %v20
  %v65 = vunpack.c.l.b16 %v21
  %v66 = vunpack.c.l.b16 %v22
  %v67 = vunpack.c.l.b16 %v23
  %v68 = vunpack.c.l.b16 %v24
  %v69 = vunpack.c.l.b16 %v25
  %v70 = vunpack.c.l.b16 %v26
  %v71 = vunpack.c.l.b16 %v27
  %v72 = vunpack.c.l.b16 %v28
  %v73 = vunpack.c.l.b16 %v29
  %v74 = vunpack.c.l.b16 %v30
  %v75 = vunpack.c.l.b16 %v31
  %v76 = vpack.c.b16 %v61, %v60
  %v77 = vpack.c.b16 %v63, %v62
  %v78 = vpack.c.b16 %v65, %v64
  %v79 = vpack.c.b16 %v67, %v66
  %v80 = vpack.c.b16 %v69, %v68
  %v81 = vpack.c.b16 %v71, %v70
  %v82 = vpack.c.b16 %v73, %v72
  %v83 = vpack.c.b16 %v75, %v74
  %92 = vmatprep.subr.bf16.mxu0 0
  %93 = vmatpush1.bf16.msra.mxu0 %v76
  %94 = vmatprep.subr.bf16.mxu0 0
  %95 = vmatpush1.bf16.msra.mxu0 %v77
  %96 = vmatprep.subr.bf16.mxu0 0
  %97 = vmatpush1.bf16.msra.mxu0 %v78
  %98 = vmatprep.subr.bf16.mxu0 0
  %99 = vmatpush1.bf16.msra.mxu0 %v79
  %100 = vmatprep.subr.bf16.mxu0 0
  %101 = vmatpush1.bf16.msra.mxu0 %v80
  %102 = vmatprep.subr.bf16.mxu0 0
  %103 = vmatpush1.bf16.msra.mxu0 %v81
  %104 = vmatprep.subr.bf16.mxu0 0
  %105 = vmatpush1.bf16.msra.mxu0 %v82
  %106 = vmatprep.subr.bf16.mxu0 0
  %107 = vmatpush1.bf16.msra.mxu0 %v83
  %108 = vmatprep.subr.bf16.mxu0 0
  %109 = vmatpush1.bf16.msra.mxu0 0
  %110 = vmatprep.subr.bf16.mxu0 0
  %111 = vmatpush1.bf16.msra.mxu0 0
  %112 = vmatprep.subr.bf16.mxu0 0
  %113 = vmatpush1.bf16.msra.mxu0 0
  %114 = vmatprep.subr.bf16.mxu0 0
  %115 = vmatpush1.bf16.msra.mxu0 0
  %116 = vmatprep.subr.bf16.mxu0 0
  %117 = vmatpush1.bf16.msra.mxu0 0
  %118 = vmatprep.subr.bf16.mxu0 0
  %119 = vmatpush1.bf16.msra.mxu0 0
  %120 = vmatprep.subr.bf16.mxu0 0
  %121 = vmatpush1.bf16.msra.mxu0 0
  %122 = vmatprep.subr.bf16.mxu0 0
  %123 = vmatpush1.bf16.msra.mxu0 0
  %124 = vmatprep.mubr.bf16.mxu0 0
  %125 = vmatmul.mubr.bf16.gmra.mrb[0].mxu0 %v40
  %v126 = vpop.f32.mrb[0].mxu0
  %v127 = vadd.f32 0.0, %v126
  %v128 = vpop.f32.mrb[0].mxu0
  %v129 = vpop.f32.mrb[0].mxu0
  %v130 = vadd.f32 0.0, %v129
  %v131 = vpop.f32.mrb[0].mxu0
  %132 = vmatprep.mubr.bf16.mxu0 0
  %133 = vmatmul.mubr.bf16.gmra.mrb[0].mxu0 %v41
  %v134 = vpop.f32.mrb[0].mxu0
  %v135 = vadd.f32 0.0, %v134
  %v136 = vpop.f32.mrb[0].mxu0
  %v137 = vpop.f32.mrb[0].mxu0
  %v138 = vadd.f32 0.0, %v137
  %v139 = vpop.f32.mrb[0].mxu0
  %140 = vdwg.mxu0
  %v141 = vpack.c.bf16 %v130, %v127
  %v142 = vpack.c.bf16 %v138, %v135
  %v145 = vunpack.c.l.b16 %v141
  %v146 = vunpack.c.h.b16 %v141
  %v147 = vunpack.c.l.b16 %v142
  %v148 = vunpack.c.h.b16 %v142
  %v149 = vpack.c.b16 %v145, %v145
  %v150 = vpack.c.b16 %v146, %v146
  %v151 = vpack.c.b16 %v147, %v147
  %v152 = vpack.c.b16 %v148, %v148
  %vm157 = vcmask 257024
  %158 = vst.msk [vmem:[%s2] sm:$0xf] %vm157, %v149
  %159 = vst.msk [vmem:[%s2 + $0x4] sm:$0xf] %vm157, %v150
  %160 = vst.msk [vmem:[%s2 + $0x8] sm:$0xf] %vm157, %v151
  %161 = vst.msk [vmem:[%s2 + $0xc] sm:$0xf] %vm157, %v152
  // Predicated region
  $region10: #{_lambda_.20} parent=0 // pred_check
    _
  $region11: #{_lambda_.20} parent=0 // pred_check_branch
    %163 = sbr.rel (0) target = $region13
  $region12: #{_lambda_.20} parent=0 // pred_region
    _
  $region13: #{_lambda_.20} parent=0 // pred_fallthru
    _
  // Predicated region
  $region14: #{_lambda_.20} parent=0 // pred_check
    _
  $region15: #{_lambda_.20} parent=0 // pred_check_branch
    %165 = sbr.rel (0) target = $region17
  $region16: #{_lambda_.20} parent=0 // pred_region
    _
  $region17: #{_lambda_.20} parent=0 // pred_fallthru
    _

// kernel: _lambda_.21
$region0: #{_lambda_.21}
  #allocation0 [shape = 'u32[]', space=smem, size = 0x4, offset = 0x4, fixed_abs, tag = 'smem constant byte address 0x4 - core index']
  #allocation1 [shape = 'u32[144,128]{1,0:T(1,128)}', space=vmem, size = 0x12000, scoped, tag = 'internal scratch']
  %s0 = inlined_call_operand.vmem [shape: bf16[128,128], index: 0, kind: input, shape index: {}]
  %s1 = inlined_call_operand.vmem [shape: bf16[128,128], index: 1, kind: input, shape index: {}]
  %s2 = inlined_call_operand.vmem [shape: bf16[128,128], index: 2, kind: input, shape index: {}]
  %s3 = inlined_call_operand.vmem [shape: bf16[128,128], index: 3, kind: input, shape index: {}]
  %s4 = inlined_call_operand.vmem [shape: bf16[128,8], index: 4, kind: output, shape index: {}]
  %s5 = sld [smem:[#allocation0]]
  $region49: #{_lambda_.21} parent=0
    _
  %s7 = ssub.s32 1, %s5
  %s8 = scalar_select 0, %s7, %s5
  loop: start=0, step=1, limit=4
  $region2: #{_lambda_.21} parent=0 // loop_pre_header
    _
  $region3: #{_lambda_.21} parent=0 // loop_header
    %s10 = sphi 0, %s14
    %p11 = scmp.ge.s32.totalorder %s10, 4
    %s20 = sphi 0, %s22
    %s23 = sphi 0, %s20
    %s24 = sphi 0, %s23
    %s40 = sphi 0, %s24
    %s46 = sphi 0, %s48
    %s49 = sphi 0, %s46
    %s50 = sphi 0, %s49
    %s66 = sphi 0, %s50
    %s70 = sphi 0, %s70
    %s72 = sphi 0, %s70
    %s73 = sphi 0, %s72
    %s87 = sphi 0, %s73
    %s91 = sphi 0, %s91
    %s93 = sphi 0, %s91
    %s94 = sphi 0, %s93
    %s108 = sphi 0, %s94
    %s114 = sphi 0, %s116
    %s117 = sphi 0, %s114
    %s118 = sphi 0, %s117
    %s134 = sphi 0, %s118
  $region4: #{_lambda_.21} parent=0 // loop_header_branch
    %13 = sbr.rel (%p11) target = $region8
  $region5: #{_lambda_.21} parent=0 // loop_body
    %s15 = ssub.s32 %s10, 1
    %s16 = ssub.s32 %s10, 2
    %s17 = sadd.s32 %s10, 1
    %s18 = ssub.s32 %s10, %s17
    %p19 = scmp.eq.s32.totalorder %s18, 0
    %s21 = sadd.s32 %s20, 1
    %s22 = scalar_select %p19, %s20, %s21
    %p25 = pneg %p19
    %p26 = scmp.eq.s32.totalorder %s10, 1
    %p27 = por %p25, %p26
    %p28 = scmp.ne.s32.totalorder %s20, %s23
    %p29 = scmp.eq.s32.totalorder %s10, 0
    %p30 = por %p28, %p29
    %p31 = scmp.ne.s32.totalorder %s20, %s23
    %p32 = scmp.eq.s32.totalorder %s15, 1
    %p33 = por %p31, %p32
    %p34 = scmp.ne.s32.totalorder %s23, %s24
    %p35 = scmp.eq.s32.totalorder %s15, 0
    %p36 = por %p34, %p35
    %p37 = scmp.ne.s32.totalorder %s23, %s24
    %p38 = scmp.eq.s32.totalorder %s16, 1
    %p39 = por %p37, %p38
    %p41 = scmp.ne.s32.totalorder %s24, %s40
    %p42 = scmp.eq.s32.totalorder %s16, 0
    %p43 = por %p41, %p42
    %s44 = ssub.s32 %s10, %s17
    %p45 = scmp.eq.s32.totalorder %s44, 0
    %s47 = sadd.s32 %s46, 1
    %s48 = scalar_select %p45, %s46, %s47
    %p51 = pneg %p45
    %p52 = scmp.eq.s32.totalorder %s10, 1
    %p53 = por %p51, %p52
    %p54 = scmp.ne.s32.totalorder %s46, %s49
    %p55 = scmp.eq.s32.totalorder %s10, 0
    %p56 = por %p54, %p55
    %p57 = scmp.ne.s32.totalorder %s46, %s49
    %p58 = scmp.eq.s32.totalorder %s15, 1
    %p59 = por %p57, %p58
    %p60 = scmp.ne.s32.totalorder %s49, %s50
    %p61 = scmp.eq.s32.totalorder %s15, 0
    %p62 = por %p60, %p61
    %p63 = scmp.ne.s32.totalorder %s49, %s50
    %p64 = scmp.eq.s32.totalorder %s16, 1
    %p65 = por %p63, %p64
    %p67 = scmp.ne.s32.totalorder %s50, %s66
    %p68 = scmp.eq.s32.totalorder %s16, 0
    %p69 = por %p67, %p68
    %s71 = sadd.s32 %s70, 1
    %p74 = scmp.eq.s32.totalorder %s10, 1
    %p75 = scmp.ne.s32.totalorder %s70, %s72
    %p76 = scmp.eq.s32.totalorder %s10, 0
    %p77 = por %p75, %p76
    %p78 = scmp.ne.s32.totalorder %s70, %s72
    %p79 = scmp.eq.s32.totalorder %s15, 1
    %p80 = por %p78, %p79
    %p81 = scmp.ne.s32.totalorder %s72, %s73
    %p82 = scmp.eq.s32.totalorder %s15, 0
    %p83 = por %p81, %p82
    %p84 = scmp.ne.s32.totalorder %s72, %s73
    %p85 = scmp.eq.s32.totalorder %s16, 1
    %p86 = por %p84, %p85
    %p88 = scmp.ne.s32.totalorder %s73, %s87
    %p89 = scmp.eq.s32.totalorder %s16, 0
    %p90 = por %p88, %p89
    %s92 = sadd.s32 %s91, 1
    %p95 = scmp.eq.s32.totalorder %s10, 1
    %p96 = scmp.ne.s32.totalorder %s91, %s93
    %p97 = scmp.eq.s32.totalorder %s10, 0
    %p98 = por %p96, %p97
    %p99 = scmp.ne.s32.totalorder %s91, %s93
    %p100 = scmp.eq.s32.totalorder %s15, 1
    %p101 = por %p99, %p100
    %p102 = scmp.ne.s32.totalorder %s93, %s94
    %p103 = scmp.eq.s32.totalorder %s15, 0
    %p104 = por %p102, %p103
    %p105 = scmp.ne.s32.totalorder %s93, %s94
    %p106 = scmp.eq.s32.totalorder %s16, 1
    %p107 = por %p105, %p106
    %p109 = scmp.ne.s32.totalorder %s94, %s108
    %p110 = scmp.eq.s32.totalorder %s16, 0
    %p111 = por %p109, %p110
    %s112 = ssub.s32 %s10, %s17
    %p113 = scmp.eq.s32.totalorder %s112, 0
    %s115 = sadd.s32 %s114, 1
    %s116 = scalar_select %p113, %s114, %s115
    %p119 = pneg %p113
    %p120 = scmp.eq.s32.totalorder %s10, 1
    %p121 = por %p119, %p120
    %p122 = scmp.ne.s32.totalorder %s114, %s117
    %p123 = scmp.eq.s32.totalorder %s10, 0
    %p124 = por %p122, %p123
    %p125 = scmp.ne.s32.totalorder %s114, %s117
    %p126 = scmp.eq.s32.totalorder %s15, 1
    %p127 = por %p125, %p126
    %p128 = scmp.ne.s32.totalorder %s117, %s118
    %p129 = scmp.eq.s32.totalorder %s15, 0
    %p130 = por %p128, %p129
    %p131 = scmp.ne.s32.totalorder %s117, %s118
    %p132 = scmp.eq.s32.totalorder %s16, 1
    %p133 = por %p131, %p132
    %p135 = scmp.ne.s32.totalorder %s118, %s134
    %p136 = scmp.eq.s32.totalorder %s16, 0
    %p137 = por %p135, %p136
    %p138 = scmp.le.s32.totalorder 1, %s10
    %p139 = scmp.lt.s32.totalorder %s10, 3
    %p140 = pnand %p138, %p139
    %p141 = pneg %p140
    // Predicated region
    $region9: #{_lambda_.21} parent=5 // pred_check
      _
    $region10: #{_lambda_.21} parent=5 // pred_check_branch
      %143 = sbr.rel (%p140) target = $region12
    $region11: #{_lambda_.21} parent=5 // pred_region
      %s144 = ssub.s32 %s10, 1
      // Predicated region
      $region13: #{_lambda_.21} parent=11 // pred_check
        %p145 = pneg %p83
      $region14: #{_lambda_.21} parent=11 // pred_check_branch
        %147 = sbr.rel (%p145) target = $region16
      $region15: #{_lambda_.21} parent=11 // pred_region
        _
      $region16: #{_lambda_.21} parent=11 // pred_fallthru
        _
      // Predicated region
      $region17: #{_lambda_.21} parent=11 // pred_check
        %p148 = pneg %p104
      $region18: #{_lambda_.21} parent=11 // pred_check_branch
        %150 = sbr.rel (%p148) target = $region20
      $region19: #{_lambda_.21} parent=11 // pred_region
        _
      $region20: #{_lambda_.21} parent=11 // pred_fallthru
        _
    $region12: #{_lambda_.21} parent=5 // pred_fallthru
      _
    %p151 = scmp.lt.s32.totalorder %s10, 2
    // Predicated region
    $region21: #{_lambda_.21} parent=5 // pred_check
      %p152 = pneg %p151
    $region22: #{_lambda_.21} parent=5 // pred_check_branch
      %154 = sbr.rel (%p152) target = $region24
    $region23: #{_lambda_.21} parent=5 // pred_region
      // Predicated region
      $region25: #{_lambda_.21} parent=23 // pred_check
        %p155 = pneg %p30
      $region26: #{_lambda_.21} parent=23 // pred_check_branch
        %157 = sbr.rel (%p155) target = $region28
      $region27: #{_lambda_.21} parent=23 // pred_region
        %s158 = smul.u32 8, %s10
        %p159 = scmp.lt.s32.totalorder %s158, 15
        %s160 = scalar_select %p159, %s158, 15
        %s161 = smul.addr %s160, 4
        %s162 = scalar_lea.vmem %s0, %s161
        %s163 = smul.u32 8, %s10
      $region28: #{_lambda_.21} parent=23 // pred_fallthru
        _
      // Predicated region
      $region29: #{_lambda_.21} parent=23 // pred_check
        %p164 = pneg %p56
      $region30: #{_lambda_.21} parent=23 // pred_check_branch
        %166 = sbr.rel (%p164) target = $region32
      $region31: #{_lambda_.21} parent=23 // pred_region
        %s167 = smul.u32 8, %s10
        %p168 = scmp.lt.s32.totalorder %s167, 15
        %s169 = scalar_select %p168, %s167, 15
        %s170 = smul.addr %s169, 4
        %s171 = scalar_lea.vmem %s1, %s170
        %s172 = smul.u32 8, %s10
      $region32: #{_lambda_.21} parent=23 // pred_fallthru
        _
    $region24: #{_lambda_.21} parent=5 // pred_fallthru
      _
    %p173 = scmp.le.s32.totalorder 1, %s10
    %p174 = scmp.lt.s32.totalorder %s10, 3
    %p175 = pnand %p173, %p174
    %p176 = pneg %p175
    // Predicated region
    $region33: #{_lambda_.21} parent=5 // pred_check
      _
    $region34: #{_lambda_.21} parent=5 // pred_check_branch
      %178 = sbr.rel (%p175) target = $region36
    $region35: #{_lambda_.21} parent=5 // pred_region
      %s179 = ssub.s32 %s10, 1
      %s180 = smul.u32 8, %s15
      %p181 = scmp.lt.s32.totalorder %s180, 15
      %s182 = scalar_select %p181, %s180, 15
      %s183 = smul.addr %s182, 4
      %s184 = scalar_lea.vmem %s0, %s183
      %p185 = pneg %p36
      %p186 = pneg %p33
      %s187 = smul.u32 8, %s15
      %p188 = scmp.lt.s32.totalorder %s187, 15
      %s189 = scalar_select %p188, %s187, 15
      %s190 = smul.addr %s189, 4
      %s191 = scalar_lea.vmem %s1, %s190
      %p192 = pneg %p62
      %p193 = pneg %p59
      %p194 = pneg %p83
      %p195 = pneg %p80
      %p196 = pneg %p104
      %p197 = pneg %p101
      %p198 = pneg %p130
      %p199 = pneg %p127
      %s200 = smul.u32 8, %s15
      %p201 = scmp.lt.s32.totalorder %s200, 15
      %s202 = scalar_select %p201, %s200, 15
      %s203 = smul.addr %s202, 4
      %s204 = scalar_lea.vmem %s4, %s203
      %s205 = smul.u32 8, %s15
      %p206 = scmp.lt.s32.totalorder %s205, 15
      %s207 = scalar_select %p206, %s205, 15
      %s208 = smul.addr %s207, 4
      %s209 = scalar_lea.vmem %s0, %s208
      %s210 = smul.u32 8, %s15
      %s211 = smul.u32 8, %s15
      %p212 = scmp.lt.s32.totalorder %s211, 15
      %s213 = scalar_select %p212, %s211, 15
      %s214 = smul.addr %s213, 4
      %s215 = scalar_lea.vmem %s1, %s214
      %s216 = smul.u32 8, %s15
      %s217 = smul.u32 8, %s15
      %p218 = scmp.lt.s32.totalorder %s217, 15
      %s219 = scalar_select %p218, %s217, 15
      %s220 = smul.addr %s219, 4
      %s221 = scalar_lea.vmem %s4, %s220
      %s222 = smul.u32 8, %s15
      %v224 = vld [vmem:[%s209] sm:$0xf]
      %v225 = vld [vmem:[%s209 + $0x4] sm:$0xf]
      %v226 = vld [vmem:[%s209 + $0x8] sm:$0xf]
      %v227 = vld [vmem:[%s209 + $0xc] sm:$0xf]
      %v228 = vld [vmem:[%s209 + $0x10] sm:$0xf]
      %v229 = vld [vmem:[%s209 + $0x14] sm:$0xf]
      %v230 = vld [vmem:[%s209 + $0x18] sm:$0xf]
      %v231 = vld [vmem:[%s209 + $0x1c] sm:$0xf]
      %v232 = vld [vmem:[%s2] sm:$0xf]
      %v233 = vld [vmem:[%s2 + $0x4] sm:$0xf]
      %v234 = vld [vmem:[%s2 + $0x8] sm:$0xf]
      %v235 = vld [vmem:[%s2 + $0xc] sm:$0xf]
      %v236 = vld [vmem:[%s2 + $0x10] sm:$0xf]
      %v237 = vld [vmem:[%s2 + $0x14] sm:$0xf]
      %v238 = vld [vmem:[%s2 + $0x18] sm:$0xf]
      %v239 = vld [vmem:[%s2 + $0x1c] sm:$0xf]
      %v240 = vld [vmem:[%s2 + $0x20] sm:$0xf]
      %v241 = vld [vmem:[%s2 + $0x24] sm:$0xf]
      %v242 = vld [vmem:[%s2 + $0x28] sm:$0xf]
      %v243 = vld [vmem:[%s2 + $0x2c] sm:$0xf]
      %v244 = vld [vmem:[%s2 + $0x30] sm:$0xf]
      %v245 = vld [vmem:[%s2 + $0x34] sm:$0xf]
      %v246 = vld [vmem:[%s2 + $0x38] sm:$0xf]
      %v247 = vld [vmem:[%s2 + $0x3c] sm:$0xf]
      %v248 = vld [vmem:[%s215] sm:$0xf]
      %v249 = vld [vmem:[%s215 + $0x4] sm:$0xf]
      %v250 = vld [vmem:[%s215 + $0x8] sm:$0xf]
      %v251 = vld [vmem:[%s215 + $0xc] sm:$0xf]
      %v252 = vld [vmem:[%s215 + $0x10] sm:$0xf]
      %v253 = vld [vmem:[%s215 + $0x14] sm:$0xf]
      %v254 = vld [vmem:[%s215 + $0x18] sm:$0xf]
      %v255 = vld [vmem:[%s215 + $0x1c] sm:$0xf]
      %v256 = vld [vmem:[%s3] sm:$0xf]
      %v257 = vld [vmem:[%s3 + $0x4] sm:$0xf]
      %v258 = vld [vmem:[%s3 + $0x8] sm:$0xf]
      %v259 = vld [vmem:[%s3 + $0xc] sm:$0xf]
      %v260 = vld [vmem:[%s3 + $0x10] sm:$0xf]
      %v261 = vld [vmem:[%s3 + $0x14] sm:$0xf]
      %v262 = vld [vmem:[%s3 + $0x18] sm:$0xf]
      %v263 = vld [vmem:[%s3 + $0x1c] sm:$0xf]
      %v264 = vld [vmem:[%s3 + $0x20] sm:$0xf]
      %v265 = vld [vmem:[%s3 + $0x24] sm:$0xf]
      %v266 = vld [vmem:[%s3 + $0x28] sm:$0xf]
      %v267 = vld [vmem:[%s3 + $0x2c] sm:$0xf]
      %v268 = vld [vmem:[%s3 + $0x30] sm:$0xf]
      %v269 = vld [vmem:[%s3 + $0x34] sm:$0xf]
      %v270 = vld [vmem:[%s3 + $0x38] sm:$0xf]
      %v271 = vld [vmem:[%s3 + $0x3c] sm:$0xf]
      %v280 = vunpack.c.l.b16 %v248
      %v281 = vunpack.c.l.b16 %v249
      %v282 = vunpack.c.l.b16 %v250
      %v283 = vunpack.c.l.b16 %v251
      %v284 = vunpack.c.l.b16 %v252
      %v285 = vunpack.c.l.b16 %v253
      %v286 = vunpack.c.l.b16 %v254
      %v287 = vunpack.c.l.b16 %v255
      %v288 = vpack.c.b16 %v281, %v280
      %v289 = vpack.c.b16 %v283, %v282
      %v290 = vpack.c.b16 %v285, %v284
      %v291 = vpack.c.b16 %v287, %v286
      %v312 = vunpack.c.l.b16 %v256
      %v313 = vunpack.c.l.b16 %v257
      %v314 = vunpack.c.l.b16 %v258
      %v315 = vunpack.c.l.b16 %v259
      %v316 = vunpack.c.l.b16 %v260
      %v317 = vunpack.c.l.b16 %v261
      %v318 = vunpack.c.l.b16 %v262
      %v319 = vunpack.c.l.b16 %v263
      %v320 = vunpack.c.l.b16 %v264
      %v321 = vunpack.c.l.b16 %v265
      %v322 = vunpack.c.l.b16 %v266
      %v323 = vunpack.c.l.b16 %v267
      %v324 = vunpack.c.l.b16 %v268
      %v325 = vunpack.c.l.b16 %v269
      %v326 = vunpack.c.l.b16 %v270
      %v327 = vunpack.c.l.b16 %v271
      %v328 = vpack.c.b16 %v313, %v312
      %v329 = vpack.c.b16 %v315, %v314
      %v330 = vpack.c.b16 %v317, %v316
      %v331 = vpack.c.b16 %v319, %v318
      %v332 = vpack.c.b16 %v321, %v320
      %v333 = vpack.c.b16 %v323, %v322
      %v334 = vpack.c.b16 %v325, %v324
      %v335 = vpack.c.b16 %v327, %v326
      %344 = vmatprep.subr.bf16.mxu0 0
      %345 = vmatpush1.bf16.msra.mxu0 %v328
      %346 = vmatprep.subr.bf16.mxu0 0
      %347 = vmatpush1.bf16.msra.mxu0 %v329
      %348 = vmatprep.subr.bf16.mxu0 0
      %349 = vmatpush1.bf16.msra.mxu0 %v330
      %350 = vmatprep.subr.bf16.mxu0 0
      %351 = vmatpush1.bf16.msra.mxu0 %v331
      %352 = vmatprep.subr.bf16.mxu0 0
      %353 = vmatpush1.bf16.msra.mxu0 %v332
      %354 = vmatprep.subr.bf16.mxu0 0
      %355 = vmatpush1.bf16.msra.mxu0 %v333
      %356 = vmatprep.subr.bf16.mxu0 0
      %357 = vmatpush1.bf16.msra.mxu0 %v334
      %358 = vmatprep.subr.bf16.mxu0 0
      %359 = vmatpush1.bf16.msra.mxu0 %v335
      %360 = vmatprep.subr.bf16.mxu0 0
      %361 = vmatpush1.bf16.msra.mxu0 0
      %362 = vmatprep.subr.bf16.mxu0 0
      %363 = vmatpush1.bf16.msra.mxu0 0
      %364 = vmatprep.subr.bf16.mxu0 0
      %365 = vmatpush1.bf16.msra.mxu0 0
      %366 = vmatprep.subr.bf16.mxu0 0
      %367 = vmatpush1.bf16.msra.mxu0 0
      %368 = vmatprep.subr.bf16.mxu0 0
      %369 = vmatpush1.bf16.msra.mxu0 0
      %370 = vmatprep.subr.bf16.mxu0 0
      %371 = vmatpush1.bf16.msra.mxu0 0
      %372 = vmatprep.subr.bf16.mxu0 0
      %373 = vmatpush1.bf16.msra.mxu0 0
      %374 = vmatprep.subr.bf16.mxu0 0
      %375 = vmatpush1.bf16.msra.mxu0 0
      %376 = vmatprep.mubr.bf16.mxu0 0
      %377 = vmatmul.mubr.bf16.gmra.mrb[0].mxu0 %v288
      %v378 = vpop.f32.mrb[0].mxu0
      %v379 = vadd.f32 0.0, %v378
      %v380 = vpop.f32.mrb[0].mxu0
      %v381 = vpop.f32.mrb[0].mxu0
      %v382 = vadd.f32 0.0, %v381
      %v383 = vpop.f32.mrb[0].mxu0
      %384 = vmatprep.mubr.bf16.mxu0 0
      %385 = vmatmul.mubr.bf16.gmra.mrb[0].mxu0 %v289
      %v386 = vpop.f32.mrb[0].mxu0
      %v387 = vadd.f32 0.0, %v386
      %v388 = vpop.f32.mrb[0].mxu0
      %v389 = vpop.f32.mrb[0].mxu0
      %v390 = vadd.f32 0.0, %v389
      %v391 = vpop.f32.mrb[0].mxu0
      %392 = vmatprep.mubr.bf16.mxu0 0
      %393 = vmatmul.mubr.bf16.gmra.mrb[0].mxu0 %v290
      %v394 = vpop.f32.mrb[0].mxu0
      %v395 = vadd.f32 0.0, %v394
      %v396 = vpop.f32.mrb[0].mxu0
      %v397 = vpop.f32.mrb[0].mxu0
      %v398 = vadd.f32 0.0, %v397
      %v399 = vpop.f32.mrb[0].mxu0
      %400 = vmatprep.mubr.bf16.mxu0 0
      %401 = vmatmul.mubr.bf16.gmra.mrb[0].mxu0 %v291
      %v402 = vpop.f32.mrb[0].mxu0
      %v403 = vadd.f32 0.0, %v402
      %v404 = vpop.f32.mrb[0].mxu0
      %v405 = vpop.f32.mrb[0].mxu0
      %v406 = vadd.f32 0.0, %v405
      %v407 = vpop.f32.mrb[0].mxu0
      %408 = vdwg.mxu0
      %v417 = vunpack.c.l.b16 %v224
      %v418 = vunpack.c.l.b16 %v225
      %v419 = vunpack.c.l.b16 %v226
      %v420 = vunpack.c.l.b16 %v227
      %v421 = vunpack.c.l.b16 %v228
      %v422 = vunpack.c.l.b16 %v229
      %v423 = vunpack.c.l.b16 %v230
      %v424 = vunpack.c.l.b16 %v231
      %v425 = vpack.c.b16 %v418, %v417
      %v426 = vpack.c.b16 %v420, %v419
      %v427 = vpack.c.b16 %v422, %v421
      %v428 = vpack.c.b16 %v424, %v423
      %v449 = vunpack.c.l.b16 %v232
      %v450 = vunpack.c.l.b16 %v233
      %v451 = vunpack.c.l.b16 %v234
      %v452 = vunpack.c.l.b16 %v235
      %v453 = vunpack.c.l.b16 %v236
      %v454 = vunpack.c.l.b16 %v237
      %v455 = vunpack.c.l.b16 %v238
      %v456 = vunpack.c.l.b16 %v239
      %v457 = vunpack.c.l.b16 %v240
      %v458 = vunpack.c.l.b16 %v241
      %v459 = vunpack.c.l.b16 %v242
      %v460 = vunpack.c.l.b16 %v243
      %v461 = vunpack.c.l.b16 %v244
      %v462 = vunpack.c.l.b16 %v245
      %v463 = vunpack.c.l.b16 %v246
      %v464 = vunpack.c.l.b16 %v247
      %v465 = vpack.c.b16 %v450, %v449
      %v466 = vpack.c.b16 %v452, %v451
      %v467 = vpack.c.b16 %v454, %v453
      %v468 = vpack.c.b16 %v456, %v455
      %v469 = vpack.c.b16 %v458, %v457
      %v470 = vpack.c.b16 %v460, %v459
      %v471 = vpack.c.b16 %v462, %v461
      %v472 = vpack.c.b16 %v464, %v463
      %481 = vmatprep.subr.bf16.mxu0 0
      %482 = vmatpush1.bf16.msra.mxu0 %v465
      %483 = vmatprep.subr.bf16.mxu0 0
      %484 = vmatpush1.bf16.msra.mxu0 %v466
      %485 = vmatprep.subr.bf16.mxu0 0
      %486 = vmatpush1.bf16.msra.mxu0 %v467
      %487 = vmatprep.subr.bf16.mxu0 0
      %488 = vmatpush1.bf16.msra.mxu0 %v468
      %489 = vmatprep.subr.bf16.mxu0 0
      %490 = vmatpush1.bf16.msra.mxu0 %v469
      %491 = vmatprep.subr.bf16.mxu0 0
      %492 = vmatpush1.bf16.msra.mxu0 %v470
      %493 = vmatprep.subr.bf16.mxu0 0
      %494 = vmatpush1.bf16.msra.mxu0 %v471
      %495 = vmatprep.subr.bf16.mxu0 0
      %496 = vmatpush1.bf16.msra.mxu0 %v472
      %497 = vmatprep.subr.bf16.mxu0 0
      %498 = vmatpush1.bf16.msra.mxu0 0
      %499 = vmatprep.subr.bf16.mxu0 0
      %500 = vmatpush1.bf16.msra.mxu0 0
      %501 = vmatprep.subr.bf16.mxu0 0
      %502 = vmatpush1.bf16.msra.mxu0 0
      %503 = vmatprep.subr.bf16.mxu0 0
      %504 = vmatpush1.bf16.msra.mxu0 0
      %505 = vmatprep.subr.bf16.mxu0 0
      %506 = vmatpush1.bf16.msra.mxu0 0
      %507 = vmatprep.subr.bf16.mxu0 0
      %508 = vmatpush1.bf16.msra.mxu0 0
      %509 = vmatprep.subr.bf16.mxu0 0
      %510 = vmatpush1.bf16.msra.mxu0 0
      %511 = vmatprep.subr.bf16.mxu0 0
      %512 = vmatpush1.bf16.msra.mxu0 0
      %513 = vmatprep.mubr.bf16.mxu0 0
      %514 = vmatmul.mubr.bf16.gmra.mrb[0].mxu0 %v425
      %v515 = vpop.f32.mrb[0].mxu0
      %v516 = vadd.f32 %v379, %v515
      %v517 = vpop.f32.mrb[0].mxu0
      %v518 = vpop.f32.mrb[0].mxu0
      %v519 = vadd.f32 %v382, %v518
      %v520 = vpop.f32.mrb[0].mxu0
      %521 = vmatprep.mubr.bf16.mxu0 0
      %522 = vmatmul.mubr.bf16.gmra.mrb[0].mxu0 %v426
      %v523 = vpop.f32.mrb[0].mxu0
      %v524 = vadd.f32 %v387, %v523
      %v525 = vpop.f32.mrb[0].mxu0
      %v526 = vpop.f32.mrb[0].mxu0
      %v527 = vadd.f32 %v390, %v526
      %v528 = vpop.f32.mrb[0].mxu0
      %529 = vmatprep.mubr.bf16.mxu0 0
      %530 = vmatmul.mubr.bf16.gmra.mrb[0].mxu0 %v427
      %v531 = vpop.f32.mrb[0].mxu0
      %v532 = vadd.f32 %v395, %v531
      %v533 = vpop.f32.mrb[0].mxu0
      %v534 = vpop.f32.mrb[0].mxu0
      %v535 = vadd.f32 %v398, %v534
      %v536 = vpop.f32.mrb[0].mxu0
      %537 = vmatprep.mubr.bf16.mxu0 0
      %538 = vmatmul.mubr.bf16.gmra.mrb[0].mxu0 %v428
      %v539 = vpop.f32.mrb[0].mxu0
      %v540 = vadd.f32 %v403, %v539
      %v541 = vpop.f32.mrb[0].mxu0
      %v542 = vpop.f32.mrb[0].mxu0
      %v543 = vadd.f32 %v406, %v542
      %v544 = vpop.f32.mrb[0].mxu0
      %545 = vdwg.mxu0
      %v546 = vpack.c.bf16 %v519, %v516
      %v547 = vpack.c.bf16 %v527, %v524
      %v548 = vpack.c.bf16 %v535, %v532
      %v549 = vpack.c.bf16 %v543, %v540
      %v554 = vunpack.c.l.b16 %v546
      %v555 = vunpack.c.h.b16 %v546
      %v556 = vunpack.c.l.b16 %v547
      %v557 = vunpack.c.h.b16 %v547
      %v558 = vunpack.c.l.b16 %v548
      %v559 = vunpack.c.h.b16 %v548
      %v560 = vunpack.c.l.b16 %v549
      %v561 = vunpack.c.h.b16 %v549
      %v562 = vpack.c.b16 %v554, %v554
      %v563 = vpack.c.b16 %v555, %v555
      %v564 = vpack.c.b16 %v556, %v556
      %v565 = vpack.c.b16 %v557, %v557
      %v566 = vpack.c.b16 %v558, %v558
      %v567 = vpack.c.b16 %v559, %v559
      %v568 = vpack.c.b16 %v560, %v560
      %v569 = vpack.c.b16 %v561, %v561
      %vm578 = vcmask 60416
      %579 = vst.msk [vmem:[%s221] sm:$0xf] %vm578, %v562
      %580 = vst.msk [vmem:[%s221 + $0x4] sm:$0xf] %vm578, %v563
      %581 = vst.msk [vmem:[%s221 + $0x8] sm:$0xf] %vm578, %v564
      %582 = vst.msk [vmem:[%s221 + $0xc] sm:$0xf] %vm578, %v565
      %583 = vst.msk [vmem:[%s221 + $0x10] sm:$0xf] %vm578, %v566
      %584 = vst.msk [vmem:[%s221 + $0x14] sm:$0xf] %vm578, %v567
      %585 = vst.msk [vmem:[%s221 + $0x18] sm:$0xf] %vm578, %v568
      %586 = vst.msk [vmem:[%s221 + $0x1c] sm:$0xf] %vm578, %v569
      %s587 = smul.u32 8, %s15
      %p588 = scmp.lt.s32.totalorder %s587, 15
      %s589 = scalar_select %p588, %s587, 15
      %s590 = smul.addr %s589, 4
      %s591 = scalar_lea.vmem %s4, %s590
      // Predicated region
      $region37: #{_lambda_.21} parent=35 // pred_check
        %p592 = pneg %p127
      $region38: #{_lambda_.21} parent=35 // pred_check_branch
        %594 = sbr.rel (%p592) target = $region40
      $region39: #{_lambda_.21} parent=35 // pred_region
        %s595 = smul.u32 8, %s15
      $region40: #{_lambda_.21} parent=35 // pred_fallthru
        _
    $region36: #{_lambda_.21} parent=5 // pred_fallthru
      _
    %p596 = scmp.le.s32.totalorder 2, %s10
    // Predicated region
    $region41: #{_lambda_.21} parent=5 // pred_check
      %p597 = pneg %p596
    $region42: #{_lambda_.21} parent=5 // pred_check_branch
      %599 = sbr.rel (%p597) target = $region44
    $region43: #{_lambda_.21} parent=5 // pred_region
      %s600 = ssub.s32 %s10, 2
      // Predicated region
      $region45: #{_lambda_.21} parent=43 // pred_check
        %p601 = pneg %p133
      $region46: #{_lambda_.21} parent=43 // pred_check_branch
        %603 = sbr.rel (%p601) target = $region48
      $region47: #{_lambda_.21} parent=43 // pred_region
        %s604 = smul.u32 8, %s16
        %p605 = scmp.lt.s32.totalorder %s604, 15
        %s606 = scalar_select %p605, %s604, 15
        %s607 = smul.addr %s606, 4
        %s608 = scalar_lea.vmem %s4, %s607
      $region48: #{_lambda_.21} parent=43 // pred_fallthru
        _
    $region44: #{_lambda_.21} parent=5 // pred_fallthru
      _
  $region6: #{_lambda_.21} parent=0 // loop_footer
    %s14 = sadd.s32 1, %s10
  $region7: #{_lambda_.21} parent=0 // loop_footer_branch
    %9 = sbr.rel target = $region3
  $region8: #{_lambda_.21} parent=0 // loop_exit
    _

// kernel: _lambda_.23
$region0: #{_lambda_.23}
  #allocation0 [shape = 'u32[]', space=smem, size = 0x4, offset = 0x4, fixed_abs, tag = 'smem constant byte address 0x4 - core index']
  #allocation1 [shape = 'u32[144,128]{1,0:T(1,128)}', space=vmem, size = 0x12000, scoped, tag = 'internal scratch']
  %s0 = inlined_call_operand.vmem [shape: bf16[128,128], index: 0, kind: input, shape index: {}]
  %s1 = inlined_call_operand.vmem [shape: bf16[128,128], index: 1, kind: input, shape index: {}]
  %s2 = inlined_call_operand.vmem [shape: bf16[128,16], index: 2, kind: output, shape index: {}]
  %s3 = sld [smem:[#allocation0]]
  $region41: #{_lambda_.23} parent=0
    _
  %s5 = ssub.s32 1, %s3
  %s6 = scalar_select 0, %s5, %s3
  loop: start=0, step=1, limit=4
  $region2: #{_lambda_.23} parent=0 // loop_pre_header
    _
  $region3: #{_lambda_.23} parent=0 // loop_header
    %s8 = sphi 0, %s12
    %p9 = scmp.ge.s32.totalorder %s8, 4
    %s18 = sphi 0, %s20
    %s21 = sphi 0, %s18
    %s22 = sphi 0, %s21
    %s38 = sphi 0, %s22
    %s42 = sphi 0, %s42
    %s44 = sphi 0, %s42
    %s45 = sphi 0, %s44
    %s59 = sphi 0, %s45
    %s65 = sphi 0, %s67
    %s68 = sphi 0, %s65
    %s69 = sphi 0, %s68
    %s85 = sphi 0, %s69
  $region4: #{_lambda_.23} parent=0 // loop_header_branch
    %11 = sbr.rel (%p9) target = $region8
  $region5: #{_lambda_.23} parent=0 // loop_body
    %s13 = ssub.s32 %s8, 1
    %s14 = ssub.s32 %s8, 2
    %s15 = sadd.s32 %s8, 1
    %s16 = ssub.s32 %s8, %s15
    %p17 = scmp.eq.s32.totalorder %s16, 0
    %s19 = sadd.s32 %s18, 1
    %s20 = scalar_select %p17, %s18, %s19
    %p23 = pneg %p17
    %p24 = scmp.eq.s32.totalorder %s8, 1
    %p25 = por %p23, %p24
    %p26 = scmp.ne.s32.totalorder %s18, %s21
    %p27 = scmp.eq.s32.totalorder %s8, 0
    %p28 = por %p26, %p27
    %p29 = scmp.ne.s32.totalorder %s18, %s21
    %p30 = scmp.eq.s32.totalorder %s13, 1
    %p31 = por %p29, %p30
    %p32 = scmp.ne.s32.totalorder %s21, %s22
    %p33 = scmp.eq.s32.totalorder %s13, 0
    %p34 = por %p32, %p33
    %p35 = scmp.ne.s32.totalorder %s21, %s22
    %p36 = scmp.eq.s32.totalorder %s14, 1
    %p37 = por %p35, %p36
    %p39 = scmp.ne.s32.totalorder %s22, %s38
    %p40 = scmp.eq.s32.totalorder %s14, 0
    %p41 = por %p39, %p40
    %s43 = sadd.s32 %s42, 1
    %p46 = scmp.eq.s32.totalorder %s8, 1
    %p47 = scmp.ne.s32.totalorder %s42, %s44
    %p48 = scmp.eq.s32.totalorder %s8, 0
    %p49 = por %p47, %p48
    %p50 = scmp.ne.s32.totalorder %s42, %s44
    %p51 = scmp.eq.s32.totalorder %s13, 1
    %p52 = por %p50, %p51
    %p53 = scmp.ne.s32.totalorder %s44, %s45
    %p54 = scmp.eq.s32.totalorder %s13, 0
    %p55 = por %p53, %p54
    %p56 = scmp.ne.s32.totalorder %s44, %s45
    %p57 = scmp.eq.s32.totalorder %s14, 1
    %p58 = por %p56, %p57
    %p60 = scmp.ne.s32.totalorder %s45, %s59
    %p61 = scmp.eq.s32.totalorder %s14, 0
    %p62 = por %p60, %p61
    %s63 = ssub.s32 %s8, %s15
    %p64 = scmp.eq.s32.totalorder %s63, 0
    %s66 = sadd.s32 %s65, 1
    %s67 = scalar_select %p64, %s65, %s66
    %p70 = pneg %p64
    %p71 = scmp.eq.s32.totalorder %s8, 1
    %p72 = por %p70, %p71
    %p73 = scmp.ne.s32.totalorder %s65, %s68
    %p74 = scmp.eq.s32.totalorder %s8, 0
    %p75 = por %p73, %p74
    %p76 = scmp.ne.s32.totalorder %s65, %s68
    %p77 = scmp.eq.s32.totalorder %s13, 1
    %p78 = por %p76, %p77
    %p79 = scmp.ne.s32.totalorder %s68, %s69
    %p80 = scmp.eq.s32.totalorder %s13, 0
    %p81 = por %p79, %p80
    %p82 = scmp.ne.s32.totalorder %s68, %s69
    %p83 = scmp.eq.s32.totalorder %s14, 1
    %p84 = por %p82, %p83
    %p86 = scmp.ne.s32.totalorder %s69, %s85
    %p87 = scmp.eq.s32.totalorder %s14, 0
    %p88 = por %p86, %p87
    %p89 = scmp.le.s32.totalorder 1, %s8
    %p90 = scmp.lt.s32.totalorder %s8, 3
    %p91 = pnand %p89, %p90
    %p92 = pneg %p91
    // Predicated region
    $region9: #{_lambda_.23} parent=5 // pred_check
      _
    $region10: #{_lambda_.23} parent=5 // pred_check_branch
      %94 = sbr.rel (%p91) target = $region12
    $region11: #{_lambda_.23} parent=5 // pred_region
      %s95 = ssub.s32 %s8, 1
      // Predicated region
      $region13: #{_lambda_.23} parent=11 // pred_check
        %p96 = pneg %p55
      $region14: #{_lambda_.23} parent=11 // pred_check_branch
        %98 = sbr.rel (%p96) target = $region16
      $region15: #{_lambda_.23} parent=11 // pred_region
        _
      $region16: #{_lambda_.23} parent=11 // pred_fallthru
        _
    $region12: #{_lambda_.23} parent=5 // pred_fallthru
      _
    %p99 = scmp.lt.s32.totalorder %s8, 2
    // Predicated region
    $region17: #{_lambda_.23} parent=5 // pred_check
      %p100 = pneg %p99
    $region18: #{_lambda_.23} parent=5 // pred_check_branch
      %102 = sbr.rel (%p100) target = $region20
    $region19: #{_lambda_.23} parent=5 // pred_region
      // Predicated region
      $region21: #{_lambda_.23} parent=19 // pred_check
        %p103 = pneg %p28
      $region22: #{_lambda_.23} parent=19 // pred_check_branch
        %105 = sbr.rel (%p103) target = $region24
      $region23: #{_lambda_.23} parent=19 // pred_region
        %s106 = smul.u32 8, %s8
        %p107 = scmp.lt.s32.totalorder %s106, 15
        %s108 = scalar_select %p107, %s106, 15
        %s109 = smul.addr %s108, 4
        %s110 = scalar_lea.vmem %s0, %s109
        %s111 = smul.u32 8, %s8
      $region24: #{_lambda_.23} parent=19 // pred_fallthru
        _
    $region20: #{_lambda_.23} parent=5 // pred_fallthru
      _
    %p112 = scmp.le.s32.totalorder 1, %s8
    %p113 = scmp.lt.s32.totalorder %s8, 3
    %p114 = pnand %p112, %p113
    %p115 = pneg %p114
    // Predicated region
    $region25: #{_lambda_.23} parent=5 // pred_check
      _
    $region26: #{_lambda_.23} parent=5 // pred_check_branch
      %117 = sbr.rel (%p114) target = $region28
    $region27: #{_lambda_.23} parent=5 // pred_region
      %s118 = ssub.s32 %s8, 1
      %s119 = smul.u32 8, %s13
      %p120 = scmp.lt.s32.totalorder %s119, 15
      %s121 = scalar_select %p120, %s119, 15
      %s122 = smul.addr %s121, 4
      %s123 = scalar_lea.vmem %s0, %s122
      %p124 = pneg %p34
      %p125 = pneg %p31
      %p126 = pneg %p55
      %p127 = pneg %p52
      %p128 = pneg %p81
      %p129 = pneg %p78
      %s130 = smul.u32 8, %s13
      %p131 = scmp.lt.s32.totalorder %s130, 15
      %s132 = scalar_select %p131, %s130, 15
      %s133 = smul.addr %s132, 4
      %s134 = scalar_lea.vmem %s2, %s133
      %s135 = smul.u32 8, %s13
      %p136 = scmp.lt.s32.totalorder %s135, 15
      %s137 = scalar_select %p136, %s135, 15
      %s138 = smul.addr %s137, 4
      %s139 = scalar_lea.vmem %s0, %s138
      %s140 = smul.u32 8, %s13
      %s141 = smul.u32 8, %s13
      %p142 = scmp.lt.s32.totalorder %s141, 15
      %s143 = scalar_select %p142, %s141, 15
      %s144 = smul.addr %s143, 4
      %s145 = scalar_lea.vmem %s2, %s144
      %s146 = smul.u32 8, %s13
      %v148 = vld [vmem:[%s139] sm:$0xf]
      %v149 = vld [vmem:[%s139 + $0x4] sm:$0xf]
      %v150 = vld [vmem:[%s139 + $0x8] sm:$0xf]
      %v151 = vld [vmem:[%s139 + $0xc] sm:$0xf]
      %v152 = vld [vmem:[%s139 + $0x10] sm:$0xf]
      %v153 = vld [vmem:[%s139 + $0x14] sm:$0xf]
      %v154 = vld [vmem:[%s139 + $0x18] sm:$0xf]
      %v155 = vld [vmem:[%s139 + $0x1c] sm:$0xf]
      %v156 = vld [vmem:[%s1] sm:$0xf]
      %v157 = vld [vmem:[%s1 + $0x4] sm:$0xf]
      %v158 = vld [vmem:[%s1 + $0x8] sm:$0xf]
      %v159 = vld [vmem:[%s1 + $0xc] sm:$0xf]
      %v160 = vld [vmem:[%s1 + $0x10] sm:$0xf]
      %v161 = vld [vmem:[%s1 + $0x14] sm:$0xf]
      %v162 = vld [vmem:[%s1 + $0x18] sm:$0xf]
      %v163 = vld [vmem:[%s1 + $0x1c] sm:$0xf]
      %v164 = vld [vmem:[%s1 + $0x20] sm:$0xf]
      %v165 = vld [vmem:[%s1 + $0x24] sm:$0xf]
      %v166 = vld [vmem:[%s1 + $0x28] sm:$0xf]
      %v167 = vld [vmem:[%s1 + $0x2c] sm:$0xf]
      %v168 = vld [vmem:[%s1 + $0x30] sm:$0xf]
      %v169 = vld [vmem:[%s1 + $0x34] sm:$0xf]
      %v170 = vld [vmem:[%s1 + $0x38] sm:$0xf]
      %v171 = vld [vmem:[%s1 + $0x3c] sm:$0xf]
      %v180 = vunpack.c.l.b16 %v148
      %v181 = vunpack.c.l.b16 %v149
      %v182 = vunpack.c.l.b16 %v150
      %v183 = vunpack.c.l.b16 %v151
      %v184 = vunpack.c.l.b16 %v152
      %v185 = vunpack.c.l.b16 %v153
      %v186 = vunpack.c.l.b16 %v154
      %v187 = vunpack.c.l.b16 %v155
      %v188 = vpack.c.b16 %v181, %v180
      %v189 = vpack.c.b16 %v183, %v182
      %v190 = vpack.c.b16 %v185, %v184
      %v191 = vpack.c.b16 %v187, %v186
      %v212 = vunpack.c.l.b16 %v156
      %v213 = vunpack.c.l.b16 %v157
      %v214 = vunpack.c.l.b16 %v158
      %v215 = vunpack.c.l.b16 %v159
      %v216 = vunpack.c.l.b16 %v160
      %v217 = vunpack.c.l.b16 %v161
      %v218 = vunpack.c.l.b16 %v162
      %v219 = vunpack.c.l.b16 %v163
      %v220 = vunpack.c.l.b16 %v164
      %v221 = vunpack.c.l.b16 %v165
      %v222 = vunpack.c.l.b16 %v166
      %v223 = vunpack.c.l.b16 %v167
      %v224 = vunpack.c.l.b16 %v168
      %v225 = vunpack.c.l.b16 %v169
      %v226 = vunpack.c.l.b16 %v170
      %v227 = vunpack.c.l.b16 %v171
      %v228 = vpack.c.b16 %v213, %v212
      %v229 = vpack.c.b16 %v215, %v214
      %v230 = vpack.c.b16 %v217, %v216
      %v231 = vpack.c.b16 %v219, %v218
      %v232 = vpack.c.b16 %v221, %v220
      %v233 = vpack.c.b16 %v223, %v222
      %v234 = vpack.c.b16 %v225, %v224
      %v235 = vpack.c.b16 %v227, %v226
      %244 = vmatprep.subr.bf16.mxu0 0
      %245 = vmatpush1.bf16.msra.mxu0 %v228
      %246 = vmatprep.subr.bf16.mxu0 0
      %247 = vmatpush1.bf16.msra.mxu0 %v229
      %248 = vmatprep.subr.bf16.mxu0 0
      %249 = vmatpush1.bf16.msra.mxu0 %v230
      %250 = vmatprep.subr.bf16.mxu0 0
      %251 = vmatpush1.bf16.msra.mxu0 %v231
      %252 = vmatprep.subr.bf16.mxu0 0
      %253 = vmatpush1.bf16.msra.mxu0 %v232
      %254 = vmatprep.subr.bf16.mxu0 0
      %255 = vmatpush1.bf16.msra.mxu0 %v233
      %256 = vmatprep.subr.bf16.mxu0 0
      %257 = vmatpush1.bf16.msra.mxu0 %v234
      %258 = vmatprep.subr.bf16.mxu0 0
      %259 = vmatpush1.bf16.msra.mxu0 %v235
      %260 = vmatprep.subr.bf16.mxu0 0
      %261 = vmatpush1.bf16.msra.mxu0 0
      %262 = vmatprep.subr.bf16.mxu0 0
      %263 = vmatpush1.bf16.msra.mxu0 0
      %264 = vmatprep.subr.bf16.mxu0 0
      %265 = vmatpush1.bf16.msra.mxu0 0
      %266 = vmatprep.subr.bf16.mxu0 0
      %267 = vmatpush1.bf16.msra.mxu0 0
      %268 = vmatprep.subr.bf16.mxu0 0
      %269 = vmatpush1.bf16.msra.mxu0 0
      %270 = vmatprep.subr.bf16.mxu0 0
      %271 = vmatpush1.bf16.msra.mxu0 0
      %272 = vmatprep.subr.bf16.mxu0 0
      %273 = vmatpush1.bf16.msra.mxu0 0
      %274 = vmatprep.subr.bf16.mxu0 0
      %275 = vmatpush1.bf16.msra.mxu0 0
      %276 = vmatprep.mubr.bf16.mxu0 0
      %277 = vmatmul.mubr.bf16.gmra.mrb[0].mxu0 %v188
      %v278 = vpop.f32.mrb[0].mxu0
      %v279 = vadd.f32 0.0, %v278
      %v280 = vpop.f32.mrb[0].mxu0
      %v281 = vpop.f32.mrb[0].mxu0
      %v282 = vadd.f32 0.0, %v281
      %v283 = vpop.f32.mrb[0].mxu0
      %284 = vmatprep.mubr.bf16.mxu0 0
      %285 = vmatmul.mubr.bf16.gmra.mrb[0].mxu0 %v189
      %v286 = vpop.f32.mrb[0].mxu0
      %v287 = vadd.f32 0.0, %v286
      %v288 = vpop.f32.mrb[0].mxu0
      %v289 = vpop.f32.mrb[0].mxu0
      %v290 = vadd.f32 0.0, %v289
      %v291 = vpop.f32.mrb[0].mxu0
      %292 = vmatprep.mubr.bf16.mxu0 0
      %293 = vmatmul.mubr.bf16.gmra.mrb[0].mxu0 %v190
      %v294 = vpop.f32.mrb[0].mxu0
      %v295 = vadd.f32 0.0, %v294
      %v296 = vpop.f32.mrb[0].mxu0
      %v297 = vpop.f32.mrb[0].mxu0
      %v298 = vadd.f32 0.0, %v297
      %v299 = vpop.f32.mrb[0].mxu0
      %300 = vmatprep.mubr.bf16.mxu0 0
      %301 = vmatmul.mubr.bf16.gmra.mrb[0].mxu0 %v191
      %v302 = vpop.f32.mrb[0].mxu0
      %v303 = vadd.f32 0.0, %v302
      %v304 = vpop.f32.mrb[0].mxu0
      %v305 = vpop.f32.mrb[0].mxu0
      %v306 = vadd.f32 0.0, %v305
      %v307 = vpop.f32.mrb[0].mxu0
      %308 = vdwg.mxu0
      %v309 = vpack.c.bf16 %v282, %v279
      %v310 = vpack.c.bf16 %v290, %v287
      %v311 = vpack.c.bf16 %v298, %v295
      %v312 = vpack.c.bf16 %v306, %v303
      %v317 = vunpack.c.l.b16 %v309
      %v318 = vunpack.c.h.b16 %v309
      %v319 = vunpack.c.l.b16 %v310
      %v320 = vunpack.c.h.b16 %v310
      %v321 = vunpack.c.l.b16 %v311
      %v322 = vunpack.c.h.b16 %v311
      %v323 = vunpack.c.l.b16 %v312
      %v324 = vunpack.c.h.b16 %v312
      %v325 = vpack.c.b16 %v317, %v317
      %v326 = vpack.c.b16 %v318, %v318
      %v327 = vpack.c.b16 %v319, %v319
      %v328 = vpack.c.b16 %v320, %v320
      %v329 = vpack.c.b16 %v321, %v321
      %v330 = vpack.c.b16 %v322, %v322
      %v331 = vpack.c.b16 %v323, %v323
      %v332 = vpack.c.b16 %v324, %v324
      %vm341 = vcmask 125952
      %342 = vst.msk [vmem:[%s145] sm:$0xf] %vm341, %v325
      %343 = vst.msk [vmem:[%s145 + $0x4] sm:$0xf] %vm341, %v326
      %344 = vst.msk [vmem:[%s145 + $0x8] sm:$0xf] %vm341, %v327
      %345 = vst.msk [vmem:[%s145 + $0xc] sm:$0xf] %vm341, %v328
      %346 = vst.msk [vmem:[%s145 + $0x10] sm:$0xf] %vm341, %v329
      %347 = vst.msk [vmem:[%s145 + $0x14] sm:$0xf] %vm341, %v330
      %348 = vst.msk [vmem:[%s145 + $0x18] sm:$0xf] %vm341, %v331
      %349 = vst.msk [vmem:[%s145 + $0x1c] sm:$0xf] %vm341, %v332
      %s350 = smul.u32 8, %s13
      %p351 = scmp.lt.s32.totalorder %s350, 15
      %s352 = scalar_select %p351, %s350, 15
      %s353 = smul.addr %s352, 4
      %s354 = scalar_lea.vmem %s2, %s353
      // Predicated region
      $region29: #{_lambda_.23} parent=27 // pred_check
        %p355 = pneg %p78
      $region30: #{_lambda_.23} parent=27 // pred_check_branch
        %357 = sbr.rel (%p355) target = $region32
      $region31: #{_lambda_.23} parent=27 // pred_region
        %s358 = smul.u32 8, %s13
      $region32: #{_lambda_.23} parent=27 // pred_fallthru
        _
    $region28: #{_lambda_.23} parent=5 // pred_fallthru
      _
    %p359 = scmp.le.s32.totalorder 2, %s8
    // Predicated region
    $region33: #{_lambda_.23} parent=5 // pred_check
      %p360 = pneg %p359
    $region34: #{_lambda_.23} parent=5 // pred_check_branch
      %362 = sbr.rel (%p360) target = $region36
    $region35: #{_lambda_.23} parent=5 // pred_region
      %s363 = ssub.s32 %s8, 2
      // Predicated region
      $region37: #{_lambda_.23} parent=35 // pred_check
        %p364 = pneg %p84
      $region38: #{_lambda_.23} parent=35 // pred_check_branch
        %366 = sbr.rel (%p364) target = $region40
      $region39: #{_lambda_.23} parent=35 // pred_region
        %s367 = smul.u32 8, %s14
        %p368 = scmp.lt.s32.totalorder %s367, 15
        %s369 = scalar_select %p368, %s367, 15
        %s370 = smul.addr %s369, 4
        %s371 = scalar_lea.vmem %s2, %s370
      $region40: #{_lambda_.23} parent=35 // pred_fallthru
        _
    $region36: #{_lambda_.23} parent=5 // pred_fallthru
      _
  $region6: #{_lambda_.23} parent=0 // loop_footer
    %s12 = sadd.s32 1, %s8
  $region7: #{_lambda_.23} parent=0 // loop_footer_branch
    %7 = sbr.rel target = $region3
  $region8: #{_lambda_.23} parent=0 // loop_exit
    _

// kernel: _lambda_.27
$region0: #{_lambda_.27}
  #allocation0 [shape = 'u32[]', space=smem, size = 0x4, offset = 0x4, fixed_abs, tag = 'smem constant byte address 0x4 - core index']
  #allocation1 [shape = 'u32[144,128]{1,0:T(1,128)}', space=vmem, size = 0x12000, scoped, tag = 'internal scratch']
  %s0 = inlined_call_operand.vmem [shape: bf16[512,128], index: 0, kind: input, shape index: {}]
  %s1 = inlined_call_operand.vmem [shape: bf16[128,128], index: 1, kind: input, shape index: {}]
  %s2 = inlined_call_operand.vmem [shape: bf16[512,4], index: 2, kind: input, shape index: {}]
  %s3 = inlined_call_operand.vmem [shape: f32[512,4], index: 3, kind: output, shape index: {}]
  %s4 = sld [smem:[#allocation0]]
  $region45: #{_lambda_.27} parent=0
    _
  %s6 = ssub.s32 1, %s4
  %s7 = scalar_select 0, %s6, %s4
  loop: start=0, step=1, limit=4
  $region2: #{_lambda_.27} parent=0 // loop_pre_header
    _
  $region3: #{_lambda_.27} parent=0 // loop_header
    %s9 = sphi 0, %s13
    %p10 = scmp.ge.s32.totalorder %s9, 4
    %s19 = sphi 0, %s21
    %s22 = sphi 0, %s19
    %s23 = sphi 0, %s22
    %s39 = sphi 0, %s23
    %s43 = sphi 0, %s43
    %s45 = sphi 0, %s43
    %s46 = sphi 0, %s45
    %s60 = sphi 0, %s46
    %s66 = sphi 0, %s68
    %s69 = sphi 0, %s66
    %s70 = sphi 0, %s69
    %s86 = sphi 0, %s70
    %s92 = sphi 0, %s94
    %s95 = sphi 0, %s92
    %s96 = sphi 0, %s95
    %s112 = sphi 0, %s96
  $region4: #{_lambda_.27} parent=0 // loop_header_branch
    %12 = sbr.rel (%p10) target = $region8
  $region5: #{_lambda_.27} parent=0 // loop_body
    %s14 = ssub.s32 %s9, 1
    %s15 = ssub.s32 %s9, 2
    %s16 = sadd.s32 %s9, 1
    %s17 = ssub.s32 %s9, %s16
    %p18 = scmp.eq.s32.totalorder %s17, 0
    %s20 = sadd.s32 %s19, 1
    %s21 = scalar_select %p18, %s19, %s20
    %p24 = pneg %p18
    %p25 = scmp.eq.s32.totalorder %s9, 1
    %p26 = por %p24, %p25
    %p27 = scmp.ne.s32.totalorder %s19, %s22
    %p28 = scmp.eq.s32.totalorder %s9, 0
    %p29 = por %p27, %p28
    %p30 = scmp.ne.s32.totalorder %s19, %s22
    %p31 = scmp.eq.s32.totalorder %s14, 1
    %p32 = por %p30, %p31
    %p33 = scmp.ne.s32.totalorder %s22, %s23
    %p34 = scmp.eq.s32.totalorder %s14, 0
    %p35 = por %p33, %p34
    %p36 = scmp.ne.s32.totalorder %s22, %s23
    %p37 = scmp.eq.s32.totalorder %s15, 1
    %p38 = por %p36, %p37
    %p40 = scmp.ne.s32.totalorder %s23, %s39
    %p41 = scmp.eq.s32.totalorder %s15, 0
    %p42 = por %p40, %p41
    %s44 = sadd.s32 %s43, 1
    %p47 = scmp.eq.s32.totalorder %s9, 1
    %p48 = scmp.ne.s32.totalorder %s43, %s45
    %p49 = scmp.eq.s32.totalorder %s9, 0
    %p50 = por %p48, %p49
    %p51 = scmp.ne.s32.totalorder %s43, %s45
    %p52 = scmp.eq.s32.totalorder %s14, 1
    %p53 = por %p51, %p52
    %p54 = scmp.ne.s32.totalorder %s45, %s46
    %p55 = scmp.eq.s32.totalorder %s14, 0
    %p56 = por %p54, %p55
    %p57 = scmp.ne.s32.totalorder %s45, %s46
    %p58 = scmp.eq.s32.totalorder %s15, 1
    %p59 = por %p57, %p58
    %p61 = scmp.ne.s32.totalorder %s46, %s60
    %p62 = scmp.eq.s32.totalorder %s15, 0
    %p63 = por %p61, %p62
    %s64 = ssub.s32 %s9, %s16
    %p65 = scmp.eq.s32.totalorder %s64, 0
    %s67 = sadd.s32 %s66, 1
    %s68 = scalar_select %p65, %s66, %s67
    %p71 = pneg %p65
    %p72 = scmp.eq.s32.totalorder %s9, 1
    %p73 = por %p71, %p72
    %p74 = scmp.ne.s32.totalorder %s66, %s69
    %p75 = scmp.eq.s32.totalorder %s9, 0
    %p76 = por %p74, %p75
    %p77 = scmp.ne.s32.totalorder %s66, %s69
    %p78 = scmp.eq.s32.totalorder %s14, 1
    %p79 = por %p77, %p78
    %p80 = scmp.ne.s32.totalorder %s69, %s70
    %p81 = scmp.eq.s32.totalorder %s14, 0
    %p82 = por %p80, %p81
    %p83 = scmp.ne.s32.totalorder %s69, %s70
    %p84 = scmp.eq.s32.totalorder %s15, 1
    %p85 = por %p83, %p84
    %p87 = scmp.ne.s32.totalorder %s70, %s86
    %p88 = scmp.eq.s32.totalorder %s15, 0
    %p89 = por %p87, %p88
    %s90 = ssub.s32 %s9, %s16
    %p91 = scmp.eq.s32.totalorder %s90, 0
    %s93 = sadd.s32 %s92, 1
    %s94 = scalar_select %p91, %s92, %s93
    %p97 = pneg %p91
    %p98 = scmp.eq.s32.totalorder %s9, 1
    %p99 = por %p97, %p98
    %p100 = scmp.ne.s32.totalorder %s92, %s95
    %p101 = scmp.eq.s32.totalorder %s9, 0
    %p102 = por %p100, %p101
    %p103 = scmp.ne.s32.totalorder %s92, %s95
    %p104 = scmp.eq.s32.totalorder %s14, 1
    %p105 = por %p103, %p104
    %p106 = scmp.ne.s32.totalorder %s95, %s96
    %p107 = scmp.eq.s32.totalorder %s14, 0
    %p108 = por %p106, %p107
    %p109 = scmp.ne.s32.totalorder %s95, %s96
    %p110 = scmp.eq.s32.totalorder %s15, 1
    %p111 = por %p109, %p110
    %p113 = scmp.ne.s32.totalorder %s96, %s112
    %p114 = scmp.eq.s32.totalorder %s15, 0
    %p115 = por %p113, %p114
    %p116 = scmp.le.s32.totalorder 1, %s9
    %p117 = scmp.lt.s32.totalorder %s9, 3
    %p118 = pnand %p116, %p117
    %p119 = pneg %p118
    // Predicated region
    $region9: #{_lambda_.27} parent=5 // pred_check
      _
    $region10: #{_lambda_.27} parent=5 // pred_check_branch
      %121 = sbr.rel (%p118) target = $region12
    $region11: #{_lambda_.27} parent=5 // pred_region
      %s122 = ssub.s32 %s9, 1
      // Predicated region
      $region13: #{_lambda_.27} parent=11 // pred_check
        %p123 = pneg %p56
      $region14: #{_lambda_.27} parent=11 // pred_check_branch
        %125 = sbr.rel (%p123) target = $region16
      $region15: #{_lambda_.27} parent=11 // pred_region
        _
      $region16: #{_lambda_.27} parent=11 // pred_fallthru
        _
    $region12: #{_lambda_.27} parent=5 // pred_fallthru
      _
    %p126 = scmp.lt.s32.totalorder %s9, 2
    // Predicated region
    $region17: #{_lambda_.27} parent=5 // pred_check
      %p127 = pneg %p126
    $region18: #{_lambda_.27} parent=5 // pred_check_branch
      %129 = sbr.rel (%p127) target = $region20
    $region19: #{_lambda_.27} parent=5 // pred_region
      // Predicated region
      $region21: #{_lambda_.27} parent=19 // pred_check
        %p130 = pneg %p29
      $region22: #{_lambda_.27} parent=19 // pred_check_branch
        %132 = sbr.rel (%p130) target = $region24
      $region23: #{_lambda_.27} parent=19 // pred_region
        %s133 = smul.u32 32, %s9
        %p134 = scmp.lt.s32.totalorder %s133, 63
        %s135 = scalar_select %p134, %s133, 63
        %s136 = smul.addr %s135, 4
        %s137 = scalar_lea.vmem %s0, %s136
        %s138 = smul.u32 32, %s9
      $region24: #{_lambda_.27} parent=19 // pred_fallthru
        _
      // Predicated region
      $region25: #{_lambda_.27} parent=19 // pred_check
        %p139 = pneg %p76
      $region26: #{_lambda_.27} parent=19 // pred_check_branch
        %141 = sbr.rel (%p139) target = $region28
      $region27: #{_lambda_.27} parent=19 // pred_region
        %s142 = smul.u32 32, %s9
        %p143 = scmp.lt.s32.totalorder %s142, 63
        %s144 = scalar_select %p143, %s142, 63
        %s145 = smul.addr %s144, 4
        %s146 = scalar_lea.vmem %s2, %s145
        %s147 = smul.u32 32, %s9
      $region28: #{_lambda_.27} parent=19 // pred_fallthru
        _
    $region20: #{_lambda_.27} parent=5 // pred_fallthru
      _
    %p148 = scmp.le.s32.totalorder 1, %s9
    %p149 = scmp.lt.s32.totalorder %s9, 3
    %p150 = pnand %p148, %p149
    %p151 = pneg %p150
    // Predicated region
    $region29: #{_lambda_.27} parent=5 // pred_check
      _
    $region30: #{_lambda_.27} parent=5 // pred_check_branch
      %153 = sbr.rel (%p150) target = $region32
    $region31: #{_lambda_.27} parent=5 // pred_region
      %s154 = ssub.s32 %s9, 1
      %s155 = smul.u32 32, %s14
      %p156 = scmp.lt.s32.totalorder %s155, 63
      %s157 = scalar_select %p156, %s155, 63
      %s158 = smul.addr %s157, 4
      %s159 = scalar_lea.vmem %s0, %s158
      %p160 = pneg %p35
      %p161 = pneg %p32
      %p162 = pneg %p56
      %p163 = pneg %p53
      %s164 = smul.u32 32, %s14
      %p165 = scmp.lt.s32.totalorder %s164, 63
      %s166 = scalar_select %p165, %s164, 63
      %s167 = smul.addr %s166, 4
      %s168 = scalar_lea.vmem %s2, %s167
      %p169 = pneg %p82
      %p170 = pneg %p79
      %p171 = pneg %p108
      %p172 = pneg %p105
      %s173 = smul.u32 32, %s14
      %p174 = scmp.lt.s32.totalorder %s173, 63
      %s175 = scalar_select %p174, %s173, 63
      %s176 = smul.addr %s175, 8
      %s177 = scalar_lea.vmem %s3, %s176
      %s178 = smul.u32 32, %s14
      %p179 = scmp.lt.s32.totalorder %s178, 63
      %s180 = scalar_select %p179, %s178, 63
      %s181 = smul.addr %s180, 4
      %s182 = scalar_lea.vmem %s0, %s181
      %s183 = smul.u32 32, %s14
      %s184 = smul.u32 32, %s14
      %p185 = scmp.lt.s32.totalorder %s184, 63
      %s186 = scalar_select %p185, %s184, 63
      %s187 = smul.addr %s186, 4
      %s188 = scalar_lea.vmem %s2, %s187
      %s189 = smul.u32 32, %s14
      %s190 = smul.u32 32, %s14
      %p191 = scmp.lt.s32.totalorder %s190, 63
      %s192 = scalar_select %p191, %s190, 63
      %s193 = smul.addr %s192, 8
      %s194 = scalar_lea.vmem %s3, %s193
      %s195 = smul.u32 32, %s14
      %v197 = vld [vmem:[%s182] sm:$0xf]
      %v198 = vld [vmem:[%s182 + $0x4] sm:$0xf]
      %v199 = vld [vmem:[%s182 + $0x8] sm:$0xf]
      %v200 = vld [vmem:[%s182 + $0xc] sm:$0xf]
      %v201 = vld [vmem:[%s182 + $0x10] sm:$0xf]
      %v202 = vld [vmem:[%s182 + $0x14] sm:$0xf]
      %v203 = vld [vmem:[%s182 + $0x18] sm:$0xf]
      %v204 = vld [vmem:[%s182 + $0x1c] sm:$0xf]
      %v205 = vld [vmem:[%s182 + $0x20] sm:$0xf]
      %v206 = vld [vmem:[%s182 + $0x24] sm:$0xf]
      %v207 = vld [vmem:[%s182 + $0x28] sm:$0xf]
      %v208 = vld [vmem:[%s182 + $0x2c] sm:$0xf]
      %v209 = vld [vmem:[%s182 + $0x30] sm:$0xf]
      %v210 = vld [vmem:[%s182 + $0x34] sm:$0xf]
      %v211 = vld [vmem:[%s182 + $0x38] sm:$0xf]
      %v212 = vld [vmem:[%s182 + $0x3c] sm:$0xf]
      %v213 = vld [vmem:[%s182 + $0x40] sm:$0xf]
      %v214 = vld [vmem:[%s182 + $0x44] sm:$0xf]
      %v215 = vld [vmem:[%s182 + $0x48] sm:$0xf]
      %v216 = vld [vmem:[%s182 + $0x4c] sm:$0xf]
      %v217 = vld [vmem:[%s182 + $0x50] sm:$0xf]
      %v218 = vld [vmem:[%s182 + $0x54] sm:$0xf]
      %v219 = vld [vmem:[%s182 + $0x58] sm:$0xf]
      %v220 = vld [vmem:[%s182 + $0x5c] sm:$0xf]
      %v221 = vld [vmem:[%s182 + $0x60] sm:$0xf]
      %v222 = vld [vmem:[%s182 + $0x64] sm:$0xf]
      %v223 = vld [vmem:[%s182 + $0x68] sm:$0xf]
      %v224 = vld [vmem:[%s182 + $0x6c] sm:$0xf]
      %v225 = vld [vmem:[%s182 + $0x70] sm:$0xf]
      %v226 = vld [vmem:[%s182 + $0x74] sm:$0xf]
      %v227 = vld [vmem:[%s182 + $0x78] sm:$0xf]
      %v228 = vld [vmem:[%s182 + $0x7c] sm:$0xf]
      %v229 = vld [vmem:[%s1] sm:$0xf]
      %v230 = vld [vmem:[%s1 + $0x4] sm:$0xf]
      %v231 = vld [vmem:[%s1 + $0x8] sm:$0xf]
      %v232 = vld [vmem:[%s1 + $0xc] sm:$0xf]
      %v233 = vld [vmem:[%s1 + $0x10] sm:$0xf]
      %v234 = vld [vmem:[%s1 + $0x14] sm:$0xf]
      %v235 = vld [vmem:[%s1 + $0x18] sm:$0xf]
      %v236 = vld [vmem:[%s1 + $0x1c] sm:$0xf]
      %v237 = vld [vmem:[%s1 + $0x20] sm:$0xf]
      %v238 = vld [vmem:[%s1 + $0x24] sm:$0xf]
      %v239 = vld [vmem:[%s1 + $0x28] sm:$0xf]
      %v240 = vld [vmem:[%s1 + $0x2c] sm:$0xf]
      %v241 = vld [vmem:[%s1 + $0x30] sm:$0xf]
      %v242 = vld [vmem:[%s1 + $0x34] sm:$0xf]
      %v243 = vld [vmem:[%s1 + $0x38] sm:$0xf]
      %v244 = vld [vmem:[%s1 + $0x3c] sm:$0xf]
      %v277 = vunpack.c.l.b16 %v197
      %v278 = vunpack.c.l.b16 %v198
      %v279 = vunpack.c.l.b16 %v199
      %v280 = vunpack.c.l.b16 %v200
      %v281 = vunpack.c.l.b16 %v201
      %v282 = vunpack.c.l.b16 %v202
      %v283 = vunpack.c.l.b16 %v203
      %v284 = vunpack.c.l.b16 %v204
      %v285 = vunpack.c.l.b16 %v205
      %v286 = vunpack.c.l.b16 %v206
      %v287 = vunpack.c.l.b16 %v207
      %v288 = vunpack.c.l.b16 %v208
      %v289 = vunpack.c.l.b16 %v209
      %v290 = vunpack.c.l.b16 %v210
      %v291 = vunpack.c.l.b16 %v211
      %v292 = vunpack.c.l.b16 %v212
      %v293 = vunpack.c.l.b16 %v213
      %v294 = vunpack.c.l.b16 %v214
      %v295 = vunpack.c.l.b16 %v215
      %v296 = vunpack.c.l.b16 %v216
      %v297 = vunpack.c.l.b16 %v217
      %v298 = vunpack.c.l.b16 %v218
      %v299 = vunpack.c.l.b16 %v219
      %v300 = vunpack.c.l.b16 %v220
      %v301 = vunpack.c.l.b16 %v221
      %v302 = vunpack.c.l.b16 %v222
      %v303 = vunpack.c.l.b16 %v223
      %v304 = vunpack.c.l.b16 %v224
      %v305 = vunpack.c.l.b16 %v225
      %v306 = vunpack.c.l.b16 %v226
      %v307 = vunpack.c.l.b16 %v227
      %v308 = vunpack.c.l.b16 %v228
      %v309 = vpack.c.b16 %v278, %v277
      %v310 = vpack.c.b16 %v280, %v279
      %v311 = vpack.c.b16 %v282, %v281
      %v312 = vpack.c.b16 %v284, %v283
      %v313 = vpack.c.b16 %v286, %v285
      %v314 = vpack.c.b16 %v288, %v287
      %v315 = vpack.c.b16 %v290, %v289
      %v316 = vpack.c.b16 %v292, %v291
      %v317 = vpack.c.b16 %v294, %v293
      %v318 = vpack.c.b16 %v296, %v295
      %v319 = vpack.c.b16 %v298, %v297
      %v320 = vpack.c.b16 %v300, %v299
      %v321 = vpack.c.b16 %v302, %v301
      %v322 = vpack.c.b16 %v304, %v303
      %v323 = vpack.c.b16 %v306, %v305
      %v324 = vpack.c.b16 %v308, %v307
      %v357 = vunpack.c.l.b16 %v229
      %v358 = vunpack.c.l.b16 %v230
      %v359 = vunpack.c.l.b16 %v231
      %v360 = vunpack.c.l.b16 %v232
      %v361 = vunpack.c.l.b16 %v233
      %v362 = vunpack.c.l.b16 %v234
      %v363 = vunpack.c.l.b16 %v235
      %v364 = vunpack.c.l.b16 %v236
      %v365 = vunpack.c.l.b16 %v237
      %v366 = vunpack.c.l.b16 %v238
      %v367 = vunpack.c.l.b16 %v239
      %v368 = vunpack.c.l.b16 %v240
      %v369 = vunpack.c.l.b16 %v241
      %v370 = vunpack.c.l.b16 %v242
      %v371 = vunpack.c.l.b16 %v243
      %v372 = vunpack.c.l.b16 %v244
      %v373 = vpack.c.b16 %v358, %v357
      %v374 = vpack.c.b16 %v360, %v359
      %v375 = vpack.c.b16 %v362, %v361
      %v376 = vpack.c.b16 %v364, %v363
      %v377 = vpack.c.b16 %v366, %v365
      %v378 = vpack.c.b16 %v368, %v367
      %v379 = vpack.c.b16 %v370, %v369
      %v380 = vpack.c.b16 %v372, %v371
      %389 = vmatprep.subr.bf16.mxu0 0
      %390 = vmatpush1.bf16.msra.mxu0 %v373
      %391 = vmatprep.subr.bf16.mxu0 0
      %392 = vmatpush1.bf16.msra.mxu0 %v374
      %393 = vmatprep.subr.bf16.mxu0 0
      %394 = vmatpush1.bf16.msra.mxu0 %v375
      %395 = vmatprep.subr.bf16.mxu0 0
      %396 = vmatpush1.bf16.msra.mxu0 %v376
      %397 = vmatprep.subr.bf16.mxu0 0
      %398 = vmatpush1.bf16.msra.mxu0 %v377
      %399 = vmatprep.subr.bf16.mxu0 0
      %400 = vmatpush1.bf16.msra.mxu0 %v378
      %401 = vmatprep.subr.bf16.mxu0 0
      %402 = vmatpush1.bf16.msra.mxu0 %v379
      %403 = vmatprep.subr.bf16.mxu0 0
      %404 = vmatpush1.bf16.msra.mxu0 %v380
      %405 = vmatprep.subr.bf16.mxu0 0
      %406 = vmatpush1.bf16.msra.mxu0 0
      %407 = vmatprep.subr.bf16.mxu0 0
      %408 = vmatpush1.bf16.msra.mxu0 0
      %409 = vmatprep.subr.bf16.mxu0 0
      %410 = vmatpush1.bf16.msra.mxu0 0
      %411 = vmatprep.subr.bf16.mxu0 0
      %412 = vmatpush1.bf16.msra.mxu0 0
      %413 = vmatprep.subr.bf16.mxu0 0
      %414 = vmatpush1.bf16.msra.mxu0 0
      %415 = vmatprep.subr.bf16.mxu0 0
      %416 = vmatpush1.bf16.msra.mxu0 0
      %417 = vmatprep.subr.bf16.mxu0 0
      %418 = vmatpush1.bf16.msra.mxu0 0
      %419 = vmatprep.subr.bf16.mxu0 0
      %420 = vmatpush1.bf16.msra.mxu0 0
      %421 = vmatprep.mubr.bf16.mxu0 0
      %422 = vmatmul.mubr.bf16.gmra.mrb[0].mxu0 %v309
      %v423 = vpop.f32.mrb[0].mxu0
      %v424 = vadd.f32 0.0, %v423
      %v425 = vpop.f32.mrb[0].mxu0
      %v426 = vpop.f32.mrb[0].mxu0
      %v427 = vadd.f32 0.0, %v426
      %v428 = vpop.f32.mrb[0].mxu0
      %429 = vmatprep.mubr.bf16.mxu0 0
      %430 = vmatmul.mubr.bf16.gmra.mrb[0].mxu0 %v310
      %v431 = vpop.f32.mrb[0].mxu0
      %v432 = vadd.f32 0.0, %v431
      %v433 = vpop.f32.mrb[0].mxu0
      %v434 = vpop.f32.mrb[0].mxu0
      %v435 = vadd.f32 0.0, %v434
      %v436 = vpop.f32.mrb[0].mxu0
      %437 = vmatprep.mubr.bf16.mxu0 0
      %438 = vmatmul.mubr.bf16.gmra.mrb[0].mxu0 %v311
      %v439 = vpop.f32.mrb[0].mxu0
      %v440 = vadd.f32 0.0, %v439
      %v441 = vpop.f32.mrb[0].mxu0
      %v442 = vpop.f32.mrb[0].mxu0
      %v443 = vadd.f32 0.0, %v442
      %v444 = vpop.f32.mrb[0].mxu0
      %445 = vmatprep.mubr.bf16.mxu0 0
      %446 = vmatmul.mubr.bf16.gmra.mrb[0].mxu0 %v312
      %v447 = vpop.f32.mrb[0].mxu0
      %v448 = vadd.f32 0.0, %v447
      %v449 = vpop.f32.mrb[0].mxu0
      %v450 = vpop.f32.mrb[0].mxu0
      %v451 = vadd.f32 0.0, %v450
      %v452 = vpop.f32.mrb[0].mxu0
      %453 = vmatprep.mubr.bf16.mxu0 0
      %454 = vmatmul.mubr.bf16.gmra.mrb[0].mxu0 %v313
      %v455 = vpop.f32.mrb[0].mxu0
      %v456 = vadd.f32 0.0, %v455
      %v457 = vpop.f32.mrb[0].mxu0
      %v458 = vpop.f32.mrb[0].mxu0
      %v459 = vadd.f32 0.0, %v458
      %v460 = vpop.f32.mrb[0].mxu0
      %461 = vmatprep.mubr.bf16.mxu0 0
      %462 = vmatmul.mubr.bf16.gmra.mrb[0].mxu0 %v314
      %v463 = vpop.f32.mrb[0].mxu0
      %v464 = vadd.f32 0.0, %v463
      %v465 = vpop.f32.mrb[0].mxu0
      %v466 = vpop.f32.mrb[0].mxu0
      %v467 = vadd.f32 0.0, %v466
      %v468 = vpop.f32.mrb[0].mxu0
      %469 = vmatprep.mubr.bf16.mxu0 0
      %470 = vmatmul.mubr.bf16.gmra.mrb[0].mxu0 %v315
      %v471 = vpop.f32.mrb[0].mxu0
      %v472 = vadd.f32 0.0, %v471
      %v473 = vpop.f32.mrb[0].mxu0
      %v474 = vpop.f32.mrb[0].mxu0
      %v475 = vadd.f32 0.0, %v474
      %v476 = vpop.f32.mrb[0].mxu0
      %477 = vmatprep.mubr.bf16.mxu0 0
      %478 = vmatmul.mubr.bf16.gmra.mrb[0].mxu0 %v316
      %v479 = vpop.f32.mrb[0].mxu0
      %v480 = vadd.f32 0.0, %v479
      %v481 = vpop.f32.mrb[0].mxu0
      %v482 = vpop.f32.mrb[0].mxu0
      %v483 = vadd.f32 0.0, %v482
      %v484 = vpop.f32.mrb[0].mxu0
      %485 = vmatprep.mubr.bf16.mxu0 0
      %486 = vmatmul.mubr.bf16.gmra.mrb[0].mxu0 %v317
      %v487 = vpop.f32.mrb[0].mxu0
      %v488 = vadd.f32 0.0, %v487
      %v489 = vpop.f32.mrb[0].mxu0
      %v490 = vpop.f32.mrb[0].mxu0
      %v491 = vadd.f32 0.0, %v490
      %v492 = vpop.f32.mrb[0].mxu0
      %493 = vmatprep.mubr.bf16.mxu0 0
      %494 = vmatmul.mubr.bf16.gmra.mrb[0].mxu0 %v318
      %v495 = vpop.f32.mrb[0].mxu0
      %v496 = vadd.f32 0.0, %v495
      %v497 = vpop.f32.mrb[0].mxu0
      %v498 = vpop.f32.mrb[0].mxu0
      %v499 = vadd.f32 0.0, %v498
      %v500 = vpop.f32.mrb[0].mxu0
      %501 = vmatprep.mubr.bf16.mxu0 0
      %502 = vmatmul.mubr.bf16.gmra.mrb[0].mxu0 %v319
      %v503 = vpop.f32.mrb[0].mxu0
      %v504 = vadd.f32 0.0, %v503
      %v505 = vpop.f32.mrb[0].mxu0
      %v506 = vpop.f32.mrb[0].mxu0
      %v507 = vadd.f32 0.0, %v506
      %v508 = vpop.f32.mrb[0].mxu0
      %509 = vmatprep.mubr.bf16.mxu0 0
      %510 = vmatmul.mubr.bf16.gmra.mrb[0].mxu0 %v320
      %v511 = vpop.f32.mrb[0].mxu0
      %v512 = vadd.f32 0.0, %v511
      %v513 = vpop.f32.mrb[0].mxu0
      %v514 = vpop.f32.mrb[0].mxu0
      %v515 = vadd.f32 0.0, %v514
      %v516 = vpop.f32.mrb[0].mxu0
      %517 = vmatprep.mubr.bf16.mxu0 0
      %518 = vmatmul.mubr.bf16.gmra.mrb[0].mxu0 %v321
      %v519 = vpop.f32.mrb[0].mxu0
      %v520 = vadd.f32 0.0, %v519
      %v521 = vpop.f32.mrb[0].mxu0
      %v522 = vpop.f32.mrb[0].mxu0
      %v523 = vadd.f32 0.0, %v522
      %v524 = vpop.f32.mrb[0].mxu0
      %525 = vmatprep.mubr.bf16.mxu0 0
      %526 = vmatmul.mubr.bf16.gmra.mrb[0].mxu0 %v322
      %v527 = vpop.f32.mrb[0].mxu0
      %v528 = vadd.f32 0.0, %v527
      %v529 = vpop.f32.mrb[0].mxu0
      %v530 = vpop.f32.mrb[0].mxu0
      %v531 = vadd.f32 0.0, %v530
      %v532 = vpop.f32.mrb[0].mxu0
      %533 = vmatprep.mubr.bf16.mxu0 0
      %534 = vmatmul.mubr.bf16.gmra.mrb[0].mxu0 %v323
      %v535 = vpop.f32.mrb[0].mxu0
      %v536 = vadd.f32 0.0, %v535
      %v537 = vpop.f32.mrb[0].mxu0
      %v538 = vpop.f32.mrb[0].mxu0
      %v539 = vadd.f32 0.0, %v538
      %v540 = vpop.f32.mrb[0].mxu0
      %541 = vmatprep.mubr.bf16.mxu0 0
      %542 = vmatmul.mubr.bf16.gmra.mrb[0].mxu0 %v324
      %v543 = vpop.f32.mrb[0].mxu0
      %v544 = vadd.f32 0.0, %v543
      %v545 = vpop.f32.mrb[0].mxu0
      %v546 = vpop.f32.mrb[0].mxu0
      %v547 = vadd.f32 0.0, %v546
      %v548 = vpop.f32.mrb[0].mxu0
      %549 = vdwg.mxu0
      %v550 = vld [vmem:[%s188] sm:$0xf]
      %v551 = vld [vmem:[%s188 + $0x4] sm:$0xf]
      %v552 = vld [vmem:[%s188 + $0x8] sm:$0xf]
      %v553 = vld [vmem:[%s188 + $0xc] sm:$0xf]
      %v554 = vld [vmem:[%s188 + $0x10] sm:$0xf]
      %v555 = vld [vmem:[%s188 + $0x14] sm:$0xf]
      %v556 = vld [vmem:[%s188 + $0x18] sm:$0xf]
      %v557 = vld [vmem:[%s188 + $0x1c] sm:$0xf]
      %v558 = vld [vmem:[%s188 + $0x20] sm:$0xf]
      %v559 = vld [vmem:[%s188 + $0x24] sm:$0xf]
      %v560 = vld [vmem:[%s188 + $0x28] sm:$0xf]
      %v561 = vld [vmem:[%s188 + $0x2c] sm:$0xf]
      %v562 = vld [vmem:[%s188 + $0x30] sm:$0xf]
      %v563 = vld [vmem:[%s188 + $0x34] sm:$0xf]
      %v564 = vld [vmem:[%s188 + $0x38] sm:$0xf]
      %v565 = vld [vmem:[%s188 + $0x3c] sm:$0xf]
      %v566 = vld [vmem:[%s188 + $0x40] sm:$0xf]
      %v567 = vld [vmem:[%s188 + $0x44] sm:$0xf]
      %v568 = vld [vmem:[%s188 + $0x48] sm:$0xf]
      %v569 = vld [vmem:[%s188 + $0x4c] sm:$0xf]
      %v570 = vld [vmem:[%s188 + $0x50] sm:$0xf]
      %v571 = vld [vmem:[%s188 + $0x54] sm:$0xf]
      %v572 = vld [vmem:[%s188 + $0x58] sm:$0xf]
      %v573 = vld [vmem:[%s188 + $0x5c] sm:$0xf]
      %v574 = vld [vmem:[%s188 + $0x60] sm:$0xf]
      %v575 = vld [vmem:[%s188 + $0x64] sm:$0xf]
      %v576 = vld [vmem:[%s188 + $0x68] sm:$0xf]
      %v577 = vld [vmem:[%s188 + $0x6c] sm:$0xf]
      %v578 = vld [vmem:[%s188 + $0x70] sm:$0xf]
      %v579 = vld [vmem:[%s188 + $0x74] sm:$0xf]
      %v580 = vld [vmem:[%s188 + $0x78] sm:$0xf]
      %v581 = vld [vmem:[%s188 + $0x7c] sm:$0xf]
      %v582 = vunpack.c.l.bf16 %v550
      %v583 = vunpack.c.l.bf16 %v551
      %v584 = vunpack.c.l.bf16 %v552
      %v585 = vunpack.c.l.bf16 %v553
      %v586 = vunpack.c.l.bf16 %v554
      %v587 = vunpack.c.l.bf16 %v555
      %v588 = vunpack.c.l.bf16 %v556
      %v589 = vunpack.c.l.bf16 %v557
      %v590 = vunpack.c.l.bf16 %v558
      %v591 = vunpack.c.l.bf16 %v559
      %v592 = vunpack.c.l.bf16 %v560
      %v593 = vunpack.c.l.bf16 %v561
      %v594 = vunpack.c.l.bf16 %v562
      %v595 = vunpack.c.l.bf16 %v563
      %v596 = vunpack.c.l.bf16 %v564
      %v597 = vunpack.c.l.bf16 %v565
      %v598 = vunpack.c.l.bf16 %v566
      %v599 = vunpack.c.l.bf16 %v567
      %v600 = vunpack.c.l.bf16 %v568
      %v601 = vunpack.c.l.bf16 %v569
      %v602 = vunpack.c.l.bf16 %v570
      %v603 = vunpack.c.l.bf16 %v571
      %v604 = vunpack.c.l.bf16 %v572
      %v605 = vunpack.c.l.bf16 %v573
      %v606 = vunpack.c.l.bf16 %v574
      %v607 = vunpack.c.l.bf16 %v575
      %v608 = vunpack.c.l.bf16 %v576
      %v609 = vunpack.c.l.bf16 %v577
      %v610 = vunpack.c.l.bf16 %v578
      %v611 = vunpack.c.l.bf16 %v579
      %v612 = vunpack.c.l.bf16 %v580
      %v613 = vunpack.c.l.bf16 %v581
      %v614 = vadd.f32 %v424, %v582
      %v615 = vadd.f32 %v427, %v583
      %v616 = vadd.f32 %v432, %v584
      %v617 = vadd.f32 %v435, %v585
      %v618 = vadd.f32 %v440, %v586
      %v619 = vadd.f32 %v443, %v587
      %v620 = vadd.f32 %v448, %v588
      %v621 = vadd.f32 %v451, %v589
      %v622 = vadd.f32 %v456, %v590
      %v623 = vadd.f32 %v459, %v591
      %v624 = vadd.f32 %v464, %v592
      %v625 = vadd.f32 %v467, %v593
      %v626 = vadd.f32 %v472, %v594
      %v627 = vadd.f32 %v475, %v595
      %v628 = vadd.f32 %v480, %v596
      %v629 = vadd.f32 %v483, %v597
      %v630 = vadd.f32 %v488, %v598
      %v631 = vadd.f32 %v491, %v599
      %v632 = vadd.f32 %v496, %v600
      %v633 = vadd.f32 %v499, %v601
      %v634 = vadd.f32 %v504, %v602
      %v635 = vadd.f32 %v507, %v603
      %v636 = vadd.f32 %v512, %v604
      %v637 = vadd.f32 %v515, %v605
      %v638 = vadd.f32 %v520, %v606
      %v639 = vadd.f32 %v523, %v607
      %v640 = vadd.f32 %v528, %v608
      %v641 = vadd.f32 %v531, %v609
      %v642 = vadd.f32 %v536, %v610
      %v643 = vadd.f32 %v539, %v611
      %v644 = vadd.f32 %v544, %v612
      %v645 = vadd.f32 %v547, %v613
      %vm646 = vcmask 31744
      %647 = vst.msk [vmem:[%s194] sm:$0xff] %vm646, %v614
      %648 = vst.msk [vmem:[%s194 + $0x8] sm:$0xff] %vm646, %v615
      %649 = vst.msk [vmem:[%s194 + $0x10] sm:$0xff] %vm646, %v616
      %650 = vst.msk [vmem:[%s194 + $0x18] sm:$0xff] %vm646, %v617
      %651 = vst.msk [vmem:[%s194 + $0x20] sm:$0xff] %vm646, %v618
      %652 = vst.msk [vmem:[%s194 + $0x28] sm:$0xff] %vm646, %v619
      %653 = vst.msk [vmem:[%s194 + $0x30] sm:$0xff] %vm646, %v620
      %654 = vst.msk [vmem:[%s194 + $0x38] sm:$0xff] %vm646, %v621
      %655 = vst.msk [vmem:[%s194 + $0x40] sm:$0xff] %vm646, %v622
      %656 = vst.msk [vmem:[%s194 + $0x48] sm:$0xff] %vm646, %v623
      %657 = vst.msk [vmem:[%s194 + $0x50] sm:$0xff] %vm646, %v624
      %658 = vst.msk [vmem:[%s194 + $0x58] sm:$0xff] %vm646, %v625
      %659 = vst.msk [vmem:[%s194 + $0x60] sm:$0xff] %vm646, %v626
      %660 = vst.msk [vmem:[%s194 + $0x68] sm:$0xff] %vm646, %v627
      %661 = vst.msk [vmem:[%s194 + $0x70] sm:$0xff] %vm646, %v628
      %662 = vst.msk [vmem:[%s194 + $0x78] sm:$0xff] %vm646, %v629
      %663 = vst.msk [vmem:[%s194 + $0x80] sm:$0xff] %vm646, %v630
      %664 = vst.msk [vmem:[%s194 + $0x88] sm:$0xff] %vm646, %v631
      %665 = vst.msk [vmem:[%s194 + $0x90] sm:$0xff] %vm646, %v632
      %666 = vst.msk [vmem:[%s194 + $0x98] sm:$0xff] %vm646, %v633
      %667 = vst.msk [vmem:[%s194 + $0xa0] sm:$0xff] %vm646, %v634
      %668 = vst.msk [vmem:[%s194 + $0xa8] sm:$0xff] %vm646, %v635
      %669 = vst.msk [vmem:[%s194 + $0xb0] sm:$0xff] %vm646, %v636
      %670 = vst.msk [vmem:[%s194 + $0xb8] sm:$0xff] %vm646, %v637
      %671 = vst.msk [vmem:[%s194 + $0xc0] sm:$0xff] %vm646, %v638
      %672 = vst.msk [vmem:[%s194 + $0xc8] sm:$0xff] %vm646, %v639
      %673 = vst.msk [vmem:[%s194 + $0xd0] sm:$0xff] %vm646, %v640
      %674 = vst.msk [vmem:[%s194 + $0xd8] sm:$0xff] %vm646, %v641
      %675 = vst.msk [vmem:[%s194 + $0xe0] sm:$0xff] %vm646, %v642
      %676 = vst.msk [vmem:[%s194 + $0xe8] sm:$0xff] %vm646, %v643
      %677 = vst.msk [vmem:[%s194 + $0xf0] sm:$0xff] %vm646, %v644
      %678 = vst.msk [vmem:[%s194 + $0xf8] sm:$0xff] %vm646, %v645
      %s679 = smul.u32 32, %s14
      %p680 = scmp.lt.s32.totalorder %s679, 63
      %s681 = scalar_select %p680, %s679, 63
      %s682 = smul.addr %s681, 8
      %s683 = scalar_lea.vmem %s3, %s682
      // Predicated region
      $region33: #{_lambda_.27} parent=31 // pred_check
        %p684 = pneg %p105
      $region34: #{_lambda_.27} parent=31 // pred_check_branch
        %686 = sbr.rel (%p684) target = $region36
      $region35: #{_lambda_.27} parent=31 // pred_region
        %s687 = smul.u32 32, %s14
      $region36: #{_lambda_.27} parent=31 // pred_fallthru
        _
    $region32: #{_lambda_.27} parent=5 // pred_fallthru
      _
    %p688 = scmp.le.s32.totalorder 2, %s9
    // Predicated region
    $region37: #{_lambda_.27} parent=5 // pred_check
      %p689 = pneg %p688
    $region38: #{_lambda_.27} parent=5 // pred_check_branch
      %691 = sbr.rel (%p689) target = $region40
    $region39: #{_lambda_.27} parent=5 // pred_region
      %s692 = ssub.s32 %s9, 2
      // Predicated region
      $region41: #{_lambda_.27} parent=39 // pred_check
        %p693 = pneg %p111
      $region42: #{_lambda_.27} parent=39 // pred_check_branch
        %695 = sbr.rel (%p693) target = $region44
      $region43: #{_lambda_.27} parent=39 // pred_region
        %s696 = smul.u32 32, %s15
        %p697 = scmp.lt.s32.totalorder %s696, 63
        %s698 = scalar_select %p697, %s696, 63
        %s699 = smul.addr %s698, 8
        %s700 = scalar_lea.vmem %s3, %s699
      $region44: #{_lambda_.27} parent=39 // pred_fallthru
        _
    $region40: #{_lambda_.27} parent=5 // pred_fallthru
      _
  $region6: #{_lambda_.27} parent=0 // loop_footer
    %s13 = sadd.s32 1, %s9
  $region7: #{_lambda_.27} parent=0 // loop_footer_branch
    %8 = sbr.rel target = $region3
  $region8: #{_lambda_.27} parent=0 // loop_exit
    _

// kernel: _lambda_.24
$region0: #{_lambda_.24}
  #allocation0 [shape = 'u32[]', space=smem, size = 0x4, offset = 0x4, fixed_abs, tag = 'smem constant byte address 0x4 - core index']
  #allocation1 [shape = 'u32[144,128]{1,0:T(1,128)}', space=vmem, size = 0x12000, scoped, tag = 'internal scratch']
  %s0 = inlined_call_operand.vmem [shape: bf16[512,128], index: 0, kind: input, shape index: {}]
  %s1 = inlined_call_operand.vmem [shape: bf16[512,128], index: 1, kind: input, shape index: {}]
  %s2 = inlined_call_operand.vmem [shape: bf16[128,128], index: 2, kind: input, shape index: {}]
  %s3 = inlined_call_operand.vmem [shape: bf16[128,128], index: 3, kind: input, shape index: {}]
  %s4 = inlined_call_operand.vmem [shape: bf16[512,4], index: 4, kind: output, shape index: {}]
  %s5 = sld [smem:[#allocation0]]
  $region49: #{_lambda_.24} parent=0
    _
  %s7 = ssub.s32 1, %s5
  %s8 = scalar_select 0, %s7, %s5
  loop: start=0, step=1, limit=4
  $region2: #{_lambda_.24} parent=0 // loop_pre_header
    _
  $region3: #{_lambda_.24} parent=0 // loop_header
    %s10 = sphi 0, %s14
    %p11 = scmp.ge.s32.totalorder %s10, 4
    %s20 = sphi 0, %s22
    %s23 = sphi 0, %s20
    %s24 = sphi 0, %s23
    %s40 = sphi 0, %s24
    %s46 = sphi 0, %s48
    %s49 = sphi 0, %s46
    %s50 = sphi 0, %s49
    %s66 = sphi 0, %s50
    %s70 = sphi 0, %s70
    %s72 = sphi 0, %s70
    %s73 = sphi 0, %s72
    %s87 = sphi 0, %s73
    %s91 = sphi 0, %s91
    %s93 = sphi 0, %s91
    %s94 = sphi 0, %s93
    %s108 = sphi 0, %s94
    %s114 = sphi 0, %s116
    %s117 = sphi 0, %s114
    %s118 = sphi 0, %s117
    %s134 = sphi 0, %s118
  $region4: #{_lambda_.24} parent=0 // loop_header_branch
    %13 = sbr.rel (%p11) target = $region8
  $region5: #{_lambda_.24} parent=0 // loop_body
    %s15 = ssub.s32 %s10, 1
    %s16 = ssub.s32 %s10, 2
    %s17 = sadd.s32 %s10, 1
    %s18 = ssub.s32 %s10, %s17
    %p19 = scmp.eq.s32.totalorder %s18, 0
    %s21 = sadd.s32 %s20, 1
    %s22 = scalar_select %p19, %s20, %s21
    %p25 = pneg %p19
    %p26 = scmp.eq.s32.totalorder %s10, 1
    %p27 = por %p25, %p26
    %p28 = scmp.ne.s32.totalorder %s20, %s23
    %p29 = scmp.eq.s32.totalorder %s10, 0
    %p30 = por %p28, %p29
    %p31 = scmp.ne.s32.totalorder %s20, %s23
    %p32 = scmp.eq.s32.totalorder %s15, 1
    %p33 = por %p31, %p32
    %p34 = scmp.ne.s32.totalorder %s23, %s24
    %p35 = scmp.eq.s32.totalorder %s15, 0
    %p36 = por %p34, %p35
    %p37 = scmp.ne.s32.totalorder %s23, %s24
    %p38 = scmp.eq.s32.totalorder %s16, 1
    %p39 = por %p37, %p38
    %p41 = scmp.ne.s32.totalorder %s24, %s40
    %p42 = scmp.eq.s32.totalorder %s16, 0
    %p43 = por %p41, %p42
    %s44 = ssub.s32 %s10, %s17
    %p45 = scmp.eq.s32.totalorder %s44, 0
    %s47 = sadd.s32 %s46, 1
    %s48 = scalar_select %p45, %s46, %s47
    %p51 = pneg %p45
    %p52 = scmp.eq.s32.totalorder %s10, 1
    %p53 = por %p51, %p52
    %p54 = scmp.ne.s32.totalorder %s46, %s49
    %p55 = scmp.eq.s32.totalorder %s10, 0
    %p56 = por %p54, %p55
    %p57 = scmp.ne.s32.totalorder %s46, %s49
    %p58 = scmp.eq.s32.totalorder %s15, 1
    %p59 = por %p57, %p58
    %p60 = scmp.ne.s32.totalorder %s49, %s50
    %p61 = scmp.eq.s32.totalorder %s15, 0
    %p62 = por %p60, %p61
    %p63 = scmp.ne.s32.totalorder %s49, %s50
    %p64 = scmp.eq.s32.totalorder %s16, 1
    %p65 = por %p63, %p64
    %p67 = scmp.ne.s32.totalorder %s50, %s66
    %p68 = scmp.eq.s32.totalorder %s16, 0
    %p69 = por %p67, %p68
    %s71 = sadd.s32 %s70, 1
    %p74 = scmp.eq.s32.totalorder %s10, 1
    %p75 = scmp.ne.s32.totalorder %s70, %s72
    %p76 = scmp.eq.s32.totalorder %s10, 0
    %p77 = por %p75, %p76
    %p78 = scmp.ne.s32.totalorder %s70, %s72
    %p79 = scmp.eq.s32.totalorder %s15, 1
    %p80 = por %p78, %p79
    %p81 = scmp.ne.s32.totalorder %s72, %s73
    %p82 = scmp.eq.s32.totalorder %s15, 0
    %p83 = por %p81, %p82
    %p84 = scmp.ne.s32.totalorder %s72, %s73
    %p85 = scmp.eq.s32.totalorder %s16, 1
    %p86 = por %p84, %p85
    %p88 = scmp.ne.s32.totalorder %s73, %s87
    %p89 = scmp.eq.s32.totalorder %s16, 0
    %p90 = por %p88, %p89
    %s92 = sadd.s32 %s91, 1
    %p95 = scmp.eq.s32.totalorder %s10, 1
    %p96 = scmp.ne.s32.totalorder %s91, %s93
    %p97 = scmp.eq.s32.totalorder %s10, 0
    %p98 = por %p96, %p97
    %p99 = scmp.ne.s32.totalorder %s91, %s93
    %p100 = scmp.eq.s32.totalorder %s15, 1
    %p101 = por %p99, %p100
    %p102 = scmp.ne.s32.totalorder %s93, %s94
    %p103 = scmp.eq.s32.totalorder %s15, 0
    %p104 = por %p102, %p103
    %p105 = scmp.ne.s32.totalorder %s93, %s94
    %p106 = scmp.eq.s32.totalorder %s16, 1
    %p107 = por %p105, %p106
    %p109 = scmp.ne.s32.totalorder %s94, %s108
    %p110 = scmp.eq.s32.totalorder %s16, 0
    %p111 = por %p109, %p110
    %s112 = ssub.s32 %s10, %s17
    %p113 = scmp.eq.s32.totalorder %s112, 0
    %s115 = sadd.s32 %s114, 1
    %s116 = scalar_select %p113, %s114, %s115
    %p119 = pneg %p113
    %p120 = scmp.eq.s32.totalorder %s10, 1
    %p121 = por %p119, %p120
    %p122 = scmp.ne.s32.totalorder %s114, %s117
    %p123 = scmp.eq.s32.totalorder %s10, 0
    %p124 = por %p122, %p123
    %p125 = scmp.ne.s32.totalorder %s114, %s117
    %p126 = scmp.eq.s32.totalorder %s15, 1
    %p127 = por %p125, %p126
    %p128 = scmp.ne.s32.totalorder %s117, %s118
    %p129 = scmp.eq.s32.totalorder %s15, 0
    %p130 = por %p128, %p129
    %p131 = scmp.ne.s32.totalorder %s117, %s118
    %p132 = scmp.eq.s32.totalorder %s16, 1
    %p133 = por %p131, %p132
    %p135 = scmp.ne.s32.totalorder %s118, %s134
    %p136 = scmp.eq.s32.totalorder %s16, 0
    %p137 = por %p135, %p136
    %p138 = scmp.le.s32.totalorder 1, %s10
    %p139 = scmp.lt.s32.totalorder %s10, 3
    %p140 = pnand %p138, %p139
    %p141 = pneg %p140
    // Predicated region
    $region9: #{_lambda_.24} parent=5 // pred_check
      _
    $region10: #{_lambda_.24} parent=5 // pred_check_branch
      %143 = sbr.rel (%p140) target = $region12
    $region11: #{_lambda_.24} parent=5 // pred_region
      %s144 = ssub.s32 %s10, 1
      // Predicated region
      $region13: #{_lambda_.24} parent=11 // pred_check
        %p145 = pneg %p83
      $region14: #{_lambda_.24} parent=11 // pred_check_branch
        %147 = sbr.rel (%p145) target = $region16
      $region15: #{_lambda_.24} parent=11 // pred_region
        _
      $region16: #{_lambda_.24} parent=11 // pred_fallthru
        _
      // Predicated region
      $region17: #{_lambda_.24} parent=11 // pred_check
        %p148 = pneg %p104
      $region18: #{_lambda_.24} parent=11 // pred_check_branch
        %150 = sbr.rel (%p148) target = $region20
      $region19: #{_lambda_.24} parent=11 // pred_region
        _
      $region20: #{_lambda_.24} parent=11 // pred_fallthru
        _
    $region12: #{_lambda_.24} parent=5 // pred_fallthru
      _
    %p151 = scmp.lt.s32.totalorder %s10, 2
    // Predicated region
    $region21: #{_lambda_.24} parent=5 // pred_check
      %p152 = pneg %p151
    $region22: #{_lambda_.24} parent=5 // pred_check_branch
      %154 = sbr.rel (%p152) target = $region24
    $region23: #{_lambda_.24} parent=5 // pred_region
      // Predicated region
      $region25: #{_lambda_.24} parent=23 // pred_check
        %p155 = pneg %p30
      $region26: #{_lambda_.24} parent=23 // pred_check_branch
        %157 = sbr.rel (%p155) target = $region28
      $region27: #{_lambda_.24} parent=23 // pred_region
        %s158 = smul.u32 32, %s10
        %p159 = scmp.lt.s32.totalorder %s158, 63
        %s160 = scalar_select %p159, %s158, 63
        %s161 = smul.addr %s160, 4
        %s162 = scalar_lea.vmem %s0, %s161
        %s163 = smul.u32 32, %s10
      $region28: #{_lambda_.24} parent=23 // pred_fallthru
        _
      // Predicated region
      $region29: #{_lambda_.24} parent=23 // pred_check
        %p164 = pneg %p56
      $region30: #{_lambda_.24} parent=23 // pred_check_branch
        %166 = sbr.rel (%p164) target = $region32
      $region31: #{_lambda_.24} parent=23 // pred_region
        %s167 = smul.u32 32, %s10
        %p168 = scmp.lt.s32.totalorder %s167, 63
        %s169 = scalar_select %p168, %s167, 63
        %s170 = smul.addr %s169, 4
        %s171 = scalar_lea.vmem %s1, %s170
        %s172 = smul.u32 32, %s10
      $region32: #{_lambda_.24} parent=23 // pred_fallthru
        _
    $region24: #{_lambda_.24} parent=5 // pred_fallthru
      _
    %p173 = scmp.le.s32.totalorder 1, %s10
    %p174 = scmp.lt.s32.totalorder %s10, 3
    %p175 = pnand %p173, %p174
    %p176 = pneg %p175
    // Predicated region
    $region33: #{_lambda_.24} parent=5 // pred_check
      _
    $region34: #{_lambda_.24} parent=5 // pred_check_branch
      %178 = sbr.rel (%p175) target = $region36
    $region35: #{_lambda_.24} parent=5 // pred_region
      %s179 = ssub.s32 %s10, 1
      %s180 = smul.u32 32, %s15
      %p181 = scmp.lt.s32.totalorder %s180, 63
      %s182 = scalar_select %p181, %s180, 63
      %s183 = smul.addr %s182, 4
      %s184 = scalar_lea.vmem %s0, %s183
      %p185 = pneg %p36
      %p186 = pneg %p33
      %s187 = smul.u32 32, %s15
      %p188 = scmp.lt.s32.totalorder %s187, 63
      %s189 = scalar_select %p188, %s187, 63
      %s190 = smul.addr %s189, 4
      %s191 = scalar_lea.vmem %s1, %s190
      %p192 = pneg %p62
      %p193 = pneg %p59
      %p194 = pneg %p83
      %p195 = pneg %p80
      %p196 = pneg %p104
      %p197 = pneg %p101
      %p198 = pneg %p130
      %p199 = pneg %p127
      %s200 = smul.u32 32, %s15
      %p201 = scmp.lt.s32.totalorder %s200, 63
      %s202 = scalar_select %p201, %s200, 63
      %s203 = smul.addr %s202, 4
      %s204 = scalar_lea.vmem %s4, %s203
      %s205 = smul.u32 32, %s15
      %p206 = scmp.lt.s32.totalorder %s205, 63
      %s207 = scalar_select %p206, %s205, 63
      %s208 = smul.addr %s207, 4
      %s209 = scalar_lea.vmem %s0, %s208
      %s210 = smul.u32 32, %s15
      %s211 = smul.u32 32, %s15
      %p212 = scmp.lt.s32.totalorder %s211, 63
      %s213 = scalar_select %p212, %s211, 63
      %s214 = smul.addr %s213, 4
      %s215 = scalar_lea.vmem %s1, %s214
      %s216 = smul.u32 32, %s15
      %s217 = smul.u32 32, %s15
      %p218 = scmp.lt.s32.totalorder %s217, 63
      %s219 = scalar_select %p218, %s217, 63
      %s220 = smul.addr %s219, 4
      %s221 = scalar_lea.vmem %s4, %s220
      %s222 = smul.u32 32, %s15
      %v224 = vld [vmem:[%s209] sm:$0xf]
      %v225 = vld [vmem:[%s209 + $0x4] sm:$0xf]
      %v226 = vld [vmem:[%s209 + $0x8] sm:$0xf]
      %v227 = vld [vmem:[%s209 + $0xc] sm:$0xf]
      %v228 = vld [vmem:[%s209 + $0x10] sm:$0xf]
      %v229 = vld [vmem:[%s209 + $0x14] sm:$0xf]
      %v230 = vld [vmem:[%s209 + $0x18] sm:$0xf]
      %v231 = vld [vmem:[%s209 + $0x1c] sm:$0xf]
      %v232 = vld [vmem:[%s209 + $0x20] sm:$0xf]
      %v233 = vld [vmem:[%s209 + $0x24] sm:$0xf]
      %v234 = vld [vmem:[%s209 + $0x28] sm:$0xf]
      %v235 = vld [vmem:[%s209 + $0x2c] sm:$0xf]
      %v236 = vld [vmem:[%s209 + $0x30] sm:$0xf]
      %v237 = vld [vmem:[%s209 + $0x34] sm:$0xf]
      %v238 = vld [vmem:[%s209 + $0x38] sm:$0xf]
      %v239 = vld [vmem:[%s209 + $0x3c] sm:$0xf]
      %v240 = vld [vmem:[%s209 + $0x40] sm:$0xf]
      %v241 = vld [vmem:[%s209 + $0x44] sm:$0xf]
      %v242 = vld [vmem:[%s209 + $0x48] sm:$0xf]
      %v243 = vld [vmem:[%s209 + $0x4c] sm:$0xf]
      %v244 = vld [vmem:[%s209 + $0x50] sm:$0xf]
      %v245 = vld [vmem:[%s209 + $0x54] sm:$0xf]
      %v246 = vld [vmem:[%s209 + $0x58] sm:$0xf]
      %v247 = vld [vmem:[%s209 + $0x5c] sm:$0xf]
      %v248 = vld [vmem:[%s209 + $0x60] sm:$0xf]
      %v249 = vld [vmem:[%s209 + $0x64] sm:$0xf]
      %v250 = vld [vmem:[%s209 + $0x68] sm:$0xf]
      %v251 = vld [vmem:[%s209 + $0x6c] sm:$0xf]
      %v252 = vld [vmem:[%s209 + $0x70] sm:$0xf]
      %v253 = vld [vmem:[%s209 + $0x74] sm:$0xf]
      %v254 = vld [vmem:[%s209 + $0x78] sm:$0xf]
      %v255 = vld [vmem:[%s209 + $0x7c] sm:$0xf]
      %v256 = vld [vmem:[%s2] sm:$0xf]
      %v257 = vld [vmem:[%s2 + $0x4] sm:$0xf]
      %v258 = vld [vmem:[%s2 + $0x8] sm:$0xf]
      %v259 = vld [vmem:[%s2 + $0xc] sm:$0xf]
      %v260 = vld [vmem:[%s2 + $0x10] sm:$0xf]
      %v261 = vld [vmem:[%s2 + $0x14] sm:$0xf]
      %v262 = vld [vmem:[%s2 + $0x18] sm:$0xf]
      %v263 = vld [vmem:[%s2 + $0x1c] sm:$0xf]
      %v264 = vld [vmem:[%s2 + $0x20] sm:$0xf]
      %v265 = vld [vmem:[%s2 + $0x24] sm:$0xf]
      %v266 = vld [vmem:[%s2 + $0x28] sm:$0xf]
      %v267 = vld [vmem:[%s2 + $0x2c] sm:$0xf]
      %v268 = vld [vmem:[%s2 + $0x30] sm:$0xf]
      %v269 = vld [vmem:[%s2 + $0x34] sm:$0xf]
      %v270 = vld [vmem:[%s2 + $0x38] sm:$0xf]
      %v271 = vld [vmem:[%s2 + $0x3c] sm:$0xf]
      %v272 = vld [vmem:[%s215] sm:$0xf]
      %v273 = vld [vmem:[%s215 + $0x4] sm:$0xf]
      %v274 = vld [vmem:[%s215 + $0x8] sm:$0xf]
      %v275 = vld [vmem:[%s215 + $0xc] sm:$0xf]
      %v276 = vld [vmem:[%s215 + $0x10] sm:$0xf]
      %v277 = vld [vmem:[%s215 + $0x14] sm:$0xf]
      %v278 = vld [vmem:[%s215 + $0x18] sm:$0xf]
      %v279 = vld [vmem:[%s215 + $0x1c] sm:$0xf]
      %v280 = vld [vmem:[%s215 + $0x20] sm:$0xf]
      %v281 = vld [vmem:[%s215 + $0x24] sm:$0xf]
      %v282 = vld [vmem:[%s215 + $0x28] sm:$0xf]
      %v283 = vld [vmem:[%s215 + $0x2c] sm:$0xf]
      %v284 = vld [vmem:[%s215 + $0x30] sm:$0xf]
      %v285 = vld [vmem:[%s215 + $0x34] sm:$0xf]
      %v286 = vld [vmem:[%s215 + $0x38] sm:$0xf]
      %v287 = vld [vmem:[%s215 + $0x3c] sm:$0xf]
      %v288 = vld [vmem:[%s215 + $0x40] sm:$0xf]
      %v289 = vld [vmem:[%s215 + $0x44] sm:$0xf]
      %v290 = vld [vmem:[%s215 + $0x48] sm:$0xf]
      %v291 = vld [vmem:[%s215 + $0x4c] sm:$0xf]
      %v292 = vld [vmem:[%s215 + $0x50] sm:$0xf]
      %v293 = vld [vmem:[%s215 + $0x54] sm:$0xf]
      %v294 = vld [vmem:[%s215 + $0x58] sm:$0xf]
      %v295 = vld [vmem:[%s215 + $0x5c] sm:$0xf]
      %v296 = vld [vmem:[%s215 + $0x60] sm:$0xf]
      %v297 = vld [vmem:[%s215 + $0x64] sm:$0xf]
      %v298 = vld [vmem:[%s215 + $0x68] sm:$0xf]
      %v299 = vld [vmem:[%s215 + $0x6c] sm:$0xf]
      %v300 = vld [vmem:[%s215 + $0x70] sm:$0xf]
      %v301 = vld [vmem:[%s215 + $0x74] sm:$0xf]
      %v302 = vld [vmem:[%s215 + $0x78] sm:$0xf]
      %v303 = vld [vmem:[%s215 + $0x7c] sm:$0xf]
      %v304 = vld [vmem:[%s3] sm:$0xf]
      %v305 = vld [vmem:[%s3 + $0x4] sm:$0xf]
      %v306 = vld [vmem:[%s3 + $0x8] sm:$0xf]
      %v307 = vld [vmem:[%s3 + $0xc] sm:$0xf]
      %v308 = vld [vmem:[%s3 + $0x10] sm:$0xf]
      %v309 = vld [vmem:[%s3 + $0x14] sm:$0xf]
      %v310 = vld [vmem:[%s3 + $0x18] sm:$0xf]
      %v311 = vld [vmem:[%s3 + $0x1c] sm:$0xf]
      %v312 = vld [vmem:[%s3 + $0x20] sm:$0xf]
      %v313 = vld [vmem:[%s3 + $0x24] sm:$0xf]
      %v314 = vld [vmem:[%s3 + $0x28] sm:$0xf]
      %v315 = vld [vmem:[%s3 + $0x2c] sm:$0xf]
      %v316 = vld [vmem:[%s3 + $0x30] sm:$0xf]
      %v317 = vld [vmem:[%s3 + $0x34] sm:$0xf]
      %v318 = vld [vmem:[%s3 + $0x38] sm:$0xf]
      %v319 = vld [vmem:[%s3 + $0x3c] sm:$0xf]
      %v352 = vunpack.c.l.b16 %v272
      %v353 = vunpack.c.l.b16 %v273
      %v354 = vunpack.c.l.b16 %v274
      %v355 = vunpack.c.l.b16 %v275
      %v356 = vunpack.c.l.b16 %v276
      %v357 = vunpack.c.l.b16 %v277
      %v358 = vunpack.c.l.b16 %v278
      %v359 = vunpack.c.l.b16 %v279
      %v360 = vunpack.c.l.b16 %v280
      %v361 = vunpack.c.l.b16 %v281
      %v362 = vunpack.c.l.b16 %v282
      %v363 = vunpack.c.l.b16 %v283
      %v364 = vunpack.c.l.b16 %v284
      %v365 = vunpack.c.l.b16 %v285
      %v366 = vunpack.c.l.b16 %v286
      %v367 = vunpack.c.l.b16 %v287
      %v368 = vunpack.c.l.b16 %v288
      %v369 = vunpack.c.l.b16 %v289
      %v370 = vunpack.c.l.b16 %v290
      %v371 = vunpack.c.l.b16 %v291
      %v372 = vunpack.c.l.b16 %v292
      %v373 = vunpack.c.l.b16 %v293
      %v374 = vunpack.c.l.b16 %v294
      %v375 = vunpack.c.l.b16 %v295
      %v376 = vunpack.c.l.b16 %v296
      %v377 = vunpack.c.l.b16 %v297
      %v378 = vunpack.c.l.b16 %v298
      %v379 = vunpack.c.l.b16 %v299
      %v380 = vunpack.c.l.b16 %v300
      %v381 = vunpack.c.l.b16 %v301
      %v382 = vunpack.c.l.b16 %v302
      %v383 = vunpack.c.l.b16 %v303
      %v384 = vpack.c.b16 %v353, %v352
      %v385 = vpack.c.b16 %v355, %v354
      %v386 = vpack.c.b16 %v357, %v356
      %v387 = vpack.c.b16 %v359, %v358
      %v388 = vpack.c.b16 %v361, %v360
      %v389 = vpack.c.b16 %v363, %v362
      %v390 = vpack.c.b16 %v365, %v364
      %v391 = vpack.c.b16 %v367, %v366
      %v392 = vpack.c.b16 %v369, %v368
      %v393 = vpack.c.b16 %v371, %v370
      %v394 = vpack.c.b16 %v373, %v372
      %v395 = vpack.c.b16 %v375, %v374
      %v396 = vpack.c.b16 %v377, %v376
      %v397 = vpack.c.b16 %v379, %v378
      %v398 = vpack.c.b16 %v381, %v380
      %v399 = vpack.c.b16 %v383, %v382
      %v432 = vunpack.c.l.b16 %v304
      %v433 = vunpack.c.l.b16 %v305
      %v434 = vunpack.c.l.b16 %v306
      %v435 = vunpack.c.l.b16 %v307
      %v436 = vunpack.c.l.b16 %v308
      %v437 = vunpack.c.l.b16 %v309
      %v438 = vunpack.c.l.b16 %v310
      %v439 = vunpack.c.l.b16 %v311
      %v440 = vunpack.c.l.b16 %v312
      %v441 = vunpack.c.l.b16 %v313
      %v442 = vunpack.c.l.b16 %v314
      %v443 = vunpack.c.l.b16 %v315
      %v444 = vunpack.c.l.b16 %v316
      %v445 = vunpack.c.l.b16 %v317
      %v446 = vunpack.c.l.b16 %v318
      %v447 = vunpack.c.l.b16 %v319
      %v448 = vpack.c.b16 %v433, %v432
      %v449 = vpack.c.b16 %v435, %v434
      %v450 = vpack.c.b16 %v437, %v436
      %v451 = vpack.c.b16 %v439, %v438
      %v452 = vpack.c.b16 %v441, %v440
      %v453 = vpack.c.b16 %v443, %v442
      %v454 = vpack.c.b16 %v445, %v444
      %v455 = vpack.c.b16 %v447, %v446
      %464 = vmatprep.subr.bf16.mxu0 0
      %465 = vmatpush1.bf16.msra.mxu0 %v448
      %466 = vmatprep.subr.bf16.mxu0 0
      %467 = vmatpush1.bf16.msra.mxu0 %v449
      %468 = vmatprep.subr.bf16.mxu0 0
      %469 = vmatpush1.bf16.msra.mxu0 %v450
      %470 = vmatprep.subr.bf16.mxu0 0
      %471 = vmatpush1.bf16.msra.mxu0 %v451
      %472 = vmatprep.subr.bf16.mxu0 0
      %473 = vmatpush1.bf16.msra.mxu0 %v452
      %474 = vmatprep.subr.bf16.mxu0 0
      %475 = vmatpush1.bf16.msra.mxu0 %v453
      %476 = vmatprep.subr.bf16.mxu0 0
      %477 = vmatpush1.bf16.msra.mxu0 %v454
      %478 = vmatprep.subr.bf16.mxu0 0
      %479 = vmatpush1.bf16.msra.mxu0 %v455
      %480 = vmatprep.subr.bf16.mxu0 0
      %481 = vmatpush1.bf16.msra.mxu0 0
      %482 = vmatprep.subr.bf16.mxu0 0
      %483 = vmatpush1.bf16.msra.mxu0 0
      %484 = vmatprep.subr.bf16.mxu0 0
      %485 = vmatpush1.bf16.msra.mxu0 0
      %486 = vmatprep.subr.bf16.mxu0 0
      %487 = vmatpush1.bf16.msra.mxu0 0
      %488 = vmatprep.subr.bf16.mxu0 0
      %489 = vmatpush1.bf16.msra.mxu0 0
      %490 = vmatprep.subr.bf16.mxu0 0
      %491 = vmatpush1.bf16.msra.mxu0 0
      %492 = vmatprep.subr.bf16.mxu0 0
      %493 = vmatpush1.bf16.msra.mxu0 0
      %494 = vmatprep.subr.bf16.mxu0 0
      %495 = vmatpush1.bf16.msra.mxu0 0
      %496 = vmatprep.mubr.bf16.mxu0 0
      %497 = vmatmul.mubr.bf16.gmra.mrb[0].mxu0 %v384
      %v498 = vpop.f32.mrb[0].mxu0
      %v499 = vadd.f32 0.0, %v498
      %v500 = vpop.f32.mrb[0].mxu0
      %v501 = vpop.f32.mrb[0].mxu0
      %v502 = vadd.f32 0.0, %v501
      %v503 = vpop.f32.mrb[0].mxu0
      %504 = vmatprep.mubr.bf16.mxu0 0
      %505 = vmatmul.mubr.bf16.gmra.mrb[0].mxu0 %v385
      %v506 = vpop.f32.mrb[0].mxu0
      %v507 = vadd.f32 0.0, %v506
      %v508 = vpop.f32.mrb[0].mxu0
      %v509 = vpop.f32.mrb[0].mxu0
      %v510 = vadd.f32 0.0, %v509
      %v511 = vpop.f32.mrb[0].mxu0
      %512 = vmatprep.mubr.bf16.mxu0 0
      %513 = vmatmul.mubr.bf16.gmra.mrb[0].mxu0 %v386
      %v514 = vpop.f32.mrb[0].mxu0
      %v515 = vadd.f32 0.0, %v514
      %v516 = vpop.f32.mrb[0].mxu0
      %v517 = vpop.f32.mrb[0].mxu0
      %v518 = vadd.f32 0.0, %v517
      %v519 = vpop.f32.mrb[0].mxu0
      %520 = vmatprep.mubr.bf16.mxu0 0
      %521 = vmatmul.mubr.bf16.gmra.mrb[0].mxu0 %v387
      %v522 = vpop.f32.mrb[0].mxu0
      %v523 = vadd.f32 0.0, %v522
      %v524 = vpop.f32.mrb[0].mxu0
      %v525 = vpop.f32.mrb[0].mxu0
      %v526 = vadd.f32 0.0, %v525
      %v527 = vpop.f32.mrb[0].mxu0
      %528 = vmatprep.mubr.bf16.mxu0 0
      %529 = vmatmul.mubr.bf16.gmra.mrb[0].mxu0 %v388
      %v530 = vpop.f32.mrb[0].mxu0
      %v531 = vadd.f32 0.0, %v530
      %v532 = vpop.f32.mrb[0].mxu0
      %v533 = vpop.f32.mrb[0].mxu0
      %v534 = vadd.f32 0.0, %v533
      %v535 = vpop.f32.mrb[0].mxu0
      %536 = vmatprep.mubr.bf16.mxu0 0
      %537 = vmatmul.mubr.bf16.gmra.mrb[0].mxu0 %v389
      %v538 = vpop.f32.mrb[0].mxu0
      %v539 = vadd.f32 0.0, %v538
      %v540 = vpop.f32.mrb[0].mxu0
      %v541 = vpop.f32.mrb[0].mxu0
      %v542 = vadd.f32 0.0, %v541
      %v543 = vpop.f32.mrb[0].mxu0
      %544 = vmatprep.mubr.bf16.mxu0 0
      %545 = vmatmul.mubr.bf16.gmra.mrb[0].mxu0 %v390
      %v546 = vpop.f32.mrb[0].mxu0
      %v547 = vadd.f32 0.0, %v546
      %v548 = vpop.f32.mrb[0].mxu0
      %v549 = vpop.f32.mrb[0].mxu0
      %v550 = vadd.f32 0.0, %v549
      %v551 = vpop.f32.mrb[0].mxu0
      %552 = vmatprep.mubr.bf16.mxu0 0
      %553 = vmatmul.mubr.bf16.gmra.mrb[0].mxu0 %v391
      %v554 = vpop.f32.mrb[0].mxu0
      %v555 = vadd.f32 0.0, %v554
      %v556 = vpop.f32.mrb[0].mxu0
      %v557 = vpop.f32.mrb[0].mxu0
      %v558 = vadd.f32 0.0, %v557
      %v559 = vpop.f32.mrb[0].mxu0
      %560 = vmatprep.mubr.bf16.mxu0 0
      %561 = vmatmul.mubr.bf16.gmra.mrb[0].mxu0 %v392
      %v562 = vpop.f32.mrb[0].mxu0
      %v563 = vadd.f32 0.0, %v562
      %v564 = vpop.f32.mrb[0].mxu0
      %v565 = vpop.f32.mrb[0].mxu0
      %v566 = vadd.f32 0.0, %v565
      %v567 = vpop.f32.mrb[0].mxu0
      %568 = vmatprep.mubr.bf16.mxu0 0
      %569 = vmatmul.mubr.bf16.gmra.mrb[0].mxu0 %v393
      %v570 = vpop.f32.mrb[0].mxu0
      %v571 = vadd.f32 0.0, %v570
      %v572 = vpop.f32.mrb[0].mxu0
      %v573 = vpop.f32.mrb[0].mxu0
      %v574 = vadd.f32 0.0, %v573
      %v575 = vpop.f32.mrb[0].mxu0
      %576 = vmatprep.mubr.bf16.mxu0 0
      %577 = vmatmul.mubr.bf16.gmra.mrb[0].mxu0 %v394
      %v578 = vpop.f32.mrb[0].mxu0
      %v579 = vadd.f32 0.0, %v578
      %v580 = vpop.f32.mrb[0].mxu0
      %v581 = vpop.f32.mrb[0].mxu0
      %v582 = vadd.f32 0.0, %v581
      %v583 = vpop.f32.mrb[0].mxu0
      %584 = vmatprep.mubr.bf16.mxu0 0
      %585 = vmatmul.mubr.bf16.gmra.mrb[0].mxu0 %v395
      %v586 = vpop.f32.mrb[0].mxu0
      %v587 = vadd.f32 0.0, %v586
      %v588 = vpop.f32.mrb[0].mxu0
      %v589 = vpop.f32.mrb[0].mxu0
      %v590 = vadd.f32 0.0, %v589
      %v591 = vpop.f32.mrb[0].mxu0
      %592 = vmatprep.mubr.bf16.mxu0 0
      %593 = vmatmul.mubr.bf16.gmra.mrb[0].mxu0 %v396
      %v594 = vpop.f32.mrb[0].mxu0
      %v595 = vadd.f32 0.0, %v594
      %v596 = vpop.f32.mrb[0].mxu0
      %v597 = vpop.f32.mrb[0].mxu0
      %v598 = vadd.f32 0.0, %v597
      %v599 = vpop.f32.mrb[0].mxu0
      %600 = vmatprep.mubr.bf16.mxu0 0
      %601 = vmatmul.mubr.bf16.gmra.mrb[0].mxu0 %v397
      %v602 = vpop.f32.mrb[0].mxu0
      %v603 = vadd.f32 0.0, %v602
      %v604 = vpop.f32.mrb[0].mxu0
      %v605 = vpop.f32.mrb[0].mxu0
      %v606 = vadd.f32 0.0, %v605
      %v607 = vpop.f32.mrb[0].mxu0
      %608 = vmatprep.mubr.bf16.mxu0 0
      %609 = vmatmul.mubr.bf16.gmra.mrb[0].mxu0 %v398
      %v610 = vpop.f32.mrb[0].mxu0
      %v611 = vadd.f32 0.0, %v610
      %v612 = vpop.f32.mrb[0].mxu0
      %v613 = vpop.f32.mrb[0].mxu0
      %v614 = vadd.f32 0.0, %v613
      %v615 = vpop.f32.mrb[0].mxu0
      %616 = vmatprep.mubr.bf16.mxu0 0
      %617 = vmatmul.mubr.bf16.gmra.mrb[0].mxu0 %v399
      %v618 = vpop.f32.mrb[0].mxu0
      %v619 = vadd.f32 0.0, %v618
      %v620 = vpop.f32.mrb[0].mxu0
      %v621 = vpop.f32.mrb[0].mxu0
      %v622 = vadd.f32 0.0, %v621
      %v623 = vpop.f32.mrb[0].mxu0
      %624 = vdwg.mxu0
      %v657 = vunpack.c.l.b16 %v224
      %v658 = vunpack.c.l.b16 %v225
      %v659 = vunpack.c.l.b16 %v226
      %v660 = vunpack.c.l.b16 %v227
      %v661 = vunpack.c.l.b16 %v228
      %v662 = vunpack.c.l.b16 %v229
      %v663 = vunpack.c.l.b16 %v230
      %v664 = vunpack.c.l.b16 %v231
      %v665 = vunpack.c.l.b16 %v232
      %v666 = vunpack.c.l.b16 %v233
      %v667 = vunpack.c.l.b16 %v234
      %v668 = vunpack.c.l.b16 %v235
      %v669 = vunpack.c.l.b16 %v236
      %v670 = vunpack.c.l.b16 %v237
      %v671 = vunpack.c.l.b16 %v238
      %v672 = vunpack.c.l.b16 %v239
      %v673 = vunpack.c.l.b16 %v240
      %v674 = vunpack.c.l.b16 %v241
      %v675 = vunpack.c.l.b16 %v242
      %v676 = vunpack.c.l.b16 %v243
      %v677 = vunpack.c.l.b16 %v244
      %v678 = vunpack.c.l.b16 %v245
      %v679 = vunpack.c.l.b16 %v246
      %v680 = vunpack.c.l.b16 %v247
      %v681 = vunpack.c.l.b16 %v248
      %v682 = vunpack.c.l.b16 %v249
      %v683 = vunpack.c.l.b16 %v250
      %v684 = vunpack.c.l.b16 %v251
      %v685 = vunpack.c.l.b16 %v252
      %v686 = vunpack.c.l.b16 %v253
      %v687 = vunpack.c.l.b16 %v254
      %v688 = vunpack.c.l.b16 %v255
      %v689 = vpack.c.b16 %v658, %v657
      %v690 = vpack.c.b16 %v660, %v659
      %v691 = vpack.c.b16 %v662, %v661
      %v692 = vpack.c.b16 %v664, %v663
      %v693 = vpack.c.b16 %v666, %v665
      %v694 = vpack.c.b16 %v668, %v667
      %v695 = vpack.c.b16 %v670, %v669
      %v696 = vpack.c.b16 %v672, %v671
      %v697 = vpack.c.b16 %v674, %v673
      %v698 = vpack.c.b16 %v676, %v675
      %v699 = vpack.c.b16 %v678, %v677
      %v700 = vpack.c.b16 %v680, %v679
      %v701 = vpack.c.b16 %v682, %v681
      %v702 = vpack.c.b16 %v684, %v683
      %v703 = vpack.c.b16 %v686, %v685
      %v704 = vpack.c.b16 %v688, %v687
      %v737 = vunpack.c.l.b16 %v256
      %v738 = vunpack.c.l.b16 %v257
      %v739 = vunpack.c.l.b16 %v258
      %v740 = vunpack.c.l.b16 %v259
      %v741 = vunpack.c.l.b16 %v260
      %v742 = vunpack.c.l.b16 %v261
      %v743 = vunpack.c.l.b16 %v262
      %v744 = vunpack.c.l.b16 %v263
      %v745 = vunpack.c.l.b16 %v264
      %v746 = vunpack.c.l.b16 %v265
      %v747 = vunpack.c.l.b16 %v266
      %v748 = vunpack.c.l.b16 %v267
      %v749 = vunpack.c.l.b16 %v268
      %v750 = vunpack.c.l.b16 %v269
      %v751 = vunpack.c.l.b16 %v270
      %v752 = vunpack.c.l.b16 %v271
      %v753 = vpack.c.b16 %v738, %v737
      %v754 = vpack.c.b16 %v740, %v739
      %v755 = vpack.c.b16 %v742, %v741
      %v756 = vpack.c.b16 %v744, %v743
      %v757 = vpack.c.b16 %v746, %v745
      %v758 = vpack.c.b16 %v748, %v747
      %v759 = vpack.c.b16 %v750, %v749
      %v760 = vpack.c.b16 %v752, %v751
      %769 = vmatprep.subr.bf16.mxu0 0
      %770 = vmatpush1.bf16.msra.mxu0 %v753
      %771 = vmatprep.subr.bf16.mxu0 0
      %772 = vmatpush1.bf16.msra.mxu0 %v754
      %773 = vmatprep.subr.bf16.mxu0 0
      %774 = vmatpush1.bf16.msra.mxu0 %v755
      %775 = vmatprep.subr.bf16.mxu0 0
      %776 = vmatpush1.bf16.msra.mxu0 %v756
      %777 = vmatprep.subr.bf16.mxu0 0
      %778 = vmatpush1.bf16.msra.mxu0 %v757
      %779 = vmatprep.subr.bf16.mxu0 0
      %780 = vmatpush1.bf16.msra.mxu0 %v758
      %781 = vmatprep.subr.bf16.mxu0 0
      %782 = vmatpush1.bf16.msra.mxu0 %v759
      %783 = vmatprep.subr.bf16.mxu0 0
      %784 = vmatpush1.bf16.msra.mxu0 %v760
      %785 = vmatprep.subr.bf16.mxu0 0
      %786 = vmatpush1.bf16.msra.mxu0 0
      %787 = vmatprep.subr.bf16.mxu0 0
      %788 = vmatpush1.bf16.msra.mxu0 0
      %789 = vmatprep.subr.bf16.mxu0 0
      %790 = vmatpush1.bf16.msra.mxu0 0
      %791 = vmatprep.subr.bf16.mxu0 0
      %792 = vmatpush1.bf16.msra.mxu0 0
      %793 = vmatprep.subr.bf16.mxu0 0
      %794 = vmatpush1.bf16.msra.mxu0 0
      %795 = vmatprep.subr.bf16.mxu0 0
      %796 = vmatpush1.bf16.msra.mxu0 0
      %797 = vmatprep.subr.bf16.mxu0 0
      %798 = vmatpush1.bf16.msra.mxu0 0
      %799 = vmatprep.subr.bf16.mxu0 0
      %800 = vmatpush1.bf16.msra.mxu0 0
      %801 = vmatprep.mubr.bf16.mxu0 0
      %802 = vmatmul.mubr.bf16.gmra.mrb[0].mxu0 %v689
      %v803 = vpop.f32.mrb[0].mxu0
      %v804 = vadd.f32 %v499, %v803
      %v805 = vpop.f32.mrb[0].mxu0
      %v806 = vpop.f32.mrb[0].mxu0
      %v807 = vadd.f32 %v502, %v806
      %v808 = vpop.f32.mrb[0].mxu0
      %809 = vmatprep.mubr.bf16.mxu0 0
      %810 = vmatmul.mubr.bf16.gmra.mrb[0].mxu0 %v690
      %v811 = vpop.f32.mrb[0].mxu0
      %v812 = vadd.f32 %v507, %v811
      %v813 = vpop.f32.mrb[0].mxu0
      %v814 = vpop.f32.mrb[0].mxu0
      %v815 = vadd.f32 %v510, %v814
      %v816 = vpop.f32.mrb[0].mxu0
      %817 = vmatprep.mubr.bf16.mxu0 0
      %818 = vmatmul.mubr.bf16.gmra.mrb[0].mxu0 %v691
      %v819 = vpop.f32.mrb[0].mxu0
      %v820 = vadd.f32 %v515, %v819
      %v821 = vpop.f32.mrb[0].mxu0
      %v822 = vpop.f32.mrb[0].mxu0
      %v823 = vadd.f32 %v518, %v822
      %v824 = vpop.f32.mrb[0].mxu0
      %825 = vmatprep.mubr.bf16.mxu0 0
      %826 = vmatmul.mubr.bf16.gmra.mrb[0].mxu0 %v692
      %v827 = vpop.f32.mrb[0].mxu0
      %v828 = vadd.f32 %v523, %v827
      %v829 = vpop.f32.mrb[0].mxu0
      %v830 = vpop.f32.mrb[0].mxu0
      %v831 = vadd.f32 %v526, %v830
      %v832 = vpop.f32.mrb[0].mxu0
      %833 = vmatprep.mubr.bf16.mxu0 0
      %834 = vmatmul.mubr.bf16.gmra.mrb[0].mxu0 %v693
      %v835 = vpop.f32.mrb[0].mxu0
      %v836 = vadd.f32 %v531, %v835
      %v837 = vpop.f32.mrb[0].mxu0
      %v838 = vpop.f32.mrb[0].mxu0
      %v839 = vadd.f32 %v534, %v838
      %v840 = vpop.f32.mrb[0].mxu0
      %841 = vmatprep.mubr.bf16.mxu0 0
      %842 = vmatmul.mubr.bf16.gmra.mrb[0].mxu0 %v694
      %v843 = vpop.f32.mrb[0].mxu0
      %v844 = vadd.f32 %v539, %v843
      %v845 = vpop.f32.mrb[0].mxu0
      %v846 = vpop.f32.mrb[0].mxu0
      %v847 = vadd.f32 %v542, %v846
      %v848 = vpop.f32.mrb[0].mxu0
      %849 = vmatprep.mubr.bf16.mxu0 0
      %850 = vmatmul.mubr.bf16.gmra.mrb[0].mxu0 %v695
      %v851 = vpop.f32.mrb[0].mxu0
      %v852 = vadd.f32 %v547, %v851
      %v853 = vpop.f32.mrb[0].mxu0
      %v854 = vpop.f32.mrb[0].mxu0
      %v855 = vadd.f32 %v550, %v854
      %v856 = vpop.f32.mrb[0].mxu0
      %857 = vmatprep.mubr.bf16.mxu0 0
      %858 = vmatmul.mubr.bf16.gmra.mrb[0].mxu0 %v696
      %v859 = vpop.f32.mrb[0].mxu0
      %v860 = vadd.f32 %v555, %v859
      %v861 = vpop.f32.mrb[0].mxu0
      %v862 = vpop.f32.mrb[0].mxu0
      %v863 = vadd.f32 %v558, %v862
      %v864 = vpop.f32.mrb[0].mxu0
      %865 = vmatprep.mubr.bf16.mxu0 0
      %866 = vmatmul.mubr.bf16.gmra.mrb[0].mxu0 %v697
      %v867 = vpop.f32.mrb[0].mxu0
      %v868 = vadd.f32 %v563, %v867
      %v869 = vpop.f32.mrb[0].mxu0
      %v870 = vpop.f32.mrb[0].mxu0
      %v871 = vadd.f32 %v566, %v870
      %v872 = vpop.f32.mrb[0].mxu0
      %873 = vmatprep.mubr.bf16.mxu0 0
      %874 = vmatmul.mubr.bf16.gmra.mrb[0].mxu0 %v698
      %v875 = vpop.f32.mrb[0].mxu0
      %v876 = vadd.f32 %v571, %v875
      %v877 = vpop.f32.mrb[0].mxu0
      %v878 = vpop.f32.mrb[0].mxu0
      %v879 = vadd.f32 %v574, %v878
      %v880 = vpop.f32.mrb[0].mxu0
      %881 = vmatprep.mubr.bf16.mxu0 0
      %882 = vmatmul.mubr.bf16.gmra.mrb[0].mxu0 %v699
      %v883 = vpop.f32.mrb[0].mxu0
      %v884 = vadd.f32 %v579, %v883
      %v885 = vpop.f32.mrb[0].mxu0
      %v886 = vpop.f32.mrb[0].mxu0
      %v887 = vadd.f32 %v582, %v886
      %v888 = vpop.f32.mrb[0].mxu0
      %889 = vmatprep.mubr.bf16.mxu0 0
      %890 = vmatmul.mubr.bf16.gmra.mrb[0].mxu0 %v700
      %v891 = vpop.f32.mrb[0].mxu0
      %v892 = vadd.f32 %v587, %v891
      %v893 = vpop.f32.mrb[0].mxu0
      %v894 = vpop.f32.mrb[0].mxu0
      %v895 = vadd.f32 %v590, %v894
      %v896 = vpop.f32.mrb[0].mxu0
      %897 = vmatprep.mubr.bf16.mxu0 0
      %898 = vmatmul.mubr.bf16.gmra.mrb[0].mxu0 %v701
      %v899 = vpop.f32.mrb[0].mxu0
      %v900 = vadd.f32 %v595, %v899
      %v901 = vpop.f32.mrb[0].mxu0
      %v902 = vpop.f32.mrb[0].mxu0
      %v903 = vadd.f32 %v598, %v902
      %v904 = vpop.f32.mrb[0].mxu0
      %905 = vmatprep.mubr.bf16.mxu0 0
      %906 = vmatmul.mubr.bf16.gmra.mrb[0].mxu0 %v702
      %v907 = vpop.f32.mrb[0].mxu0
      %v908 = vadd.f32 %v603, %v907
      %v909 = vpop.f32.mrb[0].mxu0
      %v910 = vpop.f32.mrb[0].mxu0
      %v911 = vadd.f32 %v606, %v910
      %v912 = vpop.f32.mrb[0].mxu0
      %913 = vmatprep.mubr.bf16.mxu0 0
      %914 = vmatmul.mubr.bf16.gmra.mrb[0].mxu0 %v703
      %v915 = vpop.f32.mrb[0].mxu0
      %v916 = vadd.f32 %v611, %v915
      %v917 = vpop.f32.mrb[0].mxu0
      %v918 = vpop.f32.mrb[0].mxu0
      %v919 = vadd.f32 %v614, %v918
      %v920 = vpop.f32.mrb[0].mxu0
      %921 = vmatprep.mubr.bf16.mxu0 0
      %922 = vmatmul.mubr.bf16.gmra.mrb[0].mxu0 %v704
      %v923 = vpop.f32.mrb[0].mxu0
      %v924 = vadd.f32 %v619, %v923
      %v925 = vpop.f32.mrb[0].mxu0
      %v926 = vpop.f32.mrb[0].mxu0
      %v927 = vadd.f32 %v622, %v926
      %v928 = vpop.f32.mrb[0].mxu0
      %929 = vdwg.mxu0
      %v930 = vpack.c.bf16 %v807, %v804
      %v931 = vpack.c.bf16 %v815, %v812
      %v932 = vpack.c.bf16 %v823, %v820
      %v933 = vpack.c.bf16 %v831, %v828
      %v934 = vpack.c.bf16 %v839, %v836
      %v935 = vpack.c.bf16 %v847, %v844
      %v936 = vpack.c.bf16 %v855, %v852
      %v937 = vpack.c.bf16 %v863, %v860
      %v938 = vpack.c.bf16 %v871, %v868
      %v939 = vpack.c.bf16 %v879, %v876
      %v940 = vpack.c.bf16 %v887, %v884
      %v941 = vpack.c.bf16 %v895, %v892
      %v942 = vpack.c.bf16 %v903, %v900
      %v943 = vpack.c.bf16 %v911, %v908
      %v944 = vpack.c.bf16 %v919, %v916
      %v945 = vpack.c.bf16 %v927, %v924
      %v962 = vunpack.c.l.b16 %v930
      %v963 = vunpack.c.h.b16 %v930
      %v964 = vunpack.c.l.b16 %v931
      %v965 = vunpack.c.h.b16 %v931
      %v966 = vunpack.c.l.b16 %v932
      %v967 = vunpack.c.h.b16 %v932
      %v968 = vunpack.c.l.b16 %v933
      %v969 = vunpack.c.h.b16 %v933
      %v970 = vunpack.c.l.b16 %v934
      %v971 = vunpack.c.h.b16 %v934
      %v972 = vunpack.c.l.b16 %v935
      %v973 = vunpack.c.h.b16 %v935
      %v974 = vunpack.c.l.b16 %v936
      %v975 = vunpack.c.h.b16 %v936
      %v976 = vunpack.c.l.b16 %v937
      %v977 = vunpack.c.h.b16 %v937
      %v978 = vunpack.c.l.b16 %v938
      %v979 = vunpack.c.h.b16 %v938
      %v980 = vunpack.c.l.b16 %v939
      %v981 = vunpack.c.h.b16 %v939
      %v982 = vunpack.c.l.b16 %v940
      %v983 = vunpack.c.h.b16 %v940
      %v984 = vunpack.c.l.b16 %v941
      %v985 = vunpack.c.h.b16 %v941
      %v986 = vunpack.c.l.b16 %v942
      %v987 = vunpack.c.h.b16 %v942
      %v988 = vunpack.c.l.b16 %v943
      %v989 = vunpack.c.h.b16 %v943
      %v990 = vunpack.c.l.b16 %v944
      %v991 = vunpack.c.h.b16 %v944
      %v992 = vunpack.c.l.b16 %v945
      %v993 = vunpack.c.h.b16 %v945
      %v994 = vpack.c.b16 %v962, %v962
      %v995 = vpack.c.b16 %v963, %v963
      %v996 = vpack.c.b16 %v964, %v964
      %v997 = vpack.c.b16 %v965, %v965
      %v998 = vpack.c.b16 %v966, %v966
      %v999 = vpack.c.b16 %v967, %v967
      %v1000 = vpack.c.b16 %v968, %v968
      %v1001 = vpack.c.b16 %v969, %v969
      %v1002 = vpack.c.b16 %v970, %v970
      %v1003 = vpack.c.b16 %v971, %v971
      %v1004 = vpack.c.b16 %v972, %v972
      %v1005 = vpack.c.b16 %v973, %v973
      %v1006 = vpack.c.b16 %v974, %v974
      %v1007 = vpack.c.b16 %v975, %v975
      %v1008 = vpack.c.b16 %v976, %v976
      %v1009 = vpack.c.b16 %v977, %v977
      %v1010 = vpack.c.b16 %v978, %v978
      %v1011 = vpack.c.b16 %v979, %v979
      %v1012 = vpack.c.b16 %v980, %v980
      %v1013 = vpack.c.b16 %v981, %v981
      %v1014 = vpack.c.b16 %v982, %v982
      %v1015 = vpack.c.b16 %v983, %v983
      %v1016 = vpack.c.b16 %v984, %v984
      %v1017 = vpack.c.b16 %v985, %v985
      %v1018 = vpack.c.b16 %v986, %v986
      %v1019 = vpack.c.b16 %v987, %v987
      %v1020 = vpack.c.b16 %v988, %v988
      %v1021 = vpack.c.b16 %v989, %v989
      %v1022 = vpack.c.b16 %v990, %v990
      %v1023 = vpack.c.b16 %v991, %v991
      %v1024 = vpack.c.b16 %v992, %v992
      %v1025 = vpack.c.b16 %v993, %v993
      %vm1058 = vcmask 27648
      %1059 = vst.msk [vmem:[%s221] sm:$0xf] %vm1058, %v994
      %1060 = vst.msk [vmem:[%s221 + $0x4] sm:$0xf] %vm1058, %v995
      %1061 = vst.msk [vmem:[%s221 + $0x8] sm:$0xf] %vm1058, %v996
      %1062 = vst.msk [vmem:[%s221 + $0xc] sm:$0xf] %vm1058, %v997
      %1063 = vst.msk [vmem:[%s221 + $0x10] sm:$0xf] %vm1058, %v998
      %1064 = vst.msk [vmem:[%s221 + $0x14] sm:$0xf] %vm1058, %v999
      %1065 = vst.msk [vmem:[%s221 + $0x18] sm:$0xf] %vm1058, %v1000
      %1066 = vst.msk [vmem:[%s221 + $0x1c] sm:$0xf] %vm1058, %v1001
      %1067 = vst.msk [vmem:[%s221 + $0x20] sm:$0xf] %vm1058, %v1002
      %1068 = vst.msk [vmem:[%s221 + $0x24] sm:$0xf] %vm1058, %v1003
      %1069 = vst.msk [vmem:[%s221 + $0x28] sm:$0xf] %vm1058, %v1004
      %1070 = vst.msk [vmem:[%s221 + $0x2c] sm:$0xf] %vm1058, %v1005
      %1071 = vst.msk [vmem:[%s221 + $0x30] sm:$0xf] %vm1058, %v1006
      %1072 = vst.msk [vmem:[%s221 + $0x34] sm:$0xf] %vm1058, %v1007
      %1073 = vst.msk [vmem:[%s221 + $0x38] sm:$0xf] %vm1058, %v1008
      %1074 = vst.msk [vmem:[%s221 + $0x3c] sm:$0xf] %vm1058, %v1009
      %1075 = vst.msk [vmem:[%s221 + $0x40] sm:$0xf] %vm1058, %v1010
      %1076 = vst.msk [vmem:[%s221 + $0x44] sm:$0xf] %vm1058, %v1011
      %1077 = vst.msk [vmem:[%s221 + $0x48] sm:$0xf] %vm1058, %v1012
      %1078 = vst.msk [vmem:[%s221 + $0x4c] sm:$0xf] %vm1058, %v1013
      %1079 = vst.msk [vmem:[%s221 + $0x50] sm:$0xf] %vm1058, %v1014
      %1080 = vst.msk [vmem:[%s221 + $0x54] sm:$0xf] %vm1058, %v1015
      %1081 = vst.msk [vmem:[%s221 + $0x58] sm:$0xf] %vm1058, %v1016
      %1082 = vst.msk [vmem:[%s221 + $0x5c] sm:$0xf] %vm1058, %v1017
      %1083 = vst.msk [vmem:[%s221 + $0x60] sm:$0xf] %vm1058, %v1018
      %1084 = vst.msk [vmem:[%s221 + $0x64] sm:$0xf] %vm1058, %v1019
      %1085 = vst.msk [vmem:[%s221 + $0x68] sm:$0xf] %vm1058, %v1020
      %1086 = vst.msk [vmem:[%s221 + $0x6c] sm:$0xf] %vm1058, %v1021
      %1087 = vst.msk [vmem:[%s221 + $0x70] sm:$0xf] %vm1058, %v1022
      %1088 = vst.msk [vmem:[%s221 + $0x74] sm:$0xf] %vm1058, %v1023
      %1089 = vst.msk [vmem:[%s221 + $0x78] sm:$0xf] %vm1058, %v1024
      %1090 = vst.msk [vmem:[%s221 + $0x7c] sm:$0xf] %vm1058, %v1025
      %s1091 = smul.u32 32, %s15
      %p1092 = scmp.lt.s32.totalorder %s1091, 63
      %s1093 = scalar_select %p1092, %s1091, 63
      %s1094 = smul.addr %s1093, 4
      %s1095 = scalar_lea.vmem %s4, %s1094
      // Predicated region
      $region37: #{_lambda_.24} parent=35 // pred_check
        %p1096 = pneg %p127
      $region38: #{_lambda_.24} parent=35 // pred_check_branch
        %1098 = sbr.rel (%p1096) target = $region40
      $region39: #{_lambda_.24} parent=35 // pred_region
        %s1099 = smul.u32 32, %s15
      $region40: #{_lambda_.24} parent=35 // pred_fallthru
        _
    $region36: #{_lambda_.24} parent=5 // pred_fallthru
      _
    %p1100 = scmp.le.s32.totalorder 2, %s10
    // Predicated region
    $region41: #{_lambda_.24} parent=5 // pred_check
      %p1101 = pneg %p1100
    $region42: #{_lambda_.24} parent=5 // pred_check_branch
      %1103 = sbr.rel (%p1101) target = $region44
    $region43: #{_lambda_.24} parent=5 // pred_region
      %s1104 = ssub.s32 %s10, 2
      // Predicated region
      $region45: #{_lambda_.24} parent=43 // pred_check
        %p1105 = pneg %p133
      $region46: #{_lambda_.24} parent=43 // pred_check_branch
        %1107 = sbr.rel (%p1105) target = $region48
      $region47: #{_lambda_.24} parent=43 // pred_region
        %s1108 = smul.u32 32, %s16
        %p1109 = scmp.lt.s32.totalorder %s1108, 63
        %s1110 = scalar_select %p1109, %s1108, 63
        %s1111 = smul.addr %s1110, 4
        %s1112 = scalar_lea.vmem %s4, %s1111
      $region48: #{_lambda_.24} parent=43 // pred_fallthru
        _
    $region44: #{_lambda_.24} parent=5 // pred_fallthru
      _
  $region6: #{_lambda_.24} parent=0 // loop_footer
    %s14 = sadd.s32 1, %s10
  $region7: #{_lambda_.24} parent=0 // loop_footer_branch
    %9 = sbr.rel target = $region3
  $region8: #{_lambda_.24} parent=0 // loop_exit
    _

</llo_original>
